<compile_context>
chip_gen: v5e
topology: v5e:2x2
jax: 0.10.0
libtpu: 0.0.40
codegen_flags: <defaults>
</compile_context>

<pallas_src>
import functools

import jax
import jax.numpy as jnp
import numpy as np
from jax.experimental import pallas as pl
from jax.experimental.pallas import tpu as pltpu

# Network geometry (fixed by the PyTorch module).
_C1, _C2 = 6, 16        # conv output channels
_K = 5                  # conv kernel size
_IN = 28                # input spatial size
_P1 = 12                # pool1 output spatial (28->24->12)
_P2 = 4                 # pool2 output spatial (12->8->4)
_PH1 = _C1 * _P1 * _P1  # 864: per-phase width after folded conv1
_PH1P = 896             # 864 padded up to a multiple of 128 lanes
_PH2 = _C2 * _P2 * _P2  # 256: per-phase width after folded conv2 (= flatten)
_OUT_PAD = 128          # fc2 output padded to a lane-dense store


# ----------------------------------------------------------------------------
# One-time weight folding (numpy, outside the kernel).
# ----------------------------------------------------------------------------
def _fold_conv1_pool(w):
    """(6,1,5,5) -> (784, 4*896): conv1 evaluated at the four 2x2-pool phases.

    Column k*896 + c*144 + p*12 + q of the product x_flat @ W equals the
    conv1 output of channel c at spatial position (2p+a, 2q+b), k = 2a+b.
    """
    out = np.zeros((_IN * _IN, 4 * _PH1P), np.float32)
    g = np.arange(_P1)
    for k, (a, b) in enumerate(((0, 0), (0, 1), (1, 0), (1, 1))):
        for c in range(_C1):
            for i in range(_K):
                for j in range(_K):
                    rows = ((2 * g[:, None] + a + i) * _IN
                            + (2 * g[None, :] + b + j)).ravel()
                    cols = (k * _PH1P + c * _P1 * _P1
                            + (g[:, None] * _P1 + g[None, :]).ravel())
                    out[rows, cols] = w[c, 0, i, j]
    return out


def _fold_conv2_pool(w):
    """(16,6,5,5) -> (896, 4*256): conv2 on the pool1-compact layout,
    evaluated at the four 2x2-pool phases; outputs land in PyTorch flatten
    order (c_out*16 + p*4 + q) inside each 256-wide phase block."""
    out = np.zeros((_PH1P, 4 * _PH2), np.float32)
    g = np.arange(_P2)
    for k, (a, b) in enumerate(((0, 0), (0, 1), (1, 0), (1, 1))):
        for co in range(_C2):
            for ci in range(_C1):
                for i in range(_K):
                    for j in range(_K):
                        rows = (ci * _P1 * _P1
                                + (2 * g[:, None] + a + i) * _P1
                                + (2 * g[None, :] + b + j)).ravel()
                        cols = (k * _PH2 + co * _P2 * _P2
                                + (g[:, None] * _P2 + g[None, :]).ravel())
                        out[rows, cols] = w[co, ci, i, j]
    return out


# ----------------------------------------------------------------------------
# Fused kernel: whole forward pass for a block of B samples per grid step.
# ----------------------------------------------------------------------------
def _fused_cnn_kernel(x_ref, w1_ref, b1_ref, w2_ref, b2_ref,
                      f1_ref, fb1_ref, f2_ref, fb2_ref, o_ref):
    f32, bf16 = jnp.float32, jnp.bfloat16

    # conv1 for all four pool phases: one (B,784)@(784,3584) MXU matmul.
    xb = x_ref[...].astype(bf16)
    c1 = jnp.dot(xb, w1_ref[...], preferred_element_type=f32)      # (B, 3584)
    # 2x2 max-pool = element-wise max of the four 128-aligned phase blocks,
    # then bias + ReLU (both commute with the max).
    m1 = jnp.maximum(
        jnp.maximum(c1[:, 0:_PH1P], c1[:, _PH1P:2 * _PH1P]),
        jnp.maximum(c1[:, 2 * _PH1P:3 * _PH1P], c1[:, 3 * _PH1P:4 * _PH1P]))
    a1 = jnp.maximum(m1 + b1_ref[...], 0.0).astype(bf16)           # (B, 896)

    # conv2 for all four pool phases: one (B,896)@(896,1024) matmul.
    c2 = jnp.dot(a1, w2_ref[...], preferred_element_type=f32)      # (B, 1024)
    m2 = jnp.maximum(
        jnp.maximum(c2[:, 0:_PH2], c2[:, _PH2:2 * _PH2]),
        jnp.maximum(c2[:, 2 * _PH2:3 * _PH2], c2[:, 3 * _PH2:4 * _PH2]))
    # (B, 256) in PyTorch flatten order (c*16 + h*4 + w) -- flatten is free.
    a2 = jnp.maximum(m2 + b2_ref[...], 0.0).astype(bf16)

    # fc1 + ReLU, fc2 + ReLU (fc2 padded to 128 lanes for a dense store).
    u1 = jnp.maximum(jnp.dot(a2, f1_ref[...], preferred_element_type=f32)
                     + fb1_ref[...], 0.0).astype(bf16)              # (B, h0)
    u2 = jnp.maximum(jnp.dot(u1, f2_ref[...], preferred_element_type=f32)
                     + fb2_ref[...], 0.0)                           # (B, 128)
    o_ref[...] = u2.astype(o_ref.dtype)


# ----------------------------------------------------------------------------
# Parameters (PyTorch layout) and one-time packing.
# ----------------------------------------------------------------------------
def init_params(key, hidden_dims=(32, 16)):
    def uinit(k, shape, fan_in):
        bound = 1.0 / np.sqrt(float(fan_in))
        return jax.random.uniform(k, shape, jnp.float32, -bound, bound)

    h0, h1 = hidden_dims
    ks = jax.random.split(key, 8)
    return {
        "conv1_w": uinit(ks[0], (6, 1, 5, 5), 1 * 5 * 5),
        "conv1_b": uinit(ks[1], (6,), 1 * 5 * 5),
        "conv2_w": uinit(ks[2], (16, 6, 5, 5), 6 * 5 * 5),
        "conv2_b": uinit(ks[3], (16,), 6 * 5 * 5),
        "fc1_w": uinit(ks[4], (h0, 256), 256),
        "fc1_b": uinit(ks[5], (h0,), 256),
        "fc2_w": uinit(ks[6], (h1, h0), h0),
        "fc2_b": uinit(ks[7], (h1,), h0),
    }


def pack_params(params):
    bf16 = jnp.bfloat16
    h0 = params["fc1_w"].shape[0]
    h1 = params["fc2_w"].shape[0]

    w1f = _fold_conv1_pool(np.asarray(params["conv1_w"], np.float32))
    w2f = _fold_conv2_pool(np.asarray(params["conv2_w"], np.float32))

    b1row = np.zeros((1, _PH1P), np.float32)
    b1row[0, :_PH1] = np.repeat(np.asarray(params["conv1_b"]), _P1 * _P1)
    b2row = np.repeat(np.asarray(params["conv2_b"]), _P2 * _P2).reshape(1, _PH2)

    f2pad = np.zeros((h0, _OUT_PAD), np.float32)
    f2pad[:, :h1] = np.asarray(params["fc2_w"]).T
    fb2pad = np.zeros((1, _OUT_PAD), np.float32)
    fb2pad[0, :h1] = np.asarray(params["fc2_b"])

    return {
        "w1": jnp.asarray(w1f, bf16),                              # (784, 3584)
        "b1": jnp.asarray(b1row, jnp.float32),                     # (1, 896)
        "w2": jnp.asarray(w2f, bf16),                              # (896, 1024)
        "b2": jnp.asarray(b2row, jnp.float32),                     # (1, 256)
        "f1": jnp.asarray(np.asarray(params["fc1_w"]).T, bf16),    # (256, h0)
        "fb1": jnp.asarray(np.asarray(params["fc1_b"]).reshape(1, h0),
                           jnp.float32),
        "f2": jnp.asarray(f2pad, bf16),                            # (h0, 128)
        "fb2": jnp.asarray(fb2pad, jnp.float32),                   # (1, 128)
    }


# ----------------------------------------------------------------------------
# Forward: single fused pallas_call; B samples per grid step.
# ----------------------------------------------------------------------------
@functools.partial(jax.jit, static_argnames=("out_dim", "block_b"))
def forward(packed, x, *, out_dim, block_b=128):
    n = x.shape[0]
    b = block_b if n > block_b else n          # samples per grid step
    n_pad = -(-n // b) * b

    x2 = x.reshape(n, _IN * _IN)
    if n_pad != n:
        x2 = jnp.concatenate(
            [x2, jnp.zeros((n_pad - n, _IN * _IN), x2.dtype)], axis=0)

    def const_spec(a):      # whole-array block, constant index -> fetched once
        return pl.BlockSpec(a.shape, lambda i: (0, 0))

    const_keys = ("w1", "b1", "w2", "b2", "f1", "fb1", "f2", "fb2")
    out = pl.pallas_call(
        _fused_cnn_kernel,
        out_shape=jax.ShapeDtypeStruct((n_pad, _OUT_PAD), jnp.float32),
        grid=(n_pad // b,),
        in_specs=[pl.BlockSpec((b, _IN * _IN), lambda i: (i, 0))]
                 + [const_spec(packed[k]) for k in const_keys],
        out_specs=pl.BlockSpec((b, _OUT_PAD), lambda i: (i, 0)),
        compiler_params=pltpu.CompilerParams(
            dimension_semantics=("parallel",),
            vmem_limit_bytes=48 * 1024 * 1024),
    )(x2, *[packed[k] for k in const_keys])

    return out[:n, :out_dim]


# ----------------------------------------------------------------------------
# Plain-XLA reference for the correctness check.
# ----------------------------------------------------------------------------
def reference_forward(params, x):
    dn = ("NCHW", "OIHW", "NCHW")
    hi = jax.lax.Precision.HIGHEST
    y = jax.lax.conv_general_dilated(x, params["conv1_w"], (1, 1), "VALID",
                                     dimension_numbers=dn, precision=hi)
    y = jax.nn.relu(y + params["conv1_b"][None, :, None, None])
    y = jax.lax.reduce_window(y, -jnp.inf, jax.lax.max,
                              (1, 1, 2, 2), (1, 1, 2, 2), "VALID")
    y = jax.lax.conv_general_dilated(y, params["conv2_w"], (1, 1), "VALID",
                                     dimension_numbers=dn, precision=hi)
    y = jax.nn.relu(y + params["conv2_b"][None, :, None, None])
    y = jax.lax.reduce_window(y, -jnp.inf, jax.lax.max,
                              (1, 1, 2, 2), (1, 1, 2, 2), "VALID")
    y = y.reshape(y.shape[0], -1)
    y = jax.nn.relu(jnp.dot(y, params["fc1_w"].T, precision=hi)
                    + params["fc1_b"])
    y = jax.nn.relu(jnp.dot(y, params["fc2_w"].T, precision=hi)
                    + params["fc2_b"])
    return y


if __name__ == "__main__":
    key = jax.random.PRNGKey(0)
    k_param, k_x = jax.random.split(key)

    hidden_dims = (32, 16)             # fc widths; input_dim = 16*4*4 = 256
    params = init_params(k_param, hidden_dims=hidden_dims)
    packed = pack_params(params)

    x = jax.random.normal(k_x, (2, 1, 28, 28), dtype=jnp.float32)

    out = jax.block_until_ready(forward(packed, x, out_dim=hidden_dims[1]))
    assert out.shape == (2, hidden_dims[1]), out.shape
    assert bool(jnp.all(out >= 0.0))   # final ReLU

    ref = reference_forward(params, x)
    max_err = float(jnp.max(jnp.abs(out - ref)))
    assert bool(jnp.allclose(out, ref, atol=2e-2, rtol=2e-2)), max_err

    print("KERNEL_OK")
</pallas_src>

<mosaic_0001>
module attributes {stable_mosaic.version = 11 : i64} {
  func.func @_fused_cnn_kernel(%arg0: i32, %arg1: memref<2x784xf32, #tpu.memory_space<vmem>>, %arg2: memref<784x3584xbf16, #tpu.memory_space<vmem>>, %arg3: memref<1x896xf32, #tpu.memory_space<vmem>>, %arg4: memref<896x1024xbf16, #tpu.memory_space<vmem>>, %arg5: memref<1x256xf32, #tpu.memory_space<vmem>>, %arg6: memref<256x32xbf16, #tpu.memory_space<vmem>>, %arg7: memref<1x32xf32, #tpu.memory_space<vmem>>, %arg8: memref<32x128xbf16, #tpu.memory_space<vmem>>, %arg9: memref<1x128xf32, #tpu.memory_space<vmem>>, %arg10: memref<2x128xf32, #tpu.memory_space<vmem>>) attributes {dimension_semantics = [#tpu.dimension_semantics<parallel>], iteration_bounds = array<i64: 1>, scalar_prefetch = 0 : i64, scratch_operands = 0 : i64, tpu.core_type = #tpu.core_type<tc>, window_params = [{transform_indices = @transform_0, window_bounds = array<i64: 2, 784>}, {pipeline_mode = #tpu.pipeline_mode<synchronous>, transform_indices = @transform_1, window_bounds = array<i64: 784, 3584>}, {pipeline_mode = #tpu.pipeline_mode<synchronous>, transform_indices = @transform_2, window_bounds = array<i64: 1, 896>}, {pipeline_mode = #tpu.pipeline_mode<synchronous>, transform_indices = @transform_3, window_bounds = array<i64: 896, 1024>}, {pipeline_mode = #tpu.pipeline_mode<synchronous>, transform_indices = @transform_4, window_bounds = array<i64: 1, 256>}, {pipeline_mode = #tpu.pipeline_mode<synchronous>, transform_indices = @transform_5, window_bounds = array<i64: 256, 32>}, {pipeline_mode = #tpu.pipeline_mode<synchronous>, transform_indices = @transform_6, window_bounds = array<i64: 1, 32>}, {pipeline_mode = #tpu.pipeline_mode<synchronous>, transform_indices = @transform_7, window_bounds = array<i64: 32, 128>}, {pipeline_mode = #tpu.pipeline_mode<synchronous>, transform_indices = @transform_8, window_bounds = array<i64: 1, 128>}, {transform_indices = @transform_9, window_bounds = array<i64: 2, 128>}]} {
    %c0 = arith.constant 0 : index
    %c0_0 = arith.constant 0 : index
    %0 = vector.load %arg1[%c0, %c0_0] : memref<2x784xf32, #tpu.memory_space<vmem>>, vector<2x784xf32>
    %1 = arith.truncf %0 : vector<2x784xf32> to vector<2x784xbf16>
    %c0_1 = arith.constant 0 : index
    %c0_2 = arith.constant 0 : index
    %2 = vector.load %arg2[%c0_1, %c0_2] : memref<784x3584xbf16, #tpu.memory_space<vmem>>, vector<784x3584xbf16>
    %cst = arith.constant dense<0.000000e+00> : vector<2x3584xf32>
    %3 = tpu.matmul %1, %2, %cst {dimension_numbers = #tpu.dot_dimension_numbers<[1], [0], [0], [1], [0, 0, 1, 1], [], []>} : vector<2x784xbf16>, vector<784x3584xbf16>, vector<2x3584xf32> -> vector<2x3584xf32>
    %4 = vector.extract_strided_slice %3 {offsets = [0, 0], sizes = [2, 896], strides = [1, 1]} : vector<2x3584xf32> to vector<2x896xf32>
    %5 = vector.extract_strided_slice %3 {offsets = [0, 896], sizes = [2, 896], strides = [1, 1]} : vector<2x3584xf32> to vector<2x896xf32>
    %6 = arith.maximumf %4, %5 : vector<2x896xf32>
    %7 = vector.extract_strided_slice %3 {offsets = [0, 1792], sizes = [2, 896], strides = [1, 1]} : vector<2x3584xf32> to vector<2x896xf32>
    %8 = vector.extract_strided_slice %3 {offsets = [0, 2688], sizes = [2, 896], strides = [1, 1]} : vector<2x3584xf32> to vector<2x896xf32>
    %9 = arith.maximumf %7, %8 : vector<2x896xf32>
    %10 = arith.maximumf %6, %9 : vector<2x896xf32>
    %c0_3 = arith.constant 0 : index
    %c0_4 = arith.constant 0 : index
    %11 = vector.load %arg3[%c0_3, %c0_4] : memref<1x896xf32, #tpu.memory_space<vmem>>, vector<1x896xf32>
    %12 = vector.broadcast %11 : vector<1x896xf32> to vector<2x896xf32>
    %13 = arith.addf %10, %12 : vector<2x896xf32>
    %cst_5 = arith.constant 0.000000e+00 : f32
    %14 = vector.broadcast %cst_5 : f32 to vector<2x896xf32>
    %15 = arith.maximumf %13, %14 : vector<2x896xf32>
    %16 = arith.truncf %15 : vector<2x896xf32> to vector<2x896xbf16>
    %c0_6 = arith.constant 0 : index
    %c0_7 = arith.constant 0 : index
    %17 = vector.load %arg4[%c0_6, %c0_7] : memref<896x1024xbf16, #tpu.memory_space<vmem>>, vector<896x1024xbf16>
    %cst_8 = arith.constant dense<0.000000e+00> : vector<2x1024xf32>
    %18 = tpu.matmul %16, %17, %cst_8 {dimension_numbers = #tpu.dot_dimension_numbers<[1], [0], [0], [1], [0, 0, 1, 1], [], []>} : vector<2x896xbf16>, vector<896x1024xbf16>, vector<2x1024xf32> -> vector<2x1024xf32>
    %19 = vector.extract_strided_slice %18 {offsets = [0, 0], sizes = [2, 256], strides = [1, 1]} : vector<2x1024xf32> to vector<2x256xf32>
    %20 = vector.extract_strided_slice %18 {offsets = [0, 256], sizes = [2, 256], strides = [1, 1]} : vector<2x1024xf32> to vector<2x256xf32>
    %21 = arith.maximumf %19, %20 : vector<2x256xf32>
    %22 = vector.extract_strided_slice %18 {offsets = [0, 512], sizes = [2, 256], strides = [1, 1]} : vector<2x1024xf32> to vector<2x256xf32>
    %23 = vector.extract_strided_slice %18 {offsets = [0, 768], sizes = [2, 256], strides = [1, 1]} : vector<2x1024xf32> to vector<2x256xf32>
    %24 = arith.maximumf %22, %23 : vector<2x256xf32>
    %25 = arith.maximumf %21, %24 : vector<2x256xf32>
    %c0_9 = arith.constant 0 : index
    %c0_10 = arith.constant 0 : index
    %26 = vector.load %arg5[%c0_9, %c0_10] : memref<1x256xf32, #tpu.memory_space<vmem>>, vector<1x256xf32>
    %27 = vector.broadcast %26 : vector<1x256xf32> to vector<2x256xf32>
    %28 = arith.addf %25, %27 : vector<2x256xf32>
    %cst_11 = arith.constant 0.000000e+00 : f32
    %29 = vector.broadcast %cst_11 : f32 to vector<2x256xf32>
    %30 = arith.maximumf %28, %29 : vector<2x256xf32>
    %31 = arith.truncf %30 : vector<2x256xf32> to vector<2x256xbf16>
    %c0_12 = arith.constant 0 : index
    %c0_13 = arith.constant 0 : index
    %32 = vector.load %arg6[%c0_12, %c0_13] : memref<256x32xbf16, #tpu.memory_space<vmem>>, vector<256x32xbf16>
    %cst_14 = arith.constant dense<0.000000e+00> : vector<2x32xf32>
    %33 = tpu.matmul %31, %32, %cst_14 {dimension_numbers = #tpu.dot_dimension_numbers<[1], [0], [0], [1], [0, 0, 1, 1], [], []>} : vector<2x256xbf16>, vector<256x32xbf16>, vector<2x32xf32> -> vector<2x32xf32>
    %c0_15 = arith.constant 0 : index
    %c0_16 = arith.constant 0 : index
    %34 = vector.load %arg7[%c0_15, %c0_16] : memref<1x32xf32, #tpu.memory_space<vmem>>, vector<1x32xf32>
    %35 = vector.broadcast %34 : vector<1x32xf32> to vector<2x32xf32>
    %36 = arith.addf %33, %35 : vector<2x32xf32>
    %cst_17 = arith.constant 0.000000e+00 : f32
    %37 = vector.broadcast %cst_17 : f32 to vector<2x32xf32>
    %38 = arith.maximumf %36, %37 : vector<2x32xf32>
    %39 = arith.truncf %38 : vector<2x32xf32> to vector<2x32xbf16>
    %c0_18 = arith.constant 0 : index
    %c0_19 = arith.constant 0 : index
    %40 = vector.load %arg8[%c0_18, %c0_19] : memref<32x128xbf16, #tpu.memory_space<vmem>>, vector<32x128xbf16>
    %cst_20 = arith.constant dense<0.000000e+00> : vector<2x128xf32>
    %41 = tpu.matmul %39, %40, %cst_20 {dimension_numbers = #tpu.dot_dimension_numbers<[1], [0], [0], [1], [0, 0, 1, 1], [], []>} : vector<2x32xbf16>, vector<32x128xbf16>, vector<2x128xf32> -> vector<2x128xf32>
    %c0_21 = arith.constant 0 : index
    %c0_22 = arith.constant 0 : index
    %42 = vector.load %arg9[%c0_21, %c0_22] : memref<1x128xf32, #tpu.memory_space<vmem>>, vector<1x128xf32>
    %43 = vector.broadcast %42 : vector<1x128xf32> to vector<2x128xf32>
    %44 = arith.addf %41, %43 : vector<2x128xf32>
    %cst_23 = arith.constant 0.000000e+00 : f32
    %45 = vector.broadcast %cst_23 : f32 to vector<2x128xf32>
    %46 = arith.maximumf %44, %45 : vector<2x128xf32>
    %c0_24 = arith.constant 0 : index
    %c0_25 = arith.constant 0 : index
    %47 = vector.load %arg10[%c0_24, %c0_25] : memref<2x128xf32, #tpu.memory_space<vmem>>, vector<2x128xf32>
    tpu.vector_store %arg10[%c0_24, %c0_25], %46 {strides = array<i32>} : memref<2x128xf32, #tpu.memory_space<vmem>>, vector<2x128xf32>,
    return
  }
  func.func @transform_0(%arg0: i32) -> (i32, i32) {
    %c0_i32 = arith.constant 0 : i32
    %c0_i32_0 = arith.constant 0 : i32
    return %arg0, %c0_i32 : i32, i32
  }
  func.func @transform_1(%arg0: i32) -> (i32, i32) {
    %c0_i32 = arith.constant 0 : i32
    %c0_i32_0 = arith.constant 0 : i32
    %c0_i32_1 = arith.constant 0 : i32
    return %c0_i32, %c0_i32_0 : i32, i32
  }
  func.func @transform_2(%arg0: i32) -> (i32, i32) {
    %c0_i32 = arith.constant 0 : i32
    %c0_i32_0 = arith.constant 0 : i32
    %c0_i32_1 = arith.constant 0 : i32
    return %c0_i32, %c0_i32_0 : i32, i32
  }
  func.func @transform_3(%arg0: i32) -> (i32, i32) {
    %c0_i32 = arith.constant 0 : i32
    %c0_i32_0 = arith.constant 0 : i32
    %c0_i32_1 = arith.constant 0 : i32
    return %c0_i32, %c0_i32_0 : i32, i32
  }
  func.func @transform_4(%arg0: i32) -> (i32, i32) {
    %c0_i32 = arith.constant 0 : i32
    %c0_i32_0 = arith.constant 0 : i32
    %c0_i32_1 = arith.constant 0 : i32
    return %c0_i32, %c0_i32_0 : i32, i32
  }
  func.func @transform_5(%arg0: i32) -> (i32, i32) {
    %c0_i32 = arith.constant 0 : i32
    %c0_i32_0 = arith.constant 0 : i32
    %c0_i32_1 = arith.constant 0 : i32
    return %c0_i32, %c0_i32_0 : i32, i32
  }
  func.func @transform_6(%arg0: i32) -> (i32, i32) {
    %c0_i32 = arith.constant 0 : i32
    %c0_i32_0 = arith.constant 0 : i32
    %c0_i32_1 = arith.constant 0 : i32
    return %c0_i32, %c0_i32_0 : i32, i32
  }
  func.func @transform_7(%arg0: i32) -> (i32, i32) {
    %c0_i32 = arith.constant 0 : i32
    %c0_i32_0 = arith.constant 0 : i32
    %c0_i32_1 = arith.constant 0 : i32
    return %c0_i32, %c0_i32_0 : i32, i32
  }
  func.func @transform_8(%arg0: i32) -> (i32, i32) {
    %c0_i32 = arith.constant 0 : i32
    %c0_i32_0 = arith.constant 0 : i32
    %c0_i32_1 = arith.constant 0 : i32
    return %c0_i32, %c0_i32_0 : i32, i32
  }
  func.func @transform_9(%arg0: i32) -> (i32, i32) {
    %c0_i32 = arith.constant 0 : i32
    %c0_i32_0 = arith.constant 0 : i32
    return %arg0, %c0_i32 : i32, i32
  }
}

</mosaic_0001>

<llo_original>
// kernel: forward.1
$region0: #{forward.1}
  #allocation0 [shape = 'u32[]', space=smem, size = 0x4, offset = 0x4, fixed_abs, tag = 'smem constant byte address 0x4 - core index']
  #allocation1 [shape = 'u32[72,128]{1,0:T(1,128)}', space=vmem, size = 0x9000, scoped, tag = 'internal scratch']
  %s0 = inlined_call_operand.vmem [shape: f32[2,784], index: 0, kind: input, shape index: {}]
  %s1 = inlined_call_operand.hbm [shape: bf16[784,3584], index: 1, kind: input, shape index: {}]
  %s2 = inlined_call_operand.hbm [shape: f32[1,896], index: 2, kind: input, shape index: {}]
  %s3 = inlined_call_operand.hbm [shape: bf16[896,1024], index: 3, kind: input, shape index: {}]
  %s4 = inlined_call_operand.hbm [shape: f32[1,256], index: 4, kind: input, shape index: {}]
  %s5 = inlined_call_operand.vmem [shape: bf16[256,32], index: 5, kind: input, shape index: {}]
  %s6 = inlined_call_operand.hbm [shape: f32[1,32], index: 6, kind: input, shape index: {}]
  %s7 = inlined_call_operand.hbm [shape: bf16[32,128], index: 7, kind: input, shape index: {}]
  %s8 = inlined_call_operand.hbm [shape: f32[1,128], index: 8, kind: input, shape index: {}]
  %s9 = inlined_call_operand.hbm [shape: f32[2,128], index: 9, kind: output, shape index: {}]
  %s10 = sld [smem:[#allocation0]]
  $region74: #{forward.1} parent=0
    _
  %s12 = ssub.s32 1, %s10
  %s13 = scalar_select 0, %s12, %s10
  $region1: #{forward.1} parent=0
    #allocation2 [shape = 'u8[5619712]{0}', space=vmem, size = 0x55c000, scoped, tag = 'input window, operand 1, single buffered']
    #allocation3 [shape = 's32[1]{0}', space=sflag, size = 0x4, scoped, tag = 'scoped memory for forward.1']
    #allocation4 [shape = 's32[1]{0}', space=sflag, size = 0x4, scoped, tag = 'scoped memory for forward.1']
    #allocation5 [shape = 'u8[3584]{0}', space=vmem, size = 0x1000, scoped, tag = 'input window, operand 2, single buffered']
    #allocation6 [shape = 's32[1]{0}', space=sflag, size = 0x4, scoped, tag = 'scoped memory for forward.1']
    #allocation7 [shape = 'u8[1835008]{0}', space=vmem, size = 0x1c0000, scoped, tag = 'input window, operand 3, single buffered']
    #allocation8 [shape = 'u8[1024]{0}', space=vmem, size = 0x400, scoped, tag = 'input window, operand 4, single buffered']
    #allocation9 [shape = 's32[1]{0}', space=sflag, size = 0x4, scoped, tag = 'scoped memory for forward.1']
    #allocation10 [shape = 'u8[512]{0}', space=vmem, size = 0x400, scoped, tag = 'input window, operand 6, single buffered']
    #allocation11 [shape = 'u8[8192]{0}', space=vmem, size = 0x2000, scoped, tag = 'input window, operand 7, single buffered']
    #allocation12 [shape = 's32[1]{0}', space=sflag, size = 0x4, scoped, tag = 'scoped memory for forward.1']
    #allocation13 [shape = 'u8[512]{0}', space=vmem, size = 0x400, scoped, tag = 'input window, operand 8, single buffered']
    #allocation14 [shape = 'u8[1024]{0}', space=vmem, size = 0x400, scoped, tag = 'output window, operand 0, single buffered']
    %14 = vsyncpa [#allocation3], 0
    %15 = vsyncpa [#allocation6], 0
    %16 = vsyncpa [#allocation9], 0
    %17 = vsyncpa [#allocation12], 0
    %18 = vsyncpa [#allocation4], 0
    // Predicated region
    $region2: #{forward.1} parent=1 // pred_check
      _
    $region3: #{forward.1} parent=1 // pred_check_branch
      %20 = sbr.rel (0) target = $region5
    $region4: #{forward.1} parent=1 // pred_region
      _
    $region5: #{forward.1} parent=1 // pred_fallthru
      _
    // Predicated region
    $region6: #{forward.1} parent=1 // pred_check
      _
    $region7: #{forward.1} parent=1 // pred_check_branch
      %22 = sbr.rel (0) target = $region9
    $region8: #{forward.1} parent=1 // pred_region
      %24 = vsyncadd [#allocation3], 0
      %s25 = sshll.u32 %s1, 4
      %s26 = int_to_ptr.hbm [resolvable:$true] %s25
      %s27 = sshll.u32 [#allocation2], 4
      %s28 = int_to_ptr.vmem [resolvable:$true] %s27
      %33 = dma.hbm_to_vmem [thread:$0]  %s26, 175616, %s28, [#allocation3], 1792, 1792, 112
    $region9: #{forward.1} parent=1 // pred_fallthru
      _
    // Predicated region
    $region10: #{forward.1} parent=1 // pred_check
      _
    $region11: #{forward.1} parent=1 // pred_check_branch
      %35 = sbr.rel (0) target = $region13
    $region12: #{forward.1} parent=1 // pred_region
      %37 = vsyncadd [#allocation6], 0
      %s39 = sshll.u32 %s2, 4
      %s40 = int_to_ptr.hbm [resolvable:$true] %s39
      %s41 = sshll.u32 [#allocation5], 4
      %s42 = int_to_ptr.vmem [resolvable:$true] %s41
      %44 = dma.hbm_to_vmem [thread:$0]  %s40, 112, %s42, [#allocation6]
    $region13: #{forward.1} parent=1 // pred_fallthru
      _
    // Predicated region
    $region14: #{forward.1} parent=1 // pred_check
      _
    $region15: #{forward.1} parent=1 // pred_check_branch
      %46 = sbr.rel (0) target = $region17
    $region16: #{forward.1} parent=1 // pred_region
      %48 = vsyncadd [#allocation6], 0
      %s49 = sshll.u32 %s3, 4
      %s50 = int_to_ptr.hbm [resolvable:$true] %s49
      %s51 = sshll.u32 [#allocation7], 4
      %s52 = int_to_ptr.vmem [resolvable:$true] %s51
      %57 = dma.hbm_to_vmem [thread:$0]  %s50, 57344, %s52, [#allocation6], 512, 512, 32
    $region17: #{forward.1} parent=1 // pred_fallthru
      _
    // Predicated region
    $region18: #{forward.1} parent=1 // pred_check
      _
    $region19: #{forward.1} parent=1 // pred_check_branch
      %59 = sbr.rel (0) target = $region21
    $region20: #{forward.1} parent=1 // pred_region
      %61 = vsyncadd [#allocation9], 0
      %s63 = sshll.u32 %s4, 4
      %s64 = int_to_ptr.hbm [resolvable:$true] %s63
      %s65 = sshll.u32 [#allocation8], 4
      %s66 = int_to_ptr.vmem [resolvable:$true] %s65
      %68 = dma.hbm_to_vmem [thread:$0]  %s64, 32, %s66, [#allocation9]
    $region21: #{forward.1} parent=1 // pred_fallthru
      _
    // Predicated region
    $region22: #{forward.1} parent=1 // pred_check
      _
    $region23: #{forward.1} parent=1 // pred_check_branch
      %70 = sbr.rel (0) target = $region25
    $region24: #{forward.1} parent=1 // pred_region
      _
    $region25: #{forward.1} parent=1 // pred_fallthru
      _
    // Predicated region
    $region26: #{forward.1} parent=1 // pred_check
      _
    $region27: #{forward.1} parent=1 // pred_check_branch
      %72 = sbr.rel (0) target = $region29
    $region28: #{forward.1} parent=1 // pred_region
      %74 = vsyncadd [#allocation9], 0
      %s76 = sshll.u32 %s6, 4
      %s77 = int_to_ptr.hbm [resolvable:$true] %s76
      %s78 = sshll.u32 [#allocation10], 4
      %s79 = int_to_ptr.vmem [resolvable:$true] %s78
      %81 = dma.hbm_to_vmem [thread:$0]  %s77, 16, %s79, [#allocation9]
    $region29: #{forward.1} parent=1 // pred_fallthru
      _
    // Predicated region
    $region30: #{forward.1} parent=1 // pred_check
      _
    $region31: #{forward.1} parent=1 // pred_check_branch
      %83 = sbr.rel (0) target = $region33
    $region32: #{forward.1} parent=1 // pred_region
      %85 = vsyncadd [#allocation12], 0
      %s86 = sshll.u32 %s7, 4
      %s87 = int_to_ptr.hbm [resolvable:$true] %s86
      %s88 = sshll.u32 [#allocation11], 4
      %s89 = int_to_ptr.vmem [resolvable:$true] %s88
      %94 = dma.hbm_to_vmem [thread:$0]  %s87, 256, %s89, [#allocation12], 64, 64, 4
    $region33: #{forward.1} parent=1 // pred_fallthru
      _
    // Predicated region
    $region34: #{forward.1} parent=1 // pred_check
      _
    $region35: #{forward.1} parent=1 // pred_check_branch
      %96 = sbr.rel (0) target = $region37
    $region36: #{forward.1} parent=1 // pred_region
      %98 = vsyncadd [#allocation12], 0
      %s100 = sshll.u32 %s8, 4
      %s101 = int_to_ptr.hbm [resolvable:$true] %s100
      %s102 = sshll.u32 [#allocation13], 4
      %s103 = int_to_ptr.vmem [resolvable:$true] %s102
      %105 = dma.hbm_to_vmem [thread:$0]  %s101, 16, %s103, [#allocation12]
    $region37: #{forward.1} parent=1 // pred_fallthru
      _
    // Predicated region
    $region38: #{forward.1} parent=1 // pred_check
      _
    $region39: #{forward.1} parent=1 // pred_check_branch
      %107 = sbr.rel (0) target = $region41
    $region40: #{forward.1} parent=1 // pred_region
      %109 = dma.done [#allocation3], 175616
    $region41: #{forward.1} parent=1 // pred_fallthru
      _
    // Predicated region
    $region42: #{forward.1} parent=1 // pred_check
      _
    $region43: #{forward.1} parent=1 // pred_check_branch
      %111 = sbr.rel (0) target = $region45
    $region44: #{forward.1} parent=1 // pred_region
      %113 = dma.done [#allocation6], 112
    $region45: #{forward.1} parent=1 // pred_fallthru
      _
    // Predicated region
    $region46: #{forward.1} parent=1 // pred_check
      _
    $region47: #{forward.1} parent=1 // pred_check_branch
      %115 = sbr.rel (0) target = $region49
    $region48: #{forward.1} parent=1 // pred_region
      %117 = dma.done [#allocation6], 57344
    $region49: #{forward.1} parent=1 // pred_fallthru
      _
    // Predicated region
    $region50: #{forward.1} parent=1 // pred_check
      _
    $region51: #{forward.1} parent=1 // pred_check_branch
      %119 = sbr.rel (0) target = $region53
    $region52: #{forward.1} parent=1 // pred_region
      %121 = dma.done [#allocation9], 32
    $region53: #{forward.1} parent=1 // pred_fallthru
      _
    // Predicated region
    $region54: #{forward.1} parent=1 // pred_check
      _
    $region55: #{forward.1} parent=1 // pred_check_branch
      %123 = sbr.rel (0) target = $region57
    $region56: #{forward.1} parent=1 // pred_region
      %125 = dma.done [#allocation9], 16
    $region57: #{forward.1} parent=1 // pred_fallthru
      _
    // Predicated region
    $region58: #{forward.1} parent=1 // pred_check
      _
    $region59: #{forward.1} parent=1 // pred_check_branch
      %127 = sbr.rel (0) target = $region61
    $region60: #{forward.1} parent=1 // pred_region
      %129 = dma.done [#allocation12], 256
    $region61: #{forward.1} parent=1 // pred_fallthru
      _
    // Predicated region
    $region62: #{forward.1} parent=1 // pred_check
      _
    $region63: #{forward.1} parent=1 // pred_check_branch
      %131 = sbr.rel (0) target = $region65
    $region64: #{forward.1} parent=1 // pred_region
      %133 = dma.done [#allocation12], 16
    $region65: #{forward.1} parent=1 // pred_fallthru
      _
    %v135 = vld [vmem:[%s0] sm:$0xff]
    %v136 = vld [vmem:[%s0 + $0x8] sm:$0x3f]
    %139 = vst [vmem:[#allocation1] ss:$4 sm:$0xff] %v135
    %s140 = scalar_lea.vmem [#allocation1], 32
    %141 = vst [vmem:[%s140] ss:$4 sm:$0xff] %v136
    %v142 = vld.sshfl [vmem:[#allocation1] sm:$0xff pattern:$0x73625140]
    %v143 = vld.sshfl [vmem:[#allocation1 + $0x8] sm:$0xff pattern:$0x73625140]
    %v144 = vld.sshfl [vmem:[#allocation1 + $0x10] sm:$0xff pattern:$0x73625140]
    %v145 = vld.sshfl [vmem:[#allocation1 + $0x18] sm:$0xff pattern:$0x73625140]
    %v146 = vld.sshfl [vmem:[#allocation1 + $0x20] sm:$0xff pattern:$0x73625140]
    %v147 = vld.sshfl [vmem:[#allocation1 + $0x28] sm:$0xff pattern:$0x73625140]
    %v148 = vld.sshfl [vmem:[#allocation1 + $0x30] sm:$0xff pattern:$0x73625140]
    %v156 = vpack.c.bf16 %v142, %v142
    %v157 = vpack.c.bf16 %v143, %v143
    %v158 = vpack.c.bf16 %v144, %v144
    %v159 = vpack.c.bf16 %v145, %v145
    %v160 = vpack.c.bf16 %v146, %v146
    %v161 = vpack.c.bf16 %v147, %v147
    %v162 = vpack.c.bf16 %v148, %v148
    %v163 = vld [vmem:[#allocation2] sm:$0xff]
    %v164 = vld [vmem:[#allocation2 + $0x8] sm:$0xff]
    %v165 = vld [vmem:[#allocation2 + $0x10] sm:$0xff]
    %v166 = vld [vmem:[#allocation2 + $0x18] sm:$0xff]
    %v167 = vld [vmem:[#allocation2 + $0x20] sm:$0xff]
    %v168 = vld [vmem:[#allocation2 + $0x28] sm:$0xff]
    %v169 = vld [vmem:[#allocation2 + $0x30] sm:$0xff]
    %v170 = vld [vmem:[#allocation2 + $0x38] sm:$0xff]
    %v171 = vld [vmem:[#allocation2 + $0x40] sm:$0xff]
    %v172 = vld [vmem:[#allocation2 + $0x48] sm:$0xff]
    %v173 = vld [vmem:[#allocation2 + $0x50] sm:$0xff]
    %v174 = vld [vmem:[#allocation2 + $0x58] sm:$0xff]
    %v175 = vld [vmem:[#allocation2 + $0x60] sm:$0xff]
    %v176 = vld [vmem:[#allocation2 + $0x68] sm:$0xff]
    %v177 = vld [vmem:[#allocation2 + $0x70] sm:$0xff]
    %v178 = vld [vmem:[#allocation2 + $0x78] sm:$0xff]
    %v179 = vld [vmem:[#allocation2 + $0x80] sm:$0xff]
    %v180 = vld [vmem:[#allocation2 + $0x88] sm:$0xff]
    %v181 = vld [vmem:[#allocation2 + $0x90] sm:$0xff]
    %v182 = vld [vmem:[#allocation2 + $0x98] sm:$0xff]
    %v183 = vld [vmem:[#allocation2 + $0xa0] sm:$0xff]
    %v184 = vld [vmem:[#allocation2 + $0xa8] sm:$0xff]
    %v185 = vld [vmem:[#allocation2 + $0xb0] sm:$0xff]
    %v186 = vld [vmem:[#allocation2 + $0xb8] sm:$0xff]
    %v187 = vld [vmem:[#allocation2 + $0xc0] sm:$0xff]
    %v188 = vld [vmem:[#allocation2 + $0xc8] sm:$0xff]
    %v189 = vld [vmem:[#allocation2 + $0xd0] sm:$0xff]
    %v190 = vld [vmem:[#allocation2 + $0xd8] sm:$0xff]
    %v191 = vld [vmem:[#allocation2 + $0xe0] sm:$0xff]
    %v192 = vld [vmem:[#allocation2 + $0xe8] sm:$0xff]
    %v193 = vld [vmem:[#allocation2 + $0xf0] sm:$0xff]
    %v194 = vld [vmem:[#allocation2 + $0xf8] sm:$0xff]
    %v195 = vld [vmem:[#allocation2 + $0x100] sm:$0xff]
    %v196 = vld [vmem:[#allocation2 + $0x108] sm:$0xff]
    %v197 = vld [vmem:[#allocation2 + $0x110] sm:$0xff]
    %v198 = vld [vmem:[#allocation2 + $0x118] sm:$0xff]
    %v199 = vld [vmem:[#allocation2 + $0x120] sm:$0xff]
    %v200 = vld [vmem:[#allocation2 + $0x128] sm:$0xff]
    %v201 = vld [vmem:[#allocation2 + $0x130] sm:$0xff]
    %v202 = vld [vmem:[#allocation2 + $0x138] sm:$0xff]
    %v203 = vld [vmem:[#allocation2 + $0x140] sm:$0xff]
    %v204 = vld [vmem:[#allocation2 + $0x148] sm:$0xff]
    %v205 = vld [vmem:[#allocation2 + $0x150] sm:$0xff]
    %v206 = vld [vmem:[#allocation2 + $0x158] sm:$0xff]
    %v207 = vld [vmem:[#allocation2 + $0x160] sm:$0xff]
    %v208 = vld [vmem:[#allocation2 + $0x168] sm:$0xff]
    %v209 = vld [vmem:[#allocation2 + $0x170] sm:$0xff]
    %v210 = vld [vmem:[#allocation2 + $0x178] sm:$0xff]
    %v211 = vld [vmem:[#allocation2 + $0x180] sm:$0xff]
    %v212 = vld [vmem:[#allocation2 + $0x188] sm:$0xff]
    %v213 = vld [vmem:[#allocation2 + $0x190] sm:$0xff]
    %v214 = vld [vmem:[#allocation2 + $0x198] sm:$0xff]
    %v215 = vld [vmem:[#allocation2 + $0x1a0] sm:$0xff]
    %v216 = vld [vmem:[#allocation2 + $0x1a8] sm:$0xff]
    %v217 = vld [vmem:[#allocation2 + $0x1b0] sm:$0xff]
    %v218 = vld [vmem:[#allocation2 + $0x1b8] sm:$0xff]
    %v219 = vld [vmem:[#allocation2 + $0x1c0] sm:$0xff]
    %v220 = vld [vmem:[#allocation2 + $0x1c8] sm:$0xff]
    %v221 = vld [vmem:[#allocation2 + $0x1d0] sm:$0xff]
    %v222 = vld [vmem:[#allocation2 + $0x1d8] sm:$0xff]
    %v223 = vld [vmem:[#allocation2 + $0x1e0] sm:$0xff]
    %v224 = vld [vmem:[#allocation2 + $0x1e8] sm:$0xff]
    %v225 = vld [vmem:[#allocation2 + $0x1f0] sm:$0xff]
    %v226 = vld [vmem:[#allocation2 + $0x1f8] sm:$0xff]
    %v227 = vld [vmem:[#allocation2 + $0x200] sm:$0xff]
    %v228 = vld [vmem:[#allocation2 + $0x208] sm:$0xff]
    %v229 = vld [vmem:[#allocation2 + $0x210] sm:$0xff]
    %v230 = vld [vmem:[#allocation2 + $0x218] sm:$0xff]
    %v231 = vld [vmem:[#allocation2 + $0x220] sm:$0xff]
    %v232 = vld [vmem:[#allocation2 + $0x228] sm:$0xff]
    %v233 = vld [vmem:[#allocation2 + $0x230] sm:$0xff]
    %v234 = vld [vmem:[#allocation2 + $0x238] sm:$0xff]
    %v235 = vld [vmem:[#allocation2 + $0x240] sm:$0xff]
    %v236 = vld [vmem:[#allocation2 + $0x248] sm:$0xff]
    %v237 = vld [vmem:[#allocation2 + $0x250] sm:$0xff]
    %v238 = vld [vmem:[#allocation2 + $0x258] sm:$0xff]
    %v239 = vld [vmem:[#allocation2 + $0x260] sm:$0xff]
    %v240 = vld [vmem:[#allocation2 + $0x268] sm:$0xff]
    %v241 = vld [vmem:[#allocation2 + $0x270] sm:$0xff]
    %v242 = vld [vmem:[#allocation2 + $0x278] sm:$0xff]
    %v243 = vld [vmem:[#allocation2 + $0x280] sm:$0xff]
    %v244 = vld [vmem:[#allocation2 + $0x288] sm:$0xff]
    %v245 = vld [vmem:[#allocation2 + $0x290] sm:$0xff]
    %v246 = vld [vmem:[#allocation2 + $0x298] sm:$0xff]
    %v247 = vld [vmem:[#allocation2 + $0x2a0] sm:$0xff]
    %v248 = vld [vmem:[#allocation2 + $0x2a8] sm:$0xff]
    %v249 = vld [vmem:[#allocation2 + $0x2b0] sm:$0xff]
    %v250 = vld [vmem:[#allocation2 + $0x2b8] sm:$0xff]
    %v251 = vld [vmem:[#allocation2 + $0x2c0] sm:$0xff]
    %v252 = vld [vmem:[#allocation2 + $0x2c8] sm:$0xff]
    %v253 = vld [vmem:[#allocation2 + $0x2d0] sm:$0xff]
    %v254 = vld [vmem:[#allocation2 + $0x2d8] sm:$0xff]
    %v255 = vld [vmem:[#allocation2 + $0x2e0] sm:$0xff]
    %v256 = vld [vmem:[#allocation2 + $0x2e8] sm:$0xff]
    %v257 = vld [vmem:[#allocation2 + $0x2f0] sm:$0xff]
    %v258 = vld [vmem:[#allocation2 + $0x2f8] sm:$0xff]
    %v259 = vld [vmem:[#allocation2 + $0x300] sm:$0xff]
    %v260 = vld [vmem:[#allocation2 + $0x308] sm:$0xff]
    %v261 = vld [vmem:[#allocation2 + $0x310] sm:$0xff]
    %v262 = vld [vmem:[#allocation2 + $0x318] sm:$0xff]
    %v263 = vld [vmem:[#allocation2 + $0x320] sm:$0xff]
    %v264 = vld [vmem:[#allocation2 + $0x328] sm:$0xff]
    %v265 = vld [vmem:[#allocation2 + $0x330] sm:$0xff]
    %v266 = vld [vmem:[#allocation2 + $0x338] sm:$0xff]
    %v267 = vld [vmem:[#allocation2 + $0x340] sm:$0xff]
    %v268 = vld [vmem:[#allocation2 + $0x348] sm:$0xff]
    %v269 = vld [vmem:[#allocation2 + $0x350] sm:$0xff]
    %v270 = vld [vmem:[#allocation2 + $0x358] sm:$0xff]
    %v271 = vld [vmem:[#allocation2 + $0x360] sm:$0xff]
    %v272 = vld [vmem:[#allocation2 + $0x368] sm:$0xff]
    %v273 = vld [vmem:[#allocation2 + $0x370] sm:$0xff]
    %v274 = vld [vmem:[#allocation2 + $0x378] sm:$0xff]
    %v275 = vld [vmem:[#allocation2 + $0x380] sm:$0xff]
    %v276 = vld [vmem:[#allocation2 + $0x388] sm:$0xff]
    %v277 = vld [vmem:[#allocation2 + $0x390] sm:$0xff]
    %v278 = vld [vmem:[#allocation2 + $0x398] sm:$0xff]
    %v279 = vld [vmem:[#allocation2 + $0x3a0] sm:$0xff]
    %v280 = vld [vmem:[#allocation2 + $0x3a8] sm:$0xff]
    %v281 = vld [vmem:[#allocation2 + $0x3b0] sm:$0xff]
    %v282 = vld [vmem:[#allocation2 + $0x3b8] sm:$0xff]
    %v283 = vld [vmem:[#allocation2 + $0x3c0] sm:$0xff]
    %v284 = vld [vmem:[#allocation2 + $0x3c8] sm:$0xff]
    %v285 = vld [vmem:[#allocation2 + $0x3d0] sm:$0xff]
    %v286 = vld [vmem:[#allocation2 + $0x3d8] sm:$0xff]
    %v287 = vld [vmem:[#allocation2 + $0x3e0] sm:$0xff]
    %v288 = vld [vmem:[#allocation2 + $0x3e8] sm:$0xff]
    %v289 = vld [vmem:[#allocation2 + $0x3f0] sm:$0xff]
    %v290 = vld [vmem:[#allocation2 + $0x3f8] sm:$0xff]
    %v291 = vld [vmem:[#allocation2 + $0x400] sm:$0xff]
    %v292 = vld [vmem:[#allocation2 + $0x408] sm:$0xff]
    %v293 = vld [vmem:[#allocation2 + $0x410] sm:$0xff]
    %v294 = vld [vmem:[#allocation2 + $0x418] sm:$0xff]
    %v295 = vld [vmem:[#allocation2 + $0x420] sm:$0xff]
    %v296 = vld [vmem:[#allocation2 + $0x428] sm:$0xff]
    %v297 = vld [vmem:[#allocation2 + $0x430] sm:$0xff]
    %v298 = vld [vmem:[#allocation2 + $0x438] sm:$0xff]
    %v299 = vld [vmem:[#allocation2 + $0x440] sm:$0xff]
    %v300 = vld [vmem:[#allocation2 + $0x448] sm:$0xff]
    %v301 = vld [vmem:[#allocation2 + $0x450] sm:$0xff]
    %v302 = vld [vmem:[#allocation2 + $0x458] sm:$0xff]
    %v303 = vld [vmem:[#allocation2 + $0x460] sm:$0xff]
    %v304 = vld [vmem:[#allocation2 + $0x468] sm:$0xff]
    %v305 = vld [vmem:[#allocation2 + $0x470] sm:$0xff]
    %v306 = vld [vmem:[#allocation2 + $0x478] sm:$0xff]
    %v307 = vld [vmem:[#allocation2 + $0x480] sm:$0xff]
    %v308 = vld [vmem:[#allocation2 + $0x488] sm:$0xff]
    %v309 = vld [vmem:[#allocation2 + $0x490] sm:$0xff]
    %v310 = vld [vmem:[#allocation2 + $0x498] sm:$0xff]
    %v311 = vld [vmem:[#allocation2 + $0x4a0] sm:$0xff]
    %v312 = vld [vmem:[#allocation2 + $0x4a8] sm:$0xff]
    %v313 = vld [vmem:[#allocation2 + $0x4b0] sm:$0xff]
    %v314 = vld [vmem:[#allocation2 + $0x4b8] sm:$0xff]
    %v315 = vld [vmem:[#allocation2 + $0x4c0] sm:$0xff]
    %v316 = vld [vmem:[#allocation2 + $0x4c8] sm:$0xff]
    %v317 = vld [vmem:[#allocation2 + $0x4d0] sm:$0xff]
    %v318 = vld [vmem:[#allocation2 + $0x4d8] sm:$0xff]
    %v319 = vld [vmem:[#allocation2 + $0x4e0] sm:$0xff]
    %v320 = vld [vmem:[#allocation2 + $0x4e8] sm:$0xff]
    %v321 = vld [vmem:[#allocation2 + $0x4f0] sm:$0xff]
    %v322 = vld [vmem:[#allocation2 + $0x4f8] sm:$0xff]
    %v323 = vld [vmem:[#allocation2 + $0x500] sm:$0xff]
    %v324 = vld [vmem:[#allocation2 + $0x508] sm:$0xff]
    %v325 = vld [vmem:[#allocation2 + $0x510] sm:$0xff]
    %v326 = vld [vmem:[#allocation2 + $0x518] sm:$0xff]
    %v327 = vld [vmem:[#allocation2 + $0x520] sm:$0xff]
    %v328 = vld [vmem:[#allocation2 + $0x528] sm:$0xff]
    %v329 = vld [vmem:[#allocation2 + $0x530] sm:$0xff]
    %v330 = vld [vmem:[#allocation2 + $0x538] sm:$0xff]
    %v331 = vld [vmem:[#allocation2 + $0x540] sm:$0xff]
    %v332 = vld [vmem:[#allocation2 + $0x548] sm:$0xff]
    %v333 = vld [vmem:[#allocation2 + $0x550] sm:$0xff]
    %v334 = vld [vmem:[#allocation2 + $0x558] sm:$0xff]
    %v335 = vld [vmem:[#allocation2 + $0x560] sm:$0xff]
    %v336 = vld [vmem:[#allocation2 + $0x568] sm:$0xff]
    %v337 = vld [vmem:[#allocation2 + $0x570] sm:$0xff]
    %v338 = vld [vmem:[#allocation2 + $0x578] sm:$0xff]
    %v339 = vld [vmem:[#allocation2 + $0x580] sm:$0xff]
    %v340 = vld [vmem:[#allocation2 + $0x588] sm:$0xff]
    %v341 = vld [vmem:[#allocation2 + $0x590] sm:$0xff]
    %v342 = vld [vmem:[#allocation2 + $0x598] sm:$0xff]
    %v343 = vld [vmem:[#allocation2 + $0x5a0] sm:$0xff]
    %v344 = vld [vmem:[#allocation2 + $0x5a8] sm:$0xff]
    %v345 = vld [vmem:[#allocation2 + $0x5b0] sm:$0xff]
    %v346 = vld [vmem:[#allocation2 + $0x5b8] sm:$0xff]
    %v347 = vld [vmem:[#allocation2 + $0x5c0] sm:$0xff]
    %v348 = vld [vmem:[#allocation2 + $0x5c8] sm:$0xff]
    %v349 = vld [vmem:[#allocation2 + $0x5d0] sm:$0xff]
    %v350 = vld [vmem:[#allocation2 + $0x5d8] sm:$0xff]
    %v351 = vld [vmem:[#allocation2 + $0x5e0] sm:$0xff]
    %v352 = vld [vmem:[#allocation2 + $0x5e8] sm:$0xff]
    %v353 = vld [vmem:[#allocation2 + $0x5f0] sm:$0xff]
    %v354 = vld [vmem:[#allocation2 + $0x5f8] sm:$0xff]
    %v355 = vld [vmem:[#allocation2 + $0x600] sm:$0xff]
    %v356 = vld [vmem:[#allocation2 + $0x608] sm:$0xff]
    %v357 = vld [vmem:[#allocation2 + $0x610] sm:$0xff]
    %v358 = vld [vmem:[#allocation2 + $0x618] sm:$0xff]
    %v359 = vld [vmem:[#allocation2 + $0x620] sm:$0xff]
    %v360 = vld [vmem:[#allocation2 + $0x628] sm:$0xff]
    %v361 = vld [vmem:[#allocation2 + $0x630] sm:$0xff]
    %v362 = vld [vmem:[#allocation2 + $0x638] sm:$0xff]
    %v363 = vld [vmem:[#allocation2 + $0x640] sm:$0xff]
    %v364 = vld [vmem:[#allocation2 + $0x648] sm:$0xff]
    %v365 = vld [vmem:[#allocation2 + $0x650] sm:$0xff]
    %v366 = vld [vmem:[#allocation2 + $0x658] sm:$0xff]
    %v367 = vld [vmem:[#allocation2 + $0x660] sm:$0xff]
    %v368 = vld [vmem:[#allocation2 + $0x668] sm:$0xff]
    %v369 = vld [vmem:[#allocation2 + $0x670] sm:$0xff]
    %v370 = vld [vmem:[#allocation2 + $0x678] sm:$0xff]
    %v371 = vld [vmem:[#allocation2 + $0x680] sm:$0xff]
    %v372 = vld [vmem:[#allocation2 + $0x688] sm:$0xff]
    %v373 = vld [vmem:[#allocation2 + $0x690] sm:$0xff]
    %v374 = vld [vmem:[#allocation2 + $0x698] sm:$0xff]
    %v375 = vld [vmem:[#allocation2 + $0x6a0] sm:$0xff]
    %v376 = vld [vmem:[#allocation2 + $0x6a8] sm:$0xff]
    %v377 = vld [vmem:[#allocation2 + $0x6b0] sm:$0xff]
    %v378 = vld [vmem:[#allocation2 + $0x6b8] sm:$0xff]
    %v379 = vld [vmem:[#allocation2 + $0x6c0] sm:$0xff]
    %v380 = vld [vmem:[#allocation2 + $0x6c8] sm:$0xff]
    %v381 = vld [vmem:[#allocation2 + $0x6d0] sm:$0xff]
    %v382 = vld [vmem:[#allocation2 + $0x6d8] sm:$0xff]
    %v383 = vld [vmem:[#allocation2 + $0x6e0] sm:$0xff]
    %v384 = vld [vmem:[#allocation2 + $0x6e8] sm:$0xff]
    %v385 = vld [vmem:[#allocation2 + $0x6f0] sm:$0xff]
    %v386 = vld [vmem:[#allocation2 + $0x6f8] sm:$0xff]
    %v387 = vld [vmem:[#allocation2 + $0x700] sm:$0xff]
    %v388 = vld [vmem:[#allocation2 + $0x708] sm:$0xff]
    %v389 = vld [vmem:[#allocation2 + $0x710] sm:$0xff]
    %v390 = vld [vmem:[#allocation2 + $0x718] sm:$0xff]
    %v391 = vld [vmem:[#allocation2 + $0x720] sm:$0xff]
    %v392 = vld [vmem:[#allocation2 + $0x728] sm:$0xff]
    %v393 = vld [vmem:[#allocation2 + $0x730] sm:$0xff]
    %v394 = vld [vmem:[#allocation2 + $0x738] sm:$0xff]
    %v395 = vld [vmem:[#allocation2 + $0x740] sm:$0xff]
    %v396 = vld [vmem:[#allocation2 + $0x748] sm:$0xff]
    %v397 = vld [vmem:[#allocation2 + $0x750] sm:$0xff]
    %v398 = vld [vmem:[#allocation2 + $0x758] sm:$0xff]
    %v399 = vld [vmem:[#allocation2 + $0x760] sm:$0xff]
    %v400 = vld [vmem:[#allocation2 + $0x768] sm:$0xff]
    %v401 = vld [vmem:[#allocation2 + $0x770] sm:$0xff]
    %v402 = vld [vmem:[#allocation2 + $0x778] sm:$0xff]
    %v403 = vld [vmem:[#allocation2 + $0x780] sm:$0xff]
    %v404 = vld [vmem:[#allocation2 + $0x788] sm:$0xff]
    %v405 = vld [vmem:[#allocation2 + $0x790] sm:$0xff]
    %v406 = vld [vmem:[#allocation2 + $0x798] sm:$0xff]
    %v407 = vld [vmem:[#allocation2 + $0x7a0] sm:$0xff]
    %v408 = vld [vmem:[#allocation2 + $0x7a8] sm:$0xff]
    %v409 = vld [vmem:[#allocation2 + $0x7b0] sm:$0xff]
    %v410 = vld [vmem:[#allocation2 + $0x7b8] sm:$0xff]
    %v411 = vld [vmem:[#allocation2 + $0x7c0] sm:$0xff]
    %v412 = vld [vmem:[#allocation2 + $0x7c8] sm:$0xff]
    %v413 = vld [vmem:[#allocation2 + $0x7d0] sm:$0xff]
    %v414 = vld [vmem:[#allocation2 + $0x7d8] sm:$0xff]
    %v415 = vld [vmem:[#allocation2 + $0x7e0] sm:$0xff]
    %v416 = vld [vmem:[#allocation2 + $0x7e8] sm:$0xff]
    %v417 = vld [vmem:[#allocation2 + $0x7f0] sm:$0xff]
    %v418 = vld [vmem:[#allocation2 + $0x7f8] sm:$0xff]
    %v419 = vld [vmem:[#allocation2 + $0x800] sm:$0xff]
    %v420 = vld [vmem:[#allocation2 + $0x808] sm:$0xff]
    %v421 = vld [vmem:[#allocation2 + $0x810] sm:$0xff]
    %v422 = vld [vmem:[#allocation2 + $0x818] sm:$0xff]
    %v423 = vld [vmem:[#allocation2 + $0x820] sm:$0xff]
    %v424 = vld [vmem:[#allocation2 + $0x828] sm:$0xff]
    %v425 = vld [vmem:[#allocation2 + $0x830] sm:$0xff]
    %v426 = vld [vmem:[#allocation2 + $0x838] sm:$0xff]
    %v427 = vld [vmem:[#allocation2 + $0x840] sm:$0xff]
    %v428 = vld [vmem:[#allocation2 + $0x848] sm:$0xff]
    %v429 = vld [vmem:[#allocation2 + $0x850] sm:$0xff]
    %v430 = vld [vmem:[#allocation2 + $0x858] sm:$0xff]
    %v431 = vld [vmem:[#allocation2 + $0x860] sm:$0xff]
    %v432 = vld [vmem:[#allocation2 + $0x868] sm:$0xff]
    %v433 = vld [vmem:[#allocation2 + $0x870] sm:$0xff]
    %v434 = vld [vmem:[#allocation2 + $0x878] sm:$0xff]
    %v435 = vld [vmem:[#allocation2 + $0x880] sm:$0xff]
    %v436 = vld [vmem:[#allocation2 + $0x888] sm:$0xff]
    %v437 = vld [vmem:[#allocation2 + $0x890] sm:$0xff]
    %v438 = vld [vmem:[#allocation2 + $0x898] sm:$0xff]
    %v439 = vld [vmem:[#allocation2 + $0x8a0] sm:$0xff]
    %v440 = vld [vmem:[#allocation2 + $0x8a8] sm:$0xff]
    %v441 = vld [vmem:[#allocation2 + $0x8b0] sm:$0xff]
    %v442 = vld [vmem:[#allocation2 + $0x8b8] sm:$0xff]
    %v443 = vld [vmem:[#allocation2 + $0x8c0] sm:$0xff]
    %v444 = vld [vmem:[#allocation2 + $0x8c8] sm:$0xff]
    %v445 = vld [vmem:[#allocation2 + $0x8d0] sm:$0xff]
    %v446 = vld [vmem:[#allocation2 + $0x8d8] sm:$0xff]
    %v447 = vld [vmem:[#allocation2 + $0x8e0] sm:$0xff]
    %v448 = vld [vmem:[#allocation2 + $0x8e8] sm:$0xff]
    %v449 = vld [vmem:[#allocation2 + $0x8f0] sm:$0xff]
    %v450 = vld [vmem:[#allocation2 + $0x8f8] sm:$0xff]
    %v451 = vld [vmem:[#allocation2 + $0x900] sm:$0xff]
    %v452 = vld [vmem:[#allocation2 + $0x908] sm:$0xff]
    %v453 = vld [vmem:[#allocation2 + $0x910] sm:$0xff]
    %v454 = vld [vmem:[#allocation2 + $0x918] sm:$0xff]
    %v455 = vld [vmem:[#allocation2 + $0x920] sm:$0xff]
    %v456 = vld [vmem:[#allocation2 + $0x928] sm:$0xff]
    %v457 = vld [vmem:[#allocation2 + $0x930] sm:$0xff]
    %v458 = vld [vmem:[#allocation2 + $0x938] sm:$0xff]
    %v459 = vld [vmem:[#allocation2 + $0x940] sm:$0xff]
    %v460 = vld [vmem:[#allocation2 + $0x948] sm:$0xff]
    %v461 = vld [vmem:[#allocation2 + $0x950] sm:$0xff]
    %v462 = vld [vmem:[#allocation2 + $0x958] sm:$0xff]
    %v463 = vld [vmem:[#allocation2 + $0x960] sm:$0xff]
    %v464 = vld [vmem:[#allocation2 + $0x968] sm:$0xff]
    %v465 = vld [vmem:[#allocation2 + $0x970] sm:$0xff]
    %v466 = vld [vmem:[#allocation2 + $0x978] sm:$0xff]
    %v467 = vld [vmem:[#allocation2 + $0x980] sm:$0xff]
    %v468 = vld [vmem:[#allocation2 + $0x988] sm:$0xff]
    %v469 = vld [vmem:[#allocation2 + $0x990] sm:$0xff]
    %v470 = vld [vmem:[#allocation2 + $0x998] sm:$0xff]
    %v471 = vld [vmem:[#allocation2 + $0x9a0] sm:$0xff]
    %v472 = vld [vmem:[#allocation2 + $0x9a8] sm:$0xff]
    %v473 = vld [vmem:[#allocation2 + $0x9b0] sm:$0xff]
    %v474 = vld [vmem:[#allocation2 + $0x9b8] sm:$0xff]
    %v475 = vld [vmem:[#allocation2 + $0x9c0] sm:$0xff]
    %v476 = vld [vmem:[#allocation2 + $0x9c8] sm:$0xff]
    %v477 = vld [vmem:[#allocation2 + $0x9d0] sm:$0xff]
    %v478 = vld [vmem:[#allocation2 + $0x9d8] sm:$0xff]
    %v479 = vld [vmem:[#allocation2 + $0x9e0] sm:$0xff]
    %v480 = vld [vmem:[#allocation2 + $0x9e8] sm:$0xff]
    %v481 = vld [vmem:[#allocation2 + $0x9f0] sm:$0xff]
    %v482 = vld [vmem:[#allocation2 + $0x9f8] sm:$0xff]
    %v483 = vld [vmem:[#allocation2 + $0xa00] sm:$0xff]
    %v484 = vld [vmem:[#allocation2 + $0xa08] sm:$0xff]
    %v485 = vld [vmem:[#allocation2 + $0xa10] sm:$0xff]
    %v486 = vld [vmem:[#allocation2 + $0xa18] sm:$0xff]
    %v487 = vld [vmem:[#allocation2 + $0xa20] sm:$0xff]
    %v488 = vld [vmem:[#allocation2 + $0xa28] sm:$0xff]
    %v489 = vld [vmem:[#allocation2 + $0xa30] sm:$0xff]
    %v490 = vld [vmem:[#allocation2 + $0xa38] sm:$0xff]
    %v491 = vld [vmem:[#allocation2 + $0xa40] sm:$0xff]
    %v492 = vld [vmem:[#allocation2 + $0xa48] sm:$0xff]
    %v493 = vld [vmem:[#allocation2 + $0xa50] sm:$0xff]
    %v494 = vld [vmem:[#allocation2 + $0xa58] sm:$0xff]
    %v495 = vld [vmem:[#allocation2 + $0xa60] sm:$0xff]
    %v496 = vld [vmem:[#allocation2 + $0xa68] sm:$0xff]
    %v497 = vld [vmem:[#allocation2 + $0xa70] sm:$0xff]
    %v498 = vld [vmem:[#allocation2 + $0xa78] sm:$0xff]
    %v499 = vld [vmem:[#allocation2 + $0xa80] sm:$0xff]
    %v500 = vld [vmem:[#allocation2 + $0xa88] sm:$0xff]
    %v501 = vld [vmem:[#allocation2 + $0xa90] sm:$0xff]
    %v502 = vld [vmem:[#allocation2 + $0xa98] sm:$0xff]
    %v503 = vld [vmem:[#allocation2 + $0xaa0] sm:$0xff]
    %v504 = vld [vmem:[#allocation2 + $0xaa8] sm:$0xff]
    %v505 = vld [vmem:[#allocation2 + $0xab0] sm:$0xff]
    %v506 = vld [vmem:[#allocation2 + $0xab8] sm:$0xff]
    %v507 = vld [vmem:[#allocation2 + $0xac0] sm:$0xff]
    %v508 = vld [vmem:[#allocation2 + $0xac8] sm:$0xff]
    %v509 = vld [vmem:[#allocation2 + $0xad0] sm:$0xff]
    %v510 = vld [vmem:[#allocation2 + $0xad8] sm:$0xff]
    %v511 = vld [vmem:[#allocation2 + $0xae0] sm:$0xff]
    %v512 = vld [vmem:[#allocation2 + $0xae8] sm:$0xff]
    %v513 = vld [vmem:[#allocation2 + $0xaf0] sm:$0xff]
    %v514 = vld [vmem:[#allocation2 + $0xaf8] sm:$0xff]
    %v515 = vld [vmem:[#allocation2 + $0xb00] sm:$0xff]
    %v516 = vld [vmem:[#allocation2 + $0xb08] sm:$0xff]
    %v517 = vld [vmem:[#allocation2 + $0xb10] sm:$0xff]
    %v518 = vld [vmem:[#allocation2 + $0xb18] sm:$0xff]
    %v519 = vld [vmem:[#allocation2 + $0xb20] sm:$0xff]
    %v520 = vld [vmem:[#allocation2 + $0xb28] sm:$0xff]
    %v521 = vld [vmem:[#allocation2 + $0xb30] sm:$0xff]
    %v522 = vld [vmem:[#allocation2 + $0xb38] sm:$0xff]
    %v523 = vld [vmem:[#allocation2 + $0xb40] sm:$0xff]
    %v524 = vld [vmem:[#allocation2 + $0xb48] sm:$0xff]
    %v525 = vld [vmem:[#allocation2 + $0xb50] sm:$0xff]
    %v526 = vld [vmem:[#allocation2 + $0xb58] sm:$0xff]
    %v527 = vld [vmem:[#allocation2 + $0xb60] sm:$0xff]
    %v528 = vld [vmem:[#allocation2 + $0xb68] sm:$0xff]
    %v529 = vld [vmem:[#allocation2 + $0xb70] sm:$0xff]
    %v530 = vld [vmem:[#allocation2 + $0xb78] sm:$0xff]
    %v531 = vld [vmem:[#allocation2 + $0xb80] sm:$0xff]
    %v532 = vld [vmem:[#allocation2 + $0xb88] sm:$0xff]
    %v533 = vld [vmem:[#allocation2 + $0xb90] sm:$0xff]
    %v534 = vld [vmem:[#allocation2 + $0xb98] sm:$0xff]
    %v535 = vld [vmem:[#allocation2 + $0xba0] sm:$0xff]
    %v536 = vld [vmem:[#allocation2 + $0xba8] sm:$0xff]
    %v537 = vld [vmem:[#allocation2 + $0xbb0] sm:$0xff]
    %v538 = vld [vmem:[#allocation2 + $0xbb8] sm:$0xff]
    %v539 = vld [vmem:[#allocation2 + $0xbc0] sm:$0xff]
    %v540 = vld [vmem:[#allocation2 + $0xbc8] sm:$0xff]
    %v541 = vld [vmem:[#allocation2 + $0xbd0] sm:$0xff]
    %v542 = vld [vmem:[#allocation2 + $0xbd8] sm:$0xff]
    %v543 = vld [vmem:[#allocation2 + $0xbe0] sm:$0xff]
    %v544 = vld [vmem:[#allocation2 + $0xbe8] sm:$0xff]
    %v545 = vld [vmem:[#allocation2 + $0xbf0] sm:$0xff]
    %v546 = vld [vmem:[#allocation2 + $0xbf8] sm:$0xff]
    %v547 = vld [vmem:[#allocation2 + $0xc00] sm:$0xff]
    %v548 = vld [vmem:[#allocation2 + $0xc08] sm:$0xff]
    %v549 = vld [vmem:[#allocation2 + $0xc10] sm:$0xff]
    %v550 = vld [vmem:[#allocation2 + $0xc18] sm:$0xff]
    %v551 = vld [vmem:[#allocation2 + $0xc20] sm:$0xff]
    %v552 = vld [vmem:[#allocation2 + $0xc28] sm:$0xff]
    %v553 = vld [vmem:[#allocation2 + $0xc30] sm:$0xff]
    %v554 = vld [vmem:[#allocation2 + $0xc38] sm:$0xff]
    %v555 = vld [vmem:[#allocation2 + $0xc40] sm:$0xff]
    %v556 = vld [vmem:[#allocation2 + $0xc48] sm:$0xff]
    %v557 = vld [vmem:[#allocation2 + $0xc50] sm:$0xff]
    %v558 = vld [vmem:[#allocation2 + $0xc58] sm:$0xff]
    %v559 = vld [vmem:[#allocation2 + $0xc60] sm:$0xff]
    %v560 = vld [vmem:[#allocation2 + $0xc68] sm:$0xff]
    %v561 = vld [vmem:[#allocation2 + $0xc70] sm:$0xff]
    %v562 = vld [vmem:[#allocation2 + $0xc78] sm:$0xff]
    %v563 = vld [vmem:[#allocation2 + $0xc80] sm:$0xff]
    %v564 = vld [vmem:[#allocation2 + $0xc88] sm:$0xff]
    %v565 = vld [vmem:[#allocation2 + $0xc90] sm:$0xff]
    %v566 = vld [vmem:[#allocation2 + $0xc98] sm:$0xff]
    %v567 = vld [vmem:[#allocation2 + $0xca0] sm:$0xff]
    %v568 = vld [vmem:[#allocation2 + $0xca8] sm:$0xff]
    %v569 = vld [vmem:[#allocation2 + $0xcb0] sm:$0xff]
    %v570 = vld [vmem:[#allocation2 + $0xcb8] sm:$0xff]
    %v571 = vld [vmem:[#allocation2 + $0xcc0] sm:$0xff]
    %v572 = vld [vmem:[#allocation2 + $0xcc8] sm:$0xff]
    %v573 = vld [vmem:[#allocation2 + $0xcd0] sm:$0xff]
    %v574 = vld [vmem:[#allocation2 + $0xcd8] sm:$0xff]
    %v575 = vld [vmem:[#allocation2 + $0xce0] sm:$0xff]
    %v576 = vld [vmem:[#allocation2 + $0xce8] sm:$0xff]
    %v577 = vld [vmem:[#allocation2 + $0xcf0] sm:$0xff]
    %v578 = vld [vmem:[#allocation2 + $0xcf8] sm:$0xff]
    %v579 = vld [vmem:[#allocation2 + $0xd00] sm:$0xff]
    %v580 = vld [vmem:[#allocation2 + $0xd08] sm:$0xff]
    %v581 = vld [vmem:[#allocation2 + $0xd10] sm:$0xff]
    %v582 = vld [vmem:[#allocation2 + $0xd18] sm:$0xff]
    %v583 = vld [vmem:[#allocation2 + $0xd20] sm:$0xff]
    %v584 = vld [vmem:[#allocation2 + $0xd28] sm:$0xff]
    %v585 = vld [vmem:[#allocation2 + $0xd30] sm:$0xff]
    %v586 = vld [vmem:[#allocation2 + $0xd38] sm:$0xff]
    %v587 = vld [vmem:[#allocation2 + $0xd40] sm:$0xff]
    %v588 = vld [vmem:[#allocation2 + $0xd48] sm:$0xff]
    %v589 = vld [vmem:[#allocation2 + $0xd50] sm:$0xff]
    %v590 = vld [vmem:[#allocation2 + $0xd58] sm:$0xff]
    %v591 = vld [vmem:[#allocation2 + $0xd60] sm:$0xff]
    %v592 = vld [vmem:[#allocation2 + $0xd68] sm:$0xff]
    %v593 = vld [vmem:[#allocation2 + $0xd70] sm:$0xff]
    %v594 = vld [vmem:[#allocation2 + $0xd78] sm:$0xff]
    %v595 = vld [vmem:[#allocation2 + $0xd80] sm:$0xff]
    %v596 = vld [vmem:[#allocation2 + $0xd88] sm:$0xff]
    %v597 = vld [vmem:[#allocation2 + $0xd90] sm:$0xff]
    %v598 = vld [vmem:[#allocation2 + $0xd98] sm:$0xff]
    %v599 = vld [vmem:[#allocation2 + $0xda0] sm:$0xff]
    %v600 = vld [vmem:[#allocation2 + $0xda8] sm:$0xff]
    %v601 = vld [vmem:[#allocation2 + $0xdb0] sm:$0xff]
    %v602 = vld [vmem:[#allocation2 + $0xdb8] sm:$0xff]
    %v603 = vld [vmem:[#allocation2 + $0xdc0] sm:$0xff]
    %v604 = vld [vmem:[#allocation2 + $0xdc8] sm:$0xff]
    %v605 = vld [vmem:[#allocation2 + $0xdd0] sm:$0xff]
    %v606 = vld [vmem:[#allocation2 + $0xdd8] sm:$0xff]
    %v607 = vld [vmem:[#allocation2 + $0xde0] sm:$0xff]
    %v608 = vld [vmem:[#allocation2 + $0xde8] sm:$0xff]
    %v609 = vld [vmem:[#allocation2 + $0xdf0] sm:$0xff]
    %v610 = vld [vmem:[#allocation2 + $0xdf8] sm:$0xff]
    %v611 = vld [vmem:[#allocation2 + $0xe00] sm:$0xff]
    %v612 = vld [vmem:[#allocation2 + $0xe08] sm:$0xff]
    %v613 = vld [vmem:[#allocation2 + $0xe10] sm:$0xff]
    %v614 = vld [vmem:[#allocation2 + $0xe18] sm:$0xff]
    %v615 = vld [vmem:[#allocation2 + $0xe20] sm:$0xff]
    %v616 = vld [vmem:[#allocation2 + $0xe28] sm:$0xff]
    %v617 = vld [vmem:[#allocation2 + $0xe30] sm:$0xff]
    %v618 = vld [vmem:[#allocation2 + $0xe38] sm:$0xff]
    %v619 = vld [vmem:[#allocation2 + $0xe40] sm:$0xff]
    %v620 = vld [vmem:[#allocation2 + $0xe48] sm:$0xff]
    %v621 = vld [vmem:[#allocation2 + $0xe50] sm:$0xff]
    %v622 = vld [vmem:[#allocation2 + $0xe58] sm:$0xff]
    %v623 = vld [vmem:[#allocation2 + $0xe60] sm:$0xff]
    %v624 = vld [vmem:[#allocation2 + $0xe68] sm:$0xff]
    %v625 = vld [vmem:[#allocation2 + $0xe70] sm:$0xff]
    %v626 = vld [vmem:[#allocation2 + $0xe78] sm:$0xff]
    %v627 = vld [vmem:[#allocation2 + $0xe80] sm:$0xff]
    %v628 = vld [vmem:[#allocation2 + $0xe88] sm:$0xff]
    %v629 = vld [vmem:[#allocation2 + $0xe90] sm:$0xff]
    %v630 = vld [vmem:[#allocation2 + $0xe98] sm:$0xff]
    %v631 = vld [vmem:[#allocation2 + $0xea0] sm:$0xff]
    %v632 = vld [vmem:[#allocation2 + $0xea8] sm:$0xff]
    %v633 = vld [vmem:[#allocation2 + $0xeb0] sm:$0xff]
    %v634 = vld [vmem:[#allocation2 + $0xeb8] sm:$0xff]
    %v635 = vld [vmem:[#allocation2 + $0xec0] sm:$0xff]
    %v636 = vld [vmem:[#allocation2 + $0xec8] sm:$0xff]
    %v637 = vld [vmem:[#allocation2 + $0xed0] sm:$0xff]
    %v638 = vld [vmem:[#allocation2 + $0xed8] sm:$0xff]
    %v639 = vld [vmem:[#allocation2 + $0xee0] sm:$0xff]
    %v640 = vld [vmem:[#allocation2 + $0xee8] sm:$0xff]
    %v641 = vld [vmem:[#allocation2 + $0xef0] sm:$0xff]
    %v642 = vld [vmem:[#allocation2 + $0xef8] sm:$0xff]
    %v643 = vld [vmem:[#allocation2 + $0xf00] sm:$0xff]
    %v644 = vld [vmem:[#allocation2 + $0xf08] sm:$0xff]
    %v645 = vld [vmem:[#allocation2 + $0xf10] sm:$0xff]
    %v646 = vld [vmem:[#allocation2 + $0xf18] sm:$0xff]
    %v647 = vld [vmem:[#allocation2 + $0xf20] sm:$0xff]
    %v648 = vld [vmem:[#allocation2 + $0xf28] sm:$0xff]
    %v649 = vld [vmem:[#allocation2 + $0xf30] sm:$0xff]
    %v650 = vld [vmem:[#allocation2 + $0xf38] sm:$0xff]
    %v651 = vld [vmem:[#allocation2 + $0xf40] sm:$0xff]
    %v652 = vld [vmem:[#allocation2 + $0xf48] sm:$0xff]
    %v653 = vld [vmem:[#allocation2 + $0xf50] sm:$0xff]
    %v654 = vld [vmem:[#allocation2 + $0xf58] sm:$0xff]
    %v655 = vld [vmem:[#allocation2 + $0xf60] sm:$0xff]
    %v656 = vld [vmem:[#allocation2 + $0xf68] sm:$0xff]
    %v657 = vld [vmem:[#allocation2 + $0xf70] sm:$0xff]
    %v658 = vld [vmem:[#allocation2 + $0xf78] sm:$0xff]
    %v659 = vld [vmem:[#allocation2 + $0xf80] sm:$0xff]
    %v660 = vld [vmem:[#allocation2 + $0xf88] sm:$0xff]
    %v661 = vld [vmem:[#allocation2 + $0xf90] sm:$0xff]
    %v662 = vld [vmem:[#allocation2 + $0xf98] sm:$0xff]
    %v663 = vld [vmem:[#allocation2 + $0xfa0] sm:$0xff]
    %v664 = vld [vmem:[#allocation2 + $0xfa8] sm:$0xff]
    %v665 = vld [vmem:[#allocation2 + $0xfb0] sm:$0xff]
    %v666 = vld [vmem:[#allocation2 + $0xfb8] sm:$0xff]
    %v667 = vld [vmem:[#allocation2 + $0xfc0] sm:$0xff]
    %v668 = vld [vmem:[#allocation2 + $0xfc8] sm:$0xff]
    %v669 = vld [vmem:[#allocation2 + $0xfd0] sm:$0xff]
    %v670 = vld [vmem:[#allocation2 + $0xfd8] sm:$0xff]
    %v671 = vld [vmem:[#allocation2 + $0xfe0] sm:$0xff]
    %v672 = vld [vmem:[#allocation2 + $0xfe8] sm:$0xff]
    %v673 = vld [vmem:[#allocation2 + $0xff0] sm:$0xff]
    %v674 = vld [vmem:[#allocation2 + $0xff8] sm:$0xff]
    %v675 = vld [vmem:[#allocation2 + $0x1000] sm:$0xff]
    %v676 = vld [vmem:[#allocation2 + $0x1008] sm:$0xff]
    %v677 = vld [vmem:[#allocation2 + $0x1010] sm:$0xff]
    %v678 = vld [vmem:[#allocation2 + $0x1018] sm:$0xff]
    %v679 = vld [vmem:[#allocation2 + $0x1020] sm:$0xff]
    %v680 = vld [vmem:[#allocation2 + $0x1028] sm:$0xff]
    %v681 = vld [vmem:[#allocation2 + $0x1030] sm:$0xff]
    %v682 = vld [vmem:[#allocation2 + $0x1038] sm:$0xff]
    %v683 = vld [vmem:[#allocation2 + $0x1040] sm:$0xff]
    %v684 = vld [vmem:[#allocation2 + $0x1048] sm:$0xff]
    %v685 = vld [vmem:[#allocation2 + $0x1050] sm:$0xff]
    %v686 = vld [vmem:[#allocation2 + $0x1058] sm:$0xff]
    %v687 = vld [vmem:[#allocation2 + $0x1060] sm:$0xff]
    %v688 = vld [vmem:[#allocation2 + $0x1068] sm:$0xff]
    %v689 = vld [vmem:[#allocation2 + $0x1070] sm:$0xff]
    %v690 = vld [vmem:[#allocation2 + $0x1078] sm:$0xff]
    %v691 = vld [vmem:[#allocation2 + $0x1080] sm:$0xff]
    %v692 = vld [vmem:[#allocation2 + $0x1088] sm:$0xff]
    %v693 = vld [vmem:[#allocation2 + $0x1090] sm:$0xff]
    %v694 = vld [vmem:[#allocation2 + $0x1098] sm:$0xff]
    %v695 = vld [vmem:[#allocation2 + $0x10a0] sm:$0xff]
    %v696 = vld [vmem:[#allocation2 + $0x10a8] sm:$0xff]
    %v697 = vld [vmem:[#allocation2 + $0x10b0] sm:$0xff]
    %v698 = vld [vmem:[#allocation2 + $0x10b8] sm:$0xff]
    %v699 = vld [vmem:[#allocation2 + $0x10c0] sm:$0xff]
    %v700 = vld [vmem:[#allocation2 + $0x10c8] sm:$0xff]
    %v701 = vld [vmem:[#allocation2 + $0x10d0] sm:$0xff]
    %v702 = vld [vmem:[#allocation2 + $0x10d8] sm:$0xff]
    %v703 = vld [vmem:[#allocation2 + $0x10e0] sm:$0xff]
    %v704 = vld [vmem:[#allocation2 + $0x10e8] sm:$0xff]
    %v705 = vld [vmem:[#allocation2 + $0x10f0] sm:$0xff]
    %v706 = vld [vmem:[#allocation2 + $0x10f8] sm:$0xff]
    %v707 = vld [vmem:[#allocation2 + $0x1100] sm:$0xff]
    %v708 = vld [vmem:[#allocation2 + $0x1108] sm:$0xff]
    %v709 = vld [vmem:[#allocation2 + $0x1110] sm:$0xff]
    %v710 = vld [vmem:[#allocation2 + $0x1118] sm:$0xff]
    %v711 = vld [vmem:[#allocation2 + $0x1120] sm:$0xff]
    %v712 = vld [vmem:[#allocation2 + $0x1128] sm:$0xff]
    %v713 = vld [vmem:[#allocation2 + $0x1130] sm:$0xff]
    %v714 = vld [vmem:[#allocation2 + $0x1138] sm:$0xff]
    %v715 = vld [vmem:[#allocation2 + $0x1140] sm:$0xff]
    %v716 = vld [vmem:[#allocation2 + $0x1148] sm:$0xff]
    %v717 = vld [vmem:[#allocation2 + $0x1150] sm:$0xff]
    %v718 = vld [vmem:[#allocation2 + $0x1158] sm:$0xff]
    %v719 = vld [vmem:[#allocation2 + $0x1160] sm:$0xff]
    %v720 = vld [vmem:[#allocation2 + $0x1168] sm:$0xff]
    %v721 = vld [vmem:[#allocation2 + $0x1170] sm:$0xff]
    %v722 = vld [vmem:[#allocation2 + $0x1178] sm:$0xff]
    %v723 = vld [vmem:[#allocation2 + $0x1180] sm:$0xff]
    %v724 = vld [vmem:[#allocation2 + $0x1188] sm:$0xff]
    %v725 = vld [vmem:[#allocation2 + $0x1190] sm:$0xff]
    %v726 = vld [vmem:[#allocation2 + $0x1198] sm:$0xff]
    %v727 = vld [vmem:[#allocation2 + $0x11a0] sm:$0xff]
    %v728 = vld [vmem:[#allocation2 + $0x11a8] sm:$0xff]
    %v729 = vld [vmem:[#allocation2 + $0x11b0] sm:$0xff]
    %v730 = vld [vmem:[#allocation2 + $0x11b8] sm:$0xff]
    %v731 = vld [vmem:[#allocation2 + $0x11c0] sm:$0xff]
    %v732 = vld [vmem:[#allocation2 + $0x11c8] sm:$0xff]
    %v733 = vld [vmem:[#allocation2 + $0x11d0] sm:$0xff]
    %v734 = vld [vmem:[#allocation2 + $0x11d8] sm:$0xff]
    %v735 = vld [vmem:[#allocation2 + $0x11e0] sm:$0xff]
    %v736 = vld [vmem:[#allocation2 + $0x11e8] sm:$0xff]
    %v737 = vld [vmem:[#allocation2 + $0x11f0] sm:$0xff]
    %v738 = vld [vmem:[#allocation2 + $0x11f8] sm:$0xff]
    %v739 = vld [vmem:[#allocation2 + $0x1200] sm:$0xff]
    %v740 = vld [vmem:[#allocation2 + $0x1208] sm:$0xff]
    %v741 = vld [vmem:[#allocation2 + $0x1210] sm:$0xff]
    %v742 = vld [vmem:[#allocation2 + $0x1218] sm:$0xff]
    %v743 = vld [vmem:[#allocation2 + $0x1220] sm:$0xff]
    %v744 = vld [vmem:[#allocation2 + $0x1228] sm:$0xff]
    %v745 = vld [vmem:[#allocation2 + $0x1230] sm:$0xff]
    %v746 = vld [vmem:[#allocation2 + $0x1238] sm:$0xff]
    %v747 = vld [vmem:[#allocation2 + $0x1240] sm:$0xff]
    %v748 = vld [vmem:[#allocation2 + $0x1248] sm:$0xff]
    %v749 = vld [vmem:[#allocation2 + $0x1250] sm:$0xff]
    %v750 = vld [vmem:[#allocation2 + $0x1258] sm:$0xff]
    %v751 = vld [vmem:[#allocation2 + $0x1260] sm:$0xff]
    %v752 = vld [vmem:[#allocation2 + $0x1268] sm:$0xff]
    %v753 = vld [vmem:[#allocation2 + $0x1270] sm:$0xff]
    %v754 = vld [vmem:[#allocation2 + $0x1278] sm:$0xff]
    %v755 = vld [vmem:[#allocation2 + $0x1280] sm:$0xff]
    %v756 = vld [vmem:[#allocation2 + $0x1288] sm:$0xff]
    %v757 = vld [vmem:[#allocation2 + $0x1290] sm:$0xff]
    %v758 = vld [vmem:[#allocation2 + $0x1298] sm:$0xff]
    %v759 = vld [vmem:[#allocation2 + $0x12a0] sm:$0xff]
    %v760 = vld [vmem:[#allocation2 + $0x12a8] sm:$0xff]
    %v761 = vld [vmem:[#allocation2 + $0x12b0] sm:$0xff]
    %v762 = vld [vmem:[#allocation2 + $0x12b8] sm:$0xff]
    %v763 = vld [vmem:[#allocation2 + $0x12c0] sm:$0xff]
    %v764 = vld [vmem:[#allocation2 + $0x12c8] sm:$0xff]
    %v765 = vld [vmem:[#allocation2 + $0x12d0] sm:$0xff]
    %v766 = vld [vmem:[#allocation2 + $0x12d8] sm:$0xff]
    %v767 = vld [vmem:[#allocation2 + $0x12e0] sm:$0xff]
    %v768 = vld [vmem:[#allocation2 + $0x12e8] sm:$0xff]
    %v769 = vld [vmem:[#allocation2 + $0x12f0] sm:$0xff]
    %v770 = vld [vmem:[#allocation2 + $0x12f8] sm:$0xff]
    %v771 = vld [vmem:[#allocation2 + $0x1300] sm:$0xff]
    %v772 = vld [vmem:[#allocation2 + $0x1308] sm:$0xff]
    %v773 = vld [vmem:[#allocation2 + $0x1310] sm:$0xff]
    %v774 = vld [vmem:[#allocation2 + $0x1318] sm:$0xff]
    %v775 = vld [vmem:[#allocation2 + $0x1320] sm:$0xff]
    %v776 = vld [vmem:[#allocation2 + $0x1328] sm:$0xff]
    %v777 = vld [vmem:[#allocation2 + $0x1330] sm:$0xff]
    %v778 = vld [vmem:[#allocation2 + $0x1338] sm:$0xff]
    %v779 = vld [vmem:[#allocation2 + $0x1340] sm:$0xff]
    %v780 = vld [vmem:[#allocation2 + $0x1348] sm:$0xff]
    %v781 = vld [vmem:[#allocation2 + $0x1350] sm:$0xff]
    %v782 = vld [vmem:[#allocation2 + $0x1358] sm:$0xff]
    %v783 = vld [vmem:[#allocation2 + $0x1360] sm:$0xff]
    %v784 = vld [vmem:[#allocation2 + $0x1368] sm:$0xff]
    %v785 = vld [vmem:[#allocation2 + $0x1370] sm:$0xff]
    %v786 = vld [vmem:[#allocation2 + $0x1378] sm:$0xff]
    %v787 = vld [vmem:[#allocation2 + $0x1380] sm:$0xff]
    %v788 = vld [vmem:[#allocation2 + $0x1388] sm:$0xff]
    %v789 = vld [vmem:[#allocation2 + $0x1390] sm:$0xff]
    %v790 = vld [vmem:[#allocation2 + $0x1398] sm:$0xff]
    %v791 = vld [vmem:[#allocation2 + $0x13a0] sm:$0xff]
    %v792 = vld [vmem:[#allocation2 + $0x13a8] sm:$0xff]
    %v793 = vld [vmem:[#allocation2 + $0x13b0] sm:$0xff]
    %v794 = vld [vmem:[#allocation2 + $0x13b8] sm:$0xff]
    %v795 = vld [vmem:[#allocation2 + $0x13c0] sm:$0xff]
    %v796 = vld [vmem:[#allocation2 + $0x13c8] sm:$0xff]
    %v797 = vld [vmem:[#allocation2 + $0x13d0] sm:$0xff]
    %v798 = vld [vmem:[#allocation2 + $0x13d8] sm:$0xff]
    %v799 = vld [vmem:[#allocation2 + $0x13e0] sm:$0xff]
    %v800 = vld [vmem:[#allocation2 + $0x13e8] sm:$0xff]
    %v801 = vld [vmem:[#allocation2 + $0x13f0] sm:$0xff]
    %v802 = vld [vmem:[#allocation2 + $0x13f8] sm:$0xff]
    %v803 = vld [vmem:[#allocation2 + $0x1400] sm:$0xff]
    %v804 = vld [vmem:[#allocation2 + $0x1408] sm:$0xff]
    %v805 = vld [vmem:[#allocation2 + $0x1410] sm:$0xff]
    %v806 = vld [vmem:[#allocation2 + $0x1418] sm:$0xff]
    %v807 = vld [vmem:[#allocation2 + $0x1420] sm:$0xff]
    %v808 = vld [vmem:[#allocation2 + $0x1428] sm:$0xff]
    %v809 = vld [vmem:[#allocation2 + $0x1430] sm:$0xff]
    %v810 = vld [vmem:[#allocation2 + $0x1438] sm:$0xff]
    %v811 = vld [vmem:[#allocation2 + $0x1440] sm:$0xff]
    %v812 = vld [vmem:[#allocation2 + $0x1448] sm:$0xff]
    %v813 = vld [vmem:[#allocation2 + $0x1450] sm:$0xff]
    %v814 = vld [vmem:[#allocation2 + $0x1458] sm:$0xff]
    %v815 = vld [vmem:[#allocation2 + $0x1460] sm:$0xff]
    %v816 = vld [vmem:[#allocation2 + $0x1468] sm:$0xff]
    %v817 = vld [vmem:[#allocation2 + $0x1470] sm:$0xff]
    %v818 = vld [vmem:[#allocation2 + $0x1478] sm:$0xff]
    %v819 = vld [vmem:[#allocation2 + $0x1480] sm:$0xff]
    %v820 = vld [vmem:[#allocation2 + $0x1488] sm:$0xff]
    %v821 = vld [vmem:[#allocation2 + $0x1490] sm:$0xff]
    %v822 = vld [vmem:[#allocation2 + $0x1498] sm:$0xff]
    %v823 = vld [vmem:[#allocation2 + $0x14a0] sm:$0xff]
    %v824 = vld [vmem:[#allocation2 + $0x14a8] sm:$0xff]
    %v825 = vld [vmem:[#allocation2 + $0x14b0] sm:$0xff]
    %v826 = vld [vmem:[#allocation2 + $0x14b8] sm:$0xff]
    %v827 = vld [vmem:[#allocation2 + $0x14c0] sm:$0xff]
    %v828 = vld [vmem:[#allocation2 + $0x14c8] sm:$0xff]
    %v829 = vld [vmem:[#allocation2 + $0x14d0] sm:$0xff]
    %v830 = vld [vmem:[#allocation2 + $0x14d8] sm:$0xff]
    %v831 = vld [vmem:[#allocation2 + $0x14e0] sm:$0xff]
    %v832 = vld [vmem:[#allocation2 + $0x14e8] sm:$0xff]
    %v833 = vld [vmem:[#allocation2 + $0x14f0] sm:$0xff]
    %v834 = vld [vmem:[#allocation2 + $0x14f8] sm:$0xff]
    %v835 = vld [vmem:[#allocation2 + $0x1500] sm:$0xff]
    %v836 = vld [vmem:[#allocation2 + $0x1508] sm:$0xff]
    %v837 = vld [vmem:[#allocation2 + $0x1510] sm:$0xff]
    %v838 = vld [vmem:[#allocation2 + $0x1518] sm:$0xff]
    %v839 = vld [vmem:[#allocation2 + $0x1520] sm:$0xff]
    %v840 = vld [vmem:[#allocation2 + $0x1528] sm:$0xff]
    %v841 = vld [vmem:[#allocation2 + $0x1530] sm:$0xff]
    %v842 = vld [vmem:[#allocation2 + $0x1538] sm:$0xff]
    %v843 = vld [vmem:[#allocation2 + $0x1540] sm:$0xff]
    %v844 = vld [vmem:[#allocation2 + $0x1548] sm:$0xff]
    %v845 = vld [vmem:[#allocation2 + $0x1550] sm:$0xff]
    %v846 = vld [vmem:[#allocation2 + $0x1558] sm:$0xff]
    %v847 = vld [vmem:[#allocation2 + $0x1560] sm:$0xff]
    %v848 = vld [vmem:[#allocation2 + $0x1568] sm:$0xff]
    %v849 = vld [vmem:[#allocation2 + $0x1570] sm:$0xff]
    %v850 = vld [vmem:[#allocation2 + $0x1578] sm:$0xff]
    %v851 = vld [vmem:[#allocation2 + $0x1580] sm:$0xff]
    %v852 = vld [vmem:[#allocation2 + $0x1588] sm:$0xff]
    %v853 = vld [vmem:[#allocation2 + $0x1590] sm:$0xff]
    %v854 = vld [vmem:[#allocation2 + $0x1598] sm:$0xff]
    %v855 = vld [vmem:[#allocation2 + $0x15a0] sm:$0xff]
    %v856 = vld [vmem:[#allocation2 + $0x15a8] sm:$0xff]
    %v857 = vld [vmem:[#allocation2 + $0x15b0] sm:$0xff]
    %v858 = vld [vmem:[#allocation2 + $0x15b8] sm:$0xff]
    %v859 = vld [vmem:[#allocation2 + $0x15c0] sm:$0xff]
    %v860 = vld [vmem:[#allocation2 + $0x15c8] sm:$0xff]
    %v861 = vld [vmem:[#allocation2 + $0x15d0] sm:$0xff]
    %v862 = vld [vmem:[#allocation2 + $0x15d8] sm:$0xff]
    %v863 = vld [vmem:[#allocation2 + $0x15e0] sm:$0xff]
    %v864 = vld [vmem:[#allocation2 + $0x15e8] sm:$0xff]
    %v865 = vld [vmem:[#allocation2 + $0x15f0] sm:$0xff]
    %v866 = vld [vmem:[#allocation2 + $0x15f8] sm:$0xff]
    %v867 = vld [vmem:[#allocation2 + $0x1600] sm:$0xff]
    %v868 = vld [vmem:[#allocation2 + $0x1608] sm:$0xff]
    %v869 = vld [vmem:[#allocation2 + $0x1610] sm:$0xff]
    %v870 = vld [vmem:[#allocation2 + $0x1618] sm:$0xff]
    %v871 = vld [vmem:[#allocation2 + $0x1620] sm:$0xff]
    %v872 = vld [vmem:[#allocation2 + $0x1628] sm:$0xff]
    %v873 = vld [vmem:[#allocation2 + $0x1630] sm:$0xff]
    %v874 = vld [vmem:[#allocation2 + $0x1638] sm:$0xff]
    %v875 = vld [vmem:[#allocation2 + $0x1640] sm:$0xff]
    %v876 = vld [vmem:[#allocation2 + $0x1648] sm:$0xff]
    %v877 = vld [vmem:[#allocation2 + $0x1650] sm:$0xff]
    %v878 = vld [vmem:[#allocation2 + $0x1658] sm:$0xff]
    %v879 = vld [vmem:[#allocation2 + $0x1660] sm:$0xff]
    %v880 = vld [vmem:[#allocation2 + $0x1668] sm:$0xff]
    %v881 = vld [vmem:[#allocation2 + $0x1670] sm:$0xff]
    %v882 = vld [vmem:[#allocation2 + $0x1678] sm:$0xff]
    %v883 = vld [vmem:[#allocation2 + $0x1680] sm:$0xff]
    %v884 = vld [vmem:[#allocation2 + $0x1688] sm:$0xff]
    %v885 = vld [vmem:[#allocation2 + $0x1690] sm:$0xff]
    %v886 = vld [vmem:[#allocation2 + $0x1698] sm:$0xff]
    %v887 = vld [vmem:[#allocation2 + $0x16a0] sm:$0xff]
    %v888 = vld [vmem:[#allocation2 + $0x16a8] sm:$0xff]
    %v889 = vld [vmem:[#allocation2 + $0x16b0] sm:$0xff]
    %v890 = vld [vmem:[#allocation2 + $0x16b8] sm:$0xff]
    %v891 = vld [vmem:[#allocation2 + $0x16c0] sm:$0xff]
    %v892 = vld [vmem:[#allocation2 + $0x16c8] sm:$0xff]
    %v893 = vld [vmem:[#allocation2 + $0x16d0] sm:$0xff]
    %v894 = vld [vmem:[#allocation2 + $0x16d8] sm:$0xff]
    %v895 = vld [vmem:[#allocation2 + $0x16e0] sm:$0xff]
    %v896 = vld [vmem:[#allocation2 + $0x16e8] sm:$0xff]
    %v897 = vld [vmem:[#allocation2 + $0x16f0] sm:$0xff]
    %v898 = vld [vmem:[#allocation2 + $0x16f8] sm:$0xff]
    %v899 = vld [vmem:[#allocation2 + $0x1700] sm:$0xff]
    %v900 = vld [vmem:[#allocation2 + $0x1708] sm:$0xff]
    %v901 = vld [vmem:[#allocation2 + $0x1710] sm:$0xff]
    %v902 = vld [vmem:[#allocation2 + $0x1718] sm:$0xff]
    %v903 = vld [vmem:[#allocation2 + $0x1720] sm:$0xff]
    %v904 = vld [vmem:[#allocation2 + $0x1728] sm:$0xff]
    %v905 = vld [vmem:[#allocation2 + $0x1730] sm:$0xff]
    %v906 = vld [vmem:[#allocation2 + $0x1738] sm:$0xff]
    %v907 = vld [vmem:[#allocation2 + $0x1740] sm:$0xff]
    %v908 = vld [vmem:[#allocation2 + $0x1748] sm:$0xff]
    %v909 = vld [vmem:[#allocation2 + $0x1750] sm:$0xff]
    %v910 = vld [vmem:[#allocation2 + $0x1758] sm:$0xff]
    %v911 = vld [vmem:[#allocation2 + $0x1760] sm:$0xff]
    %v912 = vld [vmem:[#allocation2 + $0x1768] sm:$0xff]
    %v913 = vld [vmem:[#allocation2 + $0x1770] sm:$0xff]
    %v914 = vld [vmem:[#allocation2 + $0x1778] sm:$0xff]
    %v915 = vld [vmem:[#allocation2 + $0x1780] sm:$0xff]
    %v916 = vld [vmem:[#allocation2 + $0x1788] sm:$0xff]
    %v917 = vld [vmem:[#allocation2 + $0x1790] sm:$0xff]
    %v918 = vld [vmem:[#allocation2 + $0x1798] sm:$0xff]
    %v919 = vld [vmem:[#allocation2 + $0x17a0] sm:$0xff]
    %v920 = vld [vmem:[#allocation2 + $0x17a8] sm:$0xff]
    %v921 = vld [vmem:[#allocation2 + $0x17b0] sm:$0xff]
    %v922 = vld [vmem:[#allocation2 + $0x17b8] sm:$0xff]
    %v923 = vld [vmem:[#allocation2 + $0x17c0] sm:$0xff]
    %v924 = vld [vmem:[#allocation2 + $0x17c8] sm:$0xff]
    %v925 = vld [vmem:[#allocation2 + $0x17d0] sm:$0xff]
    %v926 = vld [vmem:[#allocation2 + $0x17d8] sm:$0xff]
    %v927 = vld [vmem:[#allocation2 + $0x17e0] sm:$0xff]
    %v928 = vld [vmem:[#allocation2 + $0x17e8] sm:$0xff]
    %v929 = vld [vmem:[#allocation2 + $0x17f0] sm:$0xff]
    %v930 = vld [vmem:[#allocation2 + $0x17f8] sm:$0xff]
    %v931 = vld [vmem:[#allocation2 + $0x1800] sm:$0xff]
    %v932 = vld [vmem:[#allocation2 + $0x1808] sm:$0xff]
    %v933 = vld [vmem:[#allocation2 + $0x1810] sm:$0xff]
    %v934 = vld [vmem:[#allocation2 + $0x1818] sm:$0xff]
    %v935 = vld [vmem:[#allocation2 + $0x1820] sm:$0xff]
    %v936 = vld [vmem:[#allocation2 + $0x1828] sm:$0xff]
    %v937 = vld [vmem:[#allocation2 + $0x1830] sm:$0xff]
    %v938 = vld [vmem:[#allocation2 + $0x1838] sm:$0xff]
    %v939 = vld [vmem:[#allocation2 + $0x1840] sm:$0xff]
    %v940 = vld [vmem:[#allocation2 + $0x1848] sm:$0xff]
    %v941 = vld [vmem:[#allocation2 + $0x1850] sm:$0xff]
    %v942 = vld [vmem:[#allocation2 + $0x1858] sm:$0xff]
    %v943 = vld [vmem:[#allocation2 + $0x1860] sm:$0xff]
    %v944 = vld [vmem:[#allocation2 + $0x1868] sm:$0xff]
    %v945 = vld [vmem:[#allocation2 + $0x1870] sm:$0xff]
    %v946 = vld [vmem:[#allocation2 + $0x1878] sm:$0xff]
    %v947 = vld [vmem:[#allocation2 + $0x1880] sm:$0xff]
    %v948 = vld [vmem:[#allocation2 + $0x1888] sm:$0xff]
    %v949 = vld [vmem:[#allocation2 + $0x1890] sm:$0xff]
    %v950 = vld [vmem:[#allocation2 + $0x1898] sm:$0xff]
    %v951 = vld [vmem:[#allocation2 + $0x18a0] sm:$0xff]
    %v952 = vld [vmem:[#allocation2 + $0x18a8] sm:$0xff]
    %v953 = vld [vmem:[#allocation2 + $0x18b0] sm:$0xff]
    %v954 = vld [vmem:[#allocation2 + $0x18b8] sm:$0xff]
    %v955 = vld [vmem:[#allocation2 + $0x18c0] sm:$0xff]
    %v956 = vld [vmem:[#allocation2 + $0x18c8] sm:$0xff]
    %v957 = vld [vmem:[#allocation2 + $0x18d0] sm:$0xff]
    %v958 = vld [vmem:[#allocation2 + $0x18d8] sm:$0xff]
    %v959 = vld [vmem:[#allocation2 + $0x18e0] sm:$0xff]
    %v960 = vld [vmem:[#allocation2 + $0x18e8] sm:$0xff]
    %v961 = vld [vmem:[#allocation2 + $0x18f0] sm:$0xff]
    %v962 = vld [vmem:[#allocation2 + $0x18f8] sm:$0xff]
    %v963 = vld [vmem:[#allocation2 + $0x1900] sm:$0xff]
    %v964 = vld [vmem:[#allocation2 + $0x1908] sm:$0xff]
    %v965 = vld [vmem:[#allocation2 + $0x1910] sm:$0xff]
    %v966 = vld [vmem:[#allocation2 + $0x1918] sm:$0xff]
    %v967 = vld [vmem:[#allocation2 + $0x1920] sm:$0xff]
    %v968 = vld [vmem:[#allocation2 + $0x1928] sm:$0xff]
    %v969 = vld [vmem:[#allocation2 + $0x1930] sm:$0xff]
    %v970 = vld [vmem:[#allocation2 + $0x1938] sm:$0xff]
    %v971 = vld [vmem:[#allocation2 + $0x1940] sm:$0xff]
    %v972 = vld [vmem:[#allocation2 + $0x1948] sm:$0xff]
    %v973 = vld [vmem:[#allocation2 + $0x1950] sm:$0xff]
    %v974 = vld [vmem:[#allocation2 + $0x1958] sm:$0xff]
    %v975 = vld [vmem:[#allocation2 + $0x1960] sm:$0xff]
    %v976 = vld [vmem:[#allocation2 + $0x1968] sm:$0xff]
    %v977 = vld [vmem:[#allocation2 + $0x1970] sm:$0xff]
    %v978 = vld [vmem:[#allocation2 + $0x1978] sm:$0xff]
    %v979 = vld [vmem:[#allocation2 + $0x1980] sm:$0xff]
    %v980 = vld [vmem:[#allocation2 + $0x1988] sm:$0xff]
    %v981 = vld [vmem:[#allocation2 + $0x1990] sm:$0xff]
    %v982 = vld [vmem:[#allocation2 + $0x1998] sm:$0xff]
    %v983 = vld [vmem:[#allocation2 + $0x19a0] sm:$0xff]
    %v984 = vld [vmem:[#allocation2 + $0x19a8] sm:$0xff]
    %v985 = vld [vmem:[#allocation2 + $0x19b0] sm:$0xff]
    %v986 = vld [vmem:[#allocation2 + $0x19b8] sm:$0xff]
    %v987 = vld [vmem:[#allocation2 + $0x19c0] sm:$0xff]
    %v988 = vld [vmem:[#allocation2 + $0x19c8] sm:$0xff]
    %v989 = vld [vmem:[#allocation2 + $0x19d0] sm:$0xff]
    %v990 = vld [vmem:[#allocation2 + $0x19d8] sm:$0xff]
    %v991 = vld [vmem:[#allocation2 + $0x19e0] sm:$0xff]
    %v992 = vld [vmem:[#allocation2 + $0x19e8] sm:$0xff]
    %v993 = vld [vmem:[#allocation2 + $0x19f0] sm:$0xff]
    %v994 = vld [vmem:[#allocation2 + $0x19f8] sm:$0xff]
    %v995 = vld [vmem:[#allocation2 + $0x1a00] sm:$0xff]
    %v996 = vld [vmem:[#allocation2 + $0x1a08] sm:$0xff]
    %v997 = vld [vmem:[#allocation2 + $0x1a10] sm:$0xff]
    %v998 = vld [vmem:[#allocation2 + $0x1a18] sm:$0xff]
    %v999 = vld [vmem:[#allocation2 + $0x1a20] sm:$0xff]
    %v1000 = vld [vmem:[#allocation2 + $0x1a28] sm:$0xff]
    %v1001 = vld [vmem:[#allocation2 + $0x1a30] sm:$0xff]
    %v1002 = vld [vmem:[#allocation2 + $0x1a38] sm:$0xff]
    %v1003 = vld [vmem:[#allocation2 + $0x1a40] sm:$0xff]
    %v1004 = vld [vmem:[#allocation2 + $0x1a48] sm:$0xff]
    %v1005 = vld [vmem:[#allocation2 + $0x1a50] sm:$0xff]
    %v1006 = vld [vmem:[#allocation2 + $0x1a58] sm:$0xff]
    %v1007 = vld [vmem:[#allocation2 + $0x1a60] sm:$0xff]
    %v1008 = vld [vmem:[#allocation2 + $0x1a68] sm:$0xff]
    %v1009 = vld [vmem:[#allocation2 + $0x1a70] sm:$0xff]
    %v1010 = vld [vmem:[#allocation2 + $0x1a78] sm:$0xff]
    %v1011 = vld [vmem:[#allocation2 + $0x1a80] sm:$0xff]
    %v1012 = vld [vmem:[#allocation2 + $0x1a88] sm:$0xff]
    %v1013 = vld [vmem:[#allocation2 + $0x1a90] sm:$0xff]
    %v1014 = vld [vmem:[#allocation2 + $0x1a98] sm:$0xff]
    %v1015 = vld [vmem:[#allocation2 + $0x1aa0] sm:$0xff]
    %v1016 = vld [vmem:[#allocation2 + $0x1aa8] sm:$0xff]
    %v1017 = vld [vmem:[#allocation2 + $0x1ab0] sm:$0xff]
    %v1018 = vld [vmem:[#allocation2 + $0x1ab8] sm:$0xff]
    %v1019 = vld [vmem:[#allocation2 + $0x1ac0] sm:$0xff]
    %v1020 = vld [vmem:[#allocation2 + $0x1ac8] sm:$0xff]
    %v1021 = vld [vmem:[#allocation2 + $0x1ad0] sm:$0xff]
    %v1022 = vld [vmem:[#allocation2 + $0x1ad8] sm:$0xff]
    %v1023 = vld [vmem:[#allocation2 + $0x1ae0] sm:$0xff]
    %v1024 = vld [vmem:[#allocation2 + $0x1ae8] sm:$0xff]
    %v1025 = vld [vmem:[#allocation2 + $0x1af0] sm:$0xff]
    %v1026 = vld [vmem:[#allocation2 + $0x1af8] sm:$0xff]
    %v1027 = vld [vmem:[#allocation2 + $0x1b00] sm:$0xff]
    %v1028 = vld [vmem:[#allocation2 + $0x1b08] sm:$0xff]
    %v1029 = vld [vmem:[#allocation2 + $0x1b10] sm:$0xff]
    %v1030 = vld [vmem:[#allocation2 + $0x1b18] sm:$0xff]
    %v1031 = vld [vmem:[#allocation2 + $0x1b20] sm:$0xff]
    %v1032 = vld [vmem:[#allocation2 + $0x1b28] sm:$0xff]
    %v1033 = vld [vmem:[#allocation2 + $0x1b30] sm:$0xff]
    %v1034 = vld [vmem:[#allocation2 + $0x1b38] sm:$0xff]
    %v1035 = vld [vmem:[#allocation2 + $0x1b40] sm:$0xff]
    %v1036 = vld [vmem:[#allocation2 + $0x1b48] sm:$0xff]
    %v1037 = vld [vmem:[#allocation2 + $0x1b50] sm:$0xff]
    %v1038 = vld [vmem:[#allocation2 + $0x1b58] sm:$0xff]
    %v1039 = vld [vmem:[#allocation2 + $0x1b60] sm:$0xff]
    %v1040 = vld [vmem:[#allocation2 + $0x1b68] sm:$0xff]
    %v1041 = vld [vmem:[#allocation2 + $0x1b70] sm:$0xff]
    %v1042 = vld [vmem:[#allocation2 + $0x1b78] sm:$0xff]
    %v1043 = vld [vmem:[#allocation2 + $0x1b80] sm:$0xff]
    %v1044 = vld [vmem:[#allocation2 + $0x1b88] sm:$0xff]
    %v1045 = vld [vmem:[#allocation2 + $0x1b90] sm:$0xff]
    %v1046 = vld [vmem:[#allocation2 + $0x1b98] sm:$0xff]
    %v1047 = vld [vmem:[#allocation2 + $0x1ba0] sm:$0xff]
    %v1048 = vld [vmem:[#allocation2 + $0x1ba8] sm:$0xff]
    %v1049 = vld [vmem:[#allocation2 + $0x1bb0] sm:$0xff]
    %v1050 = vld [vmem:[#allocation2 + $0x1bb8] sm:$0xff]
    %v1051 = vld [vmem:[#allocation2 + $0x1bc0] sm:$0xff]
    %v1052 = vld [vmem:[#allocation2 + $0x1bc8] sm:$0xff]
    %v1053 = vld [vmem:[#allocation2 + $0x1bd0] sm:$0xff]
    %v1054 = vld [vmem:[#allocation2 + $0x1bd8] sm:$0xff]
    %v1055 = vld [vmem:[#allocation2 + $0x1be0] sm:$0xff]
    %v1056 = vld [vmem:[#allocation2 + $0x1be8] sm:$0xff]
    %v1057 = vld [vmem:[#allocation2 + $0x1bf0] sm:$0xff]
    %v1058 = vld [vmem:[#allocation2 + $0x1bf8] sm:$0xff]
    %v1059 = vld [vmem:[#allocation2 + $0x1c00] sm:$0xff]
    %v1060 = vld [vmem:[#allocation2 + $0x1c08] sm:$0xff]
    %v1061 = vld [vmem:[#allocation2 + $0x1c10] sm:$0xff]
    %v1062 = vld [vmem:[#allocation2 + $0x1c18] sm:$0xff]
    %v1063 = vld [vmem:[#allocation2 + $0x1c20] sm:$0xff]
    %v1064 = vld [vmem:[#allocation2 + $0x1c28] sm:$0xff]
    %v1065 = vld [vmem:[#allocation2 + $0x1c30] sm:$0xff]
    %v1066 = vld [vmem:[#allocation2 + $0x1c38] sm:$0xff]
    %v1067 = vld [vmem:[#allocation2 + $0x1c40] sm:$0xff]
    %v1068 = vld [vmem:[#allocation2 + $0x1c48] sm:$0xff]
    %v1069 = vld [vmem:[#allocation2 + $0x1c50] sm:$0xff]
    %v1070 = vld [vmem:[#allocation2 + $0x1c58] sm:$0xff]
    %v1071 = vld [vmem:[#allocation2 + $0x1c60] sm:$0xff]
    %v1072 = vld [vmem:[#allocation2 + $0x1c68] sm:$0xff]
    %v1073 = vld [vmem:[#allocation2 + $0x1c70] sm:$0xff]
    %v1074 = vld [vmem:[#allocation2 + $0x1c78] sm:$0xff]
    %v1075 = vld [vmem:[#allocation2 + $0x1c80] sm:$0xff]
    %v1076 = vld [vmem:[#allocation2 + $0x1c88] sm:$0xff]
    %v1077 = vld [vmem:[#allocation2 + $0x1c90] sm:$0xff]
    %v1078 = vld [vmem:[#allocation2 + $0x1c98] sm:$0xff]
    %v1079 = vld [vmem:[#allocation2 + $0x1ca0] sm:$0xff]
    %v1080 = vld [vmem:[#allocation2 + $0x1ca8] sm:$0xff]
    %v1081 = vld [vmem:[#allocation2 + $0x1cb0] sm:$0xff]
    %v1082 = vld [vmem:[#allocation2 + $0x1cb8] sm:$0xff]
    %v1083 = vld [vmem:[#allocation2 + $0x1cc0] sm:$0xff]
    %v1084 = vld [vmem:[#allocation2 + $0x1cc8] sm:$0xff]
    %v1085 = vld [vmem:[#allocation2 + $0x1cd0] sm:$0xff]
    %v1086 = vld [vmem:[#allocation2 + $0x1cd8] sm:$0xff]
    %v1087 = vld [vmem:[#allocation2 + $0x1ce0] sm:$0xff]
    %v1088 = vld [vmem:[#allocation2 + $0x1ce8] sm:$0xff]
    %v1089 = vld [vmem:[#allocation2 + $0x1cf0] sm:$0xff]
    %v1090 = vld [vmem:[#allocation2 + $0x1cf8] sm:$0xff]
    %v1091 = vld [vmem:[#allocation2 + $0x1d00] sm:$0xff]
    %v1092 = vld [vmem:[#allocation2 + $0x1d08] sm:$0xff]
    %v1093 = vld [vmem:[#allocation2 + $0x1d10] sm:$0xff]
    %v1094 = vld [vmem:[#allocation2 + $0x1d18] sm:$0xff]
    %v1095 = vld [vmem:[#allocation2 + $0x1d20] sm:$0xff]
    %v1096 = vld [vmem:[#allocation2 + $0x1d28] sm:$0xff]
    %v1097 = vld [vmem:[#allocation2 + $0x1d30] sm:$0xff]
    %v1098 = vld [vmem:[#allocation2 + $0x1d38] sm:$0xff]
    %v1099 = vld [vmem:[#allocation2 + $0x1d40] sm:$0xff]
    %v1100 = vld [vmem:[#allocation2 + $0x1d48] sm:$0xff]
    %v1101 = vld [vmem:[#allocation2 + $0x1d50] sm:$0xff]
    %v1102 = vld [vmem:[#allocation2 + $0x1d58] sm:$0xff]
    %v1103 = vld [vmem:[#allocation2 + $0x1d60] sm:$0xff]
    %v1104 = vld [vmem:[#allocation2 + $0x1d68] sm:$0xff]
    %v1105 = vld [vmem:[#allocation2 + $0x1d70] sm:$0xff]
    %v1106 = vld [vmem:[#allocation2 + $0x1d78] sm:$0xff]
    %v1107 = vld [vmem:[#allocation2 + $0x1d80] sm:$0xff]
    %v1108 = vld [vmem:[#allocation2 + $0x1d88] sm:$0xff]
    %v1109 = vld [vmem:[#allocation2 + $0x1d90] sm:$0xff]
    %v1110 = vld [vmem:[#allocation2 + $0x1d98] sm:$0xff]
    %v1111 = vld [vmem:[#allocation2 + $0x1da0] sm:$0xff]
    %v1112 = vld [vmem:[#allocation2 + $0x1da8] sm:$0xff]
    %v1113 = vld [vmem:[#allocation2 + $0x1db0] sm:$0xff]
    %v1114 = vld [vmem:[#allocation2 + $0x1db8] sm:$0xff]
    %v1115 = vld [vmem:[#allocation2 + $0x1dc0] sm:$0xff]
    %v1116 = vld [vmem:[#allocation2 + $0x1dc8] sm:$0xff]
    %v1117 = vld [vmem:[#allocation2 + $0x1dd0] sm:$0xff]
    %v1118 = vld [vmem:[#allocation2 + $0x1dd8] sm:$0xff]
    %v1119 = vld [vmem:[#allocation2 + $0x1de0] sm:$0xff]
    %v1120 = vld [vmem:[#allocation2 + $0x1de8] sm:$0xff]
    %v1121 = vld [vmem:[#allocation2 + $0x1df0] sm:$0xff]
    %v1122 = vld [vmem:[#allocation2 + $0x1df8] sm:$0xff]
    %v1123 = vld [vmem:[#allocation2 + $0x1e00] sm:$0xff]
    %v1124 = vld [vmem:[#allocation2 + $0x1e08] sm:$0xff]
    %v1125 = vld [vmem:[#allocation2 + $0x1e10] sm:$0xff]
    %v1126 = vld [vmem:[#allocation2 + $0x1e18] sm:$0xff]
    %v1127 = vld [vmem:[#allocation2 + $0x1e20] sm:$0xff]
    %v1128 = vld [vmem:[#allocation2 + $0x1e28] sm:$0xff]
    %v1129 = vld [vmem:[#allocation2 + $0x1e30] sm:$0xff]
    %v1130 = vld [vmem:[#allocation2 + $0x1e38] sm:$0xff]
    %v1131 = vld [vmem:[#allocation2 + $0x1e40] sm:$0xff]
    %v1132 = vld [vmem:[#allocation2 + $0x1e48] sm:$0xff]
    %v1133 = vld [vmem:[#allocation2 + $0x1e50] sm:$0xff]
    %v1134 = vld [vmem:[#allocation2 + $0x1e58] sm:$0xff]
    %v1135 = vld [vmem:[#allocation2 + $0x1e60] sm:$0xff]
    %v1136 = vld [vmem:[#allocation2 + $0x1e68] sm:$0xff]
    %v1137 = vld [vmem:[#allocation2 + $0x1e70] sm:$0xff]
    %v1138 = vld [vmem:[#allocation2 + $0x1e78] sm:$0xff]
    %v1139 = vld [vmem:[#allocation2 + $0x1e80] sm:$0xff]
    %v1140 = vld [vmem:[#allocation2 + $0x1e88] sm:$0xff]
    %v1141 = vld [vmem:[#allocation2 + $0x1e90] sm:$0xff]
    %v1142 = vld [vmem:[#allocation2 + $0x1e98] sm:$0xff]
    %v1143 = vld [vmem:[#allocation2 + $0x1ea0] sm:$0xff]
    %v1144 = vld [vmem:[#allocation2 + $0x1ea8] sm:$0xff]
    %v1145 = vld [vmem:[#allocation2 + $0x1eb0] sm:$0xff]
    %v1146 = vld [vmem:[#allocation2 + $0x1eb8] sm:$0xff]
    %v1147 = vld [vmem:[#allocation2 + $0x1ec0] sm:$0xff]
    %v1148 = vld [vmem:[#allocation2 + $0x1ec8] sm:$0xff]
    %v1149 = vld [vmem:[#allocation2 + $0x1ed0] sm:$0xff]
    %v1150 = vld [vmem:[#allocation2 + $0x1ed8] sm:$0xff]
    %v1151 = vld [vmem:[#allocation2 + $0x1ee0] sm:$0xff]
    %v1152 = vld [vmem:[#allocation2 + $0x1ee8] sm:$0xff]
    %v1153 = vld [vmem:[#allocation2 + $0x1ef0] sm:$0xff]
    %v1154 = vld [vmem:[#allocation2 + $0x1ef8] sm:$0xff]
    %v1155 = vld [vmem:[#allocation2 + $0x1f00] sm:$0xff]
    %v1156 = vld [vmem:[#allocation2 + $0x1f08] sm:$0xff]
    %v1157 = vld [vmem:[#allocation2 + $0x1f10] sm:$0xff]
    %v1158 = vld [vmem:[#allocation2 + $0x1f18] sm:$0xff]
    %v1159 = vld [vmem:[#allocation2 + $0x1f20] sm:$0xff]
    %v1160 = vld [vmem:[#allocation2 + $0x1f28] sm:$0xff]
    %v1161 = vld [vmem:[#allocation2 + $0x1f30] sm:$0xff]
    %v1162 = vld [vmem:[#allocation2 + $0x1f38] sm:$0xff]
    %v1163 = vld [vmem:[#allocation2 + $0x1f40] sm:$0xff]
    %v1164 = vld [vmem:[#allocation2 + $0x1f48] sm:$0xff]
    %v1165 = vld [vmem:[#allocation2 + $0x1f50] sm:$0xff]
    %v1166 = vld [vmem:[#allocation2 + $0x1f58] sm:$0xff]
    %v1167 = vld [vmem:[#allocation2 + $0x1f60] sm:$0xff]
    %v1168 = vld [vmem:[#allocation2 + $0x1f68] sm:$0xff]
    %v1169 = vld [vmem:[#allocation2 + $0x1f70] sm:$0xff]
    %v1170 = vld [vmem:[#allocation2 + $0x1f78] sm:$0xff]
    %v1171 = vld [vmem:[#allocation2 + $0x1f80] sm:$0xff]
    %v1172 = vld [vmem:[#allocation2 + $0x1f88] sm:$0xff]
    %v1173 = vld [vmem:[#allocation2 + $0x1f90] sm:$0xff]
    %v1174 = vld [vmem:[#allocation2 + $0x1f98] sm:$0xff]
    %v1175 = vld [vmem:[#allocation2 + $0x1fa0] sm:$0xff]
    %v1176 = vld [vmem:[#allocation2 + $0x1fa8] sm:$0xff]
    %v1177 = vld [vmem:[#allocation2 + $0x1fb0] sm:$0xff]
    %v1178 = vld [vmem:[#allocation2 + $0x1fb8] sm:$0xff]
    %v1179 = vld [vmem:[#allocation2 + $0x1fc0] sm:$0xff]
    %v1180 = vld [vmem:[#allocation2 + $0x1fc8] sm:$0xff]
    %v1181 = vld [vmem:[#allocation2 + $0x1fd0] sm:$0xff]
    %v1182 = vld [vmem:[#allocation2 + $0x1fd8] sm:$0xff]
    %v1183 = vld [vmem:[#allocation2 + $0x1fe0] sm:$0xff]
    %v1184 = vld [vmem:[#allocation2 + $0x1fe8] sm:$0xff]
    %v1185 = vld [vmem:[#allocation2 + $0x1ff0] sm:$0xff]
    %v1186 = vld [vmem:[#allocation2 + $0x1ff8] sm:$0xff]
    %v1187 = vld [vmem:[#allocation2 + $0x2000] sm:$0xff]
    %v1188 = vld [vmem:[#allocation2 + $0x2008] sm:$0xff]
    %v1189 = vld [vmem:[#allocation2 + $0x2010] sm:$0xff]
    %v1190 = vld [vmem:[#allocation2 + $0x2018] sm:$0xff]
    %v1191 = vld [vmem:[#allocation2 + $0x2020] sm:$0xff]
    %v1192 = vld [vmem:[#allocation2 + $0x2028] sm:$0xff]
    %v1193 = vld [vmem:[#allocation2 + $0x2030] sm:$0xff]
    %v1194 = vld [vmem:[#allocation2 + $0x2038] sm:$0xff]
    %v1195 = vld [vmem:[#allocation2 + $0x2040] sm:$0xff]
    %v1196 = vld [vmem:[#allocation2 + $0x2048] sm:$0xff]
    %v1197 = vld [vmem:[#allocation2 + $0x2050] sm:$0xff]
    %v1198 = vld [vmem:[#allocation2 + $0x2058] sm:$0xff]
    %v1199 = vld [vmem:[#allocation2 + $0x2060] sm:$0xff]
    %v1200 = vld [vmem:[#allocation2 + $0x2068] sm:$0xff]
    %v1201 = vld [vmem:[#allocation2 + $0x2070] sm:$0xff]
    %v1202 = vld [vmem:[#allocation2 + $0x2078] sm:$0xff]
    %v1203 = vld [vmem:[#allocation2 + $0x2080] sm:$0xff]
    %v1204 = vld [vmem:[#allocation2 + $0x2088] sm:$0xff]
    %v1205 = vld [vmem:[#allocation2 + $0x2090] sm:$0xff]
    %v1206 = vld [vmem:[#allocation2 + $0x2098] sm:$0xff]
    %v1207 = vld [vmem:[#allocation2 + $0x20a0] sm:$0xff]
    %v1208 = vld [vmem:[#allocation2 + $0x20a8] sm:$0xff]
    %v1209 = vld [vmem:[#allocation2 + $0x20b0] sm:$0xff]
    %v1210 = vld [vmem:[#allocation2 + $0x20b8] sm:$0xff]
    %v1211 = vld [vmem:[#allocation2 + $0x20c0] sm:$0xff]
    %v1212 = vld [vmem:[#allocation2 + $0x20c8] sm:$0xff]
    %v1213 = vld [vmem:[#allocation2 + $0x20d0] sm:$0xff]
    %v1214 = vld [vmem:[#allocation2 + $0x20d8] sm:$0xff]
    %v1215 = vld [vmem:[#allocation2 + $0x20e0] sm:$0xff]
    %v1216 = vld [vmem:[#allocation2 + $0x20e8] sm:$0xff]
    %v1217 = vld [vmem:[#allocation2 + $0x20f0] sm:$0xff]
    %v1218 = vld [vmem:[#allocation2 + $0x20f8] sm:$0xff]
    %v1219 = vld [vmem:[#allocation2 + $0x2100] sm:$0xff]
    %v1220 = vld [vmem:[#allocation2 + $0x2108] sm:$0xff]
    %v1221 = vld [vmem:[#allocation2 + $0x2110] sm:$0xff]
    %v1222 = vld [vmem:[#allocation2 + $0x2118] sm:$0xff]
    %v1223 = vld [vmem:[#allocation2 + $0x2120] sm:$0xff]
    %v1224 = vld [vmem:[#allocation2 + $0x2128] sm:$0xff]
    %v1225 = vld [vmem:[#allocation2 + $0x2130] sm:$0xff]
    %v1226 = vld [vmem:[#allocation2 + $0x2138] sm:$0xff]
    %v1227 = vld [vmem:[#allocation2 + $0x2140] sm:$0xff]
    %v1228 = vld [vmem:[#allocation2 + $0x2148] sm:$0xff]
    %v1229 = vld [vmem:[#allocation2 + $0x2150] sm:$0xff]
    %v1230 = vld [vmem:[#allocation2 + $0x2158] sm:$0xff]
    %v1231 = vld [vmem:[#allocation2 + $0x2160] sm:$0xff]
    %v1232 = vld [vmem:[#allocation2 + $0x2168] sm:$0xff]
    %v1233 = vld [vmem:[#allocation2 + $0x2170] sm:$0xff]
    %v1234 = vld [vmem:[#allocation2 + $0x2178] sm:$0xff]
    %v1235 = vld [vmem:[#allocation2 + $0x2180] sm:$0xff]
    %v1236 = vld [vmem:[#allocation2 + $0x2188] sm:$0xff]
    %v1237 = vld [vmem:[#allocation2 + $0x2190] sm:$0xff]
    %v1238 = vld [vmem:[#allocation2 + $0x2198] sm:$0xff]
    %v1239 = vld [vmem:[#allocation2 + $0x21a0] sm:$0xff]
    %v1240 = vld [vmem:[#allocation2 + $0x21a8] sm:$0xff]
    %v1241 = vld [vmem:[#allocation2 + $0x21b0] sm:$0xff]
    %v1242 = vld [vmem:[#allocation2 + $0x21b8] sm:$0xff]
    %v1243 = vld [vmem:[#allocation2 + $0x21c0] sm:$0xff]
    %v1244 = vld [vmem:[#allocation2 + $0x21c8] sm:$0xff]
    %v1245 = vld [vmem:[#allocation2 + $0x21d0] sm:$0xff]
    %v1246 = vld [vmem:[#allocation2 + $0x21d8] sm:$0xff]
    %v1247 = vld [vmem:[#allocation2 + $0x21e0] sm:$0xff]
    %v1248 = vld [vmem:[#allocation2 + $0x21e8] sm:$0xff]
    %v1249 = vld [vmem:[#allocation2 + $0x21f0] sm:$0xff]
    %v1250 = vld [vmem:[#allocation2 + $0x21f8] sm:$0xff]
    %v1251 = vld [vmem:[#allocation2 + $0x2200] sm:$0xff]
    %v1252 = vld [vmem:[#allocation2 + $0x2208] sm:$0xff]
    %v1253 = vld [vmem:[#allocation2 + $0x2210] sm:$0xff]
    %v1254 = vld [vmem:[#allocation2 + $0x2218] sm:$0xff]
    %v1255 = vld [vmem:[#allocation2 + $0x2220] sm:$0xff]
    %v1256 = vld [vmem:[#allocation2 + $0x2228] sm:$0xff]
    %v1257 = vld [vmem:[#allocation2 + $0x2230] sm:$0xff]
    %v1258 = vld [vmem:[#allocation2 + $0x2238] sm:$0xff]
    %v1259 = vld [vmem:[#allocation2 + $0x2240] sm:$0xff]
    %v1260 = vld [vmem:[#allocation2 + $0x2248] sm:$0xff]
    %v1261 = vld [vmem:[#allocation2 + $0x2250] sm:$0xff]
    %v1262 = vld [vmem:[#allocation2 + $0x2258] sm:$0xff]
    %v1263 = vld [vmem:[#allocation2 + $0x2260] sm:$0xff]
    %v1264 = vld [vmem:[#allocation2 + $0x2268] sm:$0xff]
    %v1265 = vld [vmem:[#allocation2 + $0x2270] sm:$0xff]
    %v1266 = vld [vmem:[#allocation2 + $0x2278] sm:$0xff]
    %v1267 = vld [vmem:[#allocation2 + $0x2280] sm:$0xff]
    %v1268 = vld [vmem:[#allocation2 + $0x2288] sm:$0xff]
    %v1269 = vld [vmem:[#allocation2 + $0x2290] sm:$0xff]
    %v1270 = vld [vmem:[#allocation2 + $0x2298] sm:$0xff]
    %v1271 = vld [vmem:[#allocation2 + $0x22a0] sm:$0xff]
    %v1272 = vld [vmem:[#allocation2 + $0x22a8] sm:$0xff]
    %v1273 = vld [vmem:[#allocation2 + $0x22b0] sm:$0xff]
    %v1274 = vld [vmem:[#allocation2 + $0x22b8] sm:$0xff]
    %v1275 = vld [vmem:[#allocation2 + $0x22c0] sm:$0xff]
    %v1276 = vld [vmem:[#allocation2 + $0x22c8] sm:$0xff]
    %v1277 = vld [vmem:[#allocation2 + $0x22d0] sm:$0xff]
    %v1278 = vld [vmem:[#allocation2 + $0x22d8] sm:$0xff]
    %v1279 = vld [vmem:[#allocation2 + $0x22e0] sm:$0xff]
    %v1280 = vld [vmem:[#allocation2 + $0x22e8] sm:$0xff]
    %v1281 = vld [vmem:[#allocation2 + $0x22f0] sm:$0xff]
    %v1282 = vld [vmem:[#allocation2 + $0x22f8] sm:$0xff]
    %v1283 = vld [vmem:[#allocation2 + $0x2300] sm:$0xff]
    %v1284 = vld [vmem:[#allocation2 + $0x2308] sm:$0xff]
    %v1285 = vld [vmem:[#allocation2 + $0x2310] sm:$0xff]
    %v1286 = vld [vmem:[#allocation2 + $0x2318] sm:$0xff]
    %v1287 = vld [vmem:[#allocation2 + $0x2320] sm:$0xff]
    %v1288 = vld [vmem:[#allocation2 + $0x2328] sm:$0xff]
    %v1289 = vld [vmem:[#allocation2 + $0x2330] sm:$0xff]
    %v1290 = vld [vmem:[#allocation2 + $0x2338] sm:$0xff]
    %v1291 = vld [vmem:[#allocation2 + $0x2340] sm:$0xff]
    %v1292 = vld [vmem:[#allocation2 + $0x2348] sm:$0xff]
    %v1293 = vld [vmem:[#allocation2 + $0x2350] sm:$0xff]
    %v1294 = vld [vmem:[#allocation2 + $0x2358] sm:$0xff]
    %v1295 = vld [vmem:[#allocation2 + $0x2360] sm:$0xff]
    %v1296 = vld [vmem:[#allocation2 + $0x2368] sm:$0xff]
    %v1297 = vld [vmem:[#allocation2 + $0x2370] sm:$0xff]
    %v1298 = vld [vmem:[#allocation2 + $0x2378] sm:$0xff]
    %v1299 = vld [vmem:[#allocation2 + $0x2380] sm:$0xff]
    %v1300 = vld [vmem:[#allocation2 + $0x2388] sm:$0xff]
    %v1301 = vld [vmem:[#allocation2 + $0x2390] sm:$0xff]
    %v1302 = vld [vmem:[#allocation2 + $0x2398] sm:$0xff]
    %v1303 = vld [vmem:[#allocation2 + $0x23a0] sm:$0xff]
    %v1304 = vld [vmem:[#allocation2 + $0x23a8] sm:$0xff]
    %v1305 = vld [vmem:[#allocation2 + $0x23b0] sm:$0xff]
    %v1306 = vld [vmem:[#allocation2 + $0x23b8] sm:$0xff]
    %v1307 = vld [vmem:[#allocation2 + $0x23c0] sm:$0xff]
    %v1308 = vld [vmem:[#allocation2 + $0x23c8] sm:$0xff]
    %v1309 = vld [vmem:[#allocation2 + $0x23d0] sm:$0xff]
    %v1310 = vld [vmem:[#allocation2 + $0x23d8] sm:$0xff]
    %v1311 = vld [vmem:[#allocation2 + $0x23e0] sm:$0xff]
    %v1312 = vld [vmem:[#allocation2 + $0x23e8] sm:$0xff]
    %v1313 = vld [vmem:[#allocation2 + $0x23f0] sm:$0xff]
    %v1314 = vld [vmem:[#allocation2 + $0x23f8] sm:$0xff]
    %v1315 = vld [vmem:[#allocation2 + $0x2400] sm:$0xff]
    %v1316 = vld [vmem:[#allocation2 + $0x2408] sm:$0xff]
    %v1317 = vld [vmem:[#allocation2 + $0x2410] sm:$0xff]
    %v1318 = vld [vmem:[#allocation2 + $0x2418] sm:$0xff]
    %v1319 = vld [vmem:[#allocation2 + $0x2420] sm:$0xff]
    %v1320 = vld [vmem:[#allocation2 + $0x2428] sm:$0xff]
    %v1321 = vld [vmem:[#allocation2 + $0x2430] sm:$0xff]
    %v1322 = vld [vmem:[#allocation2 + $0x2438] sm:$0xff]
    %v1323 = vld [vmem:[#allocation2 + $0x2440] sm:$0xff]
    %v1324 = vld [vmem:[#allocation2 + $0x2448] sm:$0xff]
    %v1325 = vld [vmem:[#allocation2 + $0x2450] sm:$0xff]
    %v1326 = vld [vmem:[#allocation2 + $0x2458] sm:$0xff]
    %v1327 = vld [vmem:[#allocation2 + $0x2460] sm:$0xff]
    %v1328 = vld [vmem:[#allocation2 + $0x2468] sm:$0xff]
    %v1329 = vld [vmem:[#allocation2 + $0x2470] sm:$0xff]
    %v1330 = vld [vmem:[#allocation2 + $0x2478] sm:$0xff]
    %v1331 = vld [vmem:[#allocation2 + $0x2480] sm:$0xff]
    %v1332 = vld [vmem:[#allocation2 + $0x2488] sm:$0xff]
    %v1333 = vld [vmem:[#allocation2 + $0x2490] sm:$0xff]
    %v1334 = vld [vmem:[#allocation2 + $0x2498] sm:$0xff]
    %v1335 = vld [vmem:[#allocation2 + $0x24a0] sm:$0xff]
    %v1336 = vld [vmem:[#allocation2 + $0x24a8] sm:$0xff]
    %v1337 = vld [vmem:[#allocation2 + $0x24b0] sm:$0xff]
    %v1338 = vld [vmem:[#allocation2 + $0x24b8] sm:$0xff]
    %v1339 = vld [vmem:[#allocation2 + $0x24c0] sm:$0xff]
    %v1340 = vld [vmem:[#allocation2 + $0x24c8] sm:$0xff]
    %v1341 = vld [vmem:[#allocation2 + $0x24d0] sm:$0xff]
    %v1342 = vld [vmem:[#allocation2 + $0x24d8] sm:$0xff]
    %v1343 = vld [vmem:[#allocation2 + $0x24e0] sm:$0xff]
    %v1344 = vld [vmem:[#allocation2 + $0x24e8] sm:$0xff]
    %v1345 = vld [vmem:[#allocation2 + $0x24f0] sm:$0xff]
    %v1346 = vld [vmem:[#allocation2 + $0x24f8] sm:$0xff]
    %v1347 = vld [vmem:[#allocation2 + $0x2500] sm:$0xff]
    %v1348 = vld [vmem:[#allocation2 + $0x2508] sm:$0xff]
    %v1349 = vld [vmem:[#allocation2 + $0x2510] sm:$0xff]
    %v1350 = vld [vmem:[#allocation2 + $0x2518] sm:$0xff]
    %v1351 = vld [vmem:[#allocation2 + $0x2520] sm:$0xff]
    %v1352 = vld [vmem:[#allocation2 + $0x2528] sm:$0xff]
    %v1353 = vld [vmem:[#allocation2 + $0x2530] sm:$0xff]
    %v1354 = vld [vmem:[#allocation2 + $0x2538] sm:$0xff]
    %v1355 = vld [vmem:[#allocation2 + $0x2540] sm:$0xff]
    %v1356 = vld [vmem:[#allocation2 + $0x2548] sm:$0xff]
    %v1357 = vld [vmem:[#allocation2 + $0x2550] sm:$0xff]
    %v1358 = vld [vmem:[#allocation2 + $0x2558] sm:$0xff]
    %v1359 = vld [vmem:[#allocation2 + $0x2560] sm:$0xff]
    %v1360 = vld [vmem:[#allocation2 + $0x2568] sm:$0xff]
    %v1361 = vld [vmem:[#allocation2 + $0x2570] sm:$0xff]
    %v1362 = vld [vmem:[#allocation2 + $0x2578] sm:$0xff]
    %v1363 = vld [vmem:[#allocation2 + $0x2580] sm:$0xff]
    %v1364 = vld [vmem:[#allocation2 + $0x2588] sm:$0xff]
    %v1365 = vld [vmem:[#allocation2 + $0x2590] sm:$0xff]
    %v1366 = vld [vmem:[#allocation2 + $0x2598] sm:$0xff]
    %v1367 = vld [vmem:[#allocation2 + $0x25a0] sm:$0xff]
    %v1368 = vld [vmem:[#allocation2 + $0x25a8] sm:$0xff]
    %v1369 = vld [vmem:[#allocation2 + $0x25b0] sm:$0xff]
    %v1370 = vld [vmem:[#allocation2 + $0x25b8] sm:$0xff]
    %v1371 = vld [vmem:[#allocation2 + $0x25c0] sm:$0xff]
    %v1372 = vld [vmem:[#allocation2 + $0x25c8] sm:$0xff]
    %v1373 = vld [vmem:[#allocation2 + $0x25d0] sm:$0xff]
    %v1374 = vld [vmem:[#allocation2 + $0x25d8] sm:$0xff]
    %v1375 = vld [vmem:[#allocation2 + $0x25e0] sm:$0xff]
    %v1376 = vld [vmem:[#allocation2 + $0x25e8] sm:$0xff]
    %v1377 = vld [vmem:[#allocation2 + $0x25f0] sm:$0xff]
    %v1378 = vld [vmem:[#allocation2 + $0x25f8] sm:$0xff]
    %v1379 = vld [vmem:[#allocation2 + $0x2600] sm:$0xff]
    %v1380 = vld [vmem:[#allocation2 + $0x2608] sm:$0xff]
    %v1381 = vld [vmem:[#allocation2 + $0x2610] sm:$0xff]
    %v1382 = vld [vmem:[#allocation2 + $0x2618] sm:$0xff]
    %v1383 = vld [vmem:[#allocation2 + $0x2620] sm:$0xff]
    %v1384 = vld [vmem:[#allocation2 + $0x2628] sm:$0xff]
    %v1385 = vld [vmem:[#allocation2 + $0x2630] sm:$0xff]
    %v1386 = vld [vmem:[#allocation2 + $0x2638] sm:$0xff]
    %v1387 = vld [vmem:[#allocation2 + $0x2640] sm:$0xff]
    %v1388 = vld [vmem:[#allocation2 + $0x2648] sm:$0xff]
    %v1389 = vld [vmem:[#allocation2 + $0x2650] sm:$0xff]
    %v1390 = vld [vmem:[#allocation2 + $0x2658] sm:$0xff]
    %v1391 = vld [vmem:[#allocation2 + $0x2660] sm:$0xff]
    %v1392 = vld [vmem:[#allocation2 + $0x2668] sm:$0xff]
    %v1393 = vld [vmem:[#allocation2 + $0x2670] sm:$0xff]
    %v1394 = vld [vmem:[#allocation2 + $0x2678] sm:$0xff]
    %v1395 = vld [vmem:[#allocation2 + $0x2680] sm:$0xff]
    %v1396 = vld [vmem:[#allocation2 + $0x2688] sm:$0xff]
    %v1397 = vld [vmem:[#allocation2 + $0x2690] sm:$0xff]
    %v1398 = vld [vmem:[#allocation2 + $0x2698] sm:$0xff]
    %v1399 = vld [vmem:[#allocation2 + $0x26a0] sm:$0xff]
    %v1400 = vld [vmem:[#allocation2 + $0x26a8] sm:$0xff]
    %v1401 = vld [vmem:[#allocation2 + $0x26b0] sm:$0xff]
    %v1402 = vld [vmem:[#allocation2 + $0x26b8] sm:$0xff]
    %v1403 = vld [vmem:[#allocation2 + $0x26c0] sm:$0xff]
    %v1404 = vld [vmem:[#allocation2 + $0x26c8] sm:$0xff]
    %v1405 = vld [vmem:[#allocation2 + $0x26d0] sm:$0xff]
    %v1406 = vld [vmem:[#allocation2 + $0x26d8] sm:$0xff]
    %v1407 = vld [vmem:[#allocation2 + $0x26e0] sm:$0xff]
    %v1408 = vld [vmem:[#allocation2 + $0x26e8] sm:$0xff]
    %v1409 = vld [vmem:[#allocation2 + $0x26f0] sm:$0xff]
    %v1410 = vld [vmem:[#allocation2 + $0x26f8] sm:$0xff]
    %v1411 = vld [vmem:[#allocation2 + $0x2700] sm:$0xff]
    %v1412 = vld [vmem:[#allocation2 + $0x2708] sm:$0xff]
    %v1413 = vld [vmem:[#allocation2 + $0x2710] sm:$0xff]
    %v1414 = vld [vmem:[#allocation2 + $0x2718] sm:$0xff]
    %v1415 = vld [vmem:[#allocation2 + $0x2720] sm:$0xff]
    %v1416 = vld [vmem:[#allocation2 + $0x2728] sm:$0xff]
    %v1417 = vld [vmem:[#allocation2 + $0x2730] sm:$0xff]
    %v1418 = vld [vmem:[#allocation2 + $0x2738] sm:$0xff]
    %v1419 = vld [vmem:[#allocation2 + $0x2740] sm:$0xff]
    %v1420 = vld [vmem:[#allocation2 + $0x2748] sm:$0xff]
    %v1421 = vld [vmem:[#allocation2 + $0x2750] sm:$0xff]
    %v1422 = vld [vmem:[#allocation2 + $0x2758] sm:$0xff]
    %v1423 = vld [vmem:[#allocation2 + $0x2760] sm:$0xff]
    %v1424 = vld [vmem:[#allocation2 + $0x2768] sm:$0xff]
    %v1425 = vld [vmem:[#allocation2 + $0x2770] sm:$0xff]
    %v1426 = vld [vmem:[#allocation2 + $0x2778] sm:$0xff]
    %v1427 = vld [vmem:[#allocation2 + $0x2780] sm:$0xff]
    %v1428 = vld [vmem:[#allocation2 + $0x2788] sm:$0xff]
    %v1429 = vld [vmem:[#allocation2 + $0x2790] sm:$0xff]
    %v1430 = vld [vmem:[#allocation2 + $0x2798] sm:$0xff]
    %v1431 = vld [vmem:[#allocation2 + $0x27a0] sm:$0xff]
    %v1432 = vld [vmem:[#allocation2 + $0x27a8] sm:$0xff]
    %v1433 = vld [vmem:[#allocation2 + $0x27b0] sm:$0xff]
    %v1434 = vld [vmem:[#allocation2 + $0x27b8] sm:$0xff]
    %v1435 = vld [vmem:[#allocation2 + $0x27c0] sm:$0xff]
    %v1436 = vld [vmem:[#allocation2 + $0x27c8] sm:$0xff]
    %v1437 = vld [vmem:[#allocation2 + $0x27d0] sm:$0xff]
    %v1438 = vld [vmem:[#allocation2 + $0x27d8] sm:$0xff]
    %v1439 = vld [vmem:[#allocation2 + $0x27e0] sm:$0xff]
    %v1440 = vld [vmem:[#allocation2 + $0x27e8] sm:$0xff]
    %v1441 = vld [vmem:[#allocation2 + $0x27f0] sm:$0xff]
    %v1442 = vld [vmem:[#allocation2 + $0x27f8] sm:$0xff]
    %v1443 = vld [vmem:[#allocation2 + $0x2800] sm:$0xff]
    %v1444 = vld [vmem:[#allocation2 + $0x2808] sm:$0xff]
    %v1445 = vld [vmem:[#allocation2 + $0x2810] sm:$0xff]
    %v1446 = vld [vmem:[#allocation2 + $0x2818] sm:$0xff]
    %v1447 = vld [vmem:[#allocation2 + $0x2820] sm:$0xff]
    %v1448 = vld [vmem:[#allocation2 + $0x2828] sm:$0xff]
    %v1449 = vld [vmem:[#allocation2 + $0x2830] sm:$0xff]
    %v1450 = vld [vmem:[#allocation2 + $0x2838] sm:$0xff]
    %v1451 = vld [vmem:[#allocation2 + $0x2840] sm:$0xff]
    %v1452 = vld [vmem:[#allocation2 + $0x2848] sm:$0xff]
    %v1453 = vld [vmem:[#allocation2 + $0x2850] sm:$0xff]
    %v1454 = vld [vmem:[#allocation2 + $0x2858] sm:$0xff]
    %v1455 = vld [vmem:[#allocation2 + $0x2860] sm:$0xff]
    %v1456 = vld [vmem:[#allocation2 + $0x2868] sm:$0xff]
    %v1457 = vld [vmem:[#allocation2 + $0x2870] sm:$0xff]
    %v1458 = vld [vmem:[#allocation2 + $0x2878] sm:$0xff]
    %v1459 = vld [vmem:[#allocation2 + $0x2880] sm:$0xff]
    %v1460 = vld [vmem:[#allocation2 + $0x2888] sm:$0xff]
    %v1461 = vld [vmem:[#allocation2 + $0x2890] sm:$0xff]
    %v1462 = vld [vmem:[#allocation2 + $0x2898] sm:$0xff]
    %v1463 = vld [vmem:[#allocation2 + $0x28a0] sm:$0xff]
    %v1464 = vld [vmem:[#allocation2 + $0x28a8] sm:$0xff]
    %v1465 = vld [vmem:[#allocation2 + $0x28b0] sm:$0xff]
    %v1466 = vld [vmem:[#allocation2 + $0x28b8] sm:$0xff]
    %v1467 = vld [vmem:[#allocation2 + $0x28c0] sm:$0xff]
    %v1468 = vld [vmem:[#allocation2 + $0x28c8] sm:$0xff]
    %v1469 = vld [vmem:[#allocation2 + $0x28d0] sm:$0xff]
    %v1470 = vld [vmem:[#allocation2 + $0x28d8] sm:$0xff]
    %v1471 = vld [vmem:[#allocation2 + $0x28e0] sm:$0xff]
    %v1472 = vld [vmem:[#allocation2 + $0x28e8] sm:$0xff]
    %v1473 = vld [vmem:[#allocation2 + $0x28f0] sm:$0xff]
    %v1474 = vld [vmem:[#allocation2 + $0x28f8] sm:$0xff]
    %v1475 = vld [vmem:[#allocation2 + $0x2900] sm:$0xff]
    %v1476 = vld [vmem:[#allocation2 + $0x2908] sm:$0xff]
    %v1477 = vld [vmem:[#allocation2 + $0x2910] sm:$0xff]
    %v1478 = vld [vmem:[#allocation2 + $0x2918] sm:$0xff]
    %v1479 = vld [vmem:[#allocation2 + $0x2920] sm:$0xff]
    %v1480 = vld [vmem:[#allocation2 + $0x2928] sm:$0xff]
    %v1481 = vld [vmem:[#allocation2 + $0x2930] sm:$0xff]
    %v1482 = vld [vmem:[#allocation2 + $0x2938] sm:$0xff]
    %v1483 = vld [vmem:[#allocation2 + $0x2940] sm:$0xff]
    %v1484 = vld [vmem:[#allocation2 + $0x2948] sm:$0xff]
    %v1485 = vld [vmem:[#allocation2 + $0x2950] sm:$0xff]
    %v1486 = vld [vmem:[#allocation2 + $0x2958] sm:$0xff]
    %v1487 = vld [vmem:[#allocation2 + $0x2960] sm:$0xff]
    %v1488 = vld [vmem:[#allocation2 + $0x2968] sm:$0xff]
    %v1489 = vld [vmem:[#allocation2 + $0x2970] sm:$0xff]
    %v1490 = vld [vmem:[#allocation2 + $0x2978] sm:$0xff]
    %v1491 = vld [vmem:[#allocation2 + $0x2980] sm:$0xff]
    %v1492 = vld [vmem:[#allocation2 + $0x2988] sm:$0xff]
    %v1493 = vld [vmem:[#allocation2 + $0x2990] sm:$0xff]
    %v1494 = vld [vmem:[#allocation2 + $0x2998] sm:$0xff]
    %v1495 = vld [vmem:[#allocation2 + $0x29a0] sm:$0xff]
    %v1496 = vld [vmem:[#allocation2 + $0x29a8] sm:$0xff]
    %v1497 = vld [vmem:[#allocation2 + $0x29b0] sm:$0xff]
    %v1498 = vld [vmem:[#allocation2 + $0x29b8] sm:$0xff]
    %v1499 = vld [vmem:[#allocation2 + $0x29c0] sm:$0xff]
    %v1500 = vld [vmem:[#allocation2 + $0x29c8] sm:$0xff]
    %v1501 = vld [vmem:[#allocation2 + $0x29d0] sm:$0xff]
    %v1502 = vld [vmem:[#allocation2 + $0x29d8] sm:$0xff]
    %v1503 = vld [vmem:[#allocation2 + $0x29e0] sm:$0xff]
    %v1504 = vld [vmem:[#allocation2 + $0x29e8] sm:$0xff]
    %v1505 = vld [vmem:[#allocation2 + $0x29f0] sm:$0xff]
    %v1506 = vld [vmem:[#allocation2 + $0x29f8] sm:$0xff]
    %v1507 = vld [vmem:[#allocation2 + $0x2a00] sm:$0xff]
    %v1508 = vld [vmem:[#allocation2 + $0x2a08] sm:$0xff]
    %v1509 = vld [vmem:[#allocation2 + $0x2a10] sm:$0xff]
    %v1510 = vld [vmem:[#allocation2 + $0x2a18] sm:$0xff]
    %v1511 = vld [vmem:[#allocation2 + $0x2a20] sm:$0xff]
    %v1512 = vld [vmem:[#allocation2 + $0x2a28] sm:$0xff]
    %v1513 = vld [vmem:[#allocation2 + $0x2a30] sm:$0xff]
    %v1514 = vld [vmem:[#allocation2 + $0x2a38] sm:$0xff]
    %v1515 = vld [vmem:[#allocation2 + $0x2a40] sm:$0xff]
    %v1516 = vld [vmem:[#allocation2 + $0x2a48] sm:$0xff]
    %v1517 = vld [vmem:[#allocation2 + $0x2a50] sm:$0xff]
    %v1518 = vld [vmem:[#allocation2 + $0x2a58] sm:$0xff]
    %v1519 = vld [vmem:[#allocation2 + $0x2a60] sm:$0xff]
    %v1520 = vld [vmem:[#allocation2 + $0x2a68] sm:$0xff]
    %v1521 = vld [vmem:[#allocation2 + $0x2a70] sm:$0xff]
    %v1522 = vld [vmem:[#allocation2 + $0x2a78] sm:$0xff]
    %v1523 = vld [vmem:[#allocation2 + $0x2a80] sm:$0xff]
    %v1524 = vld [vmem:[#allocation2 + $0x2a88] sm:$0xff]
    %v1525 = vld [vmem:[#allocation2 + $0x2a90] sm:$0xff]
    %v1526 = vld [vmem:[#allocation2 + $0x2a98] sm:$0xff]
    %v1527 = vld [vmem:[#allocation2 + $0x2aa0] sm:$0xff]
    %v1528 = vld [vmem:[#allocation2 + $0x2aa8] sm:$0xff]
    %v1529 = vld [vmem:[#allocation2 + $0x2ab0] sm:$0xff]
    %v1530 = vld [vmem:[#allocation2 + $0x2ab8] sm:$0xff]
    %v1531 = vld [vmem:[#allocation2 + $0x2ac0] sm:$0xff]
    %v1532 = vld [vmem:[#allocation2 + $0x2ac8] sm:$0xff]
    %v1533 = vld [vmem:[#allocation2 + $0x2ad0] sm:$0xff]
    %v1534 = vld [vmem:[#allocation2 + $0x2ad8] sm:$0xff]
    %v2907 = vunpack.c.l.b16 %v163
    %v2908 = vunpack.c.h.b16 %v163
    %v2909 = vunpack.c.l.b16 %v164
    %v2910 = vunpack.c.h.b16 %v164
    %v2911 = vunpack.c.l.b16 %v165
    %v2912 = vunpack.c.h.b16 %v165
    %v2913 = vunpack.c.l.b16 %v166
    %v2914 = vunpack.c.h.b16 %v166
    %v2915 = vunpack.c.l.b16 %v167
    %v2916 = vunpack.c.h.b16 %v167
    %v2917 = vunpack.c.l.b16 %v168
    %v2918 = vunpack.c.h.b16 %v168
    %v2919 = vunpack.c.l.b16 %v169
    %v2920 = vunpack.c.h.b16 %v169
    %v2921 = vunpack.c.l.b16 %v170
    %v2922 = vunpack.c.h.b16 %v170
    %v2923 = vunpack.c.l.b16 %v171
    %v2924 = vunpack.c.h.b16 %v171
    %v2925 = vunpack.c.l.b16 %v172
    %v2926 = vunpack.c.h.b16 %v172
    %v2927 = vunpack.c.l.b16 %v173
    %v2928 = vunpack.c.h.b16 %v173
    %v2929 = vunpack.c.l.b16 %v174
    %v2930 = vunpack.c.h.b16 %v174
    %v2931 = vunpack.c.l.b16 %v175
    %v2932 = vunpack.c.h.b16 %v175
    %v2933 = vunpack.c.l.b16 %v176
    %v2934 = vunpack.c.h.b16 %v176
    %v2935 = vunpack.c.l.b16 %v177
    %v2936 = vunpack.c.h.b16 %v177
    %v2937 = vunpack.c.l.b16 %v178
    %v2938 = vunpack.c.h.b16 %v178
    %v2939 = vunpack.c.l.b16 %v179
    %v2940 = vunpack.c.h.b16 %v179
    %v2941 = vunpack.c.l.b16 %v180
    %v2942 = vunpack.c.h.b16 %v180
    %v2943 = vunpack.c.l.b16 %v181
    %v2944 = vunpack.c.h.b16 %v181
    %v2945 = vunpack.c.l.b16 %v182
    %v2946 = vunpack.c.h.b16 %v182
    %v2947 = vunpack.c.l.b16 %v183
    %v2948 = vunpack.c.h.b16 %v183
    %v2949 = vunpack.c.l.b16 %v184
    %v2950 = vunpack.c.h.b16 %v184
    %v2951 = vunpack.c.l.b16 %v185
    %v2952 = vunpack.c.h.b16 %v185
    %v2953 = vunpack.c.l.b16 %v186
    %v2954 = vunpack.c.h.b16 %v186
    %v2955 = vunpack.c.l.b16 %v187
    %v2956 = vunpack.c.h.b16 %v187
    %v2957 = vunpack.c.l.b16 %v188
    %v2958 = vunpack.c.h.b16 %v188
    %v2959 = vunpack.c.l.b16 %v189
    %v2960 = vunpack.c.h.b16 %v189
    %v2961 = vunpack.c.l.b16 %v190
    %v2962 = vunpack.c.h.b16 %v190
    %v2963 = vunpack.c.l.b16 %v191
    %v2964 = vunpack.c.h.b16 %v191
    %v2965 = vunpack.c.l.b16 %v192
    %v2966 = vunpack.c.h.b16 %v192
    %v2967 = vunpack.c.l.b16 %v193
    %v2968 = vunpack.c.h.b16 %v193
    %v2969 = vunpack.c.l.b16 %v194
    %v2970 = vunpack.c.h.b16 %v194
    %v2971 = vunpack.c.l.b16 %v195
    %v2972 = vunpack.c.h.b16 %v195
    %v2973 = vunpack.c.l.b16 %v196
    %v2974 = vunpack.c.h.b16 %v196
    %v2975 = vunpack.c.l.b16 %v197
    %v2976 = vunpack.c.h.b16 %v197
    %v2977 = vunpack.c.l.b16 %v198
    %v2978 = vunpack.c.h.b16 %v198
    %v2979 = vunpack.c.l.b16 %v199
    %v2980 = vunpack.c.h.b16 %v199
    %v2981 = vunpack.c.l.b16 %v200
    %v2982 = vunpack.c.h.b16 %v200
    %v2983 = vunpack.c.l.b16 %v201
    %v2984 = vunpack.c.h.b16 %v201
    %v2985 = vunpack.c.l.b16 %v202
    %v2986 = vunpack.c.h.b16 %v202
    %v2987 = vunpack.c.l.b16 %v203
    %v2988 = vunpack.c.h.b16 %v203
    %v2989 = vunpack.c.l.b16 %v204
    %v2990 = vunpack.c.h.b16 %v204
    %v2991 = vunpack.c.l.b16 %v205
    %v2992 = vunpack.c.h.b16 %v205
    %v2993 = vunpack.c.l.b16 %v206
    %v2994 = vunpack.c.h.b16 %v206
    %v2995 = vunpack.c.l.b16 %v207
    %v2996 = vunpack.c.h.b16 %v207
    %v2997 = vunpack.c.l.b16 %v208
    %v2998 = vunpack.c.h.b16 %v208
    %v2999 = vunpack.c.l.b16 %v209
    %v3000 = vunpack.c.h.b16 %v209
    %v3001 = vunpack.c.l.b16 %v210
    %v3002 = vunpack.c.h.b16 %v210
    %v3003 = vunpack.c.l.b16 %v211
    %v3004 = vunpack.c.h.b16 %v211
    %v3005 = vunpack.c.l.b16 %v212
    %v3006 = vunpack.c.h.b16 %v212
    %v3007 = vunpack.c.l.b16 %v213
    %v3008 = vunpack.c.h.b16 %v213
    %v3009 = vunpack.c.l.b16 %v214
    %v3010 = vunpack.c.h.b16 %v214
    %v3011 = vunpack.c.l.b16 %v215
    %v3012 = vunpack.c.h.b16 %v215
    %v3013 = vunpack.c.l.b16 %v216
    %v3014 = vunpack.c.h.b16 %v216
    %v3015 = vunpack.c.l.b16 %v217
    %v3016 = vunpack.c.h.b16 %v217
    %v3017 = vunpack.c.l.b16 %v218
    %v3018 = vunpack.c.h.b16 %v218
    %v3019 = vunpack.c.l.b16 %v219
    %v3020 = vunpack.c.h.b16 %v219
    %v3021 = vunpack.c.l.b16 %v220
    %v3022 = vunpack.c.h.b16 %v220
    %v3023 = vunpack.c.l.b16 %v221
    %v3024 = vunpack.c.h.b16 %v221
    %v3025 = vunpack.c.l.b16 %v222
    %v3026 = vunpack.c.h.b16 %v222
    %v3027 = vunpack.c.l.b16 %v223
    %v3028 = vunpack.c.h.b16 %v223
    %v3029 = vunpack.c.l.b16 %v224
    %v3030 = vunpack.c.h.b16 %v224
    %v3031 = vunpack.c.l.b16 %v225
    %v3032 = vunpack.c.h.b16 %v225
    %v3033 = vunpack.c.l.b16 %v226
    %v3034 = vunpack.c.h.b16 %v226
    %v3035 = vunpack.c.l.b16 %v227
    %v3036 = vunpack.c.h.b16 %v227
    %v3037 = vunpack.c.l.b16 %v228
    %v3038 = vunpack.c.h.b16 %v228
    %v3039 = vunpack.c.l.b16 %v229
    %v3040 = vunpack.c.h.b16 %v229
    %v3041 = vunpack.c.l.b16 %v230
    %v3042 = vunpack.c.h.b16 %v230
    %v3043 = vunpack.c.l.b16 %v231
    %v3044 = vunpack.c.h.b16 %v231
    %v3045 = vunpack.c.l.b16 %v232
    %v3046 = vunpack.c.h.b16 %v232
    %v3047 = vunpack.c.l.b16 %v233
    %v3048 = vunpack.c.h.b16 %v233
    %v3049 = vunpack.c.l.b16 %v234
    %v3050 = vunpack.c.h.b16 %v234
    %v3051 = vunpack.c.l.b16 %v235
    %v3052 = vunpack.c.h.b16 %v235
    %v3053 = vunpack.c.l.b16 %v236
    %v3054 = vunpack.c.h.b16 %v236
    %v3055 = vunpack.c.l.b16 %v237
    %v3056 = vunpack.c.h.b16 %v237
    %v3057 = vunpack.c.l.b16 %v238
    %v3058 = vunpack.c.h.b16 %v238
    %v3059 = vunpack.c.l.b16 %v239
    %v3060 = vunpack.c.h.b16 %v239
    %v3061 = vunpack.c.l.b16 %v240
    %v3062 = vunpack.c.h.b16 %v240
    %v3063 = vunpack.c.l.b16 %v241
    %v3064 = vunpack.c.h.b16 %v241
    %v3065 = vunpack.c.l.b16 %v242
    %v3066 = vunpack.c.h.b16 %v242
    %v3067 = vunpack.c.l.b16 %v243
    %v3068 = vunpack.c.h.b16 %v243
    %v3069 = vunpack.c.l.b16 %v244
    %v3070 = vunpack.c.h.b16 %v244
    %v3071 = vunpack.c.l.b16 %v245
    %v3072 = vunpack.c.h.b16 %v245
    %v3073 = vunpack.c.l.b16 %v246
    %v3074 = vunpack.c.h.b16 %v246
    %v3075 = vunpack.c.l.b16 %v247
    %v3076 = vunpack.c.h.b16 %v247
    %v3077 = vunpack.c.l.b16 %v248
    %v3078 = vunpack.c.h.b16 %v248
    %v3079 = vunpack.c.l.b16 %v249
    %v3080 = vunpack.c.h.b16 %v249
    %v3081 = vunpack.c.l.b16 %v250
    %v3082 = vunpack.c.h.b16 %v250
    %v3083 = vunpack.c.l.b16 %v251
    %v3084 = vunpack.c.h.b16 %v251
    %v3085 = vunpack.c.l.b16 %v252
    %v3086 = vunpack.c.h.b16 %v252
    %v3087 = vunpack.c.l.b16 %v253
    %v3088 = vunpack.c.h.b16 %v253
    %v3089 = vunpack.c.l.b16 %v254
    %v3090 = vunpack.c.h.b16 %v254
    %v3091 = vunpack.c.l.b16 %v255
    %v3092 = vunpack.c.h.b16 %v255
    %v3093 = vunpack.c.l.b16 %v256
    %v3094 = vunpack.c.h.b16 %v256
    %v3095 = vunpack.c.l.b16 %v257
    %v3096 = vunpack.c.h.b16 %v257
    %v3097 = vunpack.c.l.b16 %v258
    %v3098 = vunpack.c.h.b16 %v258
    %v3099 = vunpack.c.l.b16 %v259
    %v3100 = vunpack.c.h.b16 %v259
    %v3101 = vunpack.c.l.b16 %v260
    %v3102 = vunpack.c.h.b16 %v260
    %v3103 = vunpack.c.l.b16 %v261
    %v3104 = vunpack.c.h.b16 %v261
    %v3105 = vunpack.c.l.b16 %v262
    %v3106 = vunpack.c.h.b16 %v262
    %v3107 = vunpack.c.l.b16 %v263
    %v3108 = vunpack.c.h.b16 %v263
    %v3109 = vunpack.c.l.b16 %v264
    %v3110 = vunpack.c.h.b16 %v264
    %v3111 = vunpack.c.l.b16 %v265
    %v3112 = vunpack.c.h.b16 %v265
    %v3113 = vunpack.c.l.b16 %v266
    %v3114 = vunpack.c.h.b16 %v266
    %v3115 = vunpack.c.l.b16 %v267
    %v3116 = vunpack.c.h.b16 %v267
    %v3117 = vunpack.c.l.b16 %v268
    %v3118 = vunpack.c.h.b16 %v268
    %v3119 = vunpack.c.l.b16 %v269
    %v3120 = vunpack.c.h.b16 %v269
    %v3121 = vunpack.c.l.b16 %v270
    %v3122 = vunpack.c.h.b16 %v270
    %v3123 = vunpack.c.l.b16 %v271
    %v3124 = vunpack.c.h.b16 %v271
    %v3125 = vunpack.c.l.b16 %v272
    %v3126 = vunpack.c.h.b16 %v272
    %v3127 = vunpack.c.l.b16 %v273
    %v3128 = vunpack.c.h.b16 %v273
    %v3129 = vunpack.c.l.b16 %v274
    %v3130 = vunpack.c.h.b16 %v274
    %v3131 = vunpack.c.l.b16 %v275
    %v3132 = vunpack.c.h.b16 %v275
    %v3133 = vunpack.c.l.b16 %v276
    %v3134 = vunpack.c.h.b16 %v276
    %v3135 = vunpack.c.l.b16 %v277
    %v3136 = vunpack.c.h.b16 %v277
    %v3137 = vunpack.c.l.b16 %v278
    %v3138 = vunpack.c.h.b16 %v278
    %v3139 = vunpack.c.l.b16 %v279
    %v3140 = vunpack.c.h.b16 %v279
    %v3141 = vunpack.c.l.b16 %v280
    %v3142 = vunpack.c.h.b16 %v280
    %v3143 = vunpack.c.l.b16 %v281
    %v3144 = vunpack.c.h.b16 %v281
    %v3145 = vunpack.c.l.b16 %v282
    %v3146 = vunpack.c.h.b16 %v282
    %v3147 = vunpack.c.l.b16 %v283
    %v3148 = vunpack.c.h.b16 %v283
    %v3149 = vunpack.c.l.b16 %v284
    %v3150 = vunpack.c.h.b16 %v284
    %v3151 = vunpack.c.l.b16 %v285
    %v3152 = vunpack.c.h.b16 %v285
    %v3153 = vunpack.c.l.b16 %v286
    %v3154 = vunpack.c.h.b16 %v286
    %v3155 = vunpack.c.l.b16 %v287
    %v3156 = vunpack.c.h.b16 %v287
    %v3157 = vunpack.c.l.b16 %v288
    %v3158 = vunpack.c.h.b16 %v288
    %v3159 = vunpack.c.l.b16 %v289
    %v3160 = vunpack.c.h.b16 %v289
    %v3161 = vunpack.c.l.b16 %v290
    %v3162 = vunpack.c.h.b16 %v290
    %v3163 = vunpack.c.l.b16 %v291
    %v3164 = vunpack.c.h.b16 %v291
    %v3165 = vunpack.c.l.b16 %v292
    %v3166 = vunpack.c.h.b16 %v292
    %v3167 = vunpack.c.l.b16 %v293
    %v3168 = vunpack.c.h.b16 %v293
    %v3169 = vunpack.c.l.b16 %v294
    %v3170 = vunpack.c.h.b16 %v294
    %v3171 = vunpack.c.l.b16 %v295
    %v3172 = vunpack.c.h.b16 %v295
    %v3173 = vunpack.c.l.b16 %v296
    %v3174 = vunpack.c.h.b16 %v296
    %v3175 = vunpack.c.l.b16 %v297
    %v3176 = vunpack.c.h.b16 %v297
    %v3177 = vunpack.c.l.b16 %v298
    %v3178 = vunpack.c.h.b16 %v298
    %v3179 = vunpack.c.l.b16 %v299
    %v3180 = vunpack.c.h.b16 %v299
    %v3181 = vunpack.c.l.b16 %v300
    %v3182 = vunpack.c.h.b16 %v300
    %v3183 = vunpack.c.l.b16 %v301
    %v3184 = vunpack.c.h.b16 %v301
    %v3185 = vunpack.c.l.b16 %v302
    %v3186 = vunpack.c.h.b16 %v302
    %v3187 = vunpack.c.l.b16 %v303
    %v3188 = vunpack.c.h.b16 %v303
    %v3189 = vunpack.c.l.b16 %v304
    %v3190 = vunpack.c.h.b16 %v304
    %v3191 = vunpack.c.l.b16 %v305
    %v3192 = vunpack.c.h.b16 %v305
    %v3193 = vunpack.c.l.b16 %v306
    %v3194 = vunpack.c.h.b16 %v306
    %v3195 = vunpack.c.l.b16 %v307
    %v3196 = vunpack.c.h.b16 %v307
    %v3197 = vunpack.c.l.b16 %v308
    %v3198 = vunpack.c.h.b16 %v308
    %v3199 = vunpack.c.l.b16 %v309
    %v3200 = vunpack.c.h.b16 %v309
    %v3201 = vunpack.c.l.b16 %v310
    %v3202 = vunpack.c.h.b16 %v310
    %v3203 = vunpack.c.l.b16 %v311
    %v3204 = vunpack.c.h.b16 %v311
    %v3205 = vunpack.c.l.b16 %v312
    %v3206 = vunpack.c.h.b16 %v312
    %v3207 = vunpack.c.l.b16 %v313
    %v3208 = vunpack.c.h.b16 %v313
    %v3209 = vunpack.c.l.b16 %v314
    %v3210 = vunpack.c.h.b16 %v314
    %v3211 = vunpack.c.l.b16 %v315
    %v3212 = vunpack.c.h.b16 %v315
    %v3213 = vunpack.c.l.b16 %v316
    %v3214 = vunpack.c.h.b16 %v316
    %v3215 = vunpack.c.l.b16 %v317
    %v3216 = vunpack.c.h.b16 %v317
    %v3217 = vunpack.c.l.b16 %v318
    %v3218 = vunpack.c.h.b16 %v318
    %v3219 = vunpack.c.l.b16 %v319
    %v3220 = vunpack.c.h.b16 %v319
    %v3221 = vunpack.c.l.b16 %v320
    %v3222 = vunpack.c.h.b16 %v320
    %v3223 = vunpack.c.l.b16 %v321
    %v3224 = vunpack.c.h.b16 %v321
    %v3225 = vunpack.c.l.b16 %v322
    %v3226 = vunpack.c.h.b16 %v322
    %v3227 = vunpack.c.l.b16 %v323
    %v3228 = vunpack.c.h.b16 %v323
    %v3229 = vunpack.c.l.b16 %v324
    %v3230 = vunpack.c.h.b16 %v324
    %v3231 = vunpack.c.l.b16 %v325
    %v3232 = vunpack.c.h.b16 %v325
    %v3233 = vunpack.c.l.b16 %v326
    %v3234 = vunpack.c.h.b16 %v326
    %v3235 = vunpack.c.l.b16 %v327
    %v3236 = vunpack.c.h.b16 %v327
    %v3237 = vunpack.c.l.b16 %v328
    %v3238 = vunpack.c.h.b16 %v328
    %v3239 = vunpack.c.l.b16 %v329
    %v3240 = vunpack.c.h.b16 %v329
    %v3241 = vunpack.c.l.b16 %v330
    %v3242 = vunpack.c.h.b16 %v330
    %v3243 = vunpack.c.l.b16 %v331
    %v3244 = vunpack.c.h.b16 %v331
    %v3245 = vunpack.c.l.b16 %v332
    %v3246 = vunpack.c.h.b16 %v332
    %v3247 = vunpack.c.l.b16 %v333
    %v3248 = vunpack.c.h.b16 %v333
    %v3249 = vunpack.c.l.b16 %v334
    %v3250 = vunpack.c.h.b16 %v334
    %v3251 = vunpack.c.l.b16 %v335
    %v3252 = vunpack.c.h.b16 %v335
    %v3253 = vunpack.c.l.b16 %v336
    %v3254 = vunpack.c.h.b16 %v336
    %v3255 = vunpack.c.l.b16 %v337
    %v3256 = vunpack.c.h.b16 %v337
    %v3257 = vunpack.c.l.b16 %v338
    %v3258 = vunpack.c.h.b16 %v338
    %v3259 = vunpack.c.l.b16 %v339
    %v3260 = vunpack.c.h.b16 %v339
    %v3261 = vunpack.c.l.b16 %v340
    %v3262 = vunpack.c.h.b16 %v340
    %v3263 = vunpack.c.l.b16 %v341
    %v3264 = vunpack.c.h.b16 %v341
    %v3265 = vunpack.c.l.b16 %v342
    %v3266 = vunpack.c.h.b16 %v342
    %v3267 = vunpack.c.l.b16 %v343
    %v3268 = vunpack.c.h.b16 %v343
    %v3269 = vunpack.c.l.b16 %v344
    %v3270 = vunpack.c.h.b16 %v344
    %v3271 = vunpack.c.l.b16 %v345
    %v3272 = vunpack.c.h.b16 %v345
    %v3273 = vunpack.c.l.b16 %v346
    %v3274 = vunpack.c.h.b16 %v346
    %v3275 = vunpack.c.l.b16 %v347
    %v3276 = vunpack.c.h.b16 %v347
    %v3277 = vunpack.c.l.b16 %v348
    %v3278 = vunpack.c.h.b16 %v348
    %v3279 = vunpack.c.l.b16 %v349
    %v3280 = vunpack.c.h.b16 %v349
    %v3281 = vunpack.c.l.b16 %v350
    %v3282 = vunpack.c.h.b16 %v350
    %v3283 = vunpack.c.l.b16 %v351
    %v3284 = vunpack.c.h.b16 %v351
    %v3285 = vunpack.c.l.b16 %v352
    %v3286 = vunpack.c.h.b16 %v352
    %v3287 = vunpack.c.l.b16 %v353
    %v3288 = vunpack.c.h.b16 %v353
    %v3289 = vunpack.c.l.b16 %v354
    %v3290 = vunpack.c.h.b16 %v354
    %v3291 = vunpack.c.l.b16 %v355
    %v3292 = vunpack.c.h.b16 %v355
    %v3293 = vunpack.c.l.b16 %v356
    %v3294 = vunpack.c.h.b16 %v356
    %v3295 = vunpack.c.l.b16 %v357
    %v3296 = vunpack.c.h.b16 %v357
    %v3297 = vunpack.c.l.b16 %v358
    %v3298 = vunpack.c.h.b16 %v358
    %v3299 = vunpack.c.l.b16 %v359
    %v3300 = vunpack.c.h.b16 %v359
    %v3301 = vunpack.c.l.b16 %v360
    %v3302 = vunpack.c.h.b16 %v360
    %v3303 = vunpack.c.l.b16 %v361
    %v3304 = vunpack.c.h.b16 %v361
    %v3305 = vunpack.c.l.b16 %v362
    %v3306 = vunpack.c.h.b16 %v362
    %v3307 = vunpack.c.l.b16 %v363
    %v3308 = vunpack.c.h.b16 %v363
    %v3309 = vunpack.c.l.b16 %v364
    %v3310 = vunpack.c.h.b16 %v364
    %v3311 = vunpack.c.l.b16 %v365
    %v3312 = vunpack.c.h.b16 %v365
    %v3313 = vunpack.c.l.b16 %v366
    %v3314 = vunpack.c.h.b16 %v366
    %v3315 = vunpack.c.l.b16 %v367
    %v3316 = vunpack.c.h.b16 %v367
    %v3317 = vunpack.c.l.b16 %v368
    %v3318 = vunpack.c.h.b16 %v368
    %v3319 = vunpack.c.l.b16 %v369
    %v3320 = vunpack.c.h.b16 %v369
    %v3321 = vunpack.c.l.b16 %v370
    %v3322 = vunpack.c.h.b16 %v370
    %v3323 = vunpack.c.l.b16 %v371
    %v3324 = vunpack.c.h.b16 %v371
    %v3325 = vunpack.c.l.b16 %v372
    %v3326 = vunpack.c.h.b16 %v372
    %v3327 = vunpack.c.l.b16 %v373
    %v3328 = vunpack.c.h.b16 %v373
    %v3329 = vunpack.c.l.b16 %v374
    %v3330 = vunpack.c.h.b16 %v374
    %v3331 = vunpack.c.l.b16 %v375
    %v3332 = vunpack.c.h.b16 %v375
    %v3333 = vunpack.c.l.b16 %v376
    %v3334 = vunpack.c.h.b16 %v376
    %v3335 = vunpack.c.l.b16 %v377
    %v3336 = vunpack.c.h.b16 %v377
    %v3337 = vunpack.c.l.b16 %v378
    %v3338 = vunpack.c.h.b16 %v378
    %v3339 = vunpack.c.l.b16 %v379
    %v3340 = vunpack.c.h.b16 %v379
    %v3341 = vunpack.c.l.b16 %v380
    %v3342 = vunpack.c.h.b16 %v380
    %v3343 = vunpack.c.l.b16 %v381
    %v3344 = vunpack.c.h.b16 %v381
    %v3345 = vunpack.c.l.b16 %v382
    %v3346 = vunpack.c.h.b16 %v382
    %v3347 = vunpack.c.l.b16 %v383
    %v3348 = vunpack.c.h.b16 %v383
    %v3349 = vunpack.c.l.b16 %v384
    %v3350 = vunpack.c.h.b16 %v384
    %v3351 = vunpack.c.l.b16 %v385
    %v3352 = vunpack.c.h.b16 %v385
    %v3353 = vunpack.c.l.b16 %v386
    %v3354 = vunpack.c.h.b16 %v386
    %v3355 = vunpack.c.l.b16 %v387
    %v3356 = vunpack.c.h.b16 %v387
    %v3357 = vunpack.c.l.b16 %v388
    %v3358 = vunpack.c.h.b16 %v388
    %v3359 = vunpack.c.l.b16 %v389
    %v3360 = vunpack.c.h.b16 %v389
    %v3361 = vunpack.c.l.b16 %v390
    %v3362 = vunpack.c.h.b16 %v390
    %v3363 = vunpack.c.l.b16 %v391
    %v3364 = vunpack.c.h.b16 %v391
    %v3365 = vunpack.c.l.b16 %v392
    %v3366 = vunpack.c.h.b16 %v392
    %v3367 = vunpack.c.l.b16 %v393
    %v3368 = vunpack.c.h.b16 %v393
    %v3369 = vunpack.c.l.b16 %v394
    %v3370 = vunpack.c.h.b16 %v394
    %v3371 = vunpack.c.l.b16 %v395
    %v3372 = vunpack.c.h.b16 %v395
    %v3373 = vunpack.c.l.b16 %v396
    %v3374 = vunpack.c.h.b16 %v396
    %v3375 = vunpack.c.l.b16 %v397
    %v3376 = vunpack.c.h.b16 %v397
    %v3377 = vunpack.c.l.b16 %v398
    %v3378 = vunpack.c.h.b16 %v398
    %v3379 = vunpack.c.l.b16 %v399
    %v3380 = vunpack.c.h.b16 %v399
    %v3381 = vunpack.c.l.b16 %v400
    %v3382 = vunpack.c.h.b16 %v400
    %v3383 = vunpack.c.l.b16 %v401
    %v3384 = vunpack.c.h.b16 %v401
    %v3385 = vunpack.c.l.b16 %v402
    %v3386 = vunpack.c.h.b16 %v402
    %v3387 = vunpack.c.l.b16 %v403
    %v3388 = vunpack.c.h.b16 %v403
    %v3389 = vunpack.c.l.b16 %v404
    %v3390 = vunpack.c.h.b16 %v404
    %v3391 = vunpack.c.l.b16 %v405
    %v3392 = vunpack.c.h.b16 %v405
    %v3393 = vunpack.c.l.b16 %v406
    %v3394 = vunpack.c.h.b16 %v406
    %v3395 = vunpack.c.l.b16 %v407
    %v3396 = vunpack.c.h.b16 %v407
    %v3397 = vunpack.c.l.b16 %v408
    %v3398 = vunpack.c.h.b16 %v408
    %v3399 = vunpack.c.l.b16 %v409
    %v3400 = vunpack.c.h.b16 %v409
    %v3401 = vunpack.c.l.b16 %v410
    %v3402 = vunpack.c.h.b16 %v410
    %v3403 = vunpack.c.l.b16 %v411
    %v3404 = vunpack.c.h.b16 %v411
    %v3405 = vunpack.c.l.b16 %v412
    %v3406 = vunpack.c.h.b16 %v412
    %v3407 = vunpack.c.l.b16 %v413
    %v3408 = vunpack.c.h.b16 %v413
    %v3409 = vunpack.c.l.b16 %v414
    %v3410 = vunpack.c.h.b16 %v414
    %v3411 = vunpack.c.l.b16 %v415
    %v3412 = vunpack.c.h.b16 %v415
    %v3413 = vunpack.c.l.b16 %v416
    %v3414 = vunpack.c.h.b16 %v416
    %v3415 = vunpack.c.l.b16 %v417
    %v3416 = vunpack.c.h.b16 %v417
    %v3417 = vunpack.c.l.b16 %v418
    %v3418 = vunpack.c.h.b16 %v418
    %v3419 = vunpack.c.l.b16 %v419
    %v3420 = vunpack.c.h.b16 %v419
    %v3421 = vunpack.c.l.b16 %v420
    %v3422 = vunpack.c.h.b16 %v420
    %v3423 = vunpack.c.l.b16 %v421
    %v3424 = vunpack.c.h.b16 %v421
    %v3425 = vunpack.c.l.b16 %v422
    %v3426 = vunpack.c.h.b16 %v422
    %v3427 = vunpack.c.l.b16 %v423
    %v3428 = vunpack.c.h.b16 %v423
    %v3429 = vunpack.c.l.b16 %v424
    %v3430 = vunpack.c.h.b16 %v424
    %v3431 = vunpack.c.l.b16 %v425
    %v3432 = vunpack.c.h.b16 %v425
    %v3433 = vunpack.c.l.b16 %v426
    %v3434 = vunpack.c.h.b16 %v426
    %v3435 = vunpack.c.l.b16 %v427
    %v3436 = vunpack.c.h.b16 %v427
    %v3437 = vunpack.c.l.b16 %v428
    %v3438 = vunpack.c.h.b16 %v428
    %v3439 = vunpack.c.l.b16 %v429
    %v3440 = vunpack.c.h.b16 %v429
    %v3441 = vunpack.c.l.b16 %v430
    %v3442 = vunpack.c.h.b16 %v430
    %v3443 = vunpack.c.l.b16 %v431
    %v3444 = vunpack.c.h.b16 %v431
    %v3445 = vunpack.c.l.b16 %v432
    %v3446 = vunpack.c.h.b16 %v432
    %v3447 = vunpack.c.l.b16 %v433
    %v3448 = vunpack.c.h.b16 %v433
    %v3449 = vunpack.c.l.b16 %v434
    %v3450 = vunpack.c.h.b16 %v434
    %v3451 = vunpack.c.l.b16 %v435
    %v3452 = vunpack.c.h.b16 %v435
    %v3453 = vunpack.c.l.b16 %v436
    %v3454 = vunpack.c.h.b16 %v436
    %v3455 = vunpack.c.l.b16 %v437
    %v3456 = vunpack.c.h.b16 %v437
    %v3457 = vunpack.c.l.b16 %v438
    %v3458 = vunpack.c.h.b16 %v438
    %v3459 = vunpack.c.l.b16 %v439
    %v3460 = vunpack.c.h.b16 %v439
    %v3461 = vunpack.c.l.b16 %v440
    %v3462 = vunpack.c.h.b16 %v440
    %v3463 = vunpack.c.l.b16 %v441
    %v3464 = vunpack.c.h.b16 %v441
    %v3465 = vunpack.c.l.b16 %v442
    %v3466 = vunpack.c.h.b16 %v442
    %v3467 = vunpack.c.l.b16 %v443
    %v3468 = vunpack.c.h.b16 %v443
    %v3469 = vunpack.c.l.b16 %v444
    %v3470 = vunpack.c.h.b16 %v444
    %v3471 = vunpack.c.l.b16 %v445
    %v3472 = vunpack.c.h.b16 %v445
    %v3473 = vunpack.c.l.b16 %v446
    %v3474 = vunpack.c.h.b16 %v446
    %v3475 = vunpack.c.l.b16 %v447
    %v3476 = vunpack.c.h.b16 %v447
    %v3477 = vunpack.c.l.b16 %v448
    %v3478 = vunpack.c.h.b16 %v448
    %v3479 = vunpack.c.l.b16 %v449
    %v3480 = vunpack.c.h.b16 %v449
    %v3481 = vunpack.c.l.b16 %v450
    %v3482 = vunpack.c.h.b16 %v450
    %v3483 = vunpack.c.l.b16 %v451
    %v3484 = vunpack.c.h.b16 %v451
    %v3485 = vunpack.c.l.b16 %v452
    %v3486 = vunpack.c.h.b16 %v452
    %v3487 = vunpack.c.l.b16 %v453
    %v3488 = vunpack.c.h.b16 %v453
    %v3489 = vunpack.c.l.b16 %v454
    %v3490 = vunpack.c.h.b16 %v454
    %v3491 = vunpack.c.l.b16 %v455
    %v3492 = vunpack.c.h.b16 %v455
    %v3493 = vunpack.c.l.b16 %v456
    %v3494 = vunpack.c.h.b16 %v456
    %v3495 = vunpack.c.l.b16 %v457
    %v3496 = vunpack.c.h.b16 %v457
    %v3497 = vunpack.c.l.b16 %v458
    %v3498 = vunpack.c.h.b16 %v458
    %v3499 = vunpack.c.l.b16 %v459
    %v3500 = vunpack.c.h.b16 %v459
    %v3501 = vunpack.c.l.b16 %v460
    %v3502 = vunpack.c.h.b16 %v460
    %v3503 = vunpack.c.l.b16 %v461
    %v3504 = vunpack.c.h.b16 %v461
    %v3505 = vunpack.c.l.b16 %v462
    %v3506 = vunpack.c.h.b16 %v462
    %v3507 = vunpack.c.l.b16 %v463
    %v3508 = vunpack.c.h.b16 %v463
    %v3509 = vunpack.c.l.b16 %v464
    %v3510 = vunpack.c.h.b16 %v464
    %v3511 = vunpack.c.l.b16 %v465
    %v3512 = vunpack.c.h.b16 %v465
    %v3513 = vunpack.c.l.b16 %v466
    %v3514 = vunpack.c.h.b16 %v466
    %v3515 = vunpack.c.l.b16 %v467
    %v3516 = vunpack.c.h.b16 %v467
    %v3517 = vunpack.c.l.b16 %v468
    %v3518 = vunpack.c.h.b16 %v468
    %v3519 = vunpack.c.l.b16 %v469
    %v3520 = vunpack.c.h.b16 %v469
    %v3521 = vunpack.c.l.b16 %v470
    %v3522 = vunpack.c.h.b16 %v470
    %v3523 = vunpack.c.l.b16 %v471
    %v3524 = vunpack.c.h.b16 %v471
    %v3525 = vunpack.c.l.b16 %v472
    %v3526 = vunpack.c.h.b16 %v472
    %v3527 = vunpack.c.l.b16 %v473
    %v3528 = vunpack.c.h.b16 %v473
    %v3529 = vunpack.c.l.b16 %v474
    %v3530 = vunpack.c.h.b16 %v474
    %v3531 = vunpack.c.l.b16 %v475
    %v3532 = vunpack.c.h.b16 %v475
    %v3533 = vunpack.c.l.b16 %v476
    %v3534 = vunpack.c.h.b16 %v476
    %v3535 = vunpack.c.l.b16 %v477
    %v3536 = vunpack.c.h.b16 %v477
    %v3537 = vunpack.c.l.b16 %v478
    %v3538 = vunpack.c.h.b16 %v478
    %v3539 = vunpack.c.l.b16 %v479
    %v3540 = vunpack.c.h.b16 %v479
    %v3541 = vunpack.c.l.b16 %v480
    %v3542 = vunpack.c.h.b16 %v480
    %v3543 = vunpack.c.l.b16 %v481
    %v3544 = vunpack.c.h.b16 %v481
    %v3545 = vunpack.c.l.b16 %v482
    %v3546 = vunpack.c.h.b16 %v482
    %v3547 = vunpack.c.l.b16 %v483
    %v3548 = vunpack.c.h.b16 %v483
    %v3549 = vunpack.c.l.b16 %v484
    %v3550 = vunpack.c.h.b16 %v484
    %v3551 = vunpack.c.l.b16 %v485
    %v3552 = vunpack.c.h.b16 %v485
    %v3553 = vunpack.c.l.b16 %v486
    %v3554 = vunpack.c.h.b16 %v486
    %v3555 = vunpack.c.l.b16 %v487
    %v3556 = vunpack.c.h.b16 %v487
    %v3557 = vunpack.c.l.b16 %v488
    %v3558 = vunpack.c.h.b16 %v488
    %v3559 = vunpack.c.l.b16 %v489
    %v3560 = vunpack.c.h.b16 %v489
    %v3561 = vunpack.c.l.b16 %v490
    %v3562 = vunpack.c.h.b16 %v490
    %v3563 = vunpack.c.l.b16 %v491
    %v3564 = vunpack.c.h.b16 %v491
    %v3565 = vunpack.c.l.b16 %v492
    %v3566 = vunpack.c.h.b16 %v492
    %v3567 = vunpack.c.l.b16 %v493
    %v3568 = vunpack.c.h.b16 %v493
    %v3569 = vunpack.c.l.b16 %v494
    %v3570 = vunpack.c.h.b16 %v494
    %v3571 = vunpack.c.l.b16 %v495
    %v3572 = vunpack.c.h.b16 %v495
    %v3573 = vunpack.c.l.b16 %v496
    %v3574 = vunpack.c.h.b16 %v496
    %v3575 = vunpack.c.l.b16 %v497
    %v3576 = vunpack.c.h.b16 %v497
    %v3577 = vunpack.c.l.b16 %v498
    %v3578 = vunpack.c.h.b16 %v498
    %v3579 = vunpack.c.l.b16 %v499
    %v3580 = vunpack.c.h.b16 %v499
    %v3581 = vunpack.c.l.b16 %v500
    %v3582 = vunpack.c.h.b16 %v500
    %v3583 = vunpack.c.l.b16 %v501
    %v3584 = vunpack.c.h.b16 %v501
    %v3585 = vunpack.c.l.b16 %v502
    %v3586 = vunpack.c.h.b16 %v502
    %v3587 = vunpack.c.l.b16 %v503
    %v3588 = vunpack.c.h.b16 %v503
    %v3589 = vunpack.c.l.b16 %v504
    %v3590 = vunpack.c.h.b16 %v504
    %v3591 = vunpack.c.l.b16 %v505
    %v3592 = vunpack.c.h.b16 %v505
    %v3593 = vunpack.c.l.b16 %v506
    %v3594 = vunpack.c.h.b16 %v506
    %v3595 = vunpack.c.l.b16 %v507
    %v3596 = vunpack.c.h.b16 %v507
    %v3597 = vunpack.c.l.b16 %v508
    %v3598 = vunpack.c.h.b16 %v508
    %v3599 = vunpack.c.l.b16 %v509
    %v3600 = vunpack.c.h.b16 %v509
    %v3601 = vunpack.c.l.b16 %v510
    %v3602 = vunpack.c.h.b16 %v510
    %v3603 = vunpack.c.l.b16 %v511
    %v3604 = vunpack.c.h.b16 %v511
    %v3605 = vunpack.c.l.b16 %v512
    %v3606 = vunpack.c.h.b16 %v512
    %v3607 = vunpack.c.l.b16 %v513
    %v3608 = vunpack.c.h.b16 %v513
    %v3609 = vunpack.c.l.b16 %v514
    %v3610 = vunpack.c.h.b16 %v514
    %v3611 = vunpack.c.l.b16 %v515
    %v3612 = vunpack.c.h.b16 %v515
    %v3613 = vunpack.c.l.b16 %v516
    %v3614 = vunpack.c.h.b16 %v516
    %v3615 = vunpack.c.l.b16 %v517
    %v3616 = vunpack.c.h.b16 %v517
    %v3617 = vunpack.c.l.b16 %v518
    %v3618 = vunpack.c.h.b16 %v518
    %v3619 = vunpack.c.l.b16 %v519
    %v3620 = vunpack.c.h.b16 %v519
    %v3621 = vunpack.c.l.b16 %v520
    %v3622 = vunpack.c.h.b16 %v520
    %v3623 = vunpack.c.l.b16 %v521
    %v3624 = vunpack.c.h.b16 %v521
    %v3625 = vunpack.c.l.b16 %v522
    %v3626 = vunpack.c.h.b16 %v522
    %v3627 = vunpack.c.l.b16 %v523
    %v3628 = vunpack.c.h.b16 %v523
    %v3629 = vunpack.c.l.b16 %v524
    %v3630 = vunpack.c.h.b16 %v524
    %v3631 = vunpack.c.l.b16 %v525
    %v3632 = vunpack.c.h.b16 %v525
    %v3633 = vunpack.c.l.b16 %v526
    %v3634 = vunpack.c.h.b16 %v526
    %v3635 = vunpack.c.l.b16 %v527
    %v3636 = vunpack.c.h.b16 %v527
    %v3637 = vunpack.c.l.b16 %v528
    %v3638 = vunpack.c.h.b16 %v528
    %v3639 = vunpack.c.l.b16 %v529
    %v3640 = vunpack.c.h.b16 %v529
    %v3641 = vunpack.c.l.b16 %v530
    %v3642 = vunpack.c.h.b16 %v530
    %v3643 = vunpack.c.l.b16 %v531
    %v3644 = vunpack.c.h.b16 %v531
    %v3645 = vunpack.c.l.b16 %v532
    %v3646 = vunpack.c.h.b16 %v532
    %v3647 = vunpack.c.l.b16 %v533
    %v3648 = vunpack.c.h.b16 %v533
    %v3649 = vunpack.c.l.b16 %v534
    %v3650 = vunpack.c.h.b16 %v534
    %v3651 = vunpack.c.l.b16 %v535
    %v3652 = vunpack.c.h.b16 %v535
    %v3653 = vunpack.c.l.b16 %v536
    %v3654 = vunpack.c.h.b16 %v536
    %v3655 = vunpack.c.l.b16 %v537
    %v3656 = vunpack.c.h.b16 %v537
    %v3657 = vunpack.c.l.b16 %v538
    %v3658 = vunpack.c.h.b16 %v538
    %v3659 = vunpack.c.l.b16 %v539
    %v3660 = vunpack.c.h.b16 %v539
    %v3661 = vunpack.c.l.b16 %v540
    %v3662 = vunpack.c.h.b16 %v540
    %v3663 = vunpack.c.l.b16 %v541
    %v3664 = vunpack.c.h.b16 %v541
    %v3665 = vunpack.c.l.b16 %v542
    %v3666 = vunpack.c.h.b16 %v542
    %v3667 = vunpack.c.l.b16 %v543
    %v3668 = vunpack.c.h.b16 %v543
    %v3669 = vunpack.c.l.b16 %v544
    %v3670 = vunpack.c.h.b16 %v544
    %v3671 = vunpack.c.l.b16 %v545
    %v3672 = vunpack.c.h.b16 %v545
    %v3673 = vunpack.c.l.b16 %v546
    %v3674 = vunpack.c.h.b16 %v546
    %v3675 = vunpack.c.l.b16 %v547
    %v3676 = vunpack.c.h.b16 %v547
    %v3677 = vunpack.c.l.b16 %v548
    %v3678 = vunpack.c.h.b16 %v548
    %v3679 = vunpack.c.l.b16 %v549
    %v3680 = vunpack.c.h.b16 %v549
    %v3681 = vunpack.c.l.b16 %v550
    %v3682 = vunpack.c.h.b16 %v550
    %v3683 = vunpack.c.l.b16 %v551
    %v3684 = vunpack.c.h.b16 %v551
    %v3685 = vunpack.c.l.b16 %v552
    %v3686 = vunpack.c.h.b16 %v552
    %v3687 = vunpack.c.l.b16 %v553
    %v3688 = vunpack.c.h.b16 %v553
    %v3689 = vunpack.c.l.b16 %v554
    %v3690 = vunpack.c.h.b16 %v554
    %v3691 = vunpack.c.l.b16 %v555
    %v3692 = vunpack.c.h.b16 %v555
    %v3693 = vunpack.c.l.b16 %v556
    %v3694 = vunpack.c.h.b16 %v556
    %v3695 = vunpack.c.l.b16 %v557
    %v3696 = vunpack.c.h.b16 %v557
    %v3697 = vunpack.c.l.b16 %v558
    %v3698 = vunpack.c.h.b16 %v558
    %v3699 = vunpack.c.l.b16 %v559
    %v3700 = vunpack.c.h.b16 %v559
    %v3701 = vunpack.c.l.b16 %v560
    %v3702 = vunpack.c.h.b16 %v560
    %v3703 = vunpack.c.l.b16 %v561
    %v3704 = vunpack.c.h.b16 %v561
    %v3705 = vunpack.c.l.b16 %v562
    %v3706 = vunpack.c.h.b16 %v562
    %v3707 = vunpack.c.l.b16 %v563
    %v3708 = vunpack.c.h.b16 %v563
    %v3709 = vunpack.c.l.b16 %v564
    %v3710 = vunpack.c.h.b16 %v564
    %v3711 = vunpack.c.l.b16 %v565
    %v3712 = vunpack.c.h.b16 %v565
    %v3713 = vunpack.c.l.b16 %v566
    %v3714 = vunpack.c.h.b16 %v566
    %v3715 = vunpack.c.l.b16 %v567
    %v3716 = vunpack.c.h.b16 %v567
    %v3717 = vunpack.c.l.b16 %v568
    %v3718 = vunpack.c.h.b16 %v568
    %v3719 = vunpack.c.l.b16 %v569
    %v3720 = vunpack.c.h.b16 %v569
    %v3721 = vunpack.c.l.b16 %v570
    %v3722 = vunpack.c.h.b16 %v570
    %v3723 = vunpack.c.l.b16 %v571
    %v3724 = vunpack.c.h.b16 %v571
    %v3725 = vunpack.c.l.b16 %v572
    %v3726 = vunpack.c.h.b16 %v572
    %v3727 = vunpack.c.l.b16 %v573
    %v3728 = vunpack.c.h.b16 %v573
    %v3729 = vunpack.c.l.b16 %v574
    %v3730 = vunpack.c.h.b16 %v574
    %v3731 = vunpack.c.l.b16 %v575
    %v3732 = vunpack.c.h.b16 %v575
    %v3733 = vunpack.c.l.b16 %v576
    %v3734 = vunpack.c.h.b16 %v576
    %v3735 = vunpack.c.l.b16 %v577
    %v3736 = vunpack.c.h.b16 %v577
    %v3737 = vunpack.c.l.b16 %v578
    %v3738 = vunpack.c.h.b16 %v578
    %v3739 = vunpack.c.l.b16 %v579
    %v3740 = vunpack.c.h.b16 %v579
    %v3741 = vunpack.c.l.b16 %v580
    %v3742 = vunpack.c.h.b16 %v580
    %v3743 = vunpack.c.l.b16 %v581
    %v3744 = vunpack.c.h.b16 %v581
    %v3745 = vunpack.c.l.b16 %v582
    %v3746 = vunpack.c.h.b16 %v582
    %v3747 = vunpack.c.l.b16 %v583
    %v3748 = vunpack.c.h.b16 %v583
    %v3749 = vunpack.c.l.b16 %v584
    %v3750 = vunpack.c.h.b16 %v584
    %v3751 = vunpack.c.l.b16 %v585
    %v3752 = vunpack.c.h.b16 %v585
    %v3753 = vunpack.c.l.b16 %v586
    %v3754 = vunpack.c.h.b16 %v586
    %v3755 = vunpack.c.l.b16 %v587
    %v3756 = vunpack.c.h.b16 %v587
    %v3757 = vunpack.c.l.b16 %v588
    %v3758 = vunpack.c.h.b16 %v588
    %v3759 = vunpack.c.l.b16 %v589
    %v3760 = vunpack.c.h.b16 %v589
    %v3761 = vunpack.c.l.b16 %v590
    %v3762 = vunpack.c.h.b16 %v590
    %v3763 = vunpack.c.l.b16 %v591
    %v3764 = vunpack.c.h.b16 %v591
    %v3765 = vunpack.c.l.b16 %v592
    %v3766 = vunpack.c.h.b16 %v592
    %v3767 = vunpack.c.l.b16 %v593
    %v3768 = vunpack.c.h.b16 %v593
    %v3769 = vunpack.c.l.b16 %v594
    %v3770 = vunpack.c.h.b16 %v594
    %v3771 = vunpack.c.l.b16 %v595
    %v3772 = vunpack.c.h.b16 %v595
    %v3773 = vunpack.c.l.b16 %v596
    %v3774 = vunpack.c.h.b16 %v596
    %v3775 = vunpack.c.l.b16 %v597
    %v3776 = vunpack.c.h.b16 %v597
    %v3777 = vunpack.c.l.b16 %v598
    %v3778 = vunpack.c.h.b16 %v598
    %v3779 = vunpack.c.l.b16 %v599
    %v3780 = vunpack.c.h.b16 %v599
    %v3781 = vunpack.c.l.b16 %v600
    %v3782 = vunpack.c.h.b16 %v600
    %v3783 = vunpack.c.l.b16 %v601
    %v3784 = vunpack.c.h.b16 %v601
    %v3785 = vunpack.c.l.b16 %v602
    %v3786 = vunpack.c.h.b16 %v602
    %v3787 = vunpack.c.l.b16 %v603
    %v3788 = vunpack.c.h.b16 %v603
    %v3789 = vunpack.c.l.b16 %v604
    %v3790 = vunpack.c.h.b16 %v604
    %v3791 = vunpack.c.l.b16 %v605
    %v3792 = vunpack.c.h.b16 %v605
    %v3793 = vunpack.c.l.b16 %v606
    %v3794 = vunpack.c.h.b16 %v606
    %v3795 = vunpack.c.l.b16 %v607
    %v3796 = vunpack.c.h.b16 %v607
    %v3797 = vunpack.c.l.b16 %v608
    %v3798 = vunpack.c.h.b16 %v608
    %v3799 = vunpack.c.l.b16 %v609
    %v3800 = vunpack.c.h.b16 %v609
    %v3801 = vunpack.c.l.b16 %v610
    %v3802 = vunpack.c.h.b16 %v610
    %v3803 = vunpack.c.l.b16 %v611
    %v3804 = vunpack.c.h.b16 %v611
    %v3805 = vunpack.c.l.b16 %v612
    %v3806 = vunpack.c.h.b16 %v612
    %v3807 = vunpack.c.l.b16 %v613
    %v3808 = vunpack.c.h.b16 %v613
    %v3809 = vunpack.c.l.b16 %v614
    %v3810 = vunpack.c.h.b16 %v614
    %v3811 = vunpack.c.l.b16 %v615
    %v3812 = vunpack.c.h.b16 %v615
    %v3813 = vunpack.c.l.b16 %v616
    %v3814 = vunpack.c.h.b16 %v616
    %v3815 = vunpack.c.l.b16 %v617
    %v3816 = vunpack.c.h.b16 %v617
    %v3817 = vunpack.c.l.b16 %v618
    %v3818 = vunpack.c.h.b16 %v618
    %v3819 = vunpack.c.l.b16 %v619
    %v3820 = vunpack.c.h.b16 %v619
    %v3821 = vunpack.c.l.b16 %v620
    %v3822 = vunpack.c.h.b16 %v620
    %v3823 = vunpack.c.l.b16 %v621
    %v3824 = vunpack.c.h.b16 %v621
    %v3825 = vunpack.c.l.b16 %v622
    %v3826 = vunpack.c.h.b16 %v622
    %v3827 = vunpack.c.l.b16 %v623
    %v3828 = vunpack.c.h.b16 %v623
    %v3829 = vunpack.c.l.b16 %v624
    %v3830 = vunpack.c.h.b16 %v624
    %v3831 = vunpack.c.l.b16 %v625
    %v3832 = vunpack.c.h.b16 %v625
    %v3833 = vunpack.c.l.b16 %v626
    %v3834 = vunpack.c.h.b16 %v626
    %v3835 = vunpack.c.l.b16 %v627
    %v3836 = vunpack.c.h.b16 %v627
    %v3837 = vunpack.c.l.b16 %v628
    %v3838 = vunpack.c.h.b16 %v628
    %v3839 = vunpack.c.l.b16 %v629
    %v3840 = vunpack.c.h.b16 %v629
    %v3841 = vunpack.c.l.b16 %v630
    %v3842 = vunpack.c.h.b16 %v630
    %v3843 = vunpack.c.l.b16 %v631
    %v3844 = vunpack.c.h.b16 %v631
    %v3845 = vunpack.c.l.b16 %v632
    %v3846 = vunpack.c.h.b16 %v632
    %v3847 = vunpack.c.l.b16 %v633
    %v3848 = vunpack.c.h.b16 %v633
    %v3849 = vunpack.c.l.b16 %v634
    %v3850 = vunpack.c.h.b16 %v634
    %v3851 = vunpack.c.l.b16 %v635
    %v3852 = vunpack.c.h.b16 %v635
    %v3853 = vunpack.c.l.b16 %v636
    %v3854 = vunpack.c.h.b16 %v636
    %v3855 = vunpack.c.l.b16 %v637
    %v3856 = vunpack.c.h.b16 %v637
    %v3857 = vunpack.c.l.b16 %v638
    %v3858 = vunpack.c.h.b16 %v638
    %v3859 = vunpack.c.l.b16 %v639
    %v3860 = vunpack.c.h.b16 %v639
    %v3861 = vunpack.c.l.b16 %v640
    %v3862 = vunpack.c.h.b16 %v640
    %v3863 = vunpack.c.l.b16 %v641
    %v3864 = vunpack.c.h.b16 %v641
    %v3865 = vunpack.c.l.b16 %v642
    %v3866 = vunpack.c.h.b16 %v642
    %v3867 = vunpack.c.l.b16 %v643
    %v3868 = vunpack.c.h.b16 %v643
    %v3869 = vunpack.c.l.b16 %v644
    %v3870 = vunpack.c.h.b16 %v644
    %v3871 = vunpack.c.l.b16 %v645
    %v3872 = vunpack.c.h.b16 %v645
    %v3873 = vunpack.c.l.b16 %v646
    %v3874 = vunpack.c.h.b16 %v646
    %v3875 = vunpack.c.l.b16 %v647
    %v3876 = vunpack.c.h.b16 %v647
    %v3877 = vunpack.c.l.b16 %v648
    %v3878 = vunpack.c.h.b16 %v648
    %v3879 = vunpack.c.l.b16 %v649
    %v3880 = vunpack.c.h.b16 %v649
    %v3881 = vunpack.c.l.b16 %v650
    %v3882 = vunpack.c.h.b16 %v650
    %v3883 = vunpack.c.l.b16 %v651
    %v3884 = vunpack.c.h.b16 %v651
    %v3885 = vunpack.c.l.b16 %v652
    %v3886 = vunpack.c.h.b16 %v652
    %v3887 = vunpack.c.l.b16 %v653
    %v3888 = vunpack.c.h.b16 %v653
    %v3889 = vunpack.c.l.b16 %v654
    %v3890 = vunpack.c.h.b16 %v654
    %v3891 = vunpack.c.l.b16 %v655
    %v3892 = vunpack.c.h.b16 %v655
    %v3893 = vunpack.c.l.b16 %v656
    %v3894 = vunpack.c.h.b16 %v656
    %v3895 = vunpack.c.l.b16 %v657
    %v3896 = vunpack.c.h.b16 %v657
    %v3897 = vunpack.c.l.b16 %v658
    %v3898 = vunpack.c.h.b16 %v658
    %v3899 = vunpack.c.l.b16 %v659
    %v3900 = vunpack.c.h.b16 %v659
    %v3901 = vunpack.c.l.b16 %v660
    %v3902 = vunpack.c.h.b16 %v660
    %v3903 = vunpack.c.l.b16 %v661
    %v3904 = vunpack.c.h.b16 %v661
    %v3905 = vunpack.c.l.b16 %v662
    %v3906 = vunpack.c.h.b16 %v662
    %v3907 = vunpack.c.l.b16 %v663
    %v3908 = vunpack.c.h.b16 %v663
    %v3909 = vunpack.c.l.b16 %v664
    %v3910 = vunpack.c.h.b16 %v664
    %v3911 = vunpack.c.l.b16 %v665
    %v3912 = vunpack.c.h.b16 %v665
    %v3913 = vunpack.c.l.b16 %v666
    %v3914 = vunpack.c.h.b16 %v666
    %v3915 = vunpack.c.l.b16 %v667
    %v3916 = vunpack.c.h.b16 %v667
    %v3917 = vunpack.c.l.b16 %v668
    %v3918 = vunpack.c.h.b16 %v668
    %v3919 = vunpack.c.l.b16 %v669
    %v3920 = vunpack.c.h.b16 %v669
    %v3921 = vunpack.c.l.b16 %v670
    %v3922 = vunpack.c.h.b16 %v670
    %v3923 = vunpack.c.l.b16 %v671
    %v3924 = vunpack.c.h.b16 %v671
    %v3925 = vunpack.c.l.b16 %v672
    %v3926 = vunpack.c.h.b16 %v672
    %v3927 = vunpack.c.l.b16 %v673
    %v3928 = vunpack.c.h.b16 %v673
    %v3929 = vunpack.c.l.b16 %v674
    %v3930 = vunpack.c.h.b16 %v674
    %v3931 = vunpack.c.l.b16 %v675
    %v3932 = vunpack.c.h.b16 %v675
    %v3933 = vunpack.c.l.b16 %v676
    %v3934 = vunpack.c.h.b16 %v676
    %v3935 = vunpack.c.l.b16 %v677
    %v3936 = vunpack.c.h.b16 %v677
    %v3937 = vunpack.c.l.b16 %v678
    %v3938 = vunpack.c.h.b16 %v678
    %v3939 = vunpack.c.l.b16 %v679
    %v3940 = vunpack.c.h.b16 %v679
    %v3941 = vunpack.c.l.b16 %v680
    %v3942 = vunpack.c.h.b16 %v680
    %v3943 = vunpack.c.l.b16 %v681
    %v3944 = vunpack.c.h.b16 %v681
    %v3945 = vunpack.c.l.b16 %v682
    %v3946 = vunpack.c.h.b16 %v682
    %v3947 = vunpack.c.l.b16 %v683
    %v3948 = vunpack.c.h.b16 %v683
    %v3949 = vunpack.c.l.b16 %v684
    %v3950 = vunpack.c.h.b16 %v684
    %v3951 = vunpack.c.l.b16 %v685
    %v3952 = vunpack.c.h.b16 %v685
    %v3953 = vunpack.c.l.b16 %v686
    %v3954 = vunpack.c.h.b16 %v686
    %v3955 = vunpack.c.l.b16 %v687
    %v3956 = vunpack.c.h.b16 %v687
    %v3957 = vunpack.c.l.b16 %v688
    %v3958 = vunpack.c.h.b16 %v688
    %v3959 = vunpack.c.l.b16 %v689
    %v3960 = vunpack.c.h.b16 %v689
    %v3961 = vunpack.c.l.b16 %v690
    %v3962 = vunpack.c.h.b16 %v690
    %v3963 = vunpack.c.l.b16 %v691
    %v3964 = vunpack.c.h.b16 %v691
    %v3965 = vunpack.c.l.b16 %v692
    %v3966 = vunpack.c.h.b16 %v692
    %v3967 = vunpack.c.l.b16 %v693
    %v3968 = vunpack.c.h.b16 %v693
    %v3969 = vunpack.c.l.b16 %v694
    %v3970 = vunpack.c.h.b16 %v694
    %v3971 = vunpack.c.l.b16 %v695
    %v3972 = vunpack.c.h.b16 %v695
    %v3973 = vunpack.c.l.b16 %v696
    %v3974 = vunpack.c.h.b16 %v696
    %v3975 = vunpack.c.l.b16 %v697
    %v3976 = vunpack.c.h.b16 %v697
    %v3977 = vunpack.c.l.b16 %v698
    %v3978 = vunpack.c.h.b16 %v698
    %v3979 = vunpack.c.l.b16 %v699
    %v3980 = vunpack.c.h.b16 %v699
    %v3981 = vunpack.c.l.b16 %v700
    %v3982 = vunpack.c.h.b16 %v700
    %v3983 = vunpack.c.l.b16 %v701
    %v3984 = vunpack.c.h.b16 %v701
    %v3985 = vunpack.c.l.b16 %v702
    %v3986 = vunpack.c.h.b16 %v702
    %v3987 = vunpack.c.l.b16 %v703
    %v3988 = vunpack.c.h.b16 %v703
    %v3989 = vunpack.c.l.b16 %v704
    %v3990 = vunpack.c.h.b16 %v704
    %v3991 = vunpack.c.l.b16 %v705
    %v3992 = vunpack.c.h.b16 %v705
    %v3993 = vunpack.c.l.b16 %v706
    %v3994 = vunpack.c.h.b16 %v706
    %v3995 = vunpack.c.l.b16 %v707
    %v3996 = vunpack.c.h.b16 %v707
    %v3997 = vunpack.c.l.b16 %v708
    %v3998 = vunpack.c.h.b16 %v708
    %v3999 = vunpack.c.l.b16 %v709
    %v4000 = vunpack.c.h.b16 %v709
    %v4001 = vunpack.c.l.b16 %v710
    %v4002 = vunpack.c.h.b16 %v710
    %v4003 = vunpack.c.l.b16 %v711
    %v4004 = vunpack.c.h.b16 %v711
    %v4005 = vunpack.c.l.b16 %v712
    %v4006 = vunpack.c.h.b16 %v712
    %v4007 = vunpack.c.l.b16 %v713
    %v4008 = vunpack.c.h.b16 %v713
    %v4009 = vunpack.c.l.b16 %v714
    %v4010 = vunpack.c.h.b16 %v714
    %v4011 = vunpack.c.l.b16 %v715
    %v4012 = vunpack.c.h.b16 %v715
    %v4013 = vunpack.c.l.b16 %v716
    %v4014 = vunpack.c.h.b16 %v716
    %v4015 = vunpack.c.l.b16 %v717
    %v4016 = vunpack.c.h.b16 %v717
    %v4017 = vunpack.c.l.b16 %v718
    %v4018 = vunpack.c.h.b16 %v718
    %v4019 = vunpack.c.l.b16 %v719
    %v4020 = vunpack.c.h.b16 %v719
    %v4021 = vunpack.c.l.b16 %v720
    %v4022 = vunpack.c.h.b16 %v720
    %v4023 = vunpack.c.l.b16 %v721
    %v4024 = vunpack.c.h.b16 %v721
    %v4025 = vunpack.c.l.b16 %v722
    %v4026 = vunpack.c.h.b16 %v722
    %v4027 = vunpack.c.l.b16 %v723
    %v4028 = vunpack.c.h.b16 %v723
    %v4029 = vunpack.c.l.b16 %v724
    %v4030 = vunpack.c.h.b16 %v724
    %v4031 = vunpack.c.l.b16 %v725
    %v4032 = vunpack.c.h.b16 %v725
    %v4033 = vunpack.c.l.b16 %v726
    %v4034 = vunpack.c.h.b16 %v726
    %v4035 = vunpack.c.l.b16 %v727
    %v4036 = vunpack.c.h.b16 %v727
    %v4037 = vunpack.c.l.b16 %v728
    %v4038 = vunpack.c.h.b16 %v728
    %v4039 = vunpack.c.l.b16 %v729
    %v4040 = vunpack.c.h.b16 %v729
    %v4041 = vunpack.c.l.b16 %v730
    %v4042 = vunpack.c.h.b16 %v730
    %v4043 = vunpack.c.l.b16 %v731
    %v4044 = vunpack.c.h.b16 %v731
    %v4045 = vunpack.c.l.b16 %v732
    %v4046 = vunpack.c.h.b16 %v732
    %v4047 = vunpack.c.l.b16 %v733
    %v4048 = vunpack.c.h.b16 %v733
    %v4049 = vunpack.c.l.b16 %v734
    %v4050 = vunpack.c.h.b16 %v734
    %v4051 = vunpack.c.l.b16 %v735
    %v4052 = vunpack.c.h.b16 %v735
    %v4053 = vunpack.c.l.b16 %v736
    %v4054 = vunpack.c.h.b16 %v736
    %v4055 = vunpack.c.l.b16 %v737
    %v4056 = vunpack.c.h.b16 %v737
    %v4057 = vunpack.c.l.b16 %v738
    %v4058 = vunpack.c.h.b16 %v738
    %v4059 = vunpack.c.l.b16 %v739
    %v4060 = vunpack.c.h.b16 %v739
    %v4061 = vunpack.c.l.b16 %v740
    %v4062 = vunpack.c.h.b16 %v740
    %v4063 = vunpack.c.l.b16 %v741
    %v4064 = vunpack.c.h.b16 %v741
    %v4065 = vunpack.c.l.b16 %v742
    %v4066 = vunpack.c.h.b16 %v742
    %v4067 = vunpack.c.l.b16 %v743
    %v4068 = vunpack.c.h.b16 %v743
    %v4069 = vunpack.c.l.b16 %v744
    %v4070 = vunpack.c.h.b16 %v744
    %v4071 = vunpack.c.l.b16 %v745
    %v4072 = vunpack.c.h.b16 %v745
    %v4073 = vunpack.c.l.b16 %v746
    %v4074 = vunpack.c.h.b16 %v746
    %v4075 = vunpack.c.l.b16 %v747
    %v4076 = vunpack.c.h.b16 %v747
    %v4077 = vunpack.c.l.b16 %v748
    %v4078 = vunpack.c.h.b16 %v748
    %v4079 = vunpack.c.l.b16 %v749
    %v4080 = vunpack.c.h.b16 %v749
    %v4081 = vunpack.c.l.b16 %v750
    %v4082 = vunpack.c.h.b16 %v750
    %v4083 = vunpack.c.l.b16 %v751
    %v4084 = vunpack.c.h.b16 %v751
    %v4085 = vunpack.c.l.b16 %v752
    %v4086 = vunpack.c.h.b16 %v752
    %v4087 = vunpack.c.l.b16 %v753
    %v4088 = vunpack.c.h.b16 %v753
    %v4089 = vunpack.c.l.b16 %v754
    %v4090 = vunpack.c.h.b16 %v754
    %v4091 = vunpack.c.l.b16 %v755
    %v4092 = vunpack.c.h.b16 %v755
    %v4093 = vunpack.c.l.b16 %v756
    %v4094 = vunpack.c.h.b16 %v756
    %v4095 = vunpack.c.l.b16 %v757
    %v4096 = vunpack.c.h.b16 %v757
    %v4097 = vunpack.c.l.b16 %v758
    %v4098 = vunpack.c.h.b16 %v758
    %v4099 = vunpack.c.l.b16 %v759
    %v4100 = vunpack.c.h.b16 %v759
    %v4101 = vunpack.c.l.b16 %v760
    %v4102 = vunpack.c.h.b16 %v760
    %v4103 = vunpack.c.l.b16 %v761
    %v4104 = vunpack.c.h.b16 %v761
    %v4105 = vunpack.c.l.b16 %v762
    %v4106 = vunpack.c.h.b16 %v762
    %v4107 = vunpack.c.l.b16 %v763
    %v4108 = vunpack.c.h.b16 %v763
    %v4109 = vunpack.c.l.b16 %v764
    %v4110 = vunpack.c.h.b16 %v764
    %v4111 = vunpack.c.l.b16 %v765
    %v4112 = vunpack.c.h.b16 %v765
    %v4113 = vunpack.c.l.b16 %v766
    %v4114 = vunpack.c.h.b16 %v766
    %v4115 = vunpack.c.l.b16 %v767
    %v4116 = vunpack.c.h.b16 %v767
    %v4117 = vunpack.c.l.b16 %v768
    %v4118 = vunpack.c.h.b16 %v768
    %v4119 = vunpack.c.l.b16 %v769
    %v4120 = vunpack.c.h.b16 %v769
    %v4121 = vunpack.c.l.b16 %v770
    %v4122 = vunpack.c.h.b16 %v770
    %v4123 = vunpack.c.l.b16 %v771
    %v4124 = vunpack.c.h.b16 %v771
    %v4125 = vunpack.c.l.b16 %v772
    %v4126 = vunpack.c.h.b16 %v772
    %v4127 = vunpack.c.l.b16 %v773
    %v4128 = vunpack.c.h.b16 %v773
    %v4129 = vunpack.c.l.b16 %v774
    %v4130 = vunpack.c.h.b16 %v774
    %v4131 = vunpack.c.l.b16 %v775
    %v4132 = vunpack.c.h.b16 %v775
    %v4133 = vunpack.c.l.b16 %v776
    %v4134 = vunpack.c.h.b16 %v776
    %v4135 = vunpack.c.l.b16 %v777
    %v4136 = vunpack.c.h.b16 %v777
    %v4137 = vunpack.c.l.b16 %v778
    %v4138 = vunpack.c.h.b16 %v778
    %v4139 = vunpack.c.l.b16 %v779
    %v4140 = vunpack.c.h.b16 %v779
    %v4141 = vunpack.c.l.b16 %v780
    %v4142 = vunpack.c.h.b16 %v780
    %v4143 = vunpack.c.l.b16 %v781
    %v4144 = vunpack.c.h.b16 %v781
    %v4145 = vunpack.c.l.b16 %v782
    %v4146 = vunpack.c.h.b16 %v782
    %v4147 = vunpack.c.l.b16 %v783
    %v4148 = vunpack.c.h.b16 %v783
    %v4149 = vunpack.c.l.b16 %v784
    %v4150 = vunpack.c.h.b16 %v784
    %v4151 = vunpack.c.l.b16 %v785
    %v4152 = vunpack.c.h.b16 %v785
    %v4153 = vunpack.c.l.b16 %v786
    %v4154 = vunpack.c.h.b16 %v786
    %v4155 = vunpack.c.l.b16 %v787
    %v4156 = vunpack.c.h.b16 %v787
    %v4157 = vunpack.c.l.b16 %v788
    %v4158 = vunpack.c.h.b16 %v788
    %v4159 = vunpack.c.l.b16 %v789
    %v4160 = vunpack.c.h.b16 %v789
    %v4161 = vunpack.c.l.b16 %v790
    %v4162 = vunpack.c.h.b16 %v790
    %v4163 = vunpack.c.l.b16 %v791
    %v4164 = vunpack.c.h.b16 %v791
    %v4165 = vunpack.c.l.b16 %v792
    %v4166 = vunpack.c.h.b16 %v792
    %v4167 = vunpack.c.l.b16 %v793
    %v4168 = vunpack.c.h.b16 %v793
    %v4169 = vunpack.c.l.b16 %v794
    %v4170 = vunpack.c.h.b16 %v794
    %v4171 = vunpack.c.l.b16 %v795
    %v4172 = vunpack.c.h.b16 %v795
    %v4173 = vunpack.c.l.b16 %v796
    %v4174 = vunpack.c.h.b16 %v796
    %v4175 = vunpack.c.l.b16 %v797
    %v4176 = vunpack.c.h.b16 %v797
    %v4177 = vunpack.c.l.b16 %v798
    %v4178 = vunpack.c.h.b16 %v798
    %v4179 = vunpack.c.l.b16 %v799
    %v4180 = vunpack.c.h.b16 %v799
    %v4181 = vunpack.c.l.b16 %v800
    %v4182 = vunpack.c.h.b16 %v800
    %v4183 = vunpack.c.l.b16 %v801
    %v4184 = vunpack.c.h.b16 %v801
    %v4185 = vunpack.c.l.b16 %v802
    %v4186 = vunpack.c.h.b16 %v802
    %v4187 = vunpack.c.l.b16 %v803
    %v4188 = vunpack.c.h.b16 %v803
    %v4189 = vunpack.c.l.b16 %v804
    %v4190 = vunpack.c.h.b16 %v804
    %v4191 = vunpack.c.l.b16 %v805
    %v4192 = vunpack.c.h.b16 %v805
    %v4193 = vunpack.c.l.b16 %v806
    %v4194 = vunpack.c.h.b16 %v806
    %v4195 = vunpack.c.l.b16 %v807
    %v4196 = vunpack.c.h.b16 %v807
    %v4197 = vunpack.c.l.b16 %v808
    %v4198 = vunpack.c.h.b16 %v808
    %v4199 = vunpack.c.l.b16 %v809
    %v4200 = vunpack.c.h.b16 %v809
    %v4201 = vunpack.c.l.b16 %v810
    %v4202 = vunpack.c.h.b16 %v810
    %v4203 = vunpack.c.l.b16 %v811
    %v4204 = vunpack.c.h.b16 %v811
    %v4205 = vunpack.c.l.b16 %v812
    %v4206 = vunpack.c.h.b16 %v812
    %v4207 = vunpack.c.l.b16 %v813
    %v4208 = vunpack.c.h.b16 %v813
    %v4209 = vunpack.c.l.b16 %v814
    %v4210 = vunpack.c.h.b16 %v814
    %v4211 = vunpack.c.l.b16 %v815
    %v4212 = vunpack.c.h.b16 %v815
    %v4213 = vunpack.c.l.b16 %v816
    %v4214 = vunpack.c.h.b16 %v816
    %v4215 = vunpack.c.l.b16 %v817
    %v4216 = vunpack.c.h.b16 %v817
    %v4217 = vunpack.c.l.b16 %v818
    %v4218 = vunpack.c.h.b16 %v818
    %v4219 = vunpack.c.l.b16 %v819
    %v4220 = vunpack.c.h.b16 %v819
    %v4221 = vunpack.c.l.b16 %v820
    %v4222 = vunpack.c.h.b16 %v820
    %v4223 = vunpack.c.l.b16 %v821
    %v4224 = vunpack.c.h.b16 %v821
    %v4225 = vunpack.c.l.b16 %v822
    %v4226 = vunpack.c.h.b16 %v822
    %v4227 = vunpack.c.l.b16 %v823
    %v4228 = vunpack.c.h.b16 %v823
    %v4229 = vunpack.c.l.b16 %v824
    %v4230 = vunpack.c.h.b16 %v824
    %v4231 = vunpack.c.l.b16 %v825
    %v4232 = vunpack.c.h.b16 %v825
    %v4233 = vunpack.c.l.b16 %v826
    %v4234 = vunpack.c.h.b16 %v826
    %v4235 = vunpack.c.l.b16 %v827
    %v4236 = vunpack.c.h.b16 %v827
    %v4237 = vunpack.c.l.b16 %v828
    %v4238 = vunpack.c.h.b16 %v828
    %v4239 = vunpack.c.l.b16 %v829
    %v4240 = vunpack.c.h.b16 %v829
    %v4241 = vunpack.c.l.b16 %v830
    %v4242 = vunpack.c.h.b16 %v830
    %v4243 = vunpack.c.l.b16 %v831
    %v4244 = vunpack.c.h.b16 %v831
    %v4245 = vunpack.c.l.b16 %v832
    %v4246 = vunpack.c.h.b16 %v832
    %v4247 = vunpack.c.l.b16 %v833
    %v4248 = vunpack.c.h.b16 %v833
    %v4249 = vunpack.c.l.b16 %v834
    %v4250 = vunpack.c.h.b16 %v834
    %v4251 = vunpack.c.l.b16 %v835
    %v4252 = vunpack.c.h.b16 %v835
    %v4253 = vunpack.c.l.b16 %v836
    %v4254 = vunpack.c.h.b16 %v836
    %v4255 = vunpack.c.l.b16 %v837
    %v4256 = vunpack.c.h.b16 %v837
    %v4257 = vunpack.c.l.b16 %v838
    %v4258 = vunpack.c.h.b16 %v838
    %v4259 = vunpack.c.l.b16 %v839
    %v4260 = vunpack.c.h.b16 %v839
    %v4261 = vunpack.c.l.b16 %v840
    %v4262 = vunpack.c.h.b16 %v840
    %v4263 = vunpack.c.l.b16 %v841
    %v4264 = vunpack.c.h.b16 %v841
    %v4265 = vunpack.c.l.b16 %v842
    %v4266 = vunpack.c.h.b16 %v842
    %v4267 = vunpack.c.l.b16 %v843
    %v4268 = vunpack.c.h.b16 %v843
    %v4269 = vunpack.c.l.b16 %v844
    %v4270 = vunpack.c.h.b16 %v844
    %v4271 = vunpack.c.l.b16 %v845
    %v4272 = vunpack.c.h.b16 %v845
    %v4273 = vunpack.c.l.b16 %v846
    %v4274 = vunpack.c.h.b16 %v846
    %v4275 = vunpack.c.l.b16 %v847
    %v4276 = vunpack.c.h.b16 %v847
    %v4277 = vunpack.c.l.b16 %v848
    %v4278 = vunpack.c.h.b16 %v848
    %v4279 = vunpack.c.l.b16 %v849
    %v4280 = vunpack.c.h.b16 %v849
    %v4281 = vunpack.c.l.b16 %v850
    %v4282 = vunpack.c.h.b16 %v850
    %v4283 = vunpack.c.l.b16 %v851
    %v4284 = vunpack.c.h.b16 %v851
    %v4285 = vunpack.c.l.b16 %v852
    %v4286 = vunpack.c.h.b16 %v852
    %v4287 = vunpack.c.l.b16 %v853
    %v4288 = vunpack.c.h.b16 %v853
    %v4289 = vunpack.c.l.b16 %v854
    %v4290 = vunpack.c.h.b16 %v854
    %v4291 = vunpack.c.l.b16 %v855
    %v4292 = vunpack.c.h.b16 %v855
    %v4293 = vunpack.c.l.b16 %v856
    %v4294 = vunpack.c.h.b16 %v856
    %v4295 = vunpack.c.l.b16 %v857
    %v4296 = vunpack.c.h.b16 %v857
    %v4297 = vunpack.c.l.b16 %v858
    %v4298 = vunpack.c.h.b16 %v858
    %v4299 = vunpack.c.l.b16 %v859
    %v4300 = vunpack.c.h.b16 %v859
    %v4301 = vunpack.c.l.b16 %v860
    %v4302 = vunpack.c.h.b16 %v860
    %v4303 = vunpack.c.l.b16 %v861
    %v4304 = vunpack.c.h.b16 %v861
    %v4305 = vunpack.c.l.b16 %v862
    %v4306 = vunpack.c.h.b16 %v862
    %v4307 = vunpack.c.l.b16 %v863
    %v4308 = vunpack.c.h.b16 %v863
    %v4309 = vunpack.c.l.b16 %v864
    %v4310 = vunpack.c.h.b16 %v864
    %v4311 = vunpack.c.l.b16 %v865
    %v4312 = vunpack.c.h.b16 %v865
    %v4313 = vunpack.c.l.b16 %v866
    %v4314 = vunpack.c.h.b16 %v866
    %v4315 = vunpack.c.l.b16 %v867
    %v4316 = vunpack.c.h.b16 %v867
    %v4317 = vunpack.c.l.b16 %v868
    %v4318 = vunpack.c.h.b16 %v868
    %v4319 = vunpack.c.l.b16 %v869
    %v4320 = vunpack.c.h.b16 %v869
    %v4321 = vunpack.c.l.b16 %v870
    %v4322 = vunpack.c.h.b16 %v870
    %v4323 = vunpack.c.l.b16 %v871
    %v4324 = vunpack.c.h.b16 %v871
    %v4325 = vunpack.c.l.b16 %v872
    %v4326 = vunpack.c.h.b16 %v872
    %v4327 = vunpack.c.l.b16 %v873
    %v4328 = vunpack.c.h.b16 %v873
    %v4329 = vunpack.c.l.b16 %v874
    %v4330 = vunpack.c.h.b16 %v874
    %v4331 = vunpack.c.l.b16 %v875
    %v4332 = vunpack.c.h.b16 %v875
    %v4333 = vunpack.c.l.b16 %v876
    %v4334 = vunpack.c.h.b16 %v876
    %v4335 = vunpack.c.l.b16 %v877
    %v4336 = vunpack.c.h.b16 %v877
    %v4337 = vunpack.c.l.b16 %v878
    %v4338 = vunpack.c.h.b16 %v878
    %v4339 = vunpack.c.l.b16 %v879
    %v4340 = vunpack.c.h.b16 %v879
    %v4341 = vunpack.c.l.b16 %v880
    %v4342 = vunpack.c.h.b16 %v880
    %v4343 = vunpack.c.l.b16 %v881
    %v4344 = vunpack.c.h.b16 %v881
    %v4345 = vunpack.c.l.b16 %v882
    %v4346 = vunpack.c.h.b16 %v882
    %v4347 = vunpack.c.l.b16 %v883
    %v4348 = vunpack.c.h.b16 %v883
    %v4349 = vunpack.c.l.b16 %v884
    %v4350 = vunpack.c.h.b16 %v884
    %v4351 = vunpack.c.l.b16 %v885
    %v4352 = vunpack.c.h.b16 %v885
    %v4353 = vunpack.c.l.b16 %v886
    %v4354 = vunpack.c.h.b16 %v886
    %v4355 = vunpack.c.l.b16 %v887
    %v4356 = vunpack.c.h.b16 %v887
    %v4357 = vunpack.c.l.b16 %v888
    %v4358 = vunpack.c.h.b16 %v888
    %v4359 = vunpack.c.l.b16 %v889
    %v4360 = vunpack.c.h.b16 %v889
    %v4361 = vunpack.c.l.b16 %v890
    %v4362 = vunpack.c.h.b16 %v890
    %v4363 = vunpack.c.l.b16 %v891
    %v4364 = vunpack.c.h.b16 %v891
    %v4365 = vunpack.c.l.b16 %v892
    %v4366 = vunpack.c.h.b16 %v892
    %v4367 = vunpack.c.l.b16 %v893
    %v4368 = vunpack.c.h.b16 %v893
    %v4369 = vunpack.c.l.b16 %v894
    %v4370 = vunpack.c.h.b16 %v894
    %v4371 = vunpack.c.l.b16 %v895
    %v4372 = vunpack.c.h.b16 %v895
    %v4373 = vunpack.c.l.b16 %v896
    %v4374 = vunpack.c.h.b16 %v896
    %v4375 = vunpack.c.l.b16 %v897
    %v4376 = vunpack.c.h.b16 %v897
    %v4377 = vunpack.c.l.b16 %v898
    %v4378 = vunpack.c.h.b16 %v898
    %v4379 = vunpack.c.l.b16 %v899
    %v4380 = vunpack.c.h.b16 %v899
    %v4381 = vunpack.c.l.b16 %v900
    %v4382 = vunpack.c.h.b16 %v900
    %v4383 = vunpack.c.l.b16 %v901
    %v4384 = vunpack.c.h.b16 %v901
    %v4385 = vunpack.c.l.b16 %v902
    %v4386 = vunpack.c.h.b16 %v902
    %v4387 = vunpack.c.l.b16 %v903
    %v4388 = vunpack.c.h.b16 %v903
    %v4389 = vunpack.c.l.b16 %v904
    %v4390 = vunpack.c.h.b16 %v904
    %v4391 = vunpack.c.l.b16 %v905
    %v4392 = vunpack.c.h.b16 %v905
    %v4393 = vunpack.c.l.b16 %v906
    %v4394 = vunpack.c.h.b16 %v906
    %v4395 = vunpack.c.l.b16 %v907
    %v4396 = vunpack.c.h.b16 %v907
    %v4397 = vunpack.c.l.b16 %v908
    %v4398 = vunpack.c.h.b16 %v908
    %v4399 = vunpack.c.l.b16 %v909
    %v4400 = vunpack.c.h.b16 %v909
    %v4401 = vunpack.c.l.b16 %v910
    %v4402 = vunpack.c.h.b16 %v910
    %v4403 = vunpack.c.l.b16 %v911
    %v4404 = vunpack.c.h.b16 %v911
    %v4405 = vunpack.c.l.b16 %v912
    %v4406 = vunpack.c.h.b16 %v912
    %v4407 = vunpack.c.l.b16 %v913
    %v4408 = vunpack.c.h.b16 %v913
    %v4409 = vunpack.c.l.b16 %v914
    %v4410 = vunpack.c.h.b16 %v914
    %v4411 = vunpack.c.l.b16 %v915
    %v4412 = vunpack.c.h.b16 %v915
    %v4413 = vunpack.c.l.b16 %v916
    %v4414 = vunpack.c.h.b16 %v916
    %v4415 = vunpack.c.l.b16 %v917
    %v4416 = vunpack.c.h.b16 %v917
    %v4417 = vunpack.c.l.b16 %v918
    %v4418 = vunpack.c.h.b16 %v918
    %v4419 = vunpack.c.l.b16 %v919
    %v4420 = vunpack.c.h.b16 %v919
    %v4421 = vunpack.c.l.b16 %v920
    %v4422 = vunpack.c.h.b16 %v920
    %v4423 = vunpack.c.l.b16 %v921
    %v4424 = vunpack.c.h.b16 %v921
    %v4425 = vunpack.c.l.b16 %v922
    %v4426 = vunpack.c.h.b16 %v922
    %v4427 = vunpack.c.l.b16 %v923
    %v4428 = vunpack.c.h.b16 %v923
    %v4429 = vunpack.c.l.b16 %v924
    %v4430 = vunpack.c.h.b16 %v924
    %v4431 = vunpack.c.l.b16 %v925
    %v4432 = vunpack.c.h.b16 %v925
    %v4433 = vunpack.c.l.b16 %v926
    %v4434 = vunpack.c.h.b16 %v926
    %v4435 = vunpack.c.l.b16 %v927
    %v4436 = vunpack.c.h.b16 %v927
    %v4437 = vunpack.c.l.b16 %v928
    %v4438 = vunpack.c.h.b16 %v928
    %v4439 = vunpack.c.l.b16 %v929
    %v4440 = vunpack.c.h.b16 %v929
    %v4441 = vunpack.c.l.b16 %v930
    %v4442 = vunpack.c.h.b16 %v930
    %v4443 = vunpack.c.l.b16 %v931
    %v4444 = vunpack.c.h.b16 %v931
    %v4445 = vunpack.c.l.b16 %v932
    %v4446 = vunpack.c.h.b16 %v932
    %v4447 = vunpack.c.l.b16 %v933
    %v4448 = vunpack.c.h.b16 %v933
    %v4449 = vunpack.c.l.b16 %v934
    %v4450 = vunpack.c.h.b16 %v934
    %v4451 = vunpack.c.l.b16 %v935
    %v4452 = vunpack.c.h.b16 %v935
    %v4453 = vunpack.c.l.b16 %v936
    %v4454 = vunpack.c.h.b16 %v936
    %v4455 = vunpack.c.l.b16 %v937
    %v4456 = vunpack.c.h.b16 %v937
    %v4457 = vunpack.c.l.b16 %v938
    %v4458 = vunpack.c.h.b16 %v938
    %v4459 = vunpack.c.l.b16 %v939
    %v4460 = vunpack.c.h.b16 %v939
    %v4461 = vunpack.c.l.b16 %v940
    %v4462 = vunpack.c.h.b16 %v940
    %v4463 = vunpack.c.l.b16 %v941
    %v4464 = vunpack.c.h.b16 %v941
    %v4465 = vunpack.c.l.b16 %v942
    %v4466 = vunpack.c.h.b16 %v942
    %v4467 = vunpack.c.l.b16 %v943
    %v4468 = vunpack.c.h.b16 %v943
    %v4469 = vunpack.c.l.b16 %v944
    %v4470 = vunpack.c.h.b16 %v944
    %v4471 = vunpack.c.l.b16 %v945
    %v4472 = vunpack.c.h.b16 %v945
    %v4473 = vunpack.c.l.b16 %v946
    %v4474 = vunpack.c.h.b16 %v946
    %v4475 = vunpack.c.l.b16 %v947
    %v4476 = vunpack.c.h.b16 %v947
    %v4477 = vunpack.c.l.b16 %v948
    %v4478 = vunpack.c.h.b16 %v948
    %v4479 = vunpack.c.l.b16 %v949
    %v4480 = vunpack.c.h.b16 %v949
    %v4481 = vunpack.c.l.b16 %v950
    %v4482 = vunpack.c.h.b16 %v950
    %v4483 = vunpack.c.l.b16 %v951
    %v4484 = vunpack.c.h.b16 %v951
    %v4485 = vunpack.c.l.b16 %v952
    %v4486 = vunpack.c.h.b16 %v952
    %v4487 = vunpack.c.l.b16 %v953
    %v4488 = vunpack.c.h.b16 %v953
    %v4489 = vunpack.c.l.b16 %v954
    %v4490 = vunpack.c.h.b16 %v954
    %v4491 = vunpack.c.l.b16 %v955
    %v4492 = vunpack.c.h.b16 %v955
    %v4493 = vunpack.c.l.b16 %v956
    %v4494 = vunpack.c.h.b16 %v956
    %v4495 = vunpack.c.l.b16 %v957
    %v4496 = vunpack.c.h.b16 %v957
    %v4497 = vunpack.c.l.b16 %v958
    %v4498 = vunpack.c.h.b16 %v958
    %v4499 = vunpack.c.l.b16 %v959
    %v4500 = vunpack.c.h.b16 %v959
    %v4501 = vunpack.c.l.b16 %v960
    %v4502 = vunpack.c.h.b16 %v960
    %v4503 = vunpack.c.l.b16 %v961
    %v4504 = vunpack.c.h.b16 %v961
    %v4505 = vunpack.c.l.b16 %v962
    %v4506 = vunpack.c.h.b16 %v962
    %v4507 = vunpack.c.l.b16 %v963
    %v4508 = vunpack.c.h.b16 %v963
    %v4509 = vunpack.c.l.b16 %v964
    %v4510 = vunpack.c.h.b16 %v964
    %v4511 = vunpack.c.l.b16 %v965
    %v4512 = vunpack.c.h.b16 %v965
    %v4513 = vunpack.c.l.b16 %v966
    %v4514 = vunpack.c.h.b16 %v966
    %v4515 = vunpack.c.l.b16 %v967
    %v4516 = vunpack.c.h.b16 %v967
    %v4517 = vunpack.c.l.b16 %v968
    %v4518 = vunpack.c.h.b16 %v968
    %v4519 = vunpack.c.l.b16 %v969
    %v4520 = vunpack.c.h.b16 %v969
    %v4521 = vunpack.c.l.b16 %v970
    %v4522 = vunpack.c.h.b16 %v970
    %v4523 = vunpack.c.l.b16 %v971
    %v4524 = vunpack.c.h.b16 %v971
    %v4525 = vunpack.c.l.b16 %v972
    %v4526 = vunpack.c.h.b16 %v972
    %v4527 = vunpack.c.l.b16 %v973
    %v4528 = vunpack.c.h.b16 %v973
    %v4529 = vunpack.c.l.b16 %v974
    %v4530 = vunpack.c.h.b16 %v974
    %v4531 = vunpack.c.l.b16 %v975
    %v4532 = vunpack.c.h.b16 %v975
    %v4533 = vunpack.c.l.b16 %v976
    %v4534 = vunpack.c.h.b16 %v976
    %v4535 = vunpack.c.l.b16 %v977
    %v4536 = vunpack.c.h.b16 %v977
    %v4537 = vunpack.c.l.b16 %v978
    %v4538 = vunpack.c.h.b16 %v978
    %v4539 = vunpack.c.l.b16 %v979
    %v4540 = vunpack.c.h.b16 %v979
    %v4541 = vunpack.c.l.b16 %v980
    %v4542 = vunpack.c.h.b16 %v980
    %v4543 = vunpack.c.l.b16 %v981
    %v4544 = vunpack.c.h.b16 %v981
    %v4545 = vunpack.c.l.b16 %v982
    %v4546 = vunpack.c.h.b16 %v982
    %v4547 = vunpack.c.l.b16 %v983
    %v4548 = vunpack.c.h.b16 %v983
    %v4549 = vunpack.c.l.b16 %v984
    %v4550 = vunpack.c.h.b16 %v984
    %v4551 = vunpack.c.l.b16 %v985
    %v4552 = vunpack.c.h.b16 %v985
    %v4553 = vunpack.c.l.b16 %v986
    %v4554 = vunpack.c.h.b16 %v986
    %v4555 = vunpack.c.l.b16 %v987
    %v4556 = vunpack.c.h.b16 %v987
    %v4557 = vunpack.c.l.b16 %v988
    %v4558 = vunpack.c.h.b16 %v988
    %v4559 = vunpack.c.l.b16 %v989
    %v4560 = vunpack.c.h.b16 %v989
    %v4561 = vunpack.c.l.b16 %v990
    %v4562 = vunpack.c.h.b16 %v990
    %v4563 = vunpack.c.l.b16 %v991
    %v4564 = vunpack.c.h.b16 %v991
    %v4565 = vunpack.c.l.b16 %v992
    %v4566 = vunpack.c.h.b16 %v992
    %v4567 = vunpack.c.l.b16 %v993
    %v4568 = vunpack.c.h.b16 %v993
    %v4569 = vunpack.c.l.b16 %v994
    %v4570 = vunpack.c.h.b16 %v994
    %v4571 = vunpack.c.l.b16 %v995
    %v4572 = vunpack.c.h.b16 %v995
    %v4573 = vunpack.c.l.b16 %v996
    %v4574 = vunpack.c.h.b16 %v996
    %v4575 = vunpack.c.l.b16 %v997
    %v4576 = vunpack.c.h.b16 %v997
    %v4577 = vunpack.c.l.b16 %v998
    %v4578 = vunpack.c.h.b16 %v998
    %v4579 = vunpack.c.l.b16 %v999
    %v4580 = vunpack.c.h.b16 %v999
    %v4581 = vunpack.c.l.b16 %v1000
    %v4582 = vunpack.c.h.b16 %v1000
    %v4583 = vunpack.c.l.b16 %v1001
    %v4584 = vunpack.c.h.b16 %v1001
    %v4585 = vunpack.c.l.b16 %v1002
    %v4586 = vunpack.c.h.b16 %v1002
    %v4587 = vunpack.c.l.b16 %v1003
    %v4588 = vunpack.c.h.b16 %v1003
    %v4589 = vunpack.c.l.b16 %v1004
    %v4590 = vunpack.c.h.b16 %v1004
    %v4591 = vunpack.c.l.b16 %v1005
    %v4592 = vunpack.c.h.b16 %v1005
    %v4593 = vunpack.c.l.b16 %v1006
    %v4594 = vunpack.c.h.b16 %v1006
    %v4595 = vunpack.c.l.b16 %v1007
    %v4596 = vunpack.c.h.b16 %v1007
    %v4597 = vunpack.c.l.b16 %v1008
    %v4598 = vunpack.c.h.b16 %v1008
    %v4599 = vunpack.c.l.b16 %v1009
    %v4600 = vunpack.c.h.b16 %v1009
    %v4601 = vunpack.c.l.b16 %v1010
    %v4602 = vunpack.c.h.b16 %v1010
    %v4603 = vunpack.c.l.b16 %v1011
    %v4604 = vunpack.c.h.b16 %v1011
    %v4605 = vunpack.c.l.b16 %v1012
    %v4606 = vunpack.c.h.b16 %v1012
    %v4607 = vunpack.c.l.b16 %v1013
    %v4608 = vunpack.c.h.b16 %v1013
    %v4609 = vunpack.c.l.b16 %v1014
    %v4610 = vunpack.c.h.b16 %v1014
    %v4611 = vunpack.c.l.b16 %v1015
    %v4612 = vunpack.c.h.b16 %v1015
    %v4613 = vunpack.c.l.b16 %v1016
    %v4614 = vunpack.c.h.b16 %v1016
    %v4615 = vunpack.c.l.b16 %v1017
    %v4616 = vunpack.c.h.b16 %v1017
    %v4617 = vunpack.c.l.b16 %v1018
    %v4618 = vunpack.c.h.b16 %v1018
    %v4619 = vunpack.c.l.b16 %v1019
    %v4620 = vunpack.c.h.b16 %v1019
    %v4621 = vunpack.c.l.b16 %v1020
    %v4622 = vunpack.c.h.b16 %v1020
    %v4623 = vunpack.c.l.b16 %v1021
    %v4624 = vunpack.c.h.b16 %v1021
    %v4625 = vunpack.c.l.b16 %v1022
    %v4626 = vunpack.c.h.b16 %v1022
    %v4627 = vunpack.c.l.b16 %v1023
    %v4628 = vunpack.c.h.b16 %v1023
    %v4629 = vunpack.c.l.b16 %v1024
    %v4630 = vunpack.c.h.b16 %v1024
    %v4631 = vunpack.c.l.b16 %v1025
    %v4632 = vunpack.c.h.b16 %v1025
    %v4633 = vunpack.c.l.b16 %v1026
    %v4634 = vunpack.c.h.b16 %v1026
    %v4635 = vunpack.c.l.b16 %v1027
    %v4636 = vunpack.c.h.b16 %v1027
    %v4637 = vunpack.c.l.b16 %v1028
    %v4638 = vunpack.c.h.b16 %v1028
    %v4639 = vunpack.c.l.b16 %v1029
    %v4640 = vunpack.c.h.b16 %v1029
    %v4641 = vunpack.c.l.b16 %v1030
    %v4642 = vunpack.c.h.b16 %v1030
    %v4643 = vunpack.c.l.b16 %v1031
    %v4644 = vunpack.c.h.b16 %v1031
    %v4645 = vunpack.c.l.b16 %v1032
    %v4646 = vunpack.c.h.b16 %v1032
    %v4647 = vunpack.c.l.b16 %v1033
    %v4648 = vunpack.c.h.b16 %v1033
    %v4649 = vunpack.c.l.b16 %v1034
    %v4650 = vunpack.c.h.b16 %v1034
    %v4651 = vunpack.c.l.b16 %v1035
    %v4652 = vunpack.c.h.b16 %v1035
    %v4653 = vunpack.c.l.b16 %v1036
    %v4654 = vunpack.c.h.b16 %v1036
    %v4655 = vunpack.c.l.b16 %v1037
    %v4656 = vunpack.c.h.b16 %v1037
    %v4657 = vunpack.c.l.b16 %v1038
    %v4658 = vunpack.c.h.b16 %v1038
    %v4659 = vunpack.c.l.b16 %v1039
    %v4660 = vunpack.c.h.b16 %v1039
    %v4661 = vunpack.c.l.b16 %v1040
    %v4662 = vunpack.c.h.b16 %v1040
    %v4663 = vunpack.c.l.b16 %v1041
    %v4664 = vunpack.c.h.b16 %v1041
    %v4665 = vunpack.c.l.b16 %v1042
    %v4666 = vunpack.c.h.b16 %v1042
    %v4667 = vunpack.c.l.b16 %v1043
    %v4668 = vunpack.c.h.b16 %v1043
    %v4669 = vunpack.c.l.b16 %v1044
    %v4670 = vunpack.c.h.b16 %v1044
    %v4671 = vunpack.c.l.b16 %v1045
    %v4672 = vunpack.c.h.b16 %v1045
    %v4673 = vunpack.c.l.b16 %v1046
    %v4674 = vunpack.c.h.b16 %v1046
    %v4675 = vunpack.c.l.b16 %v1047
    %v4676 = vunpack.c.h.b16 %v1047
    %v4677 = vunpack.c.l.b16 %v1048
    %v4678 = vunpack.c.h.b16 %v1048
    %v4679 = vunpack.c.l.b16 %v1049
    %v4680 = vunpack.c.h.b16 %v1049
    %v4681 = vunpack.c.l.b16 %v1050
    %v4682 = vunpack.c.h.b16 %v1050
    %v4683 = vunpack.c.l.b16 %v1051
    %v4684 = vunpack.c.h.b16 %v1051
    %v4685 = vunpack.c.l.b16 %v1052
    %v4686 = vunpack.c.h.b16 %v1052
    %v4687 = vunpack.c.l.b16 %v1053
    %v4688 = vunpack.c.h.b16 %v1053
    %v4689 = vunpack.c.l.b16 %v1054
    %v4690 = vunpack.c.h.b16 %v1054
    %v4691 = vunpack.c.l.b16 %v1055
    %v4692 = vunpack.c.h.b16 %v1055
    %v4693 = vunpack.c.l.b16 %v1056
    %v4694 = vunpack.c.h.b16 %v1056
    %v4695 = vunpack.c.l.b16 %v1057
    %v4696 = vunpack.c.h.b16 %v1057
    %v4697 = vunpack.c.l.b16 %v1058
    %v4698 = vunpack.c.h.b16 %v1058
    %v4699 = vunpack.c.l.b16 %v1059
    %v4700 = vunpack.c.h.b16 %v1059
    %v4701 = vunpack.c.l.b16 %v1060
    %v4702 = vunpack.c.h.b16 %v1060
    %v4703 = vunpack.c.l.b16 %v1061
    %v4704 = vunpack.c.h.b16 %v1061
    %v4705 = vunpack.c.l.b16 %v1062
    %v4706 = vunpack.c.h.b16 %v1062
    %v4707 = vunpack.c.l.b16 %v1063
    %v4708 = vunpack.c.h.b16 %v1063
    %v4709 = vunpack.c.l.b16 %v1064
    %v4710 = vunpack.c.h.b16 %v1064
    %v4711 = vunpack.c.l.b16 %v1065
    %v4712 = vunpack.c.h.b16 %v1065
    %v4713 = vunpack.c.l.b16 %v1066
    %v4714 = vunpack.c.h.b16 %v1066
    %v4715 = vunpack.c.l.b16 %v1067
    %v4716 = vunpack.c.h.b16 %v1067
    %v4717 = vunpack.c.l.b16 %v1068
    %v4718 = vunpack.c.h.b16 %v1068
    %v4719 = vunpack.c.l.b16 %v1069
    %v4720 = vunpack.c.h.b16 %v1069
    %v4721 = vunpack.c.l.b16 %v1070
    %v4722 = vunpack.c.h.b16 %v1070
    %v4723 = vunpack.c.l.b16 %v1071
    %v4724 = vunpack.c.h.b16 %v1071
    %v4725 = vunpack.c.l.b16 %v1072
    %v4726 = vunpack.c.h.b16 %v1072
    %v4727 = vunpack.c.l.b16 %v1073
    %v4728 = vunpack.c.h.b16 %v1073
    %v4729 = vunpack.c.l.b16 %v1074
    %v4730 = vunpack.c.h.b16 %v1074
    %v4731 = vunpack.c.l.b16 %v1075
    %v4732 = vunpack.c.h.b16 %v1075
    %v4733 = vunpack.c.l.b16 %v1076
    %v4734 = vunpack.c.h.b16 %v1076
    %v4735 = vunpack.c.l.b16 %v1077
    %v4736 = vunpack.c.h.b16 %v1077
    %v4737 = vunpack.c.l.b16 %v1078
    %v4738 = vunpack.c.h.b16 %v1078
    %v4739 = vunpack.c.l.b16 %v1079
    %v4740 = vunpack.c.h.b16 %v1079
    %v4741 = vunpack.c.l.b16 %v1080
    %v4742 = vunpack.c.h.b16 %v1080
    %v4743 = vunpack.c.l.b16 %v1081
    %v4744 = vunpack.c.h.b16 %v1081
    %v4745 = vunpack.c.l.b16 %v1082
    %v4746 = vunpack.c.h.b16 %v1082
    %v4747 = vunpack.c.l.b16 %v1083
    %v4748 = vunpack.c.h.b16 %v1083
    %v4749 = vunpack.c.l.b16 %v1084
    %v4750 = vunpack.c.h.b16 %v1084
    %v4751 = vunpack.c.l.b16 %v1085
    %v4752 = vunpack.c.h.b16 %v1085
    %v4753 = vunpack.c.l.b16 %v1086
    %v4754 = vunpack.c.h.b16 %v1086
    %v4755 = vunpack.c.l.b16 %v1087
    %v4756 = vunpack.c.h.b16 %v1087
    %v4757 = vunpack.c.l.b16 %v1088
    %v4758 = vunpack.c.h.b16 %v1088
    %v4759 = vunpack.c.l.b16 %v1089
    %v4760 = vunpack.c.h.b16 %v1089
    %v4761 = vunpack.c.l.b16 %v1090
    %v4762 = vunpack.c.h.b16 %v1090
    %v4763 = vunpack.c.l.b16 %v1091
    %v4764 = vunpack.c.h.b16 %v1091
    %v4765 = vunpack.c.l.b16 %v1092
    %v4766 = vunpack.c.h.b16 %v1092
    %v4767 = vunpack.c.l.b16 %v1093
    %v4768 = vunpack.c.h.b16 %v1093
    %v4769 = vunpack.c.l.b16 %v1094
    %v4770 = vunpack.c.h.b16 %v1094
    %v4771 = vunpack.c.l.b16 %v1095
    %v4772 = vunpack.c.h.b16 %v1095
    %v4773 = vunpack.c.l.b16 %v1096
    %v4774 = vunpack.c.h.b16 %v1096
    %v4775 = vunpack.c.l.b16 %v1097
    %v4776 = vunpack.c.h.b16 %v1097
    %v4777 = vunpack.c.l.b16 %v1098
    %v4778 = vunpack.c.h.b16 %v1098
    %v4779 = vunpack.c.l.b16 %v1099
    %v4780 = vunpack.c.h.b16 %v1099
    %v4781 = vunpack.c.l.b16 %v1100
    %v4782 = vunpack.c.h.b16 %v1100
    %v4783 = vunpack.c.l.b16 %v1101
    %v4784 = vunpack.c.h.b16 %v1101
    %v4785 = vunpack.c.l.b16 %v1102
    %v4786 = vunpack.c.h.b16 %v1102
    %v4787 = vunpack.c.l.b16 %v1103
    %v4788 = vunpack.c.h.b16 %v1103
    %v4789 = vunpack.c.l.b16 %v1104
    %v4790 = vunpack.c.h.b16 %v1104
    %v4791 = vunpack.c.l.b16 %v1105
    %v4792 = vunpack.c.h.b16 %v1105
    %v4793 = vunpack.c.l.b16 %v1106
    %v4794 = vunpack.c.h.b16 %v1106
    %v4795 = vunpack.c.l.b16 %v1107
    %v4796 = vunpack.c.h.b16 %v1107
    %v4797 = vunpack.c.l.b16 %v1108
    %v4798 = vunpack.c.h.b16 %v1108
    %v4799 = vunpack.c.l.b16 %v1109
    %v4800 = vunpack.c.h.b16 %v1109
    %v4801 = vunpack.c.l.b16 %v1110
    %v4802 = vunpack.c.h.b16 %v1110
    %v4803 = vunpack.c.l.b16 %v1111
    %v4804 = vunpack.c.h.b16 %v1111
    %v4805 = vunpack.c.l.b16 %v1112
    %v4806 = vunpack.c.h.b16 %v1112
    %v4807 = vunpack.c.l.b16 %v1113
    %v4808 = vunpack.c.h.b16 %v1113
    %v4809 = vunpack.c.l.b16 %v1114
    %v4810 = vunpack.c.h.b16 %v1114
    %v4811 = vunpack.c.l.b16 %v1115
    %v4812 = vunpack.c.h.b16 %v1115
    %v4813 = vunpack.c.l.b16 %v1116
    %v4814 = vunpack.c.h.b16 %v1116
    %v4815 = vunpack.c.l.b16 %v1117
    %v4816 = vunpack.c.h.b16 %v1117
    %v4817 = vunpack.c.l.b16 %v1118
    %v4818 = vunpack.c.h.b16 %v1118
    %v4819 = vunpack.c.l.b16 %v1119
    %v4820 = vunpack.c.h.b16 %v1119
    %v4821 = vunpack.c.l.b16 %v1120
    %v4822 = vunpack.c.h.b16 %v1120
    %v4823 = vunpack.c.l.b16 %v1121
    %v4824 = vunpack.c.h.b16 %v1121
    %v4825 = vunpack.c.l.b16 %v1122
    %v4826 = vunpack.c.h.b16 %v1122
    %v4827 = vunpack.c.l.b16 %v1123
    %v4828 = vunpack.c.h.b16 %v1123
    %v4829 = vunpack.c.l.b16 %v1124
    %v4830 = vunpack.c.h.b16 %v1124
    %v4831 = vunpack.c.l.b16 %v1125
    %v4832 = vunpack.c.h.b16 %v1125
    %v4833 = vunpack.c.l.b16 %v1126
    %v4834 = vunpack.c.h.b16 %v1126
    %v4835 = vunpack.c.l.b16 %v1127
    %v4836 = vunpack.c.h.b16 %v1127
    %v4837 = vunpack.c.l.b16 %v1128
    %v4838 = vunpack.c.h.b16 %v1128
    %v4839 = vunpack.c.l.b16 %v1129
    %v4840 = vunpack.c.h.b16 %v1129
    %v4841 = vunpack.c.l.b16 %v1130
    %v4842 = vunpack.c.h.b16 %v1130
    %v4843 = vunpack.c.l.b16 %v1131
    %v4844 = vunpack.c.h.b16 %v1131
    %v4845 = vunpack.c.l.b16 %v1132
    %v4846 = vunpack.c.h.b16 %v1132
    %v4847 = vunpack.c.l.b16 %v1133
    %v4848 = vunpack.c.h.b16 %v1133
    %v4849 = vunpack.c.l.b16 %v1134
    %v4850 = vunpack.c.h.b16 %v1134
    %v4851 = vunpack.c.l.b16 %v1135
    %v4852 = vunpack.c.h.b16 %v1135
    %v4853 = vunpack.c.l.b16 %v1136
    %v4854 = vunpack.c.h.b16 %v1136
    %v4855 = vunpack.c.l.b16 %v1137
    %v4856 = vunpack.c.h.b16 %v1137
    %v4857 = vunpack.c.l.b16 %v1138
    %v4858 = vunpack.c.h.b16 %v1138
    %v4859 = vunpack.c.l.b16 %v1139
    %v4860 = vunpack.c.h.b16 %v1139
    %v4861 = vunpack.c.l.b16 %v1140
    %v4862 = vunpack.c.h.b16 %v1140
    %v4863 = vunpack.c.l.b16 %v1141
    %v4864 = vunpack.c.h.b16 %v1141
    %v4865 = vunpack.c.l.b16 %v1142
    %v4866 = vunpack.c.h.b16 %v1142
    %v4867 = vunpack.c.l.b16 %v1143
    %v4868 = vunpack.c.h.b16 %v1143
    %v4869 = vunpack.c.l.b16 %v1144
    %v4870 = vunpack.c.h.b16 %v1144
    %v4871 = vunpack.c.l.b16 %v1145
    %v4872 = vunpack.c.h.b16 %v1145
    %v4873 = vunpack.c.l.b16 %v1146
    %v4874 = vunpack.c.h.b16 %v1146
    %v4875 = vunpack.c.l.b16 %v1147
    %v4876 = vunpack.c.h.b16 %v1147
    %v4877 = vunpack.c.l.b16 %v1148
    %v4878 = vunpack.c.h.b16 %v1148
    %v4879 = vunpack.c.l.b16 %v1149
    %v4880 = vunpack.c.h.b16 %v1149
    %v4881 = vunpack.c.l.b16 %v1150
    %v4882 = vunpack.c.h.b16 %v1150
    %v4883 = vunpack.c.l.b16 %v1151
    %v4884 = vunpack.c.h.b16 %v1151
    %v4885 = vunpack.c.l.b16 %v1152
    %v4886 = vunpack.c.h.b16 %v1152
    %v4887 = vunpack.c.l.b16 %v1153
    %v4888 = vunpack.c.h.b16 %v1153
    %v4889 = vunpack.c.l.b16 %v1154
    %v4890 = vunpack.c.h.b16 %v1154
    %v4891 = vunpack.c.l.b16 %v1155
    %v4892 = vunpack.c.h.b16 %v1155
    %v4893 = vunpack.c.l.b16 %v1156
    %v4894 = vunpack.c.h.b16 %v1156
    %v4895 = vunpack.c.l.b16 %v1157
    %v4896 = vunpack.c.h.b16 %v1157
    %v4897 = vunpack.c.l.b16 %v1158
    %v4898 = vunpack.c.h.b16 %v1158
    %v4899 = vunpack.c.l.b16 %v1159
    %v4900 = vunpack.c.h.b16 %v1159
    %v4901 = vunpack.c.l.b16 %v1160
    %v4902 = vunpack.c.h.b16 %v1160
    %v4903 = vunpack.c.l.b16 %v1161
    %v4904 = vunpack.c.h.b16 %v1161
    %v4905 = vunpack.c.l.b16 %v1162
    %v4906 = vunpack.c.h.b16 %v1162
    %v4907 = vunpack.c.l.b16 %v1163
    %v4908 = vunpack.c.h.b16 %v1163
    %v4909 = vunpack.c.l.b16 %v1164
    %v4910 = vunpack.c.h.b16 %v1164
    %v4911 = vunpack.c.l.b16 %v1165
    %v4912 = vunpack.c.h.b16 %v1165
    %v4913 = vunpack.c.l.b16 %v1166
    %v4914 = vunpack.c.h.b16 %v1166
    %v4915 = vunpack.c.l.b16 %v1167
    %v4916 = vunpack.c.h.b16 %v1167
    %v4917 = vunpack.c.l.b16 %v1168
    %v4918 = vunpack.c.h.b16 %v1168
    %v4919 = vunpack.c.l.b16 %v1169
    %v4920 = vunpack.c.h.b16 %v1169
    %v4921 = vunpack.c.l.b16 %v1170
    %v4922 = vunpack.c.h.b16 %v1170
    %v4923 = vunpack.c.l.b16 %v1171
    %v4924 = vunpack.c.h.b16 %v1171
    %v4925 = vunpack.c.l.b16 %v1172
    %v4926 = vunpack.c.h.b16 %v1172
    %v4927 = vunpack.c.l.b16 %v1173
    %v4928 = vunpack.c.h.b16 %v1173
    %v4929 = vunpack.c.l.b16 %v1174
    %v4930 = vunpack.c.h.b16 %v1174
    %v4931 = vunpack.c.l.b16 %v1175
    %v4932 = vunpack.c.h.b16 %v1175
    %v4933 = vunpack.c.l.b16 %v1176
    %v4934 = vunpack.c.h.b16 %v1176
    %v4935 = vunpack.c.l.b16 %v1177
    %v4936 = vunpack.c.h.b16 %v1177
    %v4937 = vunpack.c.l.b16 %v1178
    %v4938 = vunpack.c.h.b16 %v1178
    %v4939 = vunpack.c.l.b16 %v1179
    %v4940 = vunpack.c.h.b16 %v1179
    %v4941 = vunpack.c.l.b16 %v1180
    %v4942 = vunpack.c.h.b16 %v1180
    %v4943 = vunpack.c.l.b16 %v1181
    %v4944 = vunpack.c.h.b16 %v1181
    %v4945 = vunpack.c.l.b16 %v1182
    %v4946 = vunpack.c.h.b16 %v1182
    %v4947 = vunpack.c.l.b16 %v1183
    %v4948 = vunpack.c.h.b16 %v1183
    %v4949 = vunpack.c.l.b16 %v1184
    %v4950 = vunpack.c.h.b16 %v1184
    %v4951 = vunpack.c.l.b16 %v1185
    %v4952 = vunpack.c.h.b16 %v1185
    %v4953 = vunpack.c.l.b16 %v1186
    %v4954 = vunpack.c.h.b16 %v1186
    %v4955 = vunpack.c.l.b16 %v1187
    %v4956 = vunpack.c.h.b16 %v1187
    %v4957 = vunpack.c.l.b16 %v1188
    %v4958 = vunpack.c.h.b16 %v1188
    %v4959 = vunpack.c.l.b16 %v1189
    %v4960 = vunpack.c.h.b16 %v1189
    %v4961 = vunpack.c.l.b16 %v1190
    %v4962 = vunpack.c.h.b16 %v1190
    %v4963 = vunpack.c.l.b16 %v1191
    %v4964 = vunpack.c.h.b16 %v1191
    %v4965 = vunpack.c.l.b16 %v1192
    %v4966 = vunpack.c.h.b16 %v1192
    %v4967 = vunpack.c.l.b16 %v1193
    %v4968 = vunpack.c.h.b16 %v1193
    %v4969 = vunpack.c.l.b16 %v1194
    %v4970 = vunpack.c.h.b16 %v1194
    %v4971 = vunpack.c.l.b16 %v1195
    %v4972 = vunpack.c.h.b16 %v1195
    %v4973 = vunpack.c.l.b16 %v1196
    %v4974 = vunpack.c.h.b16 %v1196
    %v4975 = vunpack.c.l.b16 %v1197
    %v4976 = vunpack.c.h.b16 %v1197
    %v4977 = vunpack.c.l.b16 %v1198
    %v4978 = vunpack.c.h.b16 %v1198
    %v4979 = vunpack.c.l.b16 %v1199
    %v4980 = vunpack.c.h.b16 %v1199
    %v4981 = vunpack.c.l.b16 %v1200
    %v4982 = vunpack.c.h.b16 %v1200
    %v4983 = vunpack.c.l.b16 %v1201
    %v4984 = vunpack.c.h.b16 %v1201
    %v4985 = vunpack.c.l.b16 %v1202
    %v4986 = vunpack.c.h.b16 %v1202
    %v4987 = vunpack.c.l.b16 %v1203
    %v4988 = vunpack.c.h.b16 %v1203
    %v4989 = vunpack.c.l.b16 %v1204
    %v4990 = vunpack.c.h.b16 %v1204
    %v4991 = vunpack.c.l.b16 %v1205
    %v4992 = vunpack.c.h.b16 %v1205
    %v4993 = vunpack.c.l.b16 %v1206
    %v4994 = vunpack.c.h.b16 %v1206
    %v4995 = vunpack.c.l.b16 %v1207
    %v4996 = vunpack.c.h.b16 %v1207
    %v4997 = vunpack.c.l.b16 %v1208
    %v4998 = vunpack.c.h.b16 %v1208
    %v4999 = vunpack.c.l.b16 %v1209
    %v5000 = vunpack.c.h.b16 %v1209
    %v5001 = vunpack.c.l.b16 %v1210
    %v5002 = vunpack.c.h.b16 %v1210
    %v5003 = vunpack.c.l.b16 %v1211
    %v5004 = vunpack.c.h.b16 %v1211
    %v5005 = vunpack.c.l.b16 %v1212
    %v5006 = vunpack.c.h.b16 %v1212
    %v5007 = vunpack.c.l.b16 %v1213
    %v5008 = vunpack.c.h.b16 %v1213
    %v5009 = vunpack.c.l.b16 %v1214
    %v5010 = vunpack.c.h.b16 %v1214
    %v5011 = vunpack.c.l.b16 %v1215
    %v5012 = vunpack.c.h.b16 %v1215
    %v5013 = vunpack.c.l.b16 %v1216
    %v5014 = vunpack.c.h.b16 %v1216
    %v5015 = vunpack.c.l.b16 %v1217
    %v5016 = vunpack.c.h.b16 %v1217
    %v5017 = vunpack.c.l.b16 %v1218
    %v5018 = vunpack.c.h.b16 %v1218
    %v5019 = vunpack.c.l.b16 %v1219
    %v5020 = vunpack.c.h.b16 %v1219
    %v5021 = vunpack.c.l.b16 %v1220
    %v5022 = vunpack.c.h.b16 %v1220
    %v5023 = vunpack.c.l.b16 %v1221
    %v5024 = vunpack.c.h.b16 %v1221
    %v5025 = vunpack.c.l.b16 %v1222
    %v5026 = vunpack.c.h.b16 %v1222
    %v5027 = vunpack.c.l.b16 %v1223
    %v5028 = vunpack.c.h.b16 %v1223
    %v5029 = vunpack.c.l.b16 %v1224
    %v5030 = vunpack.c.h.b16 %v1224
    %v5031 = vunpack.c.l.b16 %v1225
    %v5032 = vunpack.c.h.b16 %v1225
    %v5033 = vunpack.c.l.b16 %v1226
    %v5034 = vunpack.c.h.b16 %v1226
    %v5035 = vunpack.c.l.b16 %v1227
    %v5036 = vunpack.c.h.b16 %v1227
    %v5037 = vunpack.c.l.b16 %v1228
    %v5038 = vunpack.c.h.b16 %v1228
    %v5039 = vunpack.c.l.b16 %v1229
    %v5040 = vunpack.c.h.b16 %v1229
    %v5041 = vunpack.c.l.b16 %v1230
    %v5042 = vunpack.c.h.b16 %v1230
    %v5043 = vunpack.c.l.b16 %v1231
    %v5044 = vunpack.c.h.b16 %v1231
    %v5045 = vunpack.c.l.b16 %v1232
    %v5046 = vunpack.c.h.b16 %v1232
    %v5047 = vunpack.c.l.b16 %v1233
    %v5048 = vunpack.c.h.b16 %v1233
    %v5049 = vunpack.c.l.b16 %v1234
    %v5050 = vunpack.c.h.b16 %v1234
    %v5051 = vunpack.c.l.b16 %v1235
    %v5052 = vunpack.c.h.b16 %v1235
    %v5053 = vunpack.c.l.b16 %v1236
    %v5054 = vunpack.c.h.b16 %v1236
    %v5055 = vunpack.c.l.b16 %v1237
    %v5056 = vunpack.c.h.b16 %v1237
    %v5057 = vunpack.c.l.b16 %v1238
    %v5058 = vunpack.c.h.b16 %v1238
    %v5059 = vunpack.c.l.b16 %v1239
    %v5060 = vunpack.c.h.b16 %v1239
    %v5061 = vunpack.c.l.b16 %v1240
    %v5062 = vunpack.c.h.b16 %v1240
    %v5063 = vunpack.c.l.b16 %v1241
    %v5064 = vunpack.c.h.b16 %v1241
    %v5065 = vunpack.c.l.b16 %v1242
    %v5066 = vunpack.c.h.b16 %v1242
    %v5067 = vunpack.c.l.b16 %v1243
    %v5068 = vunpack.c.h.b16 %v1243
    %v5069 = vunpack.c.l.b16 %v1244
    %v5070 = vunpack.c.h.b16 %v1244
    %v5071 = vunpack.c.l.b16 %v1245
    %v5072 = vunpack.c.h.b16 %v1245
    %v5073 = vunpack.c.l.b16 %v1246
    %v5074 = vunpack.c.h.b16 %v1246
    %v5075 = vunpack.c.l.b16 %v1247
    %v5076 = vunpack.c.h.b16 %v1247
    %v5077 = vunpack.c.l.b16 %v1248
    %v5078 = vunpack.c.h.b16 %v1248
    %v5079 = vunpack.c.l.b16 %v1249
    %v5080 = vunpack.c.h.b16 %v1249
    %v5081 = vunpack.c.l.b16 %v1250
    %v5082 = vunpack.c.h.b16 %v1250
    %v5083 = vunpack.c.l.b16 %v1251
    %v5084 = vunpack.c.h.b16 %v1251
    %v5085 = vunpack.c.l.b16 %v1252
    %v5086 = vunpack.c.h.b16 %v1252
    %v5087 = vunpack.c.l.b16 %v1253
    %v5088 = vunpack.c.h.b16 %v1253
    %v5089 = vunpack.c.l.b16 %v1254
    %v5090 = vunpack.c.h.b16 %v1254
    %v5091 = vunpack.c.l.b16 %v1255
    %v5092 = vunpack.c.h.b16 %v1255
    %v5093 = vunpack.c.l.b16 %v1256
    %v5094 = vunpack.c.h.b16 %v1256
    %v5095 = vunpack.c.l.b16 %v1257
    %v5096 = vunpack.c.h.b16 %v1257
    %v5097 = vunpack.c.l.b16 %v1258
    %v5098 = vunpack.c.h.b16 %v1258
    %v5099 = vunpack.c.l.b16 %v1259
    %v5100 = vunpack.c.h.b16 %v1259
    %v5101 = vunpack.c.l.b16 %v1260
    %v5102 = vunpack.c.h.b16 %v1260
    %v5103 = vunpack.c.l.b16 %v1261
    %v5104 = vunpack.c.h.b16 %v1261
    %v5105 = vunpack.c.l.b16 %v1262
    %v5106 = vunpack.c.h.b16 %v1262
    %v5107 = vunpack.c.l.b16 %v1263
    %v5108 = vunpack.c.h.b16 %v1263
    %v5109 = vunpack.c.l.b16 %v1264
    %v5110 = vunpack.c.h.b16 %v1264
    %v5111 = vunpack.c.l.b16 %v1265
    %v5112 = vunpack.c.h.b16 %v1265
    %v5113 = vunpack.c.l.b16 %v1266
    %v5114 = vunpack.c.h.b16 %v1266
    %v5115 = vunpack.c.l.b16 %v1267
    %v5116 = vunpack.c.h.b16 %v1267
    %v5117 = vunpack.c.l.b16 %v1268
    %v5118 = vunpack.c.h.b16 %v1268
    %v5119 = vunpack.c.l.b16 %v1269
    %v5120 = vunpack.c.h.b16 %v1269
    %v5121 = vunpack.c.l.b16 %v1270
    %v5122 = vunpack.c.h.b16 %v1270
    %v5123 = vunpack.c.l.b16 %v1271
    %v5124 = vunpack.c.h.b16 %v1271
    %v5125 = vunpack.c.l.b16 %v1272
    %v5126 = vunpack.c.h.b16 %v1272
    %v5127 = vunpack.c.l.b16 %v1273
    %v5128 = vunpack.c.h.b16 %v1273
    %v5129 = vunpack.c.l.b16 %v1274
    %v5130 = vunpack.c.h.b16 %v1274
    %v5131 = vunpack.c.l.b16 %v1275
    %v5132 = vunpack.c.h.b16 %v1275
    %v5133 = vunpack.c.l.b16 %v1276
    %v5134 = vunpack.c.h.b16 %v1276
    %v5135 = vunpack.c.l.b16 %v1277
    %v5136 = vunpack.c.h.b16 %v1277
    %v5137 = vunpack.c.l.b16 %v1278
    %v5138 = vunpack.c.h.b16 %v1278
    %v5139 = vunpack.c.l.b16 %v1279
    %v5140 = vunpack.c.h.b16 %v1279
    %v5141 = vunpack.c.l.b16 %v1280
    %v5142 = vunpack.c.h.b16 %v1280
    %v5143 = vunpack.c.l.b16 %v1281
    %v5144 = vunpack.c.h.b16 %v1281
    %v5145 = vunpack.c.l.b16 %v1282
    %v5146 = vunpack.c.h.b16 %v1282
    %v5147 = vunpack.c.l.b16 %v1283
    %v5148 = vunpack.c.h.b16 %v1283
    %v5149 = vunpack.c.l.b16 %v1284
    %v5150 = vunpack.c.h.b16 %v1284
    %v5151 = vunpack.c.l.b16 %v1285
    %v5152 = vunpack.c.h.b16 %v1285
    %v5153 = vunpack.c.l.b16 %v1286
    %v5154 = vunpack.c.h.b16 %v1286
    %v5155 = vunpack.c.l.b16 %v1287
    %v5156 = vunpack.c.h.b16 %v1287
    %v5157 = vunpack.c.l.b16 %v1288
    %v5158 = vunpack.c.h.b16 %v1288
    %v5159 = vunpack.c.l.b16 %v1289
    %v5160 = vunpack.c.h.b16 %v1289
    %v5161 = vunpack.c.l.b16 %v1290
    %v5162 = vunpack.c.h.b16 %v1290
    %v5163 = vunpack.c.l.b16 %v1291
    %v5164 = vunpack.c.h.b16 %v1291
    %v5165 = vunpack.c.l.b16 %v1292
    %v5166 = vunpack.c.h.b16 %v1292
    %v5167 = vunpack.c.l.b16 %v1293
    %v5168 = vunpack.c.h.b16 %v1293
    %v5169 = vunpack.c.l.b16 %v1294
    %v5170 = vunpack.c.h.b16 %v1294
    %v5171 = vunpack.c.l.b16 %v1295
    %v5172 = vunpack.c.h.b16 %v1295
    %v5173 = vunpack.c.l.b16 %v1296
    %v5174 = vunpack.c.h.b16 %v1296
    %v5175 = vunpack.c.l.b16 %v1297
    %v5176 = vunpack.c.h.b16 %v1297
    %v5177 = vunpack.c.l.b16 %v1298
    %v5178 = vunpack.c.h.b16 %v1298
    %v5179 = vunpack.c.l.b16 %v1299
    %v5180 = vunpack.c.h.b16 %v1299
    %v5181 = vunpack.c.l.b16 %v1300
    %v5182 = vunpack.c.h.b16 %v1300
    %v5183 = vunpack.c.l.b16 %v1301
    %v5184 = vunpack.c.h.b16 %v1301
    %v5185 = vunpack.c.l.b16 %v1302
    %v5186 = vunpack.c.h.b16 %v1302
    %v5187 = vunpack.c.l.b16 %v1303
    %v5188 = vunpack.c.h.b16 %v1303
    %v5189 = vunpack.c.l.b16 %v1304
    %v5190 = vunpack.c.h.b16 %v1304
    %v5191 = vunpack.c.l.b16 %v1305
    %v5192 = vunpack.c.h.b16 %v1305
    %v5193 = vunpack.c.l.b16 %v1306
    %v5194 = vunpack.c.h.b16 %v1306
    %v5195 = vunpack.c.l.b16 %v1307
    %v5196 = vunpack.c.h.b16 %v1307
    %v5197 = vunpack.c.l.b16 %v1308
    %v5198 = vunpack.c.h.b16 %v1308
    %v5199 = vunpack.c.l.b16 %v1309
    %v5200 = vunpack.c.h.b16 %v1309
    %v5201 = vunpack.c.l.b16 %v1310
    %v5202 = vunpack.c.h.b16 %v1310
    %v5203 = vunpack.c.l.b16 %v1311
    %v5204 = vunpack.c.h.b16 %v1311
    %v5205 = vunpack.c.l.b16 %v1312
    %v5206 = vunpack.c.h.b16 %v1312
    %v5207 = vunpack.c.l.b16 %v1313
    %v5208 = vunpack.c.h.b16 %v1313
    %v5209 = vunpack.c.l.b16 %v1314
    %v5210 = vunpack.c.h.b16 %v1314
    %v5211 = vunpack.c.l.b16 %v1315
    %v5212 = vunpack.c.h.b16 %v1315
    %v5213 = vunpack.c.l.b16 %v1316
    %v5214 = vunpack.c.h.b16 %v1316
    %v5215 = vunpack.c.l.b16 %v1317
    %v5216 = vunpack.c.h.b16 %v1317
    %v5217 = vunpack.c.l.b16 %v1318
    %v5218 = vunpack.c.h.b16 %v1318
    %v5219 = vunpack.c.l.b16 %v1319
    %v5220 = vunpack.c.h.b16 %v1319
    %v5221 = vunpack.c.l.b16 %v1320
    %v5222 = vunpack.c.h.b16 %v1320
    %v5223 = vunpack.c.l.b16 %v1321
    %v5224 = vunpack.c.h.b16 %v1321
    %v5225 = vunpack.c.l.b16 %v1322
    %v5226 = vunpack.c.h.b16 %v1322
    %v5227 = vunpack.c.l.b16 %v1323
    %v5228 = vunpack.c.h.b16 %v1323
    %v5229 = vunpack.c.l.b16 %v1324
    %v5230 = vunpack.c.h.b16 %v1324
    %v5231 = vunpack.c.l.b16 %v1325
    %v5232 = vunpack.c.h.b16 %v1325
    %v5233 = vunpack.c.l.b16 %v1326
    %v5234 = vunpack.c.h.b16 %v1326
    %v5235 = vunpack.c.l.b16 %v1327
    %v5236 = vunpack.c.h.b16 %v1327
    %v5237 = vunpack.c.l.b16 %v1328
    %v5238 = vunpack.c.h.b16 %v1328
    %v5239 = vunpack.c.l.b16 %v1329
    %v5240 = vunpack.c.h.b16 %v1329
    %v5241 = vunpack.c.l.b16 %v1330
    %v5242 = vunpack.c.h.b16 %v1330
    %v5243 = vunpack.c.l.b16 %v1331
    %v5244 = vunpack.c.h.b16 %v1331
    %v5245 = vunpack.c.l.b16 %v1332
    %v5246 = vunpack.c.h.b16 %v1332
    %v5247 = vunpack.c.l.b16 %v1333
    %v5248 = vunpack.c.h.b16 %v1333
    %v5249 = vunpack.c.l.b16 %v1334
    %v5250 = vunpack.c.h.b16 %v1334
    %v5251 = vunpack.c.l.b16 %v1335
    %v5252 = vunpack.c.h.b16 %v1335
    %v5253 = vunpack.c.l.b16 %v1336
    %v5254 = vunpack.c.h.b16 %v1336
    %v5255 = vunpack.c.l.b16 %v1337
    %v5256 = vunpack.c.h.b16 %v1337
    %v5257 = vunpack.c.l.b16 %v1338
    %v5258 = vunpack.c.h.b16 %v1338
    %v5259 = vunpack.c.l.b16 %v1339
    %v5260 = vunpack.c.h.b16 %v1339
    %v5261 = vunpack.c.l.b16 %v1340
    %v5262 = vunpack.c.h.b16 %v1340
    %v5263 = vunpack.c.l.b16 %v1341
    %v5264 = vunpack.c.h.b16 %v1341
    %v5265 = vunpack.c.l.b16 %v1342
    %v5266 = vunpack.c.h.b16 %v1342
    %v5267 = vunpack.c.l.b16 %v1343
    %v5268 = vunpack.c.h.b16 %v1343
    %v5269 = vunpack.c.l.b16 %v1344
    %v5270 = vunpack.c.h.b16 %v1344
    %v5271 = vunpack.c.l.b16 %v1345
    %v5272 = vunpack.c.h.b16 %v1345
    %v5273 = vunpack.c.l.b16 %v1346
    %v5274 = vunpack.c.h.b16 %v1346
    %v5275 = vunpack.c.l.b16 %v1347
    %v5276 = vunpack.c.h.b16 %v1347
    %v5277 = vunpack.c.l.b16 %v1348
    %v5278 = vunpack.c.h.b16 %v1348
    %v5279 = vunpack.c.l.b16 %v1349
    %v5280 = vunpack.c.h.b16 %v1349
    %v5281 = vunpack.c.l.b16 %v1350
    %v5282 = vunpack.c.h.b16 %v1350
    %v5283 = vunpack.c.l.b16 %v1351
    %v5284 = vunpack.c.h.b16 %v1351
    %v5285 = vunpack.c.l.b16 %v1352
    %v5286 = vunpack.c.h.b16 %v1352
    %v5287 = vunpack.c.l.b16 %v1353
    %v5288 = vunpack.c.h.b16 %v1353
    %v5289 = vunpack.c.l.b16 %v1354
    %v5290 = vunpack.c.h.b16 %v1354
    %v5291 = vunpack.c.l.b16 %v1355
    %v5292 = vunpack.c.h.b16 %v1355
    %v5293 = vunpack.c.l.b16 %v1356
    %v5294 = vunpack.c.h.b16 %v1356
    %v5295 = vunpack.c.l.b16 %v1357
    %v5296 = vunpack.c.h.b16 %v1357
    %v5297 = vunpack.c.l.b16 %v1358
    %v5298 = vunpack.c.h.b16 %v1358
    %v5299 = vunpack.c.l.b16 %v1359
    %v5300 = vunpack.c.h.b16 %v1359
    %v5301 = vunpack.c.l.b16 %v1360
    %v5302 = vunpack.c.h.b16 %v1360
    %v5303 = vunpack.c.l.b16 %v1361
    %v5304 = vunpack.c.h.b16 %v1361
    %v5305 = vunpack.c.l.b16 %v1362
    %v5306 = vunpack.c.h.b16 %v1362
    %v5307 = vunpack.c.l.b16 %v1363
    %v5308 = vunpack.c.h.b16 %v1363
    %v5309 = vunpack.c.l.b16 %v1364
    %v5310 = vunpack.c.h.b16 %v1364
    %v5311 = vunpack.c.l.b16 %v1365
    %v5312 = vunpack.c.h.b16 %v1365
    %v5313 = vunpack.c.l.b16 %v1366
    %v5314 = vunpack.c.h.b16 %v1366
    %v5315 = vunpack.c.l.b16 %v1367
    %v5316 = vunpack.c.h.b16 %v1367
    %v5317 = vunpack.c.l.b16 %v1368
    %v5318 = vunpack.c.h.b16 %v1368
    %v5319 = vunpack.c.l.b16 %v1369
    %v5320 = vunpack.c.h.b16 %v1369
    %v5321 = vunpack.c.l.b16 %v1370
    %v5322 = vunpack.c.h.b16 %v1370
    %v5323 = vunpack.c.l.b16 %v1371
    %v5324 = vunpack.c.h.b16 %v1371
    %v5325 = vunpack.c.l.b16 %v1372
    %v5326 = vunpack.c.h.b16 %v1372
    %v5327 = vunpack.c.l.b16 %v1373
    %v5328 = vunpack.c.h.b16 %v1373
    %v5329 = vunpack.c.l.b16 %v1374
    %v5330 = vunpack.c.h.b16 %v1374
    %v5331 = vunpack.c.l.b16 %v1375
    %v5332 = vunpack.c.h.b16 %v1375
    %v5333 = vunpack.c.l.b16 %v1376
    %v5334 = vunpack.c.h.b16 %v1376
    %v5335 = vunpack.c.l.b16 %v1377
    %v5336 = vunpack.c.h.b16 %v1377
    %v5337 = vunpack.c.l.b16 %v1378
    %v5338 = vunpack.c.h.b16 %v1378
    %v5339 = vunpack.c.l.b16 %v1379
    %v5340 = vunpack.c.h.b16 %v1379
    %v5341 = vunpack.c.l.b16 %v1380
    %v5342 = vunpack.c.h.b16 %v1380
    %v5343 = vunpack.c.l.b16 %v1381
    %v5344 = vunpack.c.h.b16 %v1381
    %v5345 = vunpack.c.l.b16 %v1382
    %v5346 = vunpack.c.h.b16 %v1382
    %v5347 = vunpack.c.l.b16 %v1383
    %v5348 = vunpack.c.h.b16 %v1383
    %v5349 = vunpack.c.l.b16 %v1384
    %v5350 = vunpack.c.h.b16 %v1384
    %v5351 = vunpack.c.l.b16 %v1385
    %v5352 = vunpack.c.h.b16 %v1385
    %v5353 = vunpack.c.l.b16 %v1386
    %v5354 = vunpack.c.h.b16 %v1386
    %v5355 = vunpack.c.l.b16 %v1387
    %v5356 = vunpack.c.h.b16 %v1387
    %v5357 = vunpack.c.l.b16 %v1388
    %v5358 = vunpack.c.h.b16 %v1388
    %v5359 = vunpack.c.l.b16 %v1389
    %v5360 = vunpack.c.h.b16 %v1389
    %v5361 = vunpack.c.l.b16 %v1390
    %v5362 = vunpack.c.h.b16 %v1390
    %v5363 = vunpack.c.l.b16 %v1391
    %v5364 = vunpack.c.h.b16 %v1391
    %v5365 = vunpack.c.l.b16 %v1392
    %v5366 = vunpack.c.h.b16 %v1392
    %v5367 = vunpack.c.l.b16 %v1393
    %v5368 = vunpack.c.h.b16 %v1393
    %v5369 = vunpack.c.l.b16 %v1394
    %v5370 = vunpack.c.h.b16 %v1394
    %v5371 = vunpack.c.l.b16 %v1395
    %v5372 = vunpack.c.h.b16 %v1395
    %v5373 = vunpack.c.l.b16 %v1396
    %v5374 = vunpack.c.h.b16 %v1396
    %v5375 = vunpack.c.l.b16 %v1397
    %v5376 = vunpack.c.h.b16 %v1397
    %v5377 = vunpack.c.l.b16 %v1398
    %v5378 = vunpack.c.h.b16 %v1398
    %v5379 = vunpack.c.l.b16 %v1399
    %v5380 = vunpack.c.h.b16 %v1399
    %v5381 = vunpack.c.l.b16 %v1400
    %v5382 = vunpack.c.h.b16 %v1400
    %v5383 = vunpack.c.l.b16 %v1401
    %v5384 = vunpack.c.h.b16 %v1401
    %v5385 = vunpack.c.l.b16 %v1402
    %v5386 = vunpack.c.h.b16 %v1402
    %v5387 = vunpack.c.l.b16 %v1403
    %v5388 = vunpack.c.h.b16 %v1403
    %v5389 = vunpack.c.l.b16 %v1404
    %v5390 = vunpack.c.h.b16 %v1404
    %v5391 = vunpack.c.l.b16 %v1405
    %v5392 = vunpack.c.h.b16 %v1405
    %v5393 = vunpack.c.l.b16 %v1406
    %v5394 = vunpack.c.h.b16 %v1406
    %v5395 = vunpack.c.l.b16 %v1407
    %v5396 = vunpack.c.h.b16 %v1407
    %v5397 = vunpack.c.l.b16 %v1408
    %v5398 = vunpack.c.h.b16 %v1408
    %v5399 = vunpack.c.l.b16 %v1409
    %v5400 = vunpack.c.h.b16 %v1409
    %v5401 = vunpack.c.l.b16 %v1410
    %v5402 = vunpack.c.h.b16 %v1410
    %v5403 = vunpack.c.l.b16 %v1411
    %v5404 = vunpack.c.h.b16 %v1411
    %v5405 = vunpack.c.l.b16 %v1412
    %v5406 = vunpack.c.h.b16 %v1412
    %v5407 = vunpack.c.l.b16 %v1413
    %v5408 = vunpack.c.h.b16 %v1413
    %v5409 = vunpack.c.l.b16 %v1414
    %v5410 = vunpack.c.h.b16 %v1414
    %v5411 = vunpack.c.l.b16 %v1415
    %v5412 = vunpack.c.h.b16 %v1415
    %v5413 = vunpack.c.l.b16 %v1416
    %v5414 = vunpack.c.h.b16 %v1416
    %v5415 = vunpack.c.l.b16 %v1417
    %v5416 = vunpack.c.h.b16 %v1417
    %v5417 = vunpack.c.l.b16 %v1418
    %v5418 = vunpack.c.h.b16 %v1418
    %v5419 = vunpack.c.l.b16 %v1419
    %v5420 = vunpack.c.h.b16 %v1419
    %v5421 = vunpack.c.l.b16 %v1420
    %v5422 = vunpack.c.h.b16 %v1420
    %v5423 = vunpack.c.l.b16 %v1421
    %v5424 = vunpack.c.h.b16 %v1421
    %v5425 = vunpack.c.l.b16 %v1422
    %v5426 = vunpack.c.h.b16 %v1422
    %v5427 = vunpack.c.l.b16 %v1423
    %v5428 = vunpack.c.h.b16 %v1423
    %v5429 = vunpack.c.l.b16 %v1424
    %v5430 = vunpack.c.h.b16 %v1424
    %v5431 = vunpack.c.l.b16 %v1425
    %v5432 = vunpack.c.h.b16 %v1425
    %v5433 = vunpack.c.l.b16 %v1426
    %v5434 = vunpack.c.h.b16 %v1426
    %v5435 = vunpack.c.l.b16 %v1427
    %v5436 = vunpack.c.h.b16 %v1427
    %v5437 = vunpack.c.l.b16 %v1428
    %v5438 = vunpack.c.h.b16 %v1428
    %v5439 = vunpack.c.l.b16 %v1429
    %v5440 = vunpack.c.h.b16 %v1429
    %v5441 = vunpack.c.l.b16 %v1430
    %v5442 = vunpack.c.h.b16 %v1430
    %v5443 = vunpack.c.l.b16 %v1431
    %v5444 = vunpack.c.h.b16 %v1431
    %v5445 = vunpack.c.l.b16 %v1432
    %v5446 = vunpack.c.h.b16 %v1432
    %v5447 = vunpack.c.l.b16 %v1433
    %v5448 = vunpack.c.h.b16 %v1433
    %v5449 = vunpack.c.l.b16 %v1434
    %v5450 = vunpack.c.h.b16 %v1434
    %v5451 = vunpack.c.l.b16 %v1435
    %v5452 = vunpack.c.h.b16 %v1435
    %v5453 = vunpack.c.l.b16 %v1436
    %v5454 = vunpack.c.h.b16 %v1436
    %v5455 = vunpack.c.l.b16 %v1437
    %v5456 = vunpack.c.h.b16 %v1437
    %v5457 = vunpack.c.l.b16 %v1438
    %v5458 = vunpack.c.h.b16 %v1438
    %v5459 = vunpack.c.l.b16 %v1439
    %v5460 = vunpack.c.h.b16 %v1439
    %v5461 = vunpack.c.l.b16 %v1440
    %v5462 = vunpack.c.h.b16 %v1440
    %v5463 = vunpack.c.l.b16 %v1441
    %v5464 = vunpack.c.h.b16 %v1441
    %v5465 = vunpack.c.l.b16 %v1442
    %v5466 = vunpack.c.h.b16 %v1442
    %v5467 = vunpack.c.l.b16 %v1443
    %v5468 = vunpack.c.h.b16 %v1443
    %v5469 = vunpack.c.l.b16 %v1444
    %v5470 = vunpack.c.h.b16 %v1444
    %v5471 = vunpack.c.l.b16 %v1445
    %v5472 = vunpack.c.h.b16 %v1445
    %v5473 = vunpack.c.l.b16 %v1446
    %v5474 = vunpack.c.h.b16 %v1446
    %v5475 = vunpack.c.l.b16 %v1447
    %v5476 = vunpack.c.h.b16 %v1447
    %v5477 = vunpack.c.l.b16 %v1448
    %v5478 = vunpack.c.h.b16 %v1448
    %v5479 = vunpack.c.l.b16 %v1449
    %v5480 = vunpack.c.h.b16 %v1449
    %v5481 = vunpack.c.l.b16 %v1450
    %v5482 = vunpack.c.h.b16 %v1450
    %v5483 = vunpack.c.l.b16 %v1451
    %v5484 = vunpack.c.h.b16 %v1451
    %v5485 = vunpack.c.l.b16 %v1452
    %v5486 = vunpack.c.h.b16 %v1452
    %v5487 = vunpack.c.l.b16 %v1453
    %v5488 = vunpack.c.h.b16 %v1453
    %v5489 = vunpack.c.l.b16 %v1454
    %v5490 = vunpack.c.h.b16 %v1454
    %v5491 = vunpack.c.l.b16 %v1455
    %v5492 = vunpack.c.h.b16 %v1455
    %v5493 = vunpack.c.l.b16 %v1456
    %v5494 = vunpack.c.h.b16 %v1456
    %v5495 = vunpack.c.l.b16 %v1457
    %v5496 = vunpack.c.h.b16 %v1457
    %v5497 = vunpack.c.l.b16 %v1458
    %v5498 = vunpack.c.h.b16 %v1458
    %v5499 = vunpack.c.l.b16 %v1459
    %v5500 = vunpack.c.h.b16 %v1459
    %v5501 = vunpack.c.l.b16 %v1460
    %v5502 = vunpack.c.h.b16 %v1460
    %v5503 = vunpack.c.l.b16 %v1461
    %v5504 = vunpack.c.h.b16 %v1461
    %v5505 = vunpack.c.l.b16 %v1462
    %v5506 = vunpack.c.h.b16 %v1462
    %v5507 = vunpack.c.l.b16 %v1463
    %v5508 = vunpack.c.h.b16 %v1463
    %v5509 = vunpack.c.l.b16 %v1464
    %v5510 = vunpack.c.h.b16 %v1464
    %v5511 = vunpack.c.l.b16 %v1465
    %v5512 = vunpack.c.h.b16 %v1465
    %v5513 = vunpack.c.l.b16 %v1466
    %v5514 = vunpack.c.h.b16 %v1466
    %v5515 = vunpack.c.l.b16 %v1467
    %v5516 = vunpack.c.h.b16 %v1467
    %v5517 = vunpack.c.l.b16 %v1468
    %v5518 = vunpack.c.h.b16 %v1468
    %v5519 = vunpack.c.l.b16 %v1469
    %v5520 = vunpack.c.h.b16 %v1469
    %v5521 = vunpack.c.l.b16 %v1470
    %v5522 = vunpack.c.h.b16 %v1470
    %v5523 = vunpack.c.l.b16 %v1471
    %v5524 = vunpack.c.h.b16 %v1471
    %v5525 = vunpack.c.l.b16 %v1472
    %v5526 = vunpack.c.h.b16 %v1472
    %v5527 = vunpack.c.l.b16 %v1473
    %v5528 = vunpack.c.h.b16 %v1473
    %v5529 = vunpack.c.l.b16 %v1474
    %v5530 = vunpack.c.h.b16 %v1474
    %v5531 = vunpack.c.l.b16 %v1475
    %v5532 = vunpack.c.h.b16 %v1475
    %v5533 = vunpack.c.l.b16 %v1476
    %v5534 = vunpack.c.h.b16 %v1476
    %v5535 = vunpack.c.l.b16 %v1477
    %v5536 = vunpack.c.h.b16 %v1477
    %v5537 = vunpack.c.l.b16 %v1478
    %v5538 = vunpack.c.h.b16 %v1478
    %v5539 = vunpack.c.l.b16 %v1479
    %v5540 = vunpack.c.h.b16 %v1479
    %v5541 = vunpack.c.l.b16 %v1480
    %v5542 = vunpack.c.h.b16 %v1480
    %v5543 = vunpack.c.l.b16 %v1481
    %v5544 = vunpack.c.h.b16 %v1481
    %v5545 = vunpack.c.l.b16 %v1482
    %v5546 = vunpack.c.h.b16 %v1482
    %v5547 = vunpack.c.l.b16 %v1483
    %v5548 = vunpack.c.h.b16 %v1483
    %v5549 = vunpack.c.l.b16 %v1484
    %v5550 = vunpack.c.h.b16 %v1484
    %v5551 = vunpack.c.l.b16 %v1485
    %v5552 = vunpack.c.h.b16 %v1485
    %v5553 = vunpack.c.l.b16 %v1486
    %v5554 = vunpack.c.h.b16 %v1486
    %v5555 = vunpack.c.l.b16 %v1487
    %v5556 = vunpack.c.h.b16 %v1487
    %v5557 = vunpack.c.l.b16 %v1488
    %v5558 = vunpack.c.h.b16 %v1488
    %v5559 = vunpack.c.l.b16 %v1489
    %v5560 = vunpack.c.h.b16 %v1489
    %v5561 = vunpack.c.l.b16 %v1490
    %v5562 = vunpack.c.h.b16 %v1490
    %v5563 = vunpack.c.l.b16 %v1491
    %v5564 = vunpack.c.h.b16 %v1491
    %v5565 = vunpack.c.l.b16 %v1492
    %v5566 = vunpack.c.h.b16 %v1492
    %v5567 = vunpack.c.l.b16 %v1493
    %v5568 = vunpack.c.h.b16 %v1493
    %v5569 = vunpack.c.l.b16 %v1494
    %v5570 = vunpack.c.h.b16 %v1494
    %v5571 = vunpack.c.l.b16 %v1495
    %v5572 = vunpack.c.h.b16 %v1495
    %v5573 = vunpack.c.l.b16 %v1496
    %v5574 = vunpack.c.h.b16 %v1496
    %v5575 = vunpack.c.l.b16 %v1497
    %v5576 = vunpack.c.h.b16 %v1497
    %v5577 = vunpack.c.l.b16 %v1498
    %v5578 = vunpack.c.h.b16 %v1498
    %v5579 = vunpack.c.l.b16 %v1499
    %v5580 = vunpack.c.h.b16 %v1499
    %v5581 = vunpack.c.l.b16 %v1500
    %v5582 = vunpack.c.h.b16 %v1500
    %v5583 = vunpack.c.l.b16 %v1501
    %v5584 = vunpack.c.h.b16 %v1501
    %v5585 = vunpack.c.l.b16 %v1502
    %v5586 = vunpack.c.h.b16 %v1502
    %v5587 = vunpack.c.l.b16 %v1503
    %v5588 = vunpack.c.h.b16 %v1503
    %v5589 = vunpack.c.l.b16 %v1504
    %v5590 = vunpack.c.h.b16 %v1504
    %v5591 = vunpack.c.l.b16 %v1505
    %v5592 = vunpack.c.h.b16 %v1505
    %v5593 = vunpack.c.l.b16 %v1506
    %v5594 = vunpack.c.h.b16 %v1506
    %v5595 = vunpack.c.l.b16 %v1507
    %v5596 = vunpack.c.h.b16 %v1507
    %v5597 = vunpack.c.l.b16 %v1508
    %v5598 = vunpack.c.h.b16 %v1508
    %v5599 = vunpack.c.l.b16 %v1509
    %v5600 = vunpack.c.h.b16 %v1509
    %v5601 = vunpack.c.l.b16 %v1510
    %v5602 = vunpack.c.h.b16 %v1510
    %v5603 = vunpack.c.l.b16 %v1511
    %v5604 = vunpack.c.h.b16 %v1511
    %v5605 = vunpack.c.l.b16 %v1512
    %v5606 = vunpack.c.h.b16 %v1512
    %v5607 = vunpack.c.l.b16 %v1513
    %v5608 = vunpack.c.h.b16 %v1513
    %v5609 = vunpack.c.l.b16 %v1514
    %v5610 = vunpack.c.h.b16 %v1514
    %v5611 = vunpack.c.l.b16 %v1515
    %v5612 = vunpack.c.h.b16 %v1515
    %v5613 = vunpack.c.l.b16 %v1516
    %v5614 = vunpack.c.h.b16 %v1516
    %v5615 = vunpack.c.l.b16 %v1517
    %v5616 = vunpack.c.h.b16 %v1517
    %v5617 = vunpack.c.l.b16 %v1518
    %v5618 = vunpack.c.h.b16 %v1518
    %v5619 = vunpack.c.l.b16 %v1519
    %v5620 = vunpack.c.h.b16 %v1519
    %v5621 = vunpack.c.l.b16 %v1520
    %v5622 = vunpack.c.h.b16 %v1520
    %v5623 = vunpack.c.l.b16 %v1521
    %v5624 = vunpack.c.h.b16 %v1521
    %v5625 = vunpack.c.l.b16 %v1522
    %v5626 = vunpack.c.h.b16 %v1522
    %v5627 = vunpack.c.l.b16 %v1523
    %v5628 = vunpack.c.h.b16 %v1523
    %v5629 = vunpack.c.l.b16 %v1524
    %v5630 = vunpack.c.h.b16 %v1524
    %v5631 = vunpack.c.l.b16 %v1525
    %v5632 = vunpack.c.h.b16 %v1525
    %v5633 = vunpack.c.l.b16 %v1526
    %v5634 = vunpack.c.h.b16 %v1526
    %v5635 = vunpack.c.l.b16 %v1527
    %v5636 = vunpack.c.h.b16 %v1527
    %v5637 = vunpack.c.l.b16 %v1528
    %v5638 = vunpack.c.h.b16 %v1528
    %v5639 = vunpack.c.l.b16 %v1529
    %v5640 = vunpack.c.h.b16 %v1529
    %v5641 = vunpack.c.l.b16 %v1530
    %v5642 = vunpack.c.h.b16 %v1530
    %v5643 = vunpack.c.l.b16 %v1531
    %v5644 = vunpack.c.h.b16 %v1531
    %v5645 = vunpack.c.l.b16 %v1532
    %v5646 = vunpack.c.h.b16 %v1532
    %v5647 = vunpack.c.l.b16 %v1533
    %v5648 = vunpack.c.h.b16 %v1533
    %v5649 = vunpack.c.l.b16 %v1534
    %v5650 = vunpack.c.h.b16 %v1534
    %v5651 = vpack.c.b16 %v2935, %v2907
    %v5652 = vpack.c.b16 %v2936, %v2908
    %v5653 = vpack.c.b16 %v2937, %v2909
    %v5654 = vpack.c.b16 %v2938, %v2910
    %v5655 = vpack.c.b16 %v2939, %v2911
    %v5656 = vpack.c.b16 %v2940, %v2912
    %v5657 = vpack.c.b16 %v2941, %v2913
    %v5658 = vpack.c.b16 %v2942, %v2914
    %v5659 = vpack.c.b16 %v2943, %v2915
    %v5660 = vpack.c.b16 %v2944, %v2916
    %v5661 = vpack.c.b16 %v2945, %v2917
    %v5662 = vpack.c.b16 %v2946, %v2918
    %v5663 = vpack.c.b16 %v2947, %v2919
    %v5664 = vpack.c.b16 %v2948, %v2920
    %v5665 = vpack.c.b16 %v2949, %v2921
    %v5666 = vpack.c.b16 %v2950, %v2922
    %v5667 = vpack.c.b16 %v2951, %v2923
    %v5668 = vpack.c.b16 %v2952, %v2924
    %v5669 = vpack.c.b16 %v2953, %v2925
    %v5670 = vpack.c.b16 %v2954, %v2926
    %v5671 = vpack.c.b16 %v2955, %v2927
    %v5672 = vpack.c.b16 %v2956, %v2928
    %v5673 = vpack.c.b16 %v2957, %v2929
    %v5674 = vpack.c.b16 %v2958, %v2930
    %v5675 = vpack.c.b16 %v2959, %v2931
    %v5676 = vpack.c.b16 %v2960, %v2932
    %v5677 = vpack.c.b16 %v2961, %v2933
    %v5678 = vpack.c.b16 %v2962, %v2934
    %v5679 = vpack.c.b16 %v2991, %v2963
    %v5680 = vpack.c.b16 %v2992, %v2964
    %v5681 = vpack.c.b16 %v2993, %v2965
    %v5682 = vpack.c.b16 %v2994, %v2966
    %v5683 = vpack.c.b16 %v2995, %v2967
    %v5684 = vpack.c.b16 %v2996, %v2968
    %v5685 = vpack.c.b16 %v2997, %v2969
    %v5686 = vpack.c.b16 %v2998, %v2970
    %v5687 = vpack.c.b16 %v2999, %v2971
    %v5688 = vpack.c.b16 %v3000, %v2972
    %v5689 = vpack.c.b16 %v3001, %v2973
    %v5690 = vpack.c.b16 %v3002, %v2974
    %v5691 = vpack.c.b16 %v3003, %v2975
    %v5692 = vpack.c.b16 %v3004, %v2976
    %v5693 = vpack.c.b16 %v3005, %v2977
    %v5694 = vpack.c.b16 %v3006, %v2978
    %v5695 = vpack.c.b16 %v3007, %v2979
    %v5696 = vpack.c.b16 %v3008, %v2980
    %v5697 = vpack.c.b16 %v3009, %v2981
    %v5698 = vpack.c.b16 %v3010, %v2982
    %v5699 = vpack.c.b16 %v3011, %v2983
    %v5700 = vpack.c.b16 %v3012, %v2984
    %v5701 = vpack.c.b16 %v3013, %v2985
    %v5702 = vpack.c.b16 %v3014, %v2986
    %v5703 = vpack.c.b16 %v3015, %v2987
    %v5704 = vpack.c.b16 %v3016, %v2988
    %v5705 = vpack.c.b16 %v3017, %v2989
    %v5706 = vpack.c.b16 %v3018, %v2990
    %v5707 = vpack.c.b16 %v3047, %v3019
    %v5708 = vpack.c.b16 %v3048, %v3020
    %v5709 = vpack.c.b16 %v3049, %v3021
    %v5710 = vpack.c.b16 %v3050, %v3022
    %v5711 = vpack.c.b16 %v3051, %v3023
    %v5712 = vpack.c.b16 %v3052, %v3024
    %v5713 = vpack.c.b16 %v3053, %v3025
    %v5714 = vpack.c.b16 %v3054, %v3026
    %v5715 = vpack.c.b16 %v3055, %v3027
    %v5716 = vpack.c.b16 %v3056, %v3028
    %v5717 = vpack.c.b16 %v3057, %v3029
    %v5718 = vpack.c.b16 %v3058, %v3030
    %v5719 = vpack.c.b16 %v3059, %v3031
    %v5720 = vpack.c.b16 %v3060, %v3032
    %v5721 = vpack.c.b16 %v3061, %v3033
    %v5722 = vpack.c.b16 %v3062, %v3034
    %v5723 = vpack.c.b16 %v3063, %v3035
    %v5724 = vpack.c.b16 %v3064, %v3036
    %v5725 = vpack.c.b16 %v3065, %v3037
    %v5726 = vpack.c.b16 %v3066, %v3038
    %v5727 = vpack.c.b16 %v3067, %v3039
    %v5728 = vpack.c.b16 %v3068, %v3040
    %v5729 = vpack.c.b16 %v3069, %v3041
    %v5730 = vpack.c.b16 %v3070, %v3042
    %v5731 = vpack.c.b16 %v3071, %v3043
    %v5732 = vpack.c.b16 %v3072, %v3044
    %v5733 = vpack.c.b16 %v3073, %v3045
    %v5734 = vpack.c.b16 %v3074, %v3046
    %v5735 = vpack.c.b16 %v3103, %v3075
    %v5736 = vpack.c.b16 %v3104, %v3076
    %v5737 = vpack.c.b16 %v3105, %v3077
    %v5738 = vpack.c.b16 %v3106, %v3078
    %v5739 = vpack.c.b16 %v3107, %v3079
    %v5740 = vpack.c.b16 %v3108, %v3080
    %v5741 = vpack.c.b16 %v3109, %v3081
    %v5742 = vpack.c.b16 %v3110, %v3082
    %v5743 = vpack.c.b16 %v3111, %v3083
    %v5744 = vpack.c.b16 %v3112, %v3084
    %v5745 = vpack.c.b16 %v3113, %v3085
    %v5746 = vpack.c.b16 %v3114, %v3086
    %v5747 = vpack.c.b16 %v3115, %v3087
    %v5748 = vpack.c.b16 %v3116, %v3088
    %v5749 = vpack.c.b16 %v3117, %v3089
    %v5750 = vpack.c.b16 %v3118, %v3090
    %v5751 = vpack.c.b16 %v3119, %v3091
    %v5752 = vpack.c.b16 %v3120, %v3092
    %v5753 = vpack.c.b16 %v3121, %v3093
    %v5754 = vpack.c.b16 %v3122, %v3094
    %v5755 = vpack.c.b16 %v3123, %v3095
    %v5756 = vpack.c.b16 %v3124, %v3096
    %v5757 = vpack.c.b16 %v3125, %v3097
    %v5758 = vpack.c.b16 %v3126, %v3098
    %v5759 = vpack.c.b16 %v3127, %v3099
    %v5760 = vpack.c.b16 %v3128, %v3100
    %v5761 = vpack.c.b16 %v3129, %v3101
    %v5762 = vpack.c.b16 %v3130, %v3102
    %v5763 = vpack.c.b16 %v3159, %v3131
    %v5764 = vpack.c.b16 %v3160, %v3132
    %v5765 = vpack.c.b16 %v3161, %v3133
    %v5766 = vpack.c.b16 %v3162, %v3134
    %v5767 = vpack.c.b16 %v3163, %v3135
    %v5768 = vpack.c.b16 %v3164, %v3136
    %v5769 = vpack.c.b16 %v3165, %v3137
    %v5770 = vpack.c.b16 %v3166, %v3138
    %v5771 = vpack.c.b16 %v3167, %v3139
    %v5772 = vpack.c.b16 %v3168, %v3140
    %v5773 = vpack.c.b16 %v3169, %v3141
    %v5774 = vpack.c.b16 %v3170, %v3142
    %v5775 = vpack.c.b16 %v3171, %v3143
    %v5776 = vpack.c.b16 %v3172, %v3144
    %v5777 = vpack.c.b16 %v3173, %v3145
    %v5778 = vpack.c.b16 %v3174, %v3146
    %v5779 = vpack.c.b16 %v3175, %v3147
    %v5780 = vpack.c.b16 %v3176, %v3148
    %v5781 = vpack.c.b16 %v3177, %v3149
    %v5782 = vpack.c.b16 %v3178, %v3150
    %v5783 = vpack.c.b16 %v3179, %v3151
    %v5784 = vpack.c.b16 %v3180, %v3152
    %v5785 = vpack.c.b16 %v3181, %v3153
    %v5786 = vpack.c.b16 %v3182, %v3154
    %v5787 = vpack.c.b16 %v3183, %v3155
    %v5788 = vpack.c.b16 %v3184, %v3156
    %v5789 = vpack.c.b16 %v3185, %v3157
    %v5790 = vpack.c.b16 %v3186, %v3158
    %v5791 = vpack.c.b16 %v3215, %v3187
    %v5792 = vpack.c.b16 %v3216, %v3188
    %v5793 = vpack.c.b16 %v3217, %v3189
    %v5794 = vpack.c.b16 %v3218, %v3190
    %v5795 = vpack.c.b16 %v3219, %v3191
    %v5796 = vpack.c.b16 %v3220, %v3192
    %v5797 = vpack.c.b16 %v3221, %v3193
    %v5798 = vpack.c.b16 %v3222, %v3194
    %v5799 = vpack.c.b16 %v3223, %v3195
    %v5800 = vpack.c.b16 %v3224, %v3196
    %v5801 = vpack.c.b16 %v3225, %v3197
    %v5802 = vpack.c.b16 %v3226, %v3198
    %v5803 = vpack.c.b16 %v3227, %v3199
    %v5804 = vpack.c.b16 %v3228, %v3200
    %v5805 = vpack.c.b16 %v3229, %v3201
    %v5806 = vpack.c.b16 %v3230, %v3202
    %v5807 = vpack.c.b16 %v3231, %v3203
    %v5808 = vpack.c.b16 %v3232, %v3204
    %v5809 = vpack.c.b16 %v3233, %v3205
    %v5810 = vpack.c.b16 %v3234, %v3206
    %v5811 = vpack.c.b16 %v3235, %v3207
    %v5812 = vpack.c.b16 %v3236, %v3208
    %v5813 = vpack.c.b16 %v3237, %v3209
    %v5814 = vpack.c.b16 %v3238, %v3210
    %v5815 = vpack.c.b16 %v3239, %v3211
    %v5816 = vpack.c.b16 %v3240, %v3212
    %v5817 = vpack.c.b16 %v3241, %v3213
    %v5818 = vpack.c.b16 %v3242, %v3214
    %v5819 = vpack.c.b16 %v3271, %v3243
    %v5820 = vpack.c.b16 %v3272, %v3244
    %v5821 = vpack.c.b16 %v3273, %v3245
    %v5822 = vpack.c.b16 %v3274, %v3246
    %v5823 = vpack.c.b16 %v3275, %v3247
    %v5824 = vpack.c.b16 %v3276, %v3248
    %v5825 = vpack.c.b16 %v3277, %v3249
    %v5826 = vpack.c.b16 %v3278, %v3250
    %v5827 = vpack.c.b16 %v3279, %v3251
    %v5828 = vpack.c.b16 %v3280, %v3252
    %v5829 = vpack.c.b16 %v3281, %v3253
    %v5830 = vpack.c.b16 %v3282, %v3254
    %v5831 = vpack.c.b16 %v3283, %v3255
    %v5832 = vpack.c.b16 %v3284, %v3256
    %v5833 = vpack.c.b16 %v3285, %v3257
    %v5834 = vpack.c.b16 %v3286, %v3258
    %v5835 = vpack.c.b16 %v3287, %v3259
    %v5836 = vpack.c.b16 %v3288, %v3260
    %v5837 = vpack.c.b16 %v3289, %v3261
    %v5838 = vpack.c.b16 %v3290, %v3262
    %v5839 = vpack.c.b16 %v3291, %v3263
    %v5840 = vpack.c.b16 %v3292, %v3264
    %v5841 = vpack.c.b16 %v3293, %v3265
    %v5842 = vpack.c.b16 %v3294, %v3266
    %v5843 = vpack.c.b16 %v3295, %v3267
    %v5844 = vpack.c.b16 %v3296, %v3268
    %v5845 = vpack.c.b16 %v3297, %v3269
    %v5846 = vpack.c.b16 %v3298, %v3270
    %v5847 = vpack.c.b16 %v3327, %v3299
    %v5848 = vpack.c.b16 %v3328, %v3300
    %v5849 = vpack.c.b16 %v3329, %v3301
    %v5850 = vpack.c.b16 %v3330, %v3302
    %v5851 = vpack.c.b16 %v3331, %v3303
    %v5852 = vpack.c.b16 %v3332, %v3304
    %v5853 = vpack.c.b16 %v3333, %v3305
    %v5854 = vpack.c.b16 %v3334, %v3306
    %v5855 = vpack.c.b16 %v3335, %v3307
    %v5856 = vpack.c.b16 %v3336, %v3308
    %v5857 = vpack.c.b16 %v3337, %v3309
    %v5858 = vpack.c.b16 %v3338, %v3310
    %v5859 = vpack.c.b16 %v3339, %v3311
    %v5860 = vpack.c.b16 %v3340, %v3312
    %v5861 = vpack.c.b16 %v3341, %v3313
    %v5862 = vpack.c.b16 %v3342, %v3314
    %v5863 = vpack.c.b16 %v3343, %v3315
    %v5864 = vpack.c.b16 %v3344, %v3316
    %v5865 = vpack.c.b16 %v3345, %v3317
    %v5866 = vpack.c.b16 %v3346, %v3318
    %v5867 = vpack.c.b16 %v3347, %v3319
    %v5868 = vpack.c.b16 %v3348, %v3320
    %v5869 = vpack.c.b16 %v3349, %v3321
    %v5870 = vpack.c.b16 %v3350, %v3322
    %v5871 = vpack.c.b16 %v3351, %v3323
    %v5872 = vpack.c.b16 %v3352, %v3324
    %v5873 = vpack.c.b16 %v3353, %v3325
    %v5874 = vpack.c.b16 %v3354, %v3326
    %v5875 = vpack.c.b16 %v3383, %v3355
    %v5876 = vpack.c.b16 %v3384, %v3356
    %v5877 = vpack.c.b16 %v3385, %v3357
    %v5878 = vpack.c.b16 %v3386, %v3358
    %v5879 = vpack.c.b16 %v3387, %v3359
    %v5880 = vpack.c.b16 %v3388, %v3360
    %v5881 = vpack.c.b16 %v3389, %v3361
    %v5882 = vpack.c.b16 %v3390, %v3362
    %v5883 = vpack.c.b16 %v3391, %v3363
    %v5884 = vpack.c.b16 %v3392, %v3364
    %v5885 = vpack.c.b16 %v3393, %v3365
    %v5886 = vpack.c.b16 %v3394, %v3366
    %v5887 = vpack.c.b16 %v3395, %v3367
    %v5888 = vpack.c.b16 %v3396, %v3368
    %v5889 = vpack.c.b16 %v3397, %v3369
    %v5890 = vpack.c.b16 %v3398, %v3370
    %v5891 = vpack.c.b16 %v3399, %v3371
    %v5892 = vpack.c.b16 %v3400, %v3372
    %v5893 = vpack.c.b16 %v3401, %v3373
    %v5894 = vpack.c.b16 %v3402, %v3374
    %v5895 = vpack.c.b16 %v3403, %v3375
    %v5896 = vpack.c.b16 %v3404, %v3376
    %v5897 = vpack.c.b16 %v3405, %v3377
    %v5898 = vpack.c.b16 %v3406, %v3378
    %v5899 = vpack.c.b16 %v3407, %v3379
    %v5900 = vpack.c.b16 %v3408, %v3380
    %v5901 = vpack.c.b16 %v3409, %v3381
    %v5902 = vpack.c.b16 %v3410, %v3382
    %v5903 = vpack.c.b16 %v3439, %v3411
    %v5904 = vpack.c.b16 %v3440, %v3412
    %v5905 = vpack.c.b16 %v3441, %v3413
    %v5906 = vpack.c.b16 %v3442, %v3414
    %v5907 = vpack.c.b16 %v3443, %v3415
    %v5908 = vpack.c.b16 %v3444, %v3416
    %v5909 = vpack.c.b16 %v3445, %v3417
    %v5910 = vpack.c.b16 %v3446, %v3418
    %v5911 = vpack.c.b16 %v3447, %v3419
    %v5912 = vpack.c.b16 %v3448, %v3420
    %v5913 = vpack.c.b16 %v3449, %v3421
    %v5914 = vpack.c.b16 %v3450, %v3422
    %v5915 = vpack.c.b16 %v3451, %v3423
    %v5916 = vpack.c.b16 %v3452, %v3424
    %v5917 = vpack.c.b16 %v3453, %v3425
    %v5918 = vpack.c.b16 %v3454, %v3426
    %v5919 = vpack.c.b16 %v3455, %v3427
    %v5920 = vpack.c.b16 %v3456, %v3428
    %v5921 = vpack.c.b16 %v3457, %v3429
    %v5922 = vpack.c.b16 %v3458, %v3430
    %v5923 = vpack.c.b16 %v3459, %v3431
    %v5924 = vpack.c.b16 %v3460, %v3432
    %v5925 = vpack.c.b16 %v3461, %v3433
    %v5926 = vpack.c.b16 %v3462, %v3434
    %v5927 = vpack.c.b16 %v3463, %v3435
    %v5928 = vpack.c.b16 %v3464, %v3436
    %v5929 = vpack.c.b16 %v3465, %v3437
    %v5930 = vpack.c.b16 %v3466, %v3438
    %v5931 = vpack.c.b16 %v3495, %v3467
    %v5932 = vpack.c.b16 %v3496, %v3468
    %v5933 = vpack.c.b16 %v3497, %v3469
    %v5934 = vpack.c.b16 %v3498, %v3470
    %v5935 = vpack.c.b16 %v3499, %v3471
    %v5936 = vpack.c.b16 %v3500, %v3472
    %v5937 = vpack.c.b16 %v3501, %v3473
    %v5938 = vpack.c.b16 %v3502, %v3474
    %v5939 = vpack.c.b16 %v3503, %v3475
    %v5940 = vpack.c.b16 %v3504, %v3476
    %v5941 = vpack.c.b16 %v3505, %v3477
    %v5942 = vpack.c.b16 %v3506, %v3478
    %v5943 = vpack.c.b16 %v3507, %v3479
    %v5944 = vpack.c.b16 %v3508, %v3480
    %v5945 = vpack.c.b16 %v3509, %v3481
    %v5946 = vpack.c.b16 %v3510, %v3482
    %v5947 = vpack.c.b16 %v3511, %v3483
    %v5948 = vpack.c.b16 %v3512, %v3484
    %v5949 = vpack.c.b16 %v3513, %v3485
    %v5950 = vpack.c.b16 %v3514, %v3486
    %v5951 = vpack.c.b16 %v3515, %v3487
    %v5952 = vpack.c.b16 %v3516, %v3488
    %v5953 = vpack.c.b16 %v3517, %v3489
    %v5954 = vpack.c.b16 %v3518, %v3490
    %v5955 = vpack.c.b16 %v3519, %v3491
    %v5956 = vpack.c.b16 %v3520, %v3492
    %v5957 = vpack.c.b16 %v3521, %v3493
    %v5958 = vpack.c.b16 %v3522, %v3494
    %v5959 = vpack.c.b16 %v3551, %v3523
    %v5960 = vpack.c.b16 %v3552, %v3524
    %v5961 = vpack.c.b16 %v3553, %v3525
    %v5962 = vpack.c.b16 %v3554, %v3526
    %v5963 = vpack.c.b16 %v3555, %v3527
    %v5964 = vpack.c.b16 %v3556, %v3528
    %v5965 = vpack.c.b16 %v3557, %v3529
    %v5966 = vpack.c.b16 %v3558, %v3530
    %v5967 = vpack.c.b16 %v3559, %v3531
    %v5968 = vpack.c.b16 %v3560, %v3532
    %v5969 = vpack.c.b16 %v3561, %v3533
    %v5970 = vpack.c.b16 %v3562, %v3534
    %v5971 = vpack.c.b16 %v3563, %v3535
    %v5972 = vpack.c.b16 %v3564, %v3536
    %v5973 = vpack.c.b16 %v3565, %v3537
    %v5974 = vpack.c.b16 %v3566, %v3538
    %v5975 = vpack.c.b16 %v3567, %v3539
    %v5976 = vpack.c.b16 %v3568, %v3540
    %v5977 = vpack.c.b16 %v3569, %v3541
    %v5978 = vpack.c.b16 %v3570, %v3542
    %v5979 = vpack.c.b16 %v3571, %v3543
    %v5980 = vpack.c.b16 %v3572, %v3544
    %v5981 = vpack.c.b16 %v3573, %v3545
    %v5982 = vpack.c.b16 %v3574, %v3546
    %v5983 = vpack.c.b16 %v3575, %v3547
    %v5984 = vpack.c.b16 %v3576, %v3548
    %v5985 = vpack.c.b16 %v3577, %v3549
    %v5986 = vpack.c.b16 %v3578, %v3550
    %v5987 = vpack.c.b16 %v3607, %v3579
    %v5988 = vpack.c.b16 %v3608, %v3580
    %v5989 = vpack.c.b16 %v3609, %v3581
    %v5990 = vpack.c.b16 %v3610, %v3582
    %v5991 = vpack.c.b16 %v3611, %v3583
    %v5992 = vpack.c.b16 %v3612, %v3584
    %v5993 = vpack.c.b16 %v3613, %v3585
    %v5994 = vpack.c.b16 %v3614, %v3586
    %v5995 = vpack.c.b16 %v3615, %v3587
    %v5996 = vpack.c.b16 %v3616, %v3588
    %v5997 = vpack.c.b16 %v3617, %v3589
    %v5998 = vpack.c.b16 %v3618, %v3590
    %v5999 = vpack.c.b16 %v3619, %v3591
    %v6000 = vpack.c.b16 %v3620, %v3592
    %v6001 = vpack.c.b16 %v3621, %v3593
    %v6002 = vpack.c.b16 %v3622, %v3594
    %v6003 = vpack.c.b16 %v3623, %v3595
    %v6004 = vpack.c.b16 %v3624, %v3596
    %v6005 = vpack.c.b16 %v3625, %v3597
    %v6006 = vpack.c.b16 %v3626, %v3598
    %v6007 = vpack.c.b16 %v3627, %v3599
    %v6008 = vpack.c.b16 %v3628, %v3600
    %v6009 = vpack.c.b16 %v3629, %v3601
    %v6010 = vpack.c.b16 %v3630, %v3602
    %v6011 = vpack.c.b16 %v3631, %v3603
    %v6012 = vpack.c.b16 %v3632, %v3604
    %v6013 = vpack.c.b16 %v3633, %v3605
    %v6014 = vpack.c.b16 %v3634, %v3606
    %v6015 = vpack.c.b16 %v3663, %v3635
    %v6016 = vpack.c.b16 %v3664, %v3636
    %v6017 = vpack.c.b16 %v3665, %v3637
    %v6018 = vpack.c.b16 %v3666, %v3638
    %v6019 = vpack.c.b16 %v3667, %v3639
    %v6020 = vpack.c.b16 %v3668, %v3640
    %v6021 = vpack.c.b16 %v3669, %v3641
    %v6022 = vpack.c.b16 %v3670, %v3642
    %v6023 = vpack.c.b16 %v3671, %v3643
    %v6024 = vpack.c.b16 %v3672, %v3644
    %v6025 = vpack.c.b16 %v3673, %v3645
    %v6026 = vpack.c.b16 %v3674, %v3646
    %v6027 = vpack.c.b16 %v3675, %v3647
    %v6028 = vpack.c.b16 %v3676, %v3648
    %v6029 = vpack.c.b16 %v3677, %v3649
    %v6030 = vpack.c.b16 %v3678, %v3650
    %v6031 = vpack.c.b16 %v3679, %v3651
    %v6032 = vpack.c.b16 %v3680, %v3652
    %v6033 = vpack.c.b16 %v3681, %v3653
    %v6034 = vpack.c.b16 %v3682, %v3654
    %v6035 = vpack.c.b16 %v3683, %v3655
    %v6036 = vpack.c.b16 %v3684, %v3656
    %v6037 = vpack.c.b16 %v3685, %v3657
    %v6038 = vpack.c.b16 %v3686, %v3658
    %v6039 = vpack.c.b16 %v3687, %v3659
    %v6040 = vpack.c.b16 %v3688, %v3660
    %v6041 = vpack.c.b16 %v3689, %v3661
    %v6042 = vpack.c.b16 %v3690, %v3662
    %v6043 = vpack.c.b16 %v3719, %v3691
    %v6044 = vpack.c.b16 %v3720, %v3692
    %v6045 = vpack.c.b16 %v3721, %v3693
    %v6046 = vpack.c.b16 %v3722, %v3694
    %v6047 = vpack.c.b16 %v3723, %v3695
    %v6048 = vpack.c.b16 %v3724, %v3696
    %v6049 = vpack.c.b16 %v3725, %v3697
    %v6050 = vpack.c.b16 %v3726, %v3698
    %v6051 = vpack.c.b16 %v3727, %v3699
    %v6052 = vpack.c.b16 %v3728, %v3700
    %v6053 = vpack.c.b16 %v3729, %v3701
    %v6054 = vpack.c.b16 %v3730, %v3702
    %v6055 = vpack.c.b16 %v3731, %v3703
    %v6056 = vpack.c.b16 %v3732, %v3704
    %v6057 = vpack.c.b16 %v3733, %v3705
    %v6058 = vpack.c.b16 %v3734, %v3706
    %v6059 = vpack.c.b16 %v3735, %v3707
    %v6060 = vpack.c.b16 %v3736, %v3708
    %v6061 = vpack.c.b16 %v3737, %v3709
    %v6062 = vpack.c.b16 %v3738, %v3710
    %v6063 = vpack.c.b16 %v3739, %v3711
    %v6064 = vpack.c.b16 %v3740, %v3712
    %v6065 = vpack.c.b16 %v3741, %v3713
    %v6066 = vpack.c.b16 %v3742, %v3714
    %v6067 = vpack.c.b16 %v3743, %v3715
    %v6068 = vpack.c.b16 %v3744, %v3716
    %v6069 = vpack.c.b16 %v3745, %v3717
    %v6070 = vpack.c.b16 %v3746, %v3718
    %v6071 = vpack.c.b16 %v3775, %v3747
    %v6072 = vpack.c.b16 %v3776, %v3748
    %v6073 = vpack.c.b16 %v3777, %v3749
    %v6074 = vpack.c.b16 %v3778, %v3750
    %v6075 = vpack.c.b16 %v3779, %v3751
    %v6076 = vpack.c.b16 %v3780, %v3752
    %v6077 = vpack.c.b16 %v3781, %v3753
    %v6078 = vpack.c.b16 %v3782, %v3754
    %v6079 = vpack.c.b16 %v3783, %v3755
    %v6080 = vpack.c.b16 %v3784, %v3756
    %v6081 = vpack.c.b16 %v3785, %v3757
    %v6082 = vpack.c.b16 %v3786, %v3758
    %v6083 = vpack.c.b16 %v3787, %v3759
    %v6084 = vpack.c.b16 %v3788, %v3760
    %v6085 = vpack.c.b16 %v3789, %v3761
    %v6086 = vpack.c.b16 %v3790, %v3762
    %v6087 = vpack.c.b16 %v3791, %v3763
    %v6088 = vpack.c.b16 %v3792, %v3764
    %v6089 = vpack.c.b16 %v3793, %v3765
    %v6090 = vpack.c.b16 %v3794, %v3766
    %v6091 = vpack.c.b16 %v3795, %v3767
    %v6092 = vpack.c.b16 %v3796, %v3768
    %v6093 = vpack.c.b16 %v3797, %v3769
    %v6094 = vpack.c.b16 %v3798, %v3770
    %v6095 = vpack.c.b16 %v3799, %v3771
    %v6096 = vpack.c.b16 %v3800, %v3772
    %v6097 = vpack.c.b16 %v3801, %v3773
    %v6098 = vpack.c.b16 %v3802, %v3774
    %v6099 = vpack.c.b16 %v3831, %v3803
    %v6100 = vpack.c.b16 %v3832, %v3804
    %v6101 = vpack.c.b16 %v3833, %v3805
    %v6102 = vpack.c.b16 %v3834, %v3806
    %v6103 = vpack.c.b16 %v3835, %v3807
    %v6104 = vpack.c.b16 %v3836, %v3808
    %v6105 = vpack.c.b16 %v3837, %v3809
    %v6106 = vpack.c.b16 %v3838, %v3810
    %v6107 = vpack.c.b16 %v3839, %v3811
    %v6108 = vpack.c.b16 %v3840, %v3812
    %v6109 = vpack.c.b16 %v3841, %v3813
    %v6110 = vpack.c.b16 %v3842, %v3814
    %v6111 = vpack.c.b16 %v3843, %v3815
    %v6112 = vpack.c.b16 %v3844, %v3816
    %v6113 = vpack.c.b16 %v3845, %v3817
    %v6114 = vpack.c.b16 %v3846, %v3818
    %v6115 = vpack.c.b16 %v3847, %v3819
    %v6116 = vpack.c.b16 %v3848, %v3820
    %v6117 = vpack.c.b16 %v3849, %v3821
    %v6118 = vpack.c.b16 %v3850, %v3822
    %v6119 = vpack.c.b16 %v3851, %v3823
    %v6120 = vpack.c.b16 %v3852, %v3824
    %v6121 = vpack.c.b16 %v3853, %v3825
    %v6122 = vpack.c.b16 %v3854, %v3826
    %v6123 = vpack.c.b16 %v3855, %v3827
    %v6124 = vpack.c.b16 %v3856, %v3828
    %v6125 = vpack.c.b16 %v3857, %v3829
    %v6126 = vpack.c.b16 %v3858, %v3830
    %v6127 = vpack.c.b16 %v3887, %v3859
    %v6128 = vpack.c.b16 %v3888, %v3860
    %v6129 = vpack.c.b16 %v3889, %v3861
    %v6130 = vpack.c.b16 %v3890, %v3862
    %v6131 = vpack.c.b16 %v3891, %v3863
    %v6132 = vpack.c.b16 %v3892, %v3864
    %v6133 = vpack.c.b16 %v3893, %v3865
    %v6134 = vpack.c.b16 %v3894, %v3866
    %v6135 = vpack.c.b16 %v3895, %v3867
    %v6136 = vpack.c.b16 %v3896, %v3868
    %v6137 = vpack.c.b16 %v3897, %v3869
    %v6138 = vpack.c.b16 %v3898, %v3870
    %v6139 = vpack.c.b16 %v3899, %v3871
    %v6140 = vpack.c.b16 %v3900, %v3872
    %v6141 = vpack.c.b16 %v3901, %v3873
    %v6142 = vpack.c.b16 %v3902, %v3874
    %v6143 = vpack.c.b16 %v3903, %v3875
    %v6144 = vpack.c.b16 %v3904, %v3876
    %v6145 = vpack.c.b16 %v3905, %v3877
    %v6146 = vpack.c.b16 %v3906, %v3878
    %v6147 = vpack.c.b16 %v3907, %v3879
    %v6148 = vpack.c.b16 %v3908, %v3880
    %v6149 = vpack.c.b16 %v3909, %v3881
    %v6150 = vpack.c.b16 %v3910, %v3882
    %v6151 = vpack.c.b16 %v3911, %v3883
    %v6152 = vpack.c.b16 %v3912, %v3884
    %v6153 = vpack.c.b16 %v3913, %v3885
    %v6154 = vpack.c.b16 %v3914, %v3886
    %v6155 = vpack.c.b16 %v3943, %v3915
    %v6156 = vpack.c.b16 %v3944, %v3916
    %v6157 = vpack.c.b16 %v3945, %v3917
    %v6158 = vpack.c.b16 %v3946, %v3918
    %v6159 = vpack.c.b16 %v3947, %v3919
    %v6160 = vpack.c.b16 %v3948, %v3920
    %v6161 = vpack.c.b16 %v3949, %v3921
    %v6162 = vpack.c.b16 %v3950, %v3922
    %v6163 = vpack.c.b16 %v3951, %v3923
    %v6164 = vpack.c.b16 %v3952, %v3924
    %v6165 = vpack.c.b16 %v3953, %v3925
    %v6166 = vpack.c.b16 %v3954, %v3926
    %v6167 = vpack.c.b16 %v3955, %v3927
    %v6168 = vpack.c.b16 %v3956, %v3928
    %v6169 = vpack.c.b16 %v3957, %v3929
    %v6170 = vpack.c.b16 %v3958, %v3930
    %v6171 = vpack.c.b16 %v3959, %v3931
    %v6172 = vpack.c.b16 %v3960, %v3932
    %v6173 = vpack.c.b16 %v3961, %v3933
    %v6174 = vpack.c.b16 %v3962, %v3934
    %v6175 = vpack.c.b16 %v3963, %v3935
    %v6176 = vpack.c.b16 %v3964, %v3936
    %v6177 = vpack.c.b16 %v3965, %v3937
    %v6178 = vpack.c.b16 %v3966, %v3938
    %v6179 = vpack.c.b16 %v3967, %v3939
    %v6180 = vpack.c.b16 %v3968, %v3940
    %v6181 = vpack.c.b16 %v3969, %v3941
    %v6182 = vpack.c.b16 %v3970, %v3942
    %v6183 = vpack.c.b16 %v3999, %v3971
    %v6184 = vpack.c.b16 %v4000, %v3972
    %v6185 = vpack.c.b16 %v4001, %v3973
    %v6186 = vpack.c.b16 %v4002, %v3974
    %v6187 = vpack.c.b16 %v4003, %v3975
    %v6188 = vpack.c.b16 %v4004, %v3976
    %v6189 = vpack.c.b16 %v4005, %v3977
    %v6190 = vpack.c.b16 %v4006, %v3978
    %v6191 = vpack.c.b16 %v4007, %v3979
    %v6192 = vpack.c.b16 %v4008, %v3980
    %v6193 = vpack.c.b16 %v4009, %v3981
    %v6194 = vpack.c.b16 %v4010, %v3982
    %v6195 = vpack.c.b16 %v4011, %v3983
    %v6196 = vpack.c.b16 %v4012, %v3984
    %v6197 = vpack.c.b16 %v4013, %v3985
    %v6198 = vpack.c.b16 %v4014, %v3986
    %v6199 = vpack.c.b16 %v4015, %v3987
    %v6200 = vpack.c.b16 %v4016, %v3988
    %v6201 = vpack.c.b16 %v4017, %v3989
    %v6202 = vpack.c.b16 %v4018, %v3990
    %v6203 = vpack.c.b16 %v4019, %v3991
    %v6204 = vpack.c.b16 %v4020, %v3992
    %v6205 = vpack.c.b16 %v4021, %v3993
    %v6206 = vpack.c.b16 %v4022, %v3994
    %v6207 = vpack.c.b16 %v4023, %v3995
    %v6208 = vpack.c.b16 %v4024, %v3996
    %v6209 = vpack.c.b16 %v4025, %v3997
    %v6210 = vpack.c.b16 %v4026, %v3998
    %v6211 = vpack.c.b16 %v4055, %v4027
    %v6212 = vpack.c.b16 %v4056, %v4028
    %v6213 = vpack.c.b16 %v4057, %v4029
    %v6214 = vpack.c.b16 %v4058, %v4030
    %v6215 = vpack.c.b16 %v4059, %v4031
    %v6216 = vpack.c.b16 %v4060, %v4032
    %v6217 = vpack.c.b16 %v4061, %v4033
    %v6218 = vpack.c.b16 %v4062, %v4034
    %v6219 = vpack.c.b16 %v4063, %v4035
    %v6220 = vpack.c.b16 %v4064, %v4036
    %v6221 = vpack.c.b16 %v4065, %v4037
    %v6222 = vpack.c.b16 %v4066, %v4038
    %v6223 = vpack.c.b16 %v4067, %v4039
    %v6224 = vpack.c.b16 %v4068, %v4040
    %v6225 = vpack.c.b16 %v4069, %v4041
    %v6226 = vpack.c.b16 %v4070, %v4042
    %v6227 = vpack.c.b16 %v4071, %v4043
    %v6228 = vpack.c.b16 %v4072, %v4044
    %v6229 = vpack.c.b16 %v4073, %v4045
    %v6230 = vpack.c.b16 %v4074, %v4046
    %v6231 = vpack.c.b16 %v4075, %v4047
    %v6232 = vpack.c.b16 %v4076, %v4048
    %v6233 = vpack.c.b16 %v4077, %v4049
    %v6234 = vpack.c.b16 %v4078, %v4050
    %v6235 = vpack.c.b16 %v4079, %v4051
    %v6236 = vpack.c.b16 %v4080, %v4052
    %v6237 = vpack.c.b16 %v4081, %v4053
    %v6238 = vpack.c.b16 %v4082, %v4054
    %v6239 = vpack.c.b16 %v4111, %v4083
    %v6240 = vpack.c.b16 %v4112, %v4084
    %v6241 = vpack.c.b16 %v4113, %v4085
    %v6242 = vpack.c.b16 %v4114, %v4086
    %v6243 = vpack.c.b16 %v4115, %v4087
    %v6244 = vpack.c.b16 %v4116, %v4088
    %v6245 = vpack.c.b16 %v4117, %v4089
    %v6246 = vpack.c.b16 %v4118, %v4090
    %v6247 = vpack.c.b16 %v4119, %v4091
    %v6248 = vpack.c.b16 %v4120, %v4092
    %v6249 = vpack.c.b16 %v4121, %v4093
    %v6250 = vpack.c.b16 %v4122, %v4094
    %v6251 = vpack.c.b16 %v4123, %v4095
    %v6252 = vpack.c.b16 %v4124, %v4096
    %v6253 = vpack.c.b16 %v4125, %v4097
    %v6254 = vpack.c.b16 %v4126, %v4098
    %v6255 = vpack.c.b16 %v4127, %v4099
    %v6256 = vpack.c.b16 %v4128, %v4100
    %v6257 = vpack.c.b16 %v4129, %v4101
    %v6258 = vpack.c.b16 %v4130, %v4102
    %v6259 = vpack.c.b16 %v4131, %v4103
    %v6260 = vpack.c.b16 %v4132, %v4104
    %v6261 = vpack.c.b16 %v4133, %v4105
    %v6262 = vpack.c.b16 %v4134, %v4106
    %v6263 = vpack.c.b16 %v4135, %v4107
    %v6264 = vpack.c.b16 %v4136, %v4108
    %v6265 = vpack.c.b16 %v4137, %v4109
    %v6266 = vpack.c.b16 %v4138, %v4110
    %v6267 = vpack.c.b16 %v4167, %v4139
    %v6268 = vpack.c.b16 %v4168, %v4140
    %v6269 = vpack.c.b16 %v4169, %v4141
    %v6270 = vpack.c.b16 %v4170, %v4142
    %v6271 = vpack.c.b16 %v4171, %v4143
    %v6272 = vpack.c.b16 %v4172, %v4144
    %v6273 = vpack.c.b16 %v4173, %v4145
    %v6274 = vpack.c.b16 %v4174, %v4146
    %v6275 = vpack.c.b16 %v4175, %v4147
    %v6276 = vpack.c.b16 %v4176, %v4148
    %v6277 = vpack.c.b16 %v4177, %v4149
    %v6278 = vpack.c.b16 %v4178, %v4150
    %v6279 = vpack.c.b16 %v4179, %v4151
    %v6280 = vpack.c.b16 %v4180, %v4152
    %v6281 = vpack.c.b16 %v4181, %v4153
    %v6282 = vpack.c.b16 %v4182, %v4154
    %v6283 = vpack.c.b16 %v4183, %v4155
    %v6284 = vpack.c.b16 %v4184, %v4156
    %v6285 = vpack.c.b16 %v4185, %v4157
    %v6286 = vpack.c.b16 %v4186, %v4158
    %v6287 = vpack.c.b16 %v4187, %v4159
    %v6288 = vpack.c.b16 %v4188, %v4160
    %v6289 = vpack.c.b16 %v4189, %v4161
    %v6290 = vpack.c.b16 %v4190, %v4162
    %v6291 = vpack.c.b16 %v4191, %v4163
    %v6292 = vpack.c.b16 %v4192, %v4164
    %v6293 = vpack.c.b16 %v4193, %v4165
    %v6294 = vpack.c.b16 %v4194, %v4166
    %v6295 = vpack.c.b16 %v4223, %v4195
    %v6296 = vpack.c.b16 %v4224, %v4196
    %v6297 = vpack.c.b16 %v4225, %v4197
    %v6298 = vpack.c.b16 %v4226, %v4198
    %v6299 = vpack.c.b16 %v4227, %v4199
    %v6300 = vpack.c.b16 %v4228, %v4200
    %v6301 = vpack.c.b16 %v4229, %v4201
    %v6302 = vpack.c.b16 %v4230, %v4202
    %v6303 = vpack.c.b16 %v4231, %v4203
    %v6304 = vpack.c.b16 %v4232, %v4204
    %v6305 = vpack.c.b16 %v4233, %v4205
    %v6306 = vpack.c.b16 %v4234, %v4206
    %v6307 = vpack.c.b16 %v4235, %v4207
    %v6308 = vpack.c.b16 %v4236, %v4208
    %v6309 = vpack.c.b16 %v4237, %v4209
    %v6310 = vpack.c.b16 %v4238, %v4210
    %v6311 = vpack.c.b16 %v4239, %v4211
    %v6312 = vpack.c.b16 %v4240, %v4212
    %v6313 = vpack.c.b16 %v4241, %v4213
    %v6314 = vpack.c.b16 %v4242, %v4214
    %v6315 = vpack.c.b16 %v4243, %v4215
    %v6316 = vpack.c.b16 %v4244, %v4216
    %v6317 = vpack.c.b16 %v4245, %v4217
    %v6318 = vpack.c.b16 %v4246, %v4218
    %v6319 = vpack.c.b16 %v4247, %v4219
    %v6320 = vpack.c.b16 %v4248, %v4220
    %v6321 = vpack.c.b16 %v4249, %v4221
    %v6322 = vpack.c.b16 %v4250, %v4222
    %v6323 = vpack.c.b16 %v4279, %v4251
    %v6324 = vpack.c.b16 %v4280, %v4252
    %v6325 = vpack.c.b16 %v4281, %v4253
    %v6326 = vpack.c.b16 %v4282, %v4254
    %v6327 = vpack.c.b16 %v4283, %v4255
    %v6328 = vpack.c.b16 %v4284, %v4256
    %v6329 = vpack.c.b16 %v4285, %v4257
    %v6330 = vpack.c.b16 %v4286, %v4258
    %v6331 = vpack.c.b16 %v4287, %v4259
    %v6332 = vpack.c.b16 %v4288, %v4260
    %v6333 = vpack.c.b16 %v4289, %v4261
    %v6334 = vpack.c.b16 %v4290, %v4262
    %v6335 = vpack.c.b16 %v4291, %v4263
    %v6336 = vpack.c.b16 %v4292, %v4264
    %v6337 = vpack.c.b16 %v4293, %v4265
    %v6338 = vpack.c.b16 %v4294, %v4266
    %v6339 = vpack.c.b16 %v4295, %v4267
    %v6340 = vpack.c.b16 %v4296, %v4268
    %v6341 = vpack.c.b16 %v4297, %v4269
    %v6342 = vpack.c.b16 %v4298, %v4270
    %v6343 = vpack.c.b16 %v4299, %v4271
    %v6344 = vpack.c.b16 %v4300, %v4272
    %v6345 = vpack.c.b16 %v4301, %v4273
    %v6346 = vpack.c.b16 %v4302, %v4274
    %v6347 = vpack.c.b16 %v4303, %v4275
    %v6348 = vpack.c.b16 %v4304, %v4276
    %v6349 = vpack.c.b16 %v4305, %v4277
    %v6350 = vpack.c.b16 %v4306, %v4278
    %v6351 = vpack.c.b16 %v4335, %v4307
    %v6352 = vpack.c.b16 %v4336, %v4308
    %v6353 = vpack.c.b16 %v4337, %v4309
    %v6354 = vpack.c.b16 %v4338, %v4310
    %v6355 = vpack.c.b16 %v4339, %v4311
    %v6356 = vpack.c.b16 %v4340, %v4312
    %v6357 = vpack.c.b16 %v4341, %v4313
    %v6358 = vpack.c.b16 %v4342, %v4314
    %v6359 = vpack.c.b16 %v4343, %v4315
    %v6360 = vpack.c.b16 %v4344, %v4316
    %v6361 = vpack.c.b16 %v4345, %v4317
    %v6362 = vpack.c.b16 %v4346, %v4318
    %v6363 = vpack.c.b16 %v4347, %v4319
    %v6364 = vpack.c.b16 %v4348, %v4320
    %v6365 = vpack.c.b16 %v4349, %v4321
    %v6366 = vpack.c.b16 %v4350, %v4322
    %v6367 = vpack.c.b16 %v4351, %v4323
    %v6368 = vpack.c.b16 %v4352, %v4324
    %v6369 = vpack.c.b16 %v4353, %v4325
    %v6370 = vpack.c.b16 %v4354, %v4326
    %v6371 = vpack.c.b16 %v4355, %v4327
    %v6372 = vpack.c.b16 %v4356, %v4328
    %v6373 = vpack.c.b16 %v4357, %v4329
    %v6374 = vpack.c.b16 %v4358, %v4330
    %v6375 = vpack.c.b16 %v4359, %v4331
    %v6376 = vpack.c.b16 %v4360, %v4332
    %v6377 = vpack.c.b16 %v4361, %v4333
    %v6378 = vpack.c.b16 %v4362, %v4334
    %v6379 = vpack.c.b16 %v4391, %v4363
    %v6380 = vpack.c.b16 %v4392, %v4364
    %v6381 = vpack.c.b16 %v4393, %v4365
    %v6382 = vpack.c.b16 %v4394, %v4366
    %v6383 = vpack.c.b16 %v4395, %v4367
    %v6384 = vpack.c.b16 %v4396, %v4368
    %v6385 = vpack.c.b16 %v4397, %v4369
    %v6386 = vpack.c.b16 %v4398, %v4370
    %v6387 = vpack.c.b16 %v4399, %v4371
    %v6388 = vpack.c.b16 %v4400, %v4372
    %v6389 = vpack.c.b16 %v4401, %v4373
    %v6390 = vpack.c.b16 %v4402, %v4374
    %v6391 = vpack.c.b16 %v4403, %v4375
    %v6392 = vpack.c.b16 %v4404, %v4376
    %v6393 = vpack.c.b16 %v4405, %v4377
    %v6394 = vpack.c.b16 %v4406, %v4378
    %v6395 = vpack.c.b16 %v4407, %v4379
    %v6396 = vpack.c.b16 %v4408, %v4380
    %v6397 = vpack.c.b16 %v4409, %v4381
    %v6398 = vpack.c.b16 %v4410, %v4382
    %v6399 = vpack.c.b16 %v4411, %v4383
    %v6400 = vpack.c.b16 %v4412, %v4384
    %v6401 = vpack.c.b16 %v4413, %v4385
    %v6402 = vpack.c.b16 %v4414, %v4386
    %v6403 = vpack.c.b16 %v4415, %v4387
    %v6404 = vpack.c.b16 %v4416, %v4388
    %v6405 = vpack.c.b16 %v4417, %v4389
    %v6406 = vpack.c.b16 %v4418, %v4390
    %v6407 = vpack.c.b16 %v4447, %v4419
    %v6408 = vpack.c.b16 %v4448, %v4420
    %v6409 = vpack.c.b16 %v4449, %v4421
    %v6410 = vpack.c.b16 %v4450, %v4422
    %v6411 = vpack.c.b16 %v4451, %v4423
    %v6412 = vpack.c.b16 %v4452, %v4424
    %v6413 = vpack.c.b16 %v4453, %v4425
    %v6414 = vpack.c.b16 %v4454, %v4426
    %v6415 = vpack.c.b16 %v4455, %v4427
    %v6416 = vpack.c.b16 %v4456, %v4428
    %v6417 = vpack.c.b16 %v4457, %v4429
    %v6418 = vpack.c.b16 %v4458, %v4430
    %v6419 = vpack.c.b16 %v4459, %v4431
    %v6420 = vpack.c.b16 %v4460, %v4432
    %v6421 = vpack.c.b16 %v4461, %v4433
    %v6422 = vpack.c.b16 %v4462, %v4434
    %v6423 = vpack.c.b16 %v4463, %v4435
    %v6424 = vpack.c.b16 %v4464, %v4436
    %v6425 = vpack.c.b16 %v4465, %v4437
    %v6426 = vpack.c.b16 %v4466, %v4438
    %v6427 = vpack.c.b16 %v4467, %v4439
    %v6428 = vpack.c.b16 %v4468, %v4440
    %v6429 = vpack.c.b16 %v4469, %v4441
    %v6430 = vpack.c.b16 %v4470, %v4442
    %v6431 = vpack.c.b16 %v4471, %v4443
    %v6432 = vpack.c.b16 %v4472, %v4444
    %v6433 = vpack.c.b16 %v4473, %v4445
    %v6434 = vpack.c.b16 %v4474, %v4446
    %v6435 = vpack.c.b16 %v4503, %v4475
    %v6436 = vpack.c.b16 %v4504, %v4476
    %v6437 = vpack.c.b16 %v4505, %v4477
    %v6438 = vpack.c.b16 %v4506, %v4478
    %v6439 = vpack.c.b16 %v4507, %v4479
    %v6440 = vpack.c.b16 %v4508, %v4480
    %v6441 = vpack.c.b16 %v4509, %v4481
    %v6442 = vpack.c.b16 %v4510, %v4482
    %v6443 = vpack.c.b16 %v4511, %v4483
    %v6444 = vpack.c.b16 %v4512, %v4484
    %v6445 = vpack.c.b16 %v4513, %v4485
    %v6446 = vpack.c.b16 %v4514, %v4486
    %v6447 = vpack.c.b16 %v4515, %v4487
    %v6448 = vpack.c.b16 %v4516, %v4488
    %v6449 = vpack.c.b16 %v4517, %v4489
    %v6450 = vpack.c.b16 %v4518, %v4490
    %v6451 = vpack.c.b16 %v4519, %v4491
    %v6452 = vpack.c.b16 %v4520, %v4492
    %v6453 = vpack.c.b16 %v4521, %v4493
    %v6454 = vpack.c.b16 %v4522, %v4494
    %v6455 = vpack.c.b16 %v4523, %v4495
    %v6456 = vpack.c.b16 %v4524, %v4496
    %v6457 = vpack.c.b16 %v4525, %v4497
    %v6458 = vpack.c.b16 %v4526, %v4498
    %v6459 = vpack.c.b16 %v4527, %v4499
    %v6460 = vpack.c.b16 %v4528, %v4500
    %v6461 = vpack.c.b16 %v4529, %v4501
    %v6462 = vpack.c.b16 %v4530, %v4502
    %v6463 = vpack.c.b16 %v4559, %v4531
    %v6464 = vpack.c.b16 %v4560, %v4532
    %v6465 = vpack.c.b16 %v4561, %v4533
    %v6466 = vpack.c.b16 %v4562, %v4534
    %v6467 = vpack.c.b16 %v4563, %v4535
    %v6468 = vpack.c.b16 %v4564, %v4536
    %v6469 = vpack.c.b16 %v4565, %v4537
    %v6470 = vpack.c.b16 %v4566, %v4538
    %v6471 = vpack.c.b16 %v4567, %v4539
    %v6472 = vpack.c.b16 %v4568, %v4540
    %v6473 = vpack.c.b16 %v4569, %v4541
    %v6474 = vpack.c.b16 %v4570, %v4542
    %v6475 = vpack.c.b16 %v4571, %v4543
    %v6476 = vpack.c.b16 %v4572, %v4544
    %v6477 = vpack.c.b16 %v4573, %v4545
    %v6478 = vpack.c.b16 %v4574, %v4546
    %v6479 = vpack.c.b16 %v4575, %v4547
    %v6480 = vpack.c.b16 %v4576, %v4548
    %v6481 = vpack.c.b16 %v4577, %v4549
    %v6482 = vpack.c.b16 %v4578, %v4550
    %v6483 = vpack.c.b16 %v4579, %v4551
    %v6484 = vpack.c.b16 %v4580, %v4552
    %v6485 = vpack.c.b16 %v4581, %v4553
    %v6486 = vpack.c.b16 %v4582, %v4554
    %v6487 = vpack.c.b16 %v4583, %v4555
    %v6488 = vpack.c.b16 %v4584, %v4556
    %v6489 = vpack.c.b16 %v4585, %v4557
    %v6490 = vpack.c.b16 %v4586, %v4558
    %v6491 = vpack.c.b16 %v4615, %v4587
    %v6492 = vpack.c.b16 %v4616, %v4588
    %v6493 = vpack.c.b16 %v4617, %v4589
    %v6494 = vpack.c.b16 %v4618, %v4590
    %v6495 = vpack.c.b16 %v4619, %v4591
    %v6496 = vpack.c.b16 %v4620, %v4592
    %v6497 = vpack.c.b16 %v4621, %v4593
    %v6498 = vpack.c.b16 %v4622, %v4594
    %v6499 = vpack.c.b16 %v4623, %v4595
    %v6500 = vpack.c.b16 %v4624, %v4596
    %v6501 = vpack.c.b16 %v4625, %v4597
    %v6502 = vpack.c.b16 %v4626, %v4598
    %v6503 = vpack.c.b16 %v4627, %v4599
    %v6504 = vpack.c.b16 %v4628, %v4600
    %v6505 = vpack.c.b16 %v4629, %v4601
    %v6506 = vpack.c.b16 %v4630, %v4602
    %v6507 = vpack.c.b16 %v4631, %v4603
    %v6508 = vpack.c.b16 %v4632, %v4604
    %v6509 = vpack.c.b16 %v4633, %v4605
    %v6510 = vpack.c.b16 %v4634, %v4606
    %v6511 = vpack.c.b16 %v4635, %v4607
    %v6512 = vpack.c.b16 %v4636, %v4608
    %v6513 = vpack.c.b16 %v4637, %v4609
    %v6514 = vpack.c.b16 %v4638, %v4610
    %v6515 = vpack.c.b16 %v4639, %v4611
    %v6516 = vpack.c.b16 %v4640, %v4612
    %v6517 = vpack.c.b16 %v4641, %v4613
    %v6518 = vpack.c.b16 %v4642, %v4614
    %v6519 = vpack.c.b16 %v4671, %v4643
    %v6520 = vpack.c.b16 %v4672, %v4644
    %v6521 = vpack.c.b16 %v4673, %v4645
    %v6522 = vpack.c.b16 %v4674, %v4646
    %v6523 = vpack.c.b16 %v4675, %v4647
    %v6524 = vpack.c.b16 %v4676, %v4648
    %v6525 = vpack.c.b16 %v4677, %v4649
    %v6526 = vpack.c.b16 %v4678, %v4650
    %v6527 = vpack.c.b16 %v4679, %v4651
    %v6528 = vpack.c.b16 %v4680, %v4652
    %v6529 = vpack.c.b16 %v4681, %v4653
    %v6530 = vpack.c.b16 %v4682, %v4654
    %v6531 = vpack.c.b16 %v4683, %v4655
    %v6532 = vpack.c.b16 %v4684, %v4656
    %v6533 = vpack.c.b16 %v4685, %v4657
    %v6534 = vpack.c.b16 %v4686, %v4658
    %v6535 = vpack.c.b16 %v4687, %v4659
    %v6536 = vpack.c.b16 %v4688, %v4660
    %v6537 = vpack.c.b16 %v4689, %v4661
    %v6538 = vpack.c.b16 %v4690, %v4662
    %v6539 = vpack.c.b16 %v4691, %v4663
    %v6540 = vpack.c.b16 %v4692, %v4664
    %v6541 = vpack.c.b16 %v4693, %v4665
    %v6542 = vpack.c.b16 %v4694, %v4666
    %v6543 = vpack.c.b16 %v4695, %v4667
    %v6544 = vpack.c.b16 %v4696, %v4668
    %v6545 = vpack.c.b16 %v4697, %v4669
    %v6546 = vpack.c.b16 %v4698, %v4670
    %v6547 = vpack.c.b16 %v4727, %v4699
    %v6548 = vpack.c.b16 %v4728, %v4700
    %v6549 = vpack.c.b16 %v4729, %v4701
    %v6550 = vpack.c.b16 %v4730, %v4702
    %v6551 = vpack.c.b16 %v4731, %v4703
    %v6552 = vpack.c.b16 %v4732, %v4704
    %v6553 = vpack.c.b16 %v4733, %v4705
    %v6554 = vpack.c.b16 %v4734, %v4706
    %v6555 = vpack.c.b16 %v4735, %v4707
    %v6556 = vpack.c.b16 %v4736, %v4708
    %v6557 = vpack.c.b16 %v4737, %v4709
    %v6558 = vpack.c.b16 %v4738, %v4710
    %v6559 = vpack.c.b16 %v4739, %v4711
    %v6560 = vpack.c.b16 %v4740, %v4712
    %v6561 = vpack.c.b16 %v4741, %v4713
    %v6562 = vpack.c.b16 %v4742, %v4714
    %v6563 = vpack.c.b16 %v4743, %v4715
    %v6564 = vpack.c.b16 %v4744, %v4716
    %v6565 = vpack.c.b16 %v4745, %v4717
    %v6566 = vpack.c.b16 %v4746, %v4718
    %v6567 = vpack.c.b16 %v4747, %v4719
    %v6568 = vpack.c.b16 %v4748, %v4720
    %v6569 = vpack.c.b16 %v4749, %v4721
    %v6570 = vpack.c.b16 %v4750, %v4722
    %v6571 = vpack.c.b16 %v4751, %v4723
    %v6572 = vpack.c.b16 %v4752, %v4724
    %v6573 = vpack.c.b16 %v4753, %v4725
    %v6574 = vpack.c.b16 %v4754, %v4726
    %v6575 = vpack.c.b16 %v4783, %v4755
    %v6576 = vpack.c.b16 %v4784, %v4756
    %v6577 = vpack.c.b16 %v4785, %v4757
    %v6578 = vpack.c.b16 %v4786, %v4758
    %v6579 = vpack.c.b16 %v4787, %v4759
    %v6580 = vpack.c.b16 %v4788, %v4760
    %v6581 = vpack.c.b16 %v4789, %v4761
    %v6582 = vpack.c.b16 %v4790, %v4762
    %v6583 = vpack.c.b16 %v4791, %v4763
    %v6584 = vpack.c.b16 %v4792, %v4764
    %v6585 = vpack.c.b16 %v4793, %v4765
    %v6586 = vpack.c.b16 %v4794, %v4766
    %v6587 = vpack.c.b16 %v4795, %v4767
    %v6588 = vpack.c.b16 %v4796, %v4768
    %v6589 = vpack.c.b16 %v4797, %v4769
    %v6590 = vpack.c.b16 %v4798, %v4770
    %v6591 = vpack.c.b16 %v4799, %v4771
    %v6592 = vpack.c.b16 %v4800, %v4772
    %v6593 = vpack.c.b16 %v4801, %v4773
    %v6594 = vpack.c.b16 %v4802, %v4774
    %v6595 = vpack.c.b16 %v4803, %v4775
    %v6596 = vpack.c.b16 %v4804, %v4776
    %v6597 = vpack.c.b16 %v4805, %v4777
    %v6598 = vpack.c.b16 %v4806, %v4778
    %v6599 = vpack.c.b16 %v4807, %v4779
    %v6600 = vpack.c.b16 %v4808, %v4780
    %v6601 = vpack.c.b16 %v4809, %v4781
    %v6602 = vpack.c.b16 %v4810, %v4782
    %v6603 = vpack.c.b16 %v4839, %v4811
    %v6604 = vpack.c.b16 %v4840, %v4812
    %v6605 = vpack.c.b16 %v4841, %v4813
    %v6606 = vpack.c.b16 %v4842, %v4814
    %v6607 = vpack.c.b16 %v4843, %v4815
    %v6608 = vpack.c.b16 %v4844, %v4816
    %v6609 = vpack.c.b16 %v4845, %v4817
    %v6610 = vpack.c.b16 %v4846, %v4818
    %v6611 = vpack.c.b16 %v4847, %v4819
    %v6612 = vpack.c.b16 %v4848, %v4820
    %v6613 = vpack.c.b16 %v4849, %v4821
    %v6614 = vpack.c.b16 %v4850, %v4822
    %v6615 = vpack.c.b16 %v4851, %v4823
    %v6616 = vpack.c.b16 %v4852, %v4824
    %v6617 = vpack.c.b16 %v4853, %v4825
    %v6618 = vpack.c.b16 %v4854, %v4826
    %v6619 = vpack.c.b16 %v4855, %v4827
    %v6620 = vpack.c.b16 %v4856, %v4828
    %v6621 = vpack.c.b16 %v4857, %v4829
    %v6622 = vpack.c.b16 %v4858, %v4830
    %v6623 = vpack.c.b16 %v4859, %v4831
    %v6624 = vpack.c.b16 %v4860, %v4832
    %v6625 = vpack.c.b16 %v4861, %v4833
    %v6626 = vpack.c.b16 %v4862, %v4834
    %v6627 = vpack.c.b16 %v4863, %v4835
    %v6628 = vpack.c.b16 %v4864, %v4836
    %v6629 = vpack.c.b16 %v4865, %v4837
    %v6630 = vpack.c.b16 %v4866, %v4838
    %v6631 = vpack.c.b16 %v4895, %v4867
    %v6632 = vpack.c.b16 %v4896, %v4868
    %v6633 = vpack.c.b16 %v4897, %v4869
    %v6634 = vpack.c.b16 %v4898, %v4870
    %v6635 = vpack.c.b16 %v4899, %v4871
    %v6636 = vpack.c.b16 %v4900, %v4872
    %v6637 = vpack.c.b16 %v4901, %v4873
    %v6638 = vpack.c.b16 %v4902, %v4874
    %v6639 = vpack.c.b16 %v4903, %v4875
    %v6640 = vpack.c.b16 %v4904, %v4876
    %v6641 = vpack.c.b16 %v4905, %v4877
    %v6642 = vpack.c.b16 %v4906, %v4878
    %v6643 = vpack.c.b16 %v4907, %v4879
    %v6644 = vpack.c.b16 %v4908, %v4880
    %v6645 = vpack.c.b16 %v4909, %v4881
    %v6646 = vpack.c.b16 %v4910, %v4882
    %v6647 = vpack.c.b16 %v4911, %v4883
    %v6648 = vpack.c.b16 %v4912, %v4884
    %v6649 = vpack.c.b16 %v4913, %v4885
    %v6650 = vpack.c.b16 %v4914, %v4886
    %v6651 = vpack.c.b16 %v4915, %v4887
    %v6652 = vpack.c.b16 %v4916, %v4888
    %v6653 = vpack.c.b16 %v4917, %v4889
    %v6654 = vpack.c.b16 %v4918, %v4890
    %v6655 = vpack.c.b16 %v4919, %v4891
    %v6656 = vpack.c.b16 %v4920, %v4892
    %v6657 = vpack.c.b16 %v4921, %v4893
    %v6658 = vpack.c.b16 %v4922, %v4894
    %v6659 = vpack.c.b16 %v4951, %v4923
    %v6660 = vpack.c.b16 %v4952, %v4924
    %v6661 = vpack.c.b16 %v4953, %v4925
    %v6662 = vpack.c.b16 %v4954, %v4926
    %v6663 = vpack.c.b16 %v4955, %v4927
    %v6664 = vpack.c.b16 %v4956, %v4928
    %v6665 = vpack.c.b16 %v4957, %v4929
    %v6666 = vpack.c.b16 %v4958, %v4930
    %v6667 = vpack.c.b16 %v4959, %v4931
    %v6668 = vpack.c.b16 %v4960, %v4932
    %v6669 = vpack.c.b16 %v4961, %v4933
    %v6670 = vpack.c.b16 %v4962, %v4934
    %v6671 = vpack.c.b16 %v4963, %v4935
    %v6672 = vpack.c.b16 %v4964, %v4936
    %v6673 = vpack.c.b16 %v4965, %v4937
    %v6674 = vpack.c.b16 %v4966, %v4938
    %v6675 = vpack.c.b16 %v4967, %v4939
    %v6676 = vpack.c.b16 %v4968, %v4940
    %v6677 = vpack.c.b16 %v4969, %v4941
    %v6678 = vpack.c.b16 %v4970, %v4942
    %v6679 = vpack.c.b16 %v4971, %v4943
    %v6680 = vpack.c.b16 %v4972, %v4944
    %v6681 = vpack.c.b16 %v4973, %v4945
    %v6682 = vpack.c.b16 %v4974, %v4946
    %v6683 = vpack.c.b16 %v4975, %v4947
    %v6684 = vpack.c.b16 %v4976, %v4948
    %v6685 = vpack.c.b16 %v4977, %v4949
    %v6686 = vpack.c.b16 %v4978, %v4950
    %v6687 = vpack.c.b16 %v5007, %v4979
    %v6688 = vpack.c.b16 %v5008, %v4980
    %v6689 = vpack.c.b16 %v5009, %v4981
    %v6690 = vpack.c.b16 %v5010, %v4982
    %v6691 = vpack.c.b16 %v5011, %v4983
    %v6692 = vpack.c.b16 %v5012, %v4984
    %v6693 = vpack.c.b16 %v5013, %v4985
    %v6694 = vpack.c.b16 %v5014, %v4986
    %v6695 = vpack.c.b16 %v5015, %v4987
    %v6696 = vpack.c.b16 %v5016, %v4988
    %v6697 = vpack.c.b16 %v5017, %v4989
    %v6698 = vpack.c.b16 %v5018, %v4990
    %v6699 = vpack.c.b16 %v5019, %v4991
    %v6700 = vpack.c.b16 %v5020, %v4992
    %v6701 = vpack.c.b16 %v5021, %v4993
    %v6702 = vpack.c.b16 %v5022, %v4994
    %v6703 = vpack.c.b16 %v5023, %v4995
    %v6704 = vpack.c.b16 %v5024, %v4996
    %v6705 = vpack.c.b16 %v5025, %v4997
    %v6706 = vpack.c.b16 %v5026, %v4998
    %v6707 = vpack.c.b16 %v5027, %v4999
    %v6708 = vpack.c.b16 %v5028, %v5000
    %v6709 = vpack.c.b16 %v5029, %v5001
    %v6710 = vpack.c.b16 %v5030, %v5002
    %v6711 = vpack.c.b16 %v5031, %v5003
    %v6712 = vpack.c.b16 %v5032, %v5004
    %v6713 = vpack.c.b16 %v5033, %v5005
    %v6714 = vpack.c.b16 %v5034, %v5006
    %v6715 = vpack.c.b16 %v5063, %v5035
    %v6716 = vpack.c.b16 %v5064, %v5036
    %v6717 = vpack.c.b16 %v5065, %v5037
    %v6718 = vpack.c.b16 %v5066, %v5038
    %v6719 = vpack.c.b16 %v5067, %v5039
    %v6720 = vpack.c.b16 %v5068, %v5040
    %v6721 = vpack.c.b16 %v5069, %v5041
    %v6722 = vpack.c.b16 %v5070, %v5042
    %v6723 = vpack.c.b16 %v5071, %v5043
    %v6724 = vpack.c.b16 %v5072, %v5044
    %v6725 = vpack.c.b16 %v5073, %v5045
    %v6726 = vpack.c.b16 %v5074, %v5046
    %v6727 = vpack.c.b16 %v5075, %v5047
    %v6728 = vpack.c.b16 %v5076, %v5048
    %v6729 = vpack.c.b16 %v5077, %v5049
    %v6730 = vpack.c.b16 %v5078, %v5050
    %v6731 = vpack.c.b16 %v5079, %v5051
    %v6732 = vpack.c.b16 %v5080, %v5052
    %v6733 = vpack.c.b16 %v5081, %v5053
    %v6734 = vpack.c.b16 %v5082, %v5054
    %v6735 = vpack.c.b16 %v5083, %v5055
    %v6736 = vpack.c.b16 %v5084, %v5056
    %v6737 = vpack.c.b16 %v5085, %v5057
    %v6738 = vpack.c.b16 %v5086, %v5058
    %v6739 = vpack.c.b16 %v5087, %v5059
    %v6740 = vpack.c.b16 %v5088, %v5060
    %v6741 = vpack.c.b16 %v5089, %v5061
    %v6742 = vpack.c.b16 %v5090, %v5062
    %v6743 = vpack.c.b16 %v5119, %v5091
    %v6744 = vpack.c.b16 %v5120, %v5092
    %v6745 = vpack.c.b16 %v5121, %v5093
    %v6746 = vpack.c.b16 %v5122, %v5094
    %v6747 = vpack.c.b16 %v5123, %v5095
    %v6748 = vpack.c.b16 %v5124, %v5096
    %v6749 = vpack.c.b16 %v5125, %v5097
    %v6750 = vpack.c.b16 %v5126, %v5098
    %v6751 = vpack.c.b16 %v5127, %v5099
    %v6752 = vpack.c.b16 %v5128, %v5100
    %v6753 = vpack.c.b16 %v5129, %v5101
    %v6754 = vpack.c.b16 %v5130, %v5102
    %v6755 = vpack.c.b16 %v5131, %v5103
    %v6756 = vpack.c.b16 %v5132, %v5104
    %v6757 = vpack.c.b16 %v5133, %v5105
    %v6758 = vpack.c.b16 %v5134, %v5106
    %v6759 = vpack.c.b16 %v5135, %v5107
    %v6760 = vpack.c.b16 %v5136, %v5108
    %v6761 = vpack.c.b16 %v5137, %v5109
    %v6762 = vpack.c.b16 %v5138, %v5110
    %v6763 = vpack.c.b16 %v5139, %v5111
    %v6764 = vpack.c.b16 %v5140, %v5112
    %v6765 = vpack.c.b16 %v5141, %v5113
    %v6766 = vpack.c.b16 %v5142, %v5114
    %v6767 = vpack.c.b16 %v5143, %v5115
    %v6768 = vpack.c.b16 %v5144, %v5116
    %v6769 = vpack.c.b16 %v5145, %v5117
    %v6770 = vpack.c.b16 %v5146, %v5118
    %v6771 = vpack.c.b16 %v5175, %v5147
    %v6772 = vpack.c.b16 %v5176, %v5148
    %v6773 = vpack.c.b16 %v5177, %v5149
    %v6774 = vpack.c.b16 %v5178, %v5150
    %v6775 = vpack.c.b16 %v5179, %v5151
    %v6776 = vpack.c.b16 %v5180, %v5152
    %v6777 = vpack.c.b16 %v5181, %v5153
    %v6778 = vpack.c.b16 %v5182, %v5154
    %v6779 = vpack.c.b16 %v5183, %v5155
    %v6780 = vpack.c.b16 %v5184, %v5156
    %v6781 = vpack.c.b16 %v5185, %v5157
    %v6782 = vpack.c.b16 %v5186, %v5158
    %v6783 = vpack.c.b16 %v5187, %v5159
    %v6784 = vpack.c.b16 %v5188, %v5160
    %v6785 = vpack.c.b16 %v5189, %v5161
    %v6786 = vpack.c.b16 %v5190, %v5162
    %v6787 = vpack.c.b16 %v5191, %v5163
    %v6788 = vpack.c.b16 %v5192, %v5164
    %v6789 = vpack.c.b16 %v5193, %v5165
    %v6790 = vpack.c.b16 %v5194, %v5166
    %v6791 = vpack.c.b16 %v5195, %v5167
    %v6792 = vpack.c.b16 %v5196, %v5168
    %v6793 = vpack.c.b16 %v5197, %v5169
    %v6794 = vpack.c.b16 %v5198, %v5170
    %v6795 = vpack.c.b16 %v5199, %v5171
    %v6796 = vpack.c.b16 %v5200, %v5172
    %v6797 = vpack.c.b16 %v5201, %v5173
    %v6798 = vpack.c.b16 %v5202, %v5174
    %v6799 = vpack.c.b16 %v5231, %v5203
    %v6800 = vpack.c.b16 %v5232, %v5204
    %v6801 = vpack.c.b16 %v5233, %v5205
    %v6802 = vpack.c.b16 %v5234, %v5206
    %v6803 = vpack.c.b16 %v5235, %v5207
    %v6804 = vpack.c.b16 %v5236, %v5208
    %v6805 = vpack.c.b16 %v5237, %v5209
    %v6806 = vpack.c.b16 %v5238, %v5210
    %v6807 = vpack.c.b16 %v5239, %v5211
    %v6808 = vpack.c.b16 %v5240, %v5212
    %v6809 = vpack.c.b16 %v5241, %v5213
    %v6810 = vpack.c.b16 %v5242, %v5214
    %v6811 = vpack.c.b16 %v5243, %v5215
    %v6812 = vpack.c.b16 %v5244, %v5216
    %v6813 = vpack.c.b16 %v5245, %v5217
    %v6814 = vpack.c.b16 %v5246, %v5218
    %v6815 = vpack.c.b16 %v5247, %v5219
    %v6816 = vpack.c.b16 %v5248, %v5220
    %v6817 = vpack.c.b16 %v5249, %v5221
    %v6818 = vpack.c.b16 %v5250, %v5222
    %v6819 = vpack.c.b16 %v5251, %v5223
    %v6820 = vpack.c.b16 %v5252, %v5224
    %v6821 = vpack.c.b16 %v5253, %v5225
    %v6822 = vpack.c.b16 %v5254, %v5226
    %v6823 = vpack.c.b16 %v5255, %v5227
    %v6824 = vpack.c.b16 %v5256, %v5228
    %v6825 = vpack.c.b16 %v5257, %v5229
    %v6826 = vpack.c.b16 %v5258, %v5230
    %v6827 = vpack.c.b16 %v5287, %v5259
    %v6828 = vpack.c.b16 %v5288, %v5260
    %v6829 = vpack.c.b16 %v5289, %v5261
    %v6830 = vpack.c.b16 %v5290, %v5262
    %v6831 = vpack.c.b16 %v5291, %v5263
    %v6832 = vpack.c.b16 %v5292, %v5264
    %v6833 = vpack.c.b16 %v5293, %v5265
    %v6834 = vpack.c.b16 %v5294, %v5266
    %v6835 = vpack.c.b16 %v5295, %v5267
    %v6836 = vpack.c.b16 %v5296, %v5268
    %v6837 = vpack.c.b16 %v5297, %v5269
    %v6838 = vpack.c.b16 %v5298, %v5270
    %v6839 = vpack.c.b16 %v5299, %v5271
    %v6840 = vpack.c.b16 %v5300, %v5272
    %v6841 = vpack.c.b16 %v5301, %v5273
    %v6842 = vpack.c.b16 %v5302, %v5274
    %v6843 = vpack.c.b16 %v5303, %v5275
    %v6844 = vpack.c.b16 %v5304, %v5276
    %v6845 = vpack.c.b16 %v5305, %v5277
    %v6846 = vpack.c.b16 %v5306, %v5278
    %v6847 = vpack.c.b16 %v5307, %v5279
    %v6848 = vpack.c.b16 %v5308, %v5280
    %v6849 = vpack.c.b16 %v5309, %v5281
    %v6850 = vpack.c.b16 %v5310, %v5282
    %v6851 = vpack.c.b16 %v5311, %v5283
    %v6852 = vpack.c.b16 %v5312, %v5284
    %v6853 = vpack.c.b16 %v5313, %v5285
    %v6854 = vpack.c.b16 %v5314, %v5286
    %v6855 = vpack.c.b16 %v5343, %v5315
    %v6856 = vpack.c.b16 %v5344, %v5316
    %v6857 = vpack.c.b16 %v5345, %v5317
    %v6858 = vpack.c.b16 %v5346, %v5318
    %v6859 = vpack.c.b16 %v5347, %v5319
    %v6860 = vpack.c.b16 %v5348, %v5320
    %v6861 = vpack.c.b16 %v5349, %v5321
    %v6862 = vpack.c.b16 %v5350, %v5322
    %v6863 = vpack.c.b16 %v5351, %v5323
    %v6864 = vpack.c.b16 %v5352, %v5324
    %v6865 = vpack.c.b16 %v5353, %v5325
    %v6866 = vpack.c.b16 %v5354, %v5326
    %v6867 = vpack.c.b16 %v5355, %v5327
    %v6868 = vpack.c.b16 %v5356, %v5328
    %v6869 = vpack.c.b16 %v5357, %v5329
    %v6870 = vpack.c.b16 %v5358, %v5330
    %v6871 = vpack.c.b16 %v5359, %v5331
    %v6872 = vpack.c.b16 %v5360, %v5332
    %v6873 = vpack.c.b16 %v5361, %v5333
    %v6874 = vpack.c.b16 %v5362, %v5334
    %v6875 = vpack.c.b16 %v5363, %v5335
    %v6876 = vpack.c.b16 %v5364, %v5336
    %v6877 = vpack.c.b16 %v5365, %v5337
    %v6878 = vpack.c.b16 %v5366, %v5338
    %v6879 = vpack.c.b16 %v5367, %v5339
    %v6880 = vpack.c.b16 %v5368, %v5340
    %v6881 = vpack.c.b16 %v5369, %v5341
    %v6882 = vpack.c.b16 %v5370, %v5342
    %v6883 = vpack.c.b16 %v5399, %v5371
    %v6884 = vpack.c.b16 %v5400, %v5372
    %v6885 = vpack.c.b16 %v5401, %v5373
    %v6886 = vpack.c.b16 %v5402, %v5374
    %v6887 = vpack.c.b16 %v5403, %v5375
    %v6888 = vpack.c.b16 %v5404, %v5376
    %v6889 = vpack.c.b16 %v5405, %v5377
    %v6890 = vpack.c.b16 %v5406, %v5378
    %v6891 = vpack.c.b16 %v5407, %v5379
    %v6892 = vpack.c.b16 %v5408, %v5380
    %v6893 = vpack.c.b16 %v5409, %v5381
    %v6894 = vpack.c.b16 %v5410, %v5382
    %v6895 = vpack.c.b16 %v5411, %v5383
    %v6896 = vpack.c.b16 %v5412, %v5384
    %v6897 = vpack.c.b16 %v5413, %v5385
    %v6898 = vpack.c.b16 %v5414, %v5386
    %v6899 = vpack.c.b16 %v5415, %v5387
    %v6900 = vpack.c.b16 %v5416, %v5388
    %v6901 = vpack.c.b16 %v5417, %v5389
    %v6902 = vpack.c.b16 %v5418, %v5390
    %v6903 = vpack.c.b16 %v5419, %v5391
    %v6904 = vpack.c.b16 %v5420, %v5392
    %v6905 = vpack.c.b16 %v5421, %v5393
    %v6906 = vpack.c.b16 %v5422, %v5394
    %v6907 = vpack.c.b16 %v5423, %v5395
    %v6908 = vpack.c.b16 %v5424, %v5396
    %v6909 = vpack.c.b16 %v5425, %v5397
    %v6910 = vpack.c.b16 %v5426, %v5398
    %v6911 = vpack.c.b16 %v5455, %v5427
    %v6912 = vpack.c.b16 %v5456, %v5428
    %v6913 = vpack.c.b16 %v5457, %v5429
    %v6914 = vpack.c.b16 %v5458, %v5430
    %v6915 = vpack.c.b16 %v5459, %v5431
    %v6916 = vpack.c.b16 %v5460, %v5432
    %v6917 = vpack.c.b16 %v5461, %v5433
    %v6918 = vpack.c.b16 %v5462, %v5434
    %v6919 = vpack.c.b16 %v5463, %v5435
    %v6920 = vpack.c.b16 %v5464, %v5436
    %v6921 = vpack.c.b16 %v5465, %v5437
    %v6922 = vpack.c.b16 %v5466, %v5438
    %v6923 = vpack.c.b16 %v5467, %v5439
    %v6924 = vpack.c.b16 %v5468, %v5440
    %v6925 = vpack.c.b16 %v5469, %v5441
    %v6926 = vpack.c.b16 %v5470, %v5442
    %v6927 = vpack.c.b16 %v5471, %v5443
    %v6928 = vpack.c.b16 %v5472, %v5444
    %v6929 = vpack.c.b16 %v5473, %v5445
    %v6930 = vpack.c.b16 %v5474, %v5446
    %v6931 = vpack.c.b16 %v5475, %v5447
    %v6932 = vpack.c.b16 %v5476, %v5448
    %v6933 = vpack.c.b16 %v5477, %v5449
    %v6934 = vpack.c.b16 %v5478, %v5450
    %v6935 = vpack.c.b16 %v5479, %v5451
    %v6936 = vpack.c.b16 %v5480, %v5452
    %v6937 = vpack.c.b16 %v5481, %v5453
    %v6938 = vpack.c.b16 %v5482, %v5454
    %v6939 = vpack.c.b16 %v5511, %v5483
    %v6940 = vpack.c.b16 %v5512, %v5484
    %v6941 = vpack.c.b16 %v5513, %v5485
    %v6942 = vpack.c.b16 %v5514, %v5486
    %v6943 = vpack.c.b16 %v5515, %v5487
    %v6944 = vpack.c.b16 %v5516, %v5488
    %v6945 = vpack.c.b16 %v5517, %v5489
    %v6946 = vpack.c.b16 %v5518, %v5490
    %v6947 = vpack.c.b16 %v5519, %v5491
    %v6948 = vpack.c.b16 %v5520, %v5492
    %v6949 = vpack.c.b16 %v5521, %v5493
    %v6950 = vpack.c.b16 %v5522, %v5494
    %v6951 = vpack.c.b16 %v5523, %v5495
    %v6952 = vpack.c.b16 %v5524, %v5496
    %v6953 = vpack.c.b16 %v5525, %v5497
    %v6954 = vpack.c.b16 %v5526, %v5498
    %v6955 = vpack.c.b16 %v5527, %v5499
    %v6956 = vpack.c.b16 %v5528, %v5500
    %v6957 = vpack.c.b16 %v5529, %v5501
    %v6958 = vpack.c.b16 %v5530, %v5502
    %v6959 = vpack.c.b16 %v5531, %v5503
    %v6960 = vpack.c.b16 %v5532, %v5504
    %v6961 = vpack.c.b16 %v5533, %v5505
    %v6962 = vpack.c.b16 %v5534, %v5506
    %v6963 = vpack.c.b16 %v5535, %v5507
    %v6964 = vpack.c.b16 %v5536, %v5508
    %v6965 = vpack.c.b16 %v5537, %v5509
    %v6966 = vpack.c.b16 %v5538, %v5510
    %v6967 = vpack.c.b16 %v5567, %v5539
    %v6968 = vpack.c.b16 %v5568, %v5540
    %v6969 = vpack.c.b16 %v5569, %v5541
    %v6970 = vpack.c.b16 %v5570, %v5542
    %v6971 = vpack.c.b16 %v5571, %v5543
    %v6972 = vpack.c.b16 %v5572, %v5544
    %v6973 = vpack.c.b16 %v5573, %v5545
    %v6974 = vpack.c.b16 %v5574, %v5546
    %v6975 = vpack.c.b16 %v5575, %v5547
    %v6976 = vpack.c.b16 %v5576, %v5548
    %v6977 = vpack.c.b16 %v5577, %v5549
    %v6978 = vpack.c.b16 %v5578, %v5550
    %v6979 = vpack.c.b16 %v5579, %v5551
    %v6980 = vpack.c.b16 %v5580, %v5552
    %v6981 = vpack.c.b16 %v5581, %v5553
    %v6982 = vpack.c.b16 %v5582, %v5554
    %v6983 = vpack.c.b16 %v5583, %v5555
    %v6984 = vpack.c.b16 %v5584, %v5556
    %v6985 = vpack.c.b16 %v5585, %v5557
    %v6986 = vpack.c.b16 %v5586, %v5558
    %v6987 = vpack.c.b16 %v5587, %v5559
    %v6988 = vpack.c.b16 %v5588, %v5560
    %v6989 = vpack.c.b16 %v5589, %v5561
    %v6990 = vpack.c.b16 %v5590, %v5562
    %v6991 = vpack.c.b16 %v5591, %v5563
    %v6992 = vpack.c.b16 %v5592, %v5564
    %v6993 = vpack.c.b16 %v5593, %v5565
    %v6994 = vpack.c.b16 %v5594, %v5566
    %v6995 = vpack.c.b16 %v5623, %v5595
    %v6996 = vpack.c.b16 %v5624, %v5596
    %v6997 = vpack.c.b16 %v5625, %v5597
    %v6998 = vpack.c.b16 %v5626, %v5598
    %v6999 = vpack.c.b16 %v5627, %v5599
    %v7000 = vpack.c.b16 %v5628, %v5600
    %v7001 = vpack.c.b16 %v5629, %v5601
    %v7002 = vpack.c.b16 %v5630, %v5602
    %v7003 = vpack.c.b16 %v5631, %v5603
    %v7004 = vpack.c.b16 %v5632, %v5604
    %v7005 = vpack.c.b16 %v5633, %v5605
    %v7006 = vpack.c.b16 %v5634, %v5606
    %v7007 = vpack.c.b16 %v5635, %v5607
    %v7008 = vpack.c.b16 %v5636, %v5608
    %v7009 = vpack.c.b16 %v5637, %v5609
    %v7010 = vpack.c.b16 %v5638, %v5610
    %v7011 = vpack.c.b16 %v5639, %v5611
    %v7012 = vpack.c.b16 %v5640, %v5612
    %v7013 = vpack.c.b16 %v5641, %v5613
    %v7014 = vpack.c.b16 %v5642, %v5614
    %v7015 = vpack.c.b16 %v5643, %v5615
    %v7016 = vpack.c.b16 %v5644, %v5616
    %v7017 = vpack.c.b16 %v5645, %v5617
    %v7018 = vpack.c.b16 %v5646, %v5618
    %v7019 = vpack.c.b16 %v5647, %v5619
    %v7020 = vpack.c.b16 %v5648, %v5620
    %v7021 = vpack.c.b16 %v5649, %v5621
    %v7022 = vpack.c.b16 %v5650, %v5622
    %vm8395 = vcmask 130048
    %v8397 = vsel %vm8395, %v162, 0
    %8399 = vmatpush.bf16.msra.mxu0 %v5847
    %8400 = vmatpush.bf16.msra.mxu0 %v5819
    %8401 = vmatpush.bf16.msra.mxu0 %v5791
    %8402 = vmatpush.bf16.msra.mxu0 %v5763
    %8403 = vmatpush.bf16.msra.mxu0 %v5735
    %8404 = vmatpush.bf16.msra.mxu0 %v5707
    %8405 = vmatpush.bf16.msra.mxu0 %v5679
    %8406 = vmatpush.bf16.msra.mxu0 %v5651
    %8407 = vmatmul.bf16.gmra.mxu0 %v156
    %v8408 = vpop.f32.mrf.mxu0
    %v8409 = vadd.f32 0.0, %v8408
    %v8410 = vpop.f32.mrf.mxu0
    %8411 = vdwg.mxu0
    %8412 = vmatpush.bf16.msra.mxu0 %v6071
    %8413 = vmatpush.bf16.msra.mxu0 %v6043
    %8414 = vmatpush.bf16.msra.mxu0 %v6015
    %8415 = vmatpush.bf16.msra.mxu0 %v5987
    %8416 = vmatpush.bf16.msra.mxu0 %v5959
    %8417 = vmatpush.bf16.msra.mxu0 %v5931
    %8418 = vmatpush.bf16.msra.mxu0 %v5903
    %8419 = vmatpush.bf16.msra.mxu0 %v5875
    %8420 = vmatmul.bf16.gmra.mxu0 %v157
    %v8421 = vpop.f32.mrf.mxu0
    %v8422 = vadd.f32 %v8409, %v8421
    %v8423 = vpop.f32.mrf.mxu0
    %8424 = vdwg.mxu0
    %8425 = vmatpush.bf16.msra.mxu0 %v6295
    %8426 = vmatpush.bf16.msra.mxu0 %v6267
    %8427 = vmatpush.bf16.msra.mxu0 %v6239
    %8428 = vmatpush.bf16.msra.mxu0 %v6211
    %8429 = vmatpush.bf16.msra.mxu0 %v6183
    %8430 = vmatpush.bf16.msra.mxu0 %v6155
    %8431 = vmatpush.bf16.msra.mxu0 %v6127
    %8432 = vmatpush.bf16.msra.mxu0 %v6099
    %8433 = vmatmul.bf16.gmra.mxu0 %v158
    %v8434 = vpop.f32.mrf.mxu0
    %v8435 = vadd.f32 %v8422, %v8434
    %v8436 = vpop.f32.mrf.mxu0
    %8437 = vdwg.mxu0
    %8438 = vmatpush.bf16.msra.mxu0 %v6519
    %8439 = vmatpush.bf16.msra.mxu0 %v6491
    %8440 = vmatpush.bf16.msra.mxu0 %v6463
    %8441 = vmatpush.bf16.msra.mxu0 %v6435
    %8442 = vmatpush.bf16.msra.mxu0 %v6407
    %8443 = vmatpush.bf16.msra.mxu0 %v6379
    %8444 = vmatpush.bf16.msra.mxu0 %v6351
    %8445 = vmatpush.bf16.msra.mxu0 %v6323
    %8446 = vmatmul.bf16.gmra.mxu0 %v159
    %v8447 = vpop.f32.mrf.mxu0
    %v8448 = vadd.f32 %v8435, %v8447
    %v8449 = vpop.f32.mrf.mxu0
    %8450 = vdwg.mxu0
    %8451 = vmatpush.bf16.msra.mxu0 %v6743
    %8452 = vmatpush.bf16.msra.mxu0 %v6715
    %8453 = vmatpush.bf16.msra.mxu0 %v6687
    %8454 = vmatpush.bf16.msra.mxu0 %v6659
    %8455 = vmatpush.bf16.msra.mxu0 %v6631
    %8456 = vmatpush.bf16.msra.mxu0 %v6603
    %8457 = vmatpush.bf16.msra.mxu0 %v6575
    %8458 = vmatpush.bf16.msra.mxu0 %v6547
    %8459 = vmatmul.bf16.gmra.mxu0 %v160
    %v8460 = vpop.f32.mrf.mxu0
    %v8461 = vadd.f32 %v8448, %v8460
    %v8462 = vpop.f32.mrf.mxu0
    %8463 = vdwg.mxu0
    %8464 = vmatpush.bf16.msra.mxu0 %v6967
    %8465 = vmatpush.bf16.msra.mxu0 %v6939
    %8466 = vmatpush.bf16.msra.mxu0 %v6911
    %8467 = vmatpush.bf16.msra.mxu0 %v6883
    %8468 = vmatpush.bf16.msra.mxu0 %v6855
    %8469 = vmatpush.bf16.msra.mxu0 %v6827
    %8470 = vmatpush.bf16.msra.mxu0 %v6799
    %8471 = vmatpush.bf16.msra.mxu0 %v6771
    %8472 = vmatmul.bf16.gmra.mxu0 %v161
    %v8473 = vpop.f32.mrf.mxu0
    %v8474 = vadd.f32 %v8461, %v8473
    %v8475 = vpop.f32.mrf.mxu0
    %8476 = vdwg.mxu0
    %8477 = vmatpush.bf16.msra.mxu0 0
    %8478 = vmatpush.bf16.msra.mxu0 0
    %8479 = vmatpush.bf16.msra.mxu0 0
    %8480 = vmatpush.bf16.msra.mxu0 0
    %8481 = vmatpush.bf16.msra.mxu0 0
    %8482 = vmatpush.bf16.msra.mxu0 0
    %8483 = vmatpush.bf16.msra.mxu0 0
    %8484 = vmatpush.bf16.msra.mxu0 %v6995
    %8485 = vmatmul.bf16.gmra.mxu0 %v8397
    %v8486 = vpop.f32.mrf.mxu0
    %v8487 = vadd.f32 %v8474, %v8486
    %v8488 = vpop.f32.mrf.mxu0
    %8489 = vdwg.mxu0
    %8490 = vmatpush.bf16.msra.mxu0 %v5848
    %8491 = vmatpush.bf16.msra.mxu0 %v5820
    %8492 = vmatpush.bf16.msra.mxu0 %v5792
    %8493 = vmatpush.bf16.msra.mxu0 %v5764
    %8494 = vmatpush.bf16.msra.mxu0 %v5736
    %8495 = vmatpush.bf16.msra.mxu0 %v5708
    %8496 = vmatpush.bf16.msra.mxu0 %v5680
    %8497 = vmatpush.bf16.msra.mxu0 %v5652
    %8498 = vmatmul.bf16.gmra.mxu0 %v156
    %v8499 = vpop.f32.mrf.mxu0
    %v8500 = vadd.f32 0.0, %v8499
    %v8501 = vpop.f32.mrf.mxu0
    %8502 = vdwg.mxu0
    %8503 = vmatpush.bf16.msra.mxu0 %v6072
    %8504 = vmatpush.bf16.msra.mxu0 %v6044
    %8505 = vmatpush.bf16.msra.mxu0 %v6016
    %8506 = vmatpush.bf16.msra.mxu0 %v5988
    %8507 = vmatpush.bf16.msra.mxu0 %v5960
    %8508 = vmatpush.bf16.msra.mxu0 %v5932
    %8509 = vmatpush.bf16.msra.mxu0 %v5904
    %8510 = vmatpush.bf16.msra.mxu0 %v5876
    %8511 = vmatmul.bf16.gmra.mxu0 %v157
    %v8512 = vpop.f32.mrf.mxu0
    %v8513 = vadd.f32 %v8500, %v8512
    %v8514 = vpop.f32.mrf.mxu0
    %8515 = vdwg.mxu0
    %8516 = vmatpush.bf16.msra.mxu0 %v6296
    %8517 = vmatpush.bf16.msra.mxu0 %v6268
    %8518 = vmatpush.bf16.msra.mxu0 %v6240
    %8519 = vmatpush.bf16.msra.mxu0 %v6212
    %8520 = vmatpush.bf16.msra.mxu0 %v6184
    %8521 = vmatpush.bf16.msra.mxu0 %v6156
    %8522 = vmatpush.bf16.msra.mxu0 %v6128
    %8523 = vmatpush.bf16.msra.mxu0 %v6100
    %8524 = vmatmul.bf16.gmra.mxu0 %v158
    %v8525 = vpop.f32.mrf.mxu0
    %v8526 = vadd.f32 %v8513, %v8525
    %v8527 = vpop.f32.mrf.mxu0
    %8528 = vdwg.mxu0
    %8529 = vmatpush.bf16.msra.mxu0 %v6520
    %8530 = vmatpush.bf16.msra.mxu0 %v6492
    %8531 = vmatpush.bf16.msra.mxu0 %v6464
    %8532 = vmatpush.bf16.msra.mxu0 %v6436
    %8533 = vmatpush.bf16.msra.mxu0 %v6408
    %8534 = vmatpush.bf16.msra.mxu0 %v6380
    %8535 = vmatpush.bf16.msra.mxu0 %v6352
    %8536 = vmatpush.bf16.msra.mxu0 %v6324
    %8537 = vmatmul.bf16.gmra.mxu0 %v159
    %v8538 = vpop.f32.mrf.mxu0
    %v8539 = vadd.f32 %v8526, %v8538
    %v8540 = vpop.f32.mrf.mxu0
    %8541 = vdwg.mxu0
    %8542 = vmatpush.bf16.msra.mxu0 %v6744
    %8543 = vmatpush.bf16.msra.mxu0 %v6716
    %8544 = vmatpush.bf16.msra.mxu0 %v6688
    %8545 = vmatpush.bf16.msra.mxu0 %v6660
    %8546 = vmatpush.bf16.msra.mxu0 %v6632
    %8547 = vmatpush.bf16.msra.mxu0 %v6604
    %8548 = vmatpush.bf16.msra.mxu0 %v6576
    %8549 = vmatpush.bf16.msra.mxu0 %v6548
    %8550 = vmatmul.bf16.gmra.mxu0 %v160
    %v8551 = vpop.f32.mrf.mxu0
    %v8552 = vadd.f32 %v8539, %v8551
    %v8553 = vpop.f32.mrf.mxu0
    %8554 = vdwg.mxu0
    %8555 = vmatpush.bf16.msra.mxu0 %v6968
    %8556 = vmatpush.bf16.msra.mxu0 %v6940
    %8557 = vmatpush.bf16.msra.mxu0 %v6912
    %8558 = vmatpush.bf16.msra.mxu0 %v6884
    %8559 = vmatpush.bf16.msra.mxu0 %v6856
    %8560 = vmatpush.bf16.msra.mxu0 %v6828
    %8561 = vmatpush.bf16.msra.mxu0 %v6800
    %8562 = vmatpush.bf16.msra.mxu0 %v6772
    %8563 = vmatmul.bf16.gmra.mxu0 %v161
    %v8564 = vpop.f32.mrf.mxu0
    %v8565 = vadd.f32 %v8552, %v8564
    %v8566 = vpop.f32.mrf.mxu0
    %8567 = vdwg.mxu0
    %8568 = vmatpush.bf16.msra.mxu0 0
    %8569 = vmatpush.bf16.msra.mxu0 0
    %8570 = vmatpush.bf16.msra.mxu0 0
    %8571 = vmatpush.bf16.msra.mxu0 0
    %8572 = vmatpush.bf16.msra.mxu0 0
    %8573 = vmatpush.bf16.msra.mxu0 0
    %8574 = vmatpush.bf16.msra.mxu0 0
    %8575 = vmatpush.bf16.msra.mxu0 %v6996
    %8576 = vmatmul.bf16.gmra.mxu0 %v8397
    %v8577 = vpop.f32.mrf.mxu0
    %v8578 = vadd.f32 %v8565, %v8577
    %v8579 = vpop.f32.mrf.mxu0
    %8580 = vdwg.mxu0
    %8581 = vmatpush.bf16.msra.mxu0 %v5849
    %8582 = vmatpush.bf16.msra.mxu0 %v5821
    %8583 = vmatpush.bf16.msra.mxu0 %v5793
    %8584 = vmatpush.bf16.msra.mxu0 %v5765
    %8585 = vmatpush.bf16.msra.mxu0 %v5737
    %8586 = vmatpush.bf16.msra.mxu0 %v5709
    %8587 = vmatpush.bf16.msra.mxu0 %v5681
    %8588 = vmatpush.bf16.msra.mxu0 %v5653
    %8589 = vmatmul.bf16.gmra.mxu0 %v156
    %v8590 = vpop.f32.mrf.mxu0
    %v8591 = vadd.f32 0.0, %v8590
    %v8592 = vpop.f32.mrf.mxu0
    %8593 = vdwg.mxu0
    %8594 = vmatpush.bf16.msra.mxu0 %v6073
    %8595 = vmatpush.bf16.msra.mxu0 %v6045
    %8596 = vmatpush.bf16.msra.mxu0 %v6017
    %8597 = vmatpush.bf16.msra.mxu0 %v5989
    %8598 = vmatpush.bf16.msra.mxu0 %v5961
    %8599 = vmatpush.bf16.msra.mxu0 %v5933
    %8600 = vmatpush.bf16.msra.mxu0 %v5905
    %8601 = vmatpush.bf16.msra.mxu0 %v5877
    %8602 = vmatmul.bf16.gmra.mxu0 %v157
    %v8603 = vpop.f32.mrf.mxu0
    %v8604 = vadd.f32 %v8591, %v8603
    %v8605 = vpop.f32.mrf.mxu0
    %8606 = vdwg.mxu0
    %8607 = vmatpush.bf16.msra.mxu0 %v6297
    %8608 = vmatpush.bf16.msra.mxu0 %v6269
    %8609 = vmatpush.bf16.msra.mxu0 %v6241
    %8610 = vmatpush.bf16.msra.mxu0 %v6213
    %8611 = vmatpush.bf16.msra.mxu0 %v6185
    %8612 = vmatpush.bf16.msra.mxu0 %v6157
    %8613 = vmatpush.bf16.msra.mxu0 %v6129
    %8614 = vmatpush.bf16.msra.mxu0 %v6101
    %8615 = vmatmul.bf16.gmra.mxu0 %v158
    %v8616 = vpop.f32.mrf.mxu0
    %v8617 = vadd.f32 %v8604, %v8616
    %v8618 = vpop.f32.mrf.mxu0
    %8619 = vdwg.mxu0
    %8620 = vmatpush.bf16.msra.mxu0 %v6521
    %8621 = vmatpush.bf16.msra.mxu0 %v6493
    %8622 = vmatpush.bf16.msra.mxu0 %v6465
    %8623 = vmatpush.bf16.msra.mxu0 %v6437
    %8624 = vmatpush.bf16.msra.mxu0 %v6409
    %8625 = vmatpush.bf16.msra.mxu0 %v6381
    %8626 = vmatpush.bf16.msra.mxu0 %v6353
    %8627 = vmatpush.bf16.msra.mxu0 %v6325
    %8628 = vmatmul.bf16.gmra.mxu0 %v159
    %v8629 = vpop.f32.mrf.mxu0
    %v8630 = vadd.f32 %v8617, %v8629
    %v8631 = vpop.f32.mrf.mxu0
    %8632 = vdwg.mxu0
    %8633 = vmatpush.bf16.msra.mxu0 %v6745
    %8634 = vmatpush.bf16.msra.mxu0 %v6717
    %8635 = vmatpush.bf16.msra.mxu0 %v6689
    %8636 = vmatpush.bf16.msra.mxu0 %v6661
    %8637 = vmatpush.bf16.msra.mxu0 %v6633
    %8638 = vmatpush.bf16.msra.mxu0 %v6605
    %8639 = vmatpush.bf16.msra.mxu0 %v6577
    %8640 = vmatpush.bf16.msra.mxu0 %v6549
    %8641 = vmatmul.bf16.gmra.mxu0 %v160
    %v8642 = vpop.f32.mrf.mxu0
    %v8643 = vadd.f32 %v8630, %v8642
    %v8644 = vpop.f32.mrf.mxu0
    %8645 = vdwg.mxu0
    %8646 = vmatpush.bf16.msra.mxu0 %v6969
    %8647 = vmatpush.bf16.msra.mxu0 %v6941
    %8648 = vmatpush.bf16.msra.mxu0 %v6913
    %8649 = vmatpush.bf16.msra.mxu0 %v6885
    %8650 = vmatpush.bf16.msra.mxu0 %v6857
    %8651 = vmatpush.bf16.msra.mxu0 %v6829
    %8652 = vmatpush.bf16.msra.mxu0 %v6801
    %8653 = vmatpush.bf16.msra.mxu0 %v6773
    %8654 = vmatmul.bf16.gmra.mxu0 %v161
    %v8655 = vpop.f32.mrf.mxu0
    %v8656 = vadd.f32 %v8643, %v8655
    %v8657 = vpop.f32.mrf.mxu0
    %8658 = vdwg.mxu0
    %8659 = vmatpush.bf16.msra.mxu0 0
    %8660 = vmatpush.bf16.msra.mxu0 0
    %8661 = vmatpush.bf16.msra.mxu0 0
    %8662 = vmatpush.bf16.msra.mxu0 0
    %8663 = vmatpush.bf16.msra.mxu0 0
    %8664 = vmatpush.bf16.msra.mxu0 0
    %8665 = vmatpush.bf16.msra.mxu0 0
    %8666 = vmatpush.bf16.msra.mxu0 %v6997
    %8667 = vmatmul.bf16.gmra.mxu0 %v8397
    %v8668 = vpop.f32.mrf.mxu0
    %v8669 = vadd.f32 %v8656, %v8668
    %v8670 = vpop.f32.mrf.mxu0
    %8671 = vdwg.mxu0
    %8672 = vmatpush.bf16.msra.mxu0 %v5850
    %8673 = vmatpush.bf16.msra.mxu0 %v5822
    %8674 = vmatpush.bf16.msra.mxu0 %v5794
    %8675 = vmatpush.bf16.msra.mxu0 %v5766
    %8676 = vmatpush.bf16.msra.mxu0 %v5738
    %8677 = vmatpush.bf16.msra.mxu0 %v5710
    %8678 = vmatpush.bf16.msra.mxu0 %v5682
    %8679 = vmatpush.bf16.msra.mxu0 %v5654
    %8680 = vmatmul.bf16.gmra.mxu0 %v156
    %v8681 = vpop.f32.mrf.mxu0
    %v8682 = vadd.f32 0.0, %v8681
    %v8683 = vpop.f32.mrf.mxu0
    %8684 = vdwg.mxu0
    %8685 = vmatpush.bf16.msra.mxu0 %v6074
    %8686 = vmatpush.bf16.msra.mxu0 %v6046
    %8687 = vmatpush.bf16.msra.mxu0 %v6018
    %8688 = vmatpush.bf16.msra.mxu0 %v5990
    %8689 = vmatpush.bf16.msra.mxu0 %v5962
    %8690 = vmatpush.bf16.msra.mxu0 %v5934
    %8691 = vmatpush.bf16.msra.mxu0 %v5906
    %8692 = vmatpush.bf16.msra.mxu0 %v5878
    %8693 = vmatmul.bf16.gmra.mxu0 %v157
    %v8694 = vpop.f32.mrf.mxu0
    %v8695 = vadd.f32 %v8682, %v8694
    %v8696 = vpop.f32.mrf.mxu0
    %8697 = vdwg.mxu0
    %8698 = vmatpush.bf16.msra.mxu0 %v6298
    %8699 = vmatpush.bf16.msra.mxu0 %v6270
    %8700 = vmatpush.bf16.msra.mxu0 %v6242
    %8701 = vmatpush.bf16.msra.mxu0 %v6214
    %8702 = vmatpush.bf16.msra.mxu0 %v6186
    %8703 = vmatpush.bf16.msra.mxu0 %v6158
    %8704 = vmatpush.bf16.msra.mxu0 %v6130
    %8705 = vmatpush.bf16.msra.mxu0 %v6102
    %8706 = vmatmul.bf16.gmra.mxu0 %v158
    %v8707 = vpop.f32.mrf.mxu0
    %v8708 = vadd.f32 %v8695, %v8707
    %v8709 = vpop.f32.mrf.mxu0
    %8710 = vdwg.mxu0
    %8711 = vmatpush.bf16.msra.mxu0 %v6522
    %8712 = vmatpush.bf16.msra.mxu0 %v6494
    %8713 = vmatpush.bf16.msra.mxu0 %v6466
    %8714 = vmatpush.bf16.msra.mxu0 %v6438
    %8715 = vmatpush.bf16.msra.mxu0 %v6410
    %8716 = vmatpush.bf16.msra.mxu0 %v6382
    %8717 = vmatpush.bf16.msra.mxu0 %v6354
    %8718 = vmatpush.bf16.msra.mxu0 %v6326
    %8719 = vmatmul.bf16.gmra.mxu0 %v159
    %v8720 = vpop.f32.mrf.mxu0
    %v8721 = vadd.f32 %v8708, %v8720
    %v8722 = vpop.f32.mrf.mxu0
    %8723 = vdwg.mxu0
    %8724 = vmatpush.bf16.msra.mxu0 %v6746
    %8725 = vmatpush.bf16.msra.mxu0 %v6718
    %8726 = vmatpush.bf16.msra.mxu0 %v6690
    %8727 = vmatpush.bf16.msra.mxu0 %v6662
    %8728 = vmatpush.bf16.msra.mxu0 %v6634
    %8729 = vmatpush.bf16.msra.mxu0 %v6606
    %8730 = vmatpush.bf16.msra.mxu0 %v6578
    %8731 = vmatpush.bf16.msra.mxu0 %v6550
    %8732 = vmatmul.bf16.gmra.mxu0 %v160
    %v8733 = vpop.f32.mrf.mxu0
    %v8734 = vadd.f32 %v8721, %v8733
    %v8735 = vpop.f32.mrf.mxu0
    %8736 = vdwg.mxu0
    %8737 = vmatpush.bf16.msra.mxu0 %v6970
    %8738 = vmatpush.bf16.msra.mxu0 %v6942
    %8739 = vmatpush.bf16.msra.mxu0 %v6914
    %8740 = vmatpush.bf16.msra.mxu0 %v6886
    %8741 = vmatpush.bf16.msra.mxu0 %v6858
    %8742 = vmatpush.bf16.msra.mxu0 %v6830
    %8743 = vmatpush.bf16.msra.mxu0 %v6802
    %8744 = vmatpush.bf16.msra.mxu0 %v6774
    %8745 = vmatmul.bf16.gmra.mxu0 %v161
    %v8746 = vpop.f32.mrf.mxu0
    %v8747 = vadd.f32 %v8734, %v8746
    %v8748 = vpop.f32.mrf.mxu0
    %8749 = vdwg.mxu0
    %8750 = vmatpush.bf16.msra.mxu0 0
    %8751 = vmatpush.bf16.msra.mxu0 0
    %8752 = vmatpush.bf16.msra.mxu0 0
    %8753 = vmatpush.bf16.msra.mxu0 0
    %8754 = vmatpush.bf16.msra.mxu0 0
    %8755 = vmatpush.bf16.msra.mxu0 0
    %8756 = vmatpush.bf16.msra.mxu0 0
    %8757 = vmatpush.bf16.msra.mxu0 %v6998
    %8758 = vmatmul.bf16.gmra.mxu0 %v8397
    %v8759 = vpop.f32.mrf.mxu0
    %v8760 = vadd.f32 %v8747, %v8759
    %v8761 = vpop.f32.mrf.mxu0
    %8762 = vdwg.mxu0
    %8763 = vmatpush.bf16.msra.mxu0 %v5851
    %8764 = vmatpush.bf16.msra.mxu0 %v5823
    %8765 = vmatpush.bf16.msra.mxu0 %v5795
    %8766 = vmatpush.bf16.msra.mxu0 %v5767
    %8767 = vmatpush.bf16.msra.mxu0 %v5739
    %8768 = vmatpush.bf16.msra.mxu0 %v5711
    %8769 = vmatpush.bf16.msra.mxu0 %v5683
    %8770 = vmatpush.bf16.msra.mxu0 %v5655
    %8771 = vmatmul.bf16.gmra.mxu0 %v156
    %v8772 = vpop.f32.mrf.mxu0
    %v8773 = vadd.f32 0.0, %v8772
    %v8774 = vpop.f32.mrf.mxu0
    %8775 = vdwg.mxu0
    %8776 = vmatpush.bf16.msra.mxu0 %v6075
    %8777 = vmatpush.bf16.msra.mxu0 %v6047
    %8778 = vmatpush.bf16.msra.mxu0 %v6019
    %8779 = vmatpush.bf16.msra.mxu0 %v5991
    %8780 = vmatpush.bf16.msra.mxu0 %v5963
    %8781 = vmatpush.bf16.msra.mxu0 %v5935
    %8782 = vmatpush.bf16.msra.mxu0 %v5907
    %8783 = vmatpush.bf16.msra.mxu0 %v5879
    %8784 = vmatmul.bf16.gmra.mxu0 %v157
    %v8785 = vpop.f32.mrf.mxu0
    %v8786 = vadd.f32 %v8773, %v8785
    %v8787 = vpop.f32.mrf.mxu0
    %8788 = vdwg.mxu0
    %8789 = vmatpush.bf16.msra.mxu0 %v6299
    %8790 = vmatpush.bf16.msra.mxu0 %v6271
    %8791 = vmatpush.bf16.msra.mxu0 %v6243
    %8792 = vmatpush.bf16.msra.mxu0 %v6215
    %8793 = vmatpush.bf16.msra.mxu0 %v6187
    %8794 = vmatpush.bf16.msra.mxu0 %v6159
    %8795 = vmatpush.bf16.msra.mxu0 %v6131
    %8796 = vmatpush.bf16.msra.mxu0 %v6103
    %8797 = vmatmul.bf16.gmra.mxu0 %v158
    %v8798 = vpop.f32.mrf.mxu0
    %v8799 = vadd.f32 %v8786, %v8798
    %v8800 = vpop.f32.mrf.mxu0
    %8801 = vdwg.mxu0
    %8802 = vmatpush.bf16.msra.mxu0 %v6523
    %8803 = vmatpush.bf16.msra.mxu0 %v6495
    %8804 = vmatpush.bf16.msra.mxu0 %v6467
    %8805 = vmatpush.bf16.msra.mxu0 %v6439
    %8806 = vmatpush.bf16.msra.mxu0 %v6411
    %8807 = vmatpush.bf16.msra.mxu0 %v6383
    %8808 = vmatpush.bf16.msra.mxu0 %v6355
    %8809 = vmatpush.bf16.msra.mxu0 %v6327
    %8810 = vmatmul.bf16.gmra.mxu0 %v159
    %v8811 = vpop.f32.mrf.mxu0
    %v8812 = vadd.f32 %v8799, %v8811
    %v8813 = vpop.f32.mrf.mxu0
    %8814 = vdwg.mxu0
    %8815 = vmatpush.bf16.msra.mxu0 %v6747
    %8816 = vmatpush.bf16.msra.mxu0 %v6719
    %8817 = vmatpush.bf16.msra.mxu0 %v6691
    %8818 = vmatpush.bf16.msra.mxu0 %v6663
    %8819 = vmatpush.bf16.msra.mxu0 %v6635
    %8820 = vmatpush.bf16.msra.mxu0 %v6607
    %8821 = vmatpush.bf16.msra.mxu0 %v6579
    %8822 = vmatpush.bf16.msra.mxu0 %v6551
    %8823 = vmatmul.bf16.gmra.mxu0 %v160
    %v8824 = vpop.f32.mrf.mxu0
    %v8825 = vadd.f32 %v8812, %v8824
    %v8826 = vpop.f32.mrf.mxu0
    %8827 = vdwg.mxu0
    %8828 = vmatpush.bf16.msra.mxu0 %v6971
    %8829 = vmatpush.bf16.msra.mxu0 %v6943
    %8830 = vmatpush.bf16.msra.mxu0 %v6915
    %8831 = vmatpush.bf16.msra.mxu0 %v6887
    %8832 = vmatpush.bf16.msra.mxu0 %v6859
    %8833 = vmatpush.bf16.msra.mxu0 %v6831
    %8834 = vmatpush.bf16.msra.mxu0 %v6803
    %8835 = vmatpush.bf16.msra.mxu0 %v6775
    %8836 = vmatmul.bf16.gmra.mxu0 %v161
    %v8837 = vpop.f32.mrf.mxu0
    %v8838 = vadd.f32 %v8825, %v8837
    %v8839 = vpop.f32.mrf.mxu0
    %8840 = vdwg.mxu0
    %8841 = vmatpush.bf16.msra.mxu0 0
    %8842 = vmatpush.bf16.msra.mxu0 0
    %8843 = vmatpush.bf16.msra.mxu0 0
    %8844 = vmatpush.bf16.msra.mxu0 0
    %8845 = vmatpush.bf16.msra.mxu0 0
    %8846 = vmatpush.bf16.msra.mxu0 0
    %8847 = vmatpush.bf16.msra.mxu0 0
    %8848 = vmatpush.bf16.msra.mxu0 %v6999
    %8849 = vmatmul.bf16.gmra.mxu0 %v8397
    %v8850 = vpop.f32.mrf.mxu0
    %v8851 = vadd.f32 %v8838, %v8850
    %v8852 = vpop.f32.mrf.mxu0
    %8853 = vdwg.mxu0
    %8854 = vmatpush.bf16.msra.mxu0 %v5852
    %8855 = vmatpush.bf16.msra.mxu0 %v5824
    %8856 = vmatpush.bf16.msra.mxu0 %v5796
    %8857 = vmatpush.bf16.msra.mxu0 %v5768
    %8858 = vmatpush.bf16.msra.mxu0 %v5740
    %8859 = vmatpush.bf16.msra.mxu0 %v5712
    %8860 = vmatpush.bf16.msra.mxu0 %v5684
    %8861 = vmatpush.bf16.msra.mxu0 %v5656
    %8862 = vmatmul.bf16.gmra.mxu0 %v156
    %v8863 = vpop.f32.mrf.mxu0
    %v8864 = vadd.f32 0.0, %v8863
    %v8865 = vpop.f32.mrf.mxu0
    %8866 = vdwg.mxu0
    %8867 = vmatpush.bf16.msra.mxu0 %v6076
    %8868 = vmatpush.bf16.msra.mxu0 %v6048
    %8869 = vmatpush.bf16.msra.mxu0 %v6020
    %8870 = vmatpush.bf16.msra.mxu0 %v5992
    %8871 = vmatpush.bf16.msra.mxu0 %v5964
    %8872 = vmatpush.bf16.msra.mxu0 %v5936
    %8873 = vmatpush.bf16.msra.mxu0 %v5908
    %8874 = vmatpush.bf16.msra.mxu0 %v5880
    %8875 = vmatmul.bf16.gmra.mxu0 %v157
    %v8876 = vpop.f32.mrf.mxu0
    %v8877 = vadd.f32 %v8864, %v8876
    %v8878 = vpop.f32.mrf.mxu0
    %8879 = vdwg.mxu0
    %8880 = vmatpush.bf16.msra.mxu0 %v6300
    %8881 = vmatpush.bf16.msra.mxu0 %v6272
    %8882 = vmatpush.bf16.msra.mxu0 %v6244
    %8883 = vmatpush.bf16.msra.mxu0 %v6216
    %8884 = vmatpush.bf16.msra.mxu0 %v6188
    %8885 = vmatpush.bf16.msra.mxu0 %v6160
    %8886 = vmatpush.bf16.msra.mxu0 %v6132
    %8887 = vmatpush.bf16.msra.mxu0 %v6104
    %8888 = vmatmul.bf16.gmra.mxu0 %v158
    %v8889 = vpop.f32.mrf.mxu0
    %v8890 = vadd.f32 %v8877, %v8889
    %v8891 = vpop.f32.mrf.mxu0
    %8892 = vdwg.mxu0
    %8893 = vmatpush.bf16.msra.mxu0 %v6524
    %8894 = vmatpush.bf16.msra.mxu0 %v6496
    %8895 = vmatpush.bf16.msra.mxu0 %v6468
    %8896 = vmatpush.bf16.msra.mxu0 %v6440
    %8897 = vmatpush.bf16.msra.mxu0 %v6412
    %8898 = vmatpush.bf16.msra.mxu0 %v6384
    %8899 = vmatpush.bf16.msra.mxu0 %v6356
    %8900 = vmatpush.bf16.msra.mxu0 %v6328
    %8901 = vmatmul.bf16.gmra.mxu0 %v159
    %v8902 = vpop.f32.mrf.mxu0
    %v8903 = vadd.f32 %v8890, %v8902
    %v8904 = vpop.f32.mrf.mxu0
    %8905 = vdwg.mxu0
    %8906 = vmatpush.bf16.msra.mxu0 %v6748
    %8907 = vmatpush.bf16.msra.mxu0 %v6720
    %8908 = vmatpush.bf16.msra.mxu0 %v6692
    %8909 = vmatpush.bf16.msra.mxu0 %v6664
    %8910 = vmatpush.bf16.msra.mxu0 %v6636
    %8911 = vmatpush.bf16.msra.mxu0 %v6608
    %8912 = vmatpush.bf16.msra.mxu0 %v6580
    %8913 = vmatpush.bf16.msra.mxu0 %v6552
    %8914 = vmatmul.bf16.gmra.mxu0 %v160
    %v8915 = vpop.f32.mrf.mxu0
    %v8916 = vadd.f32 %v8903, %v8915
    %v8917 = vpop.f32.mrf.mxu0
    %8918 = vdwg.mxu0
    %8919 = vmatpush.bf16.msra.mxu0 %v6972
    %8920 = vmatpush.bf16.msra.mxu0 %v6944
    %8921 = vmatpush.bf16.msra.mxu0 %v6916
    %8922 = vmatpush.bf16.msra.mxu0 %v6888
    %8923 = vmatpush.bf16.msra.mxu0 %v6860
    %8924 = vmatpush.bf16.msra.mxu0 %v6832
    %8925 = vmatpush.bf16.msra.mxu0 %v6804
    %8926 = vmatpush.bf16.msra.mxu0 %v6776
    %8927 = vmatmul.bf16.gmra.mxu0 %v161
    %v8928 = vpop.f32.mrf.mxu0
    %v8929 = vadd.f32 %v8916, %v8928
    %v8930 = vpop.f32.mrf.mxu0
    %8931 = vdwg.mxu0
    %8932 = vmatpush.bf16.msra.mxu0 0
    %8933 = vmatpush.bf16.msra.mxu0 0
    %8934 = vmatpush.bf16.msra.mxu0 0
    %8935 = vmatpush.bf16.msra.mxu0 0
    %8936 = vmatpush.bf16.msra.mxu0 0
    %8937 = vmatpush.bf16.msra.mxu0 0
    %8938 = vmatpush.bf16.msra.mxu0 0
    %8939 = vmatpush.bf16.msra.mxu0 %v7000
    %8940 = vmatmul.bf16.gmra.mxu0 %v8397
    %v8941 = vpop.f32.mrf.mxu0
    %v8942 = vadd.f32 %v8929, %v8941
    %v8943 = vpop.f32.mrf.mxu0
    %8944 = vdwg.mxu0
    %8945 = vmatpush.bf16.msra.mxu0 %v5853
    %8946 = vmatpush.bf16.msra.mxu0 %v5825
    %8947 = vmatpush.bf16.msra.mxu0 %v5797
    %8948 = vmatpush.bf16.msra.mxu0 %v5769
    %8949 = vmatpush.bf16.msra.mxu0 %v5741
    %8950 = vmatpush.bf16.msra.mxu0 %v5713
    %8951 = vmatpush.bf16.msra.mxu0 %v5685
    %8952 = vmatpush.bf16.msra.mxu0 %v5657
    %8953 = vmatmul.bf16.gmra.mxu0 %v156
    %v8954 = vpop.f32.mrf.mxu0
    %v8955 = vadd.f32 0.0, %v8954
    %v8956 = vpop.f32.mrf.mxu0
    %8957 = vdwg.mxu0
    %8958 = vmatpush.bf16.msra.mxu0 %v6077
    %8959 = vmatpush.bf16.msra.mxu0 %v6049
    %8960 = vmatpush.bf16.msra.mxu0 %v6021
    %8961 = vmatpush.bf16.msra.mxu0 %v5993
    %8962 = vmatpush.bf16.msra.mxu0 %v5965
    %8963 = vmatpush.bf16.msra.mxu0 %v5937
    %8964 = vmatpush.bf16.msra.mxu0 %v5909
    %8965 = vmatpush.bf16.msra.mxu0 %v5881
    %8966 = vmatmul.bf16.gmra.mxu0 %v157
    %v8967 = vpop.f32.mrf.mxu0
    %v8968 = vadd.f32 %v8955, %v8967
    %v8969 = vpop.f32.mrf.mxu0
    %8970 = vdwg.mxu0
    %8971 = vmatpush.bf16.msra.mxu0 %v6301
    %8972 = vmatpush.bf16.msra.mxu0 %v6273
    %8973 = vmatpush.bf16.msra.mxu0 %v6245
    %8974 = vmatpush.bf16.msra.mxu0 %v6217
    %8975 = vmatpush.bf16.msra.mxu0 %v6189
    %8976 = vmatpush.bf16.msra.mxu0 %v6161
    %8977 = vmatpush.bf16.msra.mxu0 %v6133
    %8978 = vmatpush.bf16.msra.mxu0 %v6105
    %8979 = vmatmul.bf16.gmra.mxu0 %v158
    %v8980 = vpop.f32.mrf.mxu0
    %v8981 = vadd.f32 %v8968, %v8980
    %v8982 = vpop.f32.mrf.mxu0
    %8983 = vdwg.mxu0
    %8984 = vmatpush.bf16.msra.mxu0 %v6525
    %8985 = vmatpush.bf16.msra.mxu0 %v6497
    %8986 = vmatpush.bf16.msra.mxu0 %v6469
    %8987 = vmatpush.bf16.msra.mxu0 %v6441
    %8988 = vmatpush.bf16.msra.mxu0 %v6413
    %8989 = vmatpush.bf16.msra.mxu0 %v6385
    %8990 = vmatpush.bf16.msra.mxu0 %v6357
    %8991 = vmatpush.bf16.msra.mxu0 %v6329
    %8992 = vmatmul.bf16.gmra.mxu0 %v159
    %v8993 = vpop.f32.mrf.mxu0
    %v8994 = vadd.f32 %v8981, %v8993
    %v8995 = vpop.f32.mrf.mxu0
    %8996 = vdwg.mxu0
    %8997 = vmatpush.bf16.msra.mxu0 %v6749
    %8998 = vmatpush.bf16.msra.mxu0 %v6721
    %8999 = vmatpush.bf16.msra.mxu0 %v6693
    %9000 = vmatpush.bf16.msra.mxu0 %v6665
    %9001 = vmatpush.bf16.msra.mxu0 %v6637
    %9002 = vmatpush.bf16.msra.mxu0 %v6609
    %9003 = vmatpush.bf16.msra.mxu0 %v6581
    %9004 = vmatpush.bf16.msra.mxu0 %v6553
    %9005 = vmatmul.bf16.gmra.mxu0 %v160
    %v9006 = vpop.f32.mrf.mxu0
    %v9007 = vadd.f32 %v8994, %v9006
    %v9008 = vpop.f32.mrf.mxu0
    %9009 = vdwg.mxu0
    %9010 = vmatpush.bf16.msra.mxu0 %v6973
    %9011 = vmatpush.bf16.msra.mxu0 %v6945
    %9012 = vmatpush.bf16.msra.mxu0 %v6917
    %9013 = vmatpush.bf16.msra.mxu0 %v6889
    %9014 = vmatpush.bf16.msra.mxu0 %v6861
    %9015 = vmatpush.bf16.msra.mxu0 %v6833
    %9016 = vmatpush.bf16.msra.mxu0 %v6805
    %9017 = vmatpush.bf16.msra.mxu0 %v6777
    %9018 = vmatmul.bf16.gmra.mxu0 %v161
    %v9019 = vpop.f32.mrf.mxu0
    %v9020 = vadd.f32 %v9007, %v9019
    %v9021 = vpop.f32.mrf.mxu0
    %9022 = vdwg.mxu0
    %9023 = vmatpush.bf16.msra.mxu0 0
    %9024 = vmatpush.bf16.msra.mxu0 0
    %9025 = vmatpush.bf16.msra.mxu0 0
    %9026 = vmatpush.bf16.msra.mxu0 0
    %9027 = vmatpush.bf16.msra.mxu0 0
    %9028 = vmatpush.bf16.msra.mxu0 0
    %9029 = vmatpush.bf16.msra.mxu0 0
    %9030 = vmatpush.bf16.msra.mxu0 %v7001
    %9031 = vmatmul.bf16.gmra.mxu0 %v8397
    %v9032 = vpop.f32.mrf.mxu0
    %v9033 = vadd.f32 %v9020, %v9032
    %v9034 = vpop.f32.mrf.mxu0
    %9035 = vdwg.mxu0
    %9036 = vmatpush.bf16.msra.mxu0 %v5854
    %9037 = vmatpush.bf16.msra.mxu0 %v5826
    %9038 = vmatpush.bf16.msra.mxu0 %v5798
    %9039 = vmatpush.bf16.msra.mxu0 %v5770
    %9040 = vmatpush.bf16.msra.mxu0 %v5742
    %9041 = vmatpush.bf16.msra.mxu0 %v5714
    %9042 = vmatpush.bf16.msra.mxu0 %v5686
    %9043 = vmatpush.bf16.msra.mxu0 %v5658
    %9044 = vmatmul.bf16.gmra.mxu0 %v156
    %v9045 = vpop.f32.mrf.mxu0
    %v9046 = vadd.f32 0.0, %v9045
    %v9047 = vpop.f32.mrf.mxu0
    %9048 = vdwg.mxu0
    %9049 = vmatpush.bf16.msra.mxu0 %v6078
    %9050 = vmatpush.bf16.msra.mxu0 %v6050
    %9051 = vmatpush.bf16.msra.mxu0 %v6022
    %9052 = vmatpush.bf16.msra.mxu0 %v5994
    %9053 = vmatpush.bf16.msra.mxu0 %v5966
    %9054 = vmatpush.bf16.msra.mxu0 %v5938
    %9055 = vmatpush.bf16.msra.mxu0 %v5910
    %9056 = vmatpush.bf16.msra.mxu0 %v5882
    %9057 = vmatmul.bf16.gmra.mxu0 %v157
    %v9058 = vpop.f32.mrf.mxu0
    %v9059 = vadd.f32 %v9046, %v9058
    %v9060 = vpop.f32.mrf.mxu0
    %9061 = vdwg.mxu0
    %9062 = vmatpush.bf16.msra.mxu0 %v6302
    %9063 = vmatpush.bf16.msra.mxu0 %v6274
    %9064 = vmatpush.bf16.msra.mxu0 %v6246
    %9065 = vmatpush.bf16.msra.mxu0 %v6218
    %9066 = vmatpush.bf16.msra.mxu0 %v6190
    %9067 = vmatpush.bf16.msra.mxu0 %v6162
    %9068 = vmatpush.bf16.msra.mxu0 %v6134
    %9069 = vmatpush.bf16.msra.mxu0 %v6106
    %9070 = vmatmul.bf16.gmra.mxu0 %v158
    %v9071 = vpop.f32.mrf.mxu0
    %v9072 = vadd.f32 %v9059, %v9071
    %v9073 = vpop.f32.mrf.mxu0
    %9074 = vdwg.mxu0
    %9075 = vmatpush.bf16.msra.mxu0 %v6526
    %9076 = vmatpush.bf16.msra.mxu0 %v6498
    %9077 = vmatpush.bf16.msra.mxu0 %v6470
    %9078 = vmatpush.bf16.msra.mxu0 %v6442
    %9079 = vmatpush.bf16.msra.mxu0 %v6414
    %9080 = vmatpush.bf16.msra.mxu0 %v6386
    %9081 = vmatpush.bf16.msra.mxu0 %v6358
    %9082 = vmatpush.bf16.msra.mxu0 %v6330
    %9083 = vmatmul.bf16.gmra.mxu0 %v159
    %v9084 = vpop.f32.mrf.mxu0
    %v9085 = vadd.f32 %v9072, %v9084
    %v9086 = vpop.f32.mrf.mxu0
    %9087 = vdwg.mxu0
    %9088 = vmatpush.bf16.msra.mxu0 %v6750
    %9089 = vmatpush.bf16.msra.mxu0 %v6722
    %9090 = vmatpush.bf16.msra.mxu0 %v6694
    %9091 = vmatpush.bf16.msra.mxu0 %v6666
    %9092 = vmatpush.bf16.msra.mxu0 %v6638
    %9093 = vmatpush.bf16.msra.mxu0 %v6610
    %9094 = vmatpush.bf16.msra.mxu0 %v6582
    %9095 = vmatpush.bf16.msra.mxu0 %v6554
    %9096 = vmatmul.bf16.gmra.mxu0 %v160
    %v9097 = vpop.f32.mrf.mxu0
    %v9098 = vadd.f32 %v9085, %v9097
    %v9099 = vpop.f32.mrf.mxu0
    %9100 = vdwg.mxu0
    %9101 = vmatpush.bf16.msra.mxu0 %v6974
    %9102 = vmatpush.bf16.msra.mxu0 %v6946
    %9103 = vmatpush.bf16.msra.mxu0 %v6918
    %9104 = vmatpush.bf16.msra.mxu0 %v6890
    %9105 = vmatpush.bf16.msra.mxu0 %v6862
    %9106 = vmatpush.bf16.msra.mxu0 %v6834
    %9107 = vmatpush.bf16.msra.mxu0 %v6806
    %9108 = vmatpush.bf16.msra.mxu0 %v6778
    %9109 = vmatmul.bf16.gmra.mxu0 %v161
    %v9110 = vpop.f32.mrf.mxu0
    %v9111 = vadd.f32 %v9098, %v9110
    %v9112 = vpop.f32.mrf.mxu0
    %9113 = vdwg.mxu0
    %9114 = vmatpush.bf16.msra.mxu0 0
    %9115 = vmatpush.bf16.msra.mxu0 0
    %9116 = vmatpush.bf16.msra.mxu0 0
    %9117 = vmatpush.bf16.msra.mxu0 0
    %9118 = vmatpush.bf16.msra.mxu0 0
    %9119 = vmatpush.bf16.msra.mxu0 0
    %9120 = vmatpush.bf16.msra.mxu0 0
    %9121 = vmatpush.bf16.msra.mxu0 %v7002
    %9122 = vmatmul.bf16.gmra.mxu0 %v8397
    %v9123 = vpop.f32.mrf.mxu0
    %v9124 = vadd.f32 %v9111, %v9123
    %v9125 = vpop.f32.mrf.mxu0
    %9126 = vdwg.mxu0
    %9127 = vmatpush.bf16.msra.mxu0 %v5855
    %9128 = vmatpush.bf16.msra.mxu0 %v5827
    %9129 = vmatpush.bf16.msra.mxu0 %v5799
    %9130 = vmatpush.bf16.msra.mxu0 %v5771
    %9131 = vmatpush.bf16.msra.mxu0 %v5743
    %9132 = vmatpush.bf16.msra.mxu0 %v5715
    %9133 = vmatpush.bf16.msra.mxu0 %v5687
    %9134 = vmatpush.bf16.msra.mxu0 %v5659
    %9135 = vmatmul.bf16.gmra.mxu0 %v156
    %v9136 = vpop.f32.mrf.mxu0
    %v9137 = vadd.f32 0.0, %v9136
    %v9138 = vpop.f32.mrf.mxu0
    %9139 = vdwg.mxu0
    %9140 = vmatpush.bf16.msra.mxu0 %v6079
    %9141 = vmatpush.bf16.msra.mxu0 %v6051
    %9142 = vmatpush.bf16.msra.mxu0 %v6023
    %9143 = vmatpush.bf16.msra.mxu0 %v5995
    %9144 = vmatpush.bf16.msra.mxu0 %v5967
    %9145 = vmatpush.bf16.msra.mxu0 %v5939
    %9146 = vmatpush.bf16.msra.mxu0 %v5911
    %9147 = vmatpush.bf16.msra.mxu0 %v5883
    %9148 = vmatmul.bf16.gmra.mxu0 %v157
    %v9149 = vpop.f32.mrf.mxu0
    %v9150 = vadd.f32 %v9137, %v9149
    %v9151 = vpop.f32.mrf.mxu0
    %9152 = vdwg.mxu0
    %9153 = vmatpush.bf16.msra.mxu0 %v6303
    %9154 = vmatpush.bf16.msra.mxu0 %v6275
    %9155 = vmatpush.bf16.msra.mxu0 %v6247
    %9156 = vmatpush.bf16.msra.mxu0 %v6219
    %9157 = vmatpush.bf16.msra.mxu0 %v6191
    %9158 = vmatpush.bf16.msra.mxu0 %v6163
    %9159 = vmatpush.bf16.msra.mxu0 %v6135
    %9160 = vmatpush.bf16.msra.mxu0 %v6107
    %9161 = vmatmul.bf16.gmra.mxu0 %v158
    %v9162 = vpop.f32.mrf.mxu0
    %v9163 = vadd.f32 %v9150, %v9162
    %v9164 = vpop.f32.mrf.mxu0
    %9165 = vdwg.mxu0
    %9166 = vmatpush.bf16.msra.mxu0 %v6527
    %9167 = vmatpush.bf16.msra.mxu0 %v6499
    %9168 = vmatpush.bf16.msra.mxu0 %v6471
    %9169 = vmatpush.bf16.msra.mxu0 %v6443
    %9170 = vmatpush.bf16.msra.mxu0 %v6415
    %9171 = vmatpush.bf16.msra.mxu0 %v6387
    %9172 = vmatpush.bf16.msra.mxu0 %v6359
    %9173 = vmatpush.bf16.msra.mxu0 %v6331
    %9174 = vmatmul.bf16.gmra.mxu0 %v159
    %v9175 = vpop.f32.mrf.mxu0
    %v9176 = vadd.f32 %v9163, %v9175
    %v9177 = vpop.f32.mrf.mxu0
    %9178 = vdwg.mxu0
    %9179 = vmatpush.bf16.msra.mxu0 %v6751
    %9180 = vmatpush.bf16.msra.mxu0 %v6723
    %9181 = vmatpush.bf16.msra.mxu0 %v6695
    %9182 = vmatpush.bf16.msra.mxu0 %v6667
    %9183 = vmatpush.bf16.msra.mxu0 %v6639
    %9184 = vmatpush.bf16.msra.mxu0 %v6611
    %9185 = vmatpush.bf16.msra.mxu0 %v6583
    %9186 = vmatpush.bf16.msra.mxu0 %v6555
    %9187 = vmatmul.bf16.gmra.mxu0 %v160
    %v9188 = vpop.f32.mrf.mxu0
    %v9189 = vadd.f32 %v9176, %v9188
    %v9190 = vpop.f32.mrf.mxu0
    %9191 = vdwg.mxu0
    %9192 = vmatpush.bf16.msra.mxu0 %v6975
    %9193 = vmatpush.bf16.msra.mxu0 %v6947
    %9194 = vmatpush.bf16.msra.mxu0 %v6919
    %9195 = vmatpush.bf16.msra.mxu0 %v6891
    %9196 = vmatpush.bf16.msra.mxu0 %v6863
    %9197 = vmatpush.bf16.msra.mxu0 %v6835
    %9198 = vmatpush.bf16.msra.mxu0 %v6807
    %9199 = vmatpush.bf16.msra.mxu0 %v6779
    %9200 = vmatmul.bf16.gmra.mxu0 %v161
    %v9201 = vpop.f32.mrf.mxu0
    %v9202 = vadd.f32 %v9189, %v9201
    %v9203 = vpop.f32.mrf.mxu0
    %9204 = vdwg.mxu0
    %9205 = vmatpush.bf16.msra.mxu0 0
    %9206 = vmatpush.bf16.msra.mxu0 0
    %9207 = vmatpush.bf16.msra.mxu0 0
    %9208 = vmatpush.bf16.msra.mxu0 0
    %9209 = vmatpush.bf16.msra.mxu0 0
    %9210 = vmatpush.bf16.msra.mxu0 0
    %9211 = vmatpush.bf16.msra.mxu0 0
    %9212 = vmatpush.bf16.msra.mxu0 %v7003
    %9213 = vmatmul.bf16.gmra.mxu0 %v8397
    %v9214 = vpop.f32.mrf.mxu0
    %v9215 = vadd.f32 %v9202, %v9214
    %v9216 = vpop.f32.mrf.mxu0
    %9217 = vdwg.mxu0
    %9218 = vmatpush.bf16.msra.mxu0 %v5856
    %9219 = vmatpush.bf16.msra.mxu0 %v5828
    %9220 = vmatpush.bf16.msra.mxu0 %v5800
    %9221 = vmatpush.bf16.msra.mxu0 %v5772
    %9222 = vmatpush.bf16.msra.mxu0 %v5744
    %9223 = vmatpush.bf16.msra.mxu0 %v5716
    %9224 = vmatpush.bf16.msra.mxu0 %v5688
    %9225 = vmatpush.bf16.msra.mxu0 %v5660
    %9226 = vmatmul.bf16.gmra.mxu0 %v156
    %v9227 = vpop.f32.mrf.mxu0
    %v9228 = vadd.f32 0.0, %v9227
    %v9229 = vpop.f32.mrf.mxu0
    %9230 = vdwg.mxu0
    %9231 = vmatpush.bf16.msra.mxu0 %v6080
    %9232 = vmatpush.bf16.msra.mxu0 %v6052
    %9233 = vmatpush.bf16.msra.mxu0 %v6024
    %9234 = vmatpush.bf16.msra.mxu0 %v5996
    %9235 = vmatpush.bf16.msra.mxu0 %v5968
    %9236 = vmatpush.bf16.msra.mxu0 %v5940
    %9237 = vmatpush.bf16.msra.mxu0 %v5912
    %9238 = vmatpush.bf16.msra.mxu0 %v5884
    %9239 = vmatmul.bf16.gmra.mxu0 %v157
    %v9240 = vpop.f32.mrf.mxu0
    %v9241 = vadd.f32 %v9228, %v9240
    %v9242 = vpop.f32.mrf.mxu0
    %9243 = vdwg.mxu0
    %9244 = vmatpush.bf16.msra.mxu0 %v6304
    %9245 = vmatpush.bf16.msra.mxu0 %v6276
    %9246 = vmatpush.bf16.msra.mxu0 %v6248
    %9247 = vmatpush.bf16.msra.mxu0 %v6220
    %9248 = vmatpush.bf16.msra.mxu0 %v6192
    %9249 = vmatpush.bf16.msra.mxu0 %v6164
    %9250 = vmatpush.bf16.msra.mxu0 %v6136
    %9251 = vmatpush.bf16.msra.mxu0 %v6108
    %9252 = vmatmul.bf16.gmra.mxu0 %v158
    %v9253 = vpop.f32.mrf.mxu0
    %v9254 = vadd.f32 %v9241, %v9253
    %v9255 = vpop.f32.mrf.mxu0
    %9256 = vdwg.mxu0
    %9257 = vmatpush.bf16.msra.mxu0 %v6528
    %9258 = vmatpush.bf16.msra.mxu0 %v6500
    %9259 = vmatpush.bf16.msra.mxu0 %v6472
    %9260 = vmatpush.bf16.msra.mxu0 %v6444
    %9261 = vmatpush.bf16.msra.mxu0 %v6416
    %9262 = vmatpush.bf16.msra.mxu0 %v6388
    %9263 = vmatpush.bf16.msra.mxu0 %v6360
    %9264 = vmatpush.bf16.msra.mxu0 %v6332
    %9265 = vmatmul.bf16.gmra.mxu0 %v159
    %v9266 = vpop.f32.mrf.mxu0
    %v9267 = vadd.f32 %v9254, %v9266
    %v9268 = vpop.f32.mrf.mxu0
    %9269 = vdwg.mxu0
    %9270 = vmatpush.bf16.msra.mxu0 %v6752
    %9271 = vmatpush.bf16.msra.mxu0 %v6724
    %9272 = vmatpush.bf16.msra.mxu0 %v6696
    %9273 = vmatpush.bf16.msra.mxu0 %v6668
    %9274 = vmatpush.bf16.msra.mxu0 %v6640
    %9275 = vmatpush.bf16.msra.mxu0 %v6612
    %9276 = vmatpush.bf16.msra.mxu0 %v6584
    %9277 = vmatpush.bf16.msra.mxu0 %v6556
    %9278 = vmatmul.bf16.gmra.mxu0 %v160
    %v9279 = vpop.f32.mrf.mxu0
    %v9280 = vadd.f32 %v9267, %v9279
    %v9281 = vpop.f32.mrf.mxu0
    %9282 = vdwg.mxu0
    %9283 = vmatpush.bf16.msra.mxu0 %v6976
    %9284 = vmatpush.bf16.msra.mxu0 %v6948
    %9285 = vmatpush.bf16.msra.mxu0 %v6920
    %9286 = vmatpush.bf16.msra.mxu0 %v6892
    %9287 = vmatpush.bf16.msra.mxu0 %v6864
    %9288 = vmatpush.bf16.msra.mxu0 %v6836
    %9289 = vmatpush.bf16.msra.mxu0 %v6808
    %9290 = vmatpush.bf16.msra.mxu0 %v6780
    %9291 = vmatmul.bf16.gmra.mxu0 %v161
    %v9292 = vpop.f32.mrf.mxu0
    %v9293 = vadd.f32 %v9280, %v9292
    %v9294 = vpop.f32.mrf.mxu0
    %9295 = vdwg.mxu0
    %9296 = vmatpush.bf16.msra.mxu0 0
    %9297 = vmatpush.bf16.msra.mxu0 0
    %9298 = vmatpush.bf16.msra.mxu0 0
    %9299 = vmatpush.bf16.msra.mxu0 0
    %9300 = vmatpush.bf16.msra.mxu0 0
    %9301 = vmatpush.bf16.msra.mxu0 0
    %9302 = vmatpush.bf16.msra.mxu0 0
    %9303 = vmatpush.bf16.msra.mxu0 %v7004
    %9304 = vmatmul.bf16.gmra.mxu0 %v8397
    %v9305 = vpop.f32.mrf.mxu0
    %v9306 = vadd.f32 %v9293, %v9305
    %v9307 = vpop.f32.mrf.mxu0
    %9308 = vdwg.mxu0
    %9309 = vmatpush.bf16.msra.mxu0 %v5857
    %9310 = vmatpush.bf16.msra.mxu0 %v5829
    %9311 = vmatpush.bf16.msra.mxu0 %v5801
    %9312 = vmatpush.bf16.msra.mxu0 %v5773
    %9313 = vmatpush.bf16.msra.mxu0 %v5745
    %9314 = vmatpush.bf16.msra.mxu0 %v5717
    %9315 = vmatpush.bf16.msra.mxu0 %v5689
    %9316 = vmatpush.bf16.msra.mxu0 %v5661
    %9317 = vmatmul.bf16.gmra.mxu0 %v156
    %v9318 = vpop.f32.mrf.mxu0
    %v9319 = vadd.f32 0.0, %v9318
    %v9320 = vpop.f32.mrf.mxu0
    %9321 = vdwg.mxu0
    %9322 = vmatpush.bf16.msra.mxu0 %v6081
    %9323 = vmatpush.bf16.msra.mxu0 %v6053
    %9324 = vmatpush.bf16.msra.mxu0 %v6025
    %9325 = vmatpush.bf16.msra.mxu0 %v5997
    %9326 = vmatpush.bf16.msra.mxu0 %v5969
    %9327 = vmatpush.bf16.msra.mxu0 %v5941
    %9328 = vmatpush.bf16.msra.mxu0 %v5913
    %9329 = vmatpush.bf16.msra.mxu0 %v5885
    %9330 = vmatmul.bf16.gmra.mxu0 %v157
    %v9331 = vpop.f32.mrf.mxu0
    %v9332 = vadd.f32 %v9319, %v9331
    %v9333 = vpop.f32.mrf.mxu0
    %9334 = vdwg.mxu0
    %9335 = vmatpush.bf16.msra.mxu0 %v6305
    %9336 = vmatpush.bf16.msra.mxu0 %v6277
    %9337 = vmatpush.bf16.msra.mxu0 %v6249
    %9338 = vmatpush.bf16.msra.mxu0 %v6221
    %9339 = vmatpush.bf16.msra.mxu0 %v6193
    %9340 = vmatpush.bf16.msra.mxu0 %v6165
    %9341 = vmatpush.bf16.msra.mxu0 %v6137
    %9342 = vmatpush.bf16.msra.mxu0 %v6109
    %9343 = vmatmul.bf16.gmra.mxu0 %v158
    %v9344 = vpop.f32.mrf.mxu0
    %v9345 = vadd.f32 %v9332, %v9344
    %v9346 = vpop.f32.mrf.mxu0
    %9347 = vdwg.mxu0
    %9348 = vmatpush.bf16.msra.mxu0 %v6529
    %9349 = vmatpush.bf16.msra.mxu0 %v6501
    %9350 = vmatpush.bf16.msra.mxu0 %v6473
    %9351 = vmatpush.bf16.msra.mxu0 %v6445
    %9352 = vmatpush.bf16.msra.mxu0 %v6417
    %9353 = vmatpush.bf16.msra.mxu0 %v6389
    %9354 = vmatpush.bf16.msra.mxu0 %v6361
    %9355 = vmatpush.bf16.msra.mxu0 %v6333
    %9356 = vmatmul.bf16.gmra.mxu0 %v159
    %v9357 = vpop.f32.mrf.mxu0
    %v9358 = vadd.f32 %v9345, %v9357
    %v9359 = vpop.f32.mrf.mxu0
    %9360 = vdwg.mxu0
    %9361 = vmatpush.bf16.msra.mxu0 %v6753
    %9362 = vmatpush.bf16.msra.mxu0 %v6725
    %9363 = vmatpush.bf16.msra.mxu0 %v6697
    %9364 = vmatpush.bf16.msra.mxu0 %v6669
    %9365 = vmatpush.bf16.msra.mxu0 %v6641
    %9366 = vmatpush.bf16.msra.mxu0 %v6613
    %9367 = vmatpush.bf16.msra.mxu0 %v6585
    %9368 = vmatpush.bf16.msra.mxu0 %v6557
    %9369 = vmatmul.bf16.gmra.mxu0 %v160
    %v9370 = vpop.f32.mrf.mxu0
    %v9371 = vadd.f32 %v9358, %v9370
    %v9372 = vpop.f32.mrf.mxu0
    %9373 = vdwg.mxu0
    %9374 = vmatpush.bf16.msra.mxu0 %v6977
    %9375 = vmatpush.bf16.msra.mxu0 %v6949
    %9376 = vmatpush.bf16.msra.mxu0 %v6921
    %9377 = vmatpush.bf16.msra.mxu0 %v6893
    %9378 = vmatpush.bf16.msra.mxu0 %v6865
    %9379 = vmatpush.bf16.msra.mxu0 %v6837
    %9380 = vmatpush.bf16.msra.mxu0 %v6809
    %9381 = vmatpush.bf16.msra.mxu0 %v6781
    %9382 = vmatmul.bf16.gmra.mxu0 %v161
    %v9383 = vpop.f32.mrf.mxu0
    %v9384 = vadd.f32 %v9371, %v9383
    %v9385 = vpop.f32.mrf.mxu0
    %9386 = vdwg.mxu0
    %9387 = vmatpush.bf16.msra.mxu0 0
    %9388 = vmatpush.bf16.msra.mxu0 0
    %9389 = vmatpush.bf16.msra.mxu0 0
    %9390 = vmatpush.bf16.msra.mxu0 0
    %9391 = vmatpush.bf16.msra.mxu0 0
    %9392 = vmatpush.bf16.msra.mxu0 0
    %9393 = vmatpush.bf16.msra.mxu0 0
    %9394 = vmatpush.bf16.msra.mxu0 %v7005
    %9395 = vmatmul.bf16.gmra.mxu0 %v8397
    %v9396 = vpop.f32.mrf.mxu0
    %v9397 = vadd.f32 %v9384, %v9396
    %v9398 = vpop.f32.mrf.mxu0
    %9399 = vdwg.mxu0
    %9400 = vmatpush.bf16.msra.mxu0 %v5858
    %9401 = vmatpush.bf16.msra.mxu0 %v5830
    %9402 = vmatpush.bf16.msra.mxu0 %v5802
    %9403 = vmatpush.bf16.msra.mxu0 %v5774
    %9404 = vmatpush.bf16.msra.mxu0 %v5746
    %9405 = vmatpush.bf16.msra.mxu0 %v5718
    %9406 = vmatpush.bf16.msra.mxu0 %v5690
    %9407 = vmatpush.bf16.msra.mxu0 %v5662
    %9408 = vmatmul.bf16.gmra.mxu0 %v156
    %v9409 = vpop.f32.mrf.mxu0
    %v9410 = vadd.f32 0.0, %v9409
    %v9411 = vpop.f32.mrf.mxu0
    %9412 = vdwg.mxu0
    %9413 = vmatpush.bf16.msra.mxu0 %v6082
    %9414 = vmatpush.bf16.msra.mxu0 %v6054
    %9415 = vmatpush.bf16.msra.mxu0 %v6026
    %9416 = vmatpush.bf16.msra.mxu0 %v5998
    %9417 = vmatpush.bf16.msra.mxu0 %v5970
    %9418 = vmatpush.bf16.msra.mxu0 %v5942
    %9419 = vmatpush.bf16.msra.mxu0 %v5914
    %9420 = vmatpush.bf16.msra.mxu0 %v5886
    %9421 = vmatmul.bf16.gmra.mxu0 %v157
    %v9422 = vpop.f32.mrf.mxu0
    %v9423 = vadd.f32 %v9410, %v9422
    %v9424 = vpop.f32.mrf.mxu0
    %9425 = vdwg.mxu0
    %9426 = vmatpush.bf16.msra.mxu0 %v6306
    %9427 = vmatpush.bf16.msra.mxu0 %v6278
    %9428 = vmatpush.bf16.msra.mxu0 %v6250
    %9429 = vmatpush.bf16.msra.mxu0 %v6222
    %9430 = vmatpush.bf16.msra.mxu0 %v6194
    %9431 = vmatpush.bf16.msra.mxu0 %v6166
    %9432 = vmatpush.bf16.msra.mxu0 %v6138
    %9433 = vmatpush.bf16.msra.mxu0 %v6110
    %9434 = vmatmul.bf16.gmra.mxu0 %v158
    %v9435 = vpop.f32.mrf.mxu0
    %v9436 = vadd.f32 %v9423, %v9435
    %v9437 = vpop.f32.mrf.mxu0
    %9438 = vdwg.mxu0
    %9439 = vmatpush.bf16.msra.mxu0 %v6530
    %9440 = vmatpush.bf16.msra.mxu0 %v6502
    %9441 = vmatpush.bf16.msra.mxu0 %v6474
    %9442 = vmatpush.bf16.msra.mxu0 %v6446
    %9443 = vmatpush.bf16.msra.mxu0 %v6418
    %9444 = vmatpush.bf16.msra.mxu0 %v6390
    %9445 = vmatpush.bf16.msra.mxu0 %v6362
    %9446 = vmatpush.bf16.msra.mxu0 %v6334
    %9447 = vmatmul.bf16.gmra.mxu0 %v159
    %v9448 = vpop.f32.mrf.mxu0
    %v9449 = vadd.f32 %v9436, %v9448
    %v9450 = vpop.f32.mrf.mxu0
    %9451 = vdwg.mxu0
    %9452 = vmatpush.bf16.msra.mxu0 %v6754
    %9453 = vmatpush.bf16.msra.mxu0 %v6726
    %9454 = vmatpush.bf16.msra.mxu0 %v6698
    %9455 = vmatpush.bf16.msra.mxu0 %v6670
    %9456 = vmatpush.bf16.msra.mxu0 %v6642
    %9457 = vmatpush.bf16.msra.mxu0 %v6614
    %9458 = vmatpush.bf16.msra.mxu0 %v6586
    %9459 = vmatpush.bf16.msra.mxu0 %v6558
    %9460 = vmatmul.bf16.gmra.mxu0 %v160
    %v9461 = vpop.f32.mrf.mxu0
    %v9462 = vadd.f32 %v9449, %v9461
    %v9463 = vpop.f32.mrf.mxu0
    %9464 = vdwg.mxu0
    %9465 = vmatpush.bf16.msra.mxu0 %v6978
    %9466 = vmatpush.bf16.msra.mxu0 %v6950
    %9467 = vmatpush.bf16.msra.mxu0 %v6922
    %9468 = vmatpush.bf16.msra.mxu0 %v6894
    %9469 = vmatpush.bf16.msra.mxu0 %v6866
    %9470 = vmatpush.bf16.msra.mxu0 %v6838
    %9471 = vmatpush.bf16.msra.mxu0 %v6810
    %9472 = vmatpush.bf16.msra.mxu0 %v6782
    %9473 = vmatmul.bf16.gmra.mxu0 %v161
    %v9474 = vpop.f32.mrf.mxu0
    %v9475 = vadd.f32 %v9462, %v9474
    %v9476 = vpop.f32.mrf.mxu0
    %9477 = vdwg.mxu0
    %9478 = vmatpush.bf16.msra.mxu0 0
    %9479 = vmatpush.bf16.msra.mxu0 0
    %9480 = vmatpush.bf16.msra.mxu0 0
    %9481 = vmatpush.bf16.msra.mxu0 0
    %9482 = vmatpush.bf16.msra.mxu0 0
    %9483 = vmatpush.bf16.msra.mxu0 0
    %9484 = vmatpush.bf16.msra.mxu0 0
    %9485 = vmatpush.bf16.msra.mxu0 %v7006
    %9486 = vmatmul.bf16.gmra.mxu0 %v8397
    %v9487 = vpop.f32.mrf.mxu0
    %v9488 = vadd.f32 %v9475, %v9487
    %v9489 = vpop.f32.mrf.mxu0
    %9490 = vdwg.mxu0
    %9491 = vmatpush.bf16.msra.mxu0 %v5859
    %9492 = vmatpush.bf16.msra.mxu0 %v5831
    %9493 = vmatpush.bf16.msra.mxu0 %v5803
    %9494 = vmatpush.bf16.msra.mxu0 %v5775
    %9495 = vmatpush.bf16.msra.mxu0 %v5747
    %9496 = vmatpush.bf16.msra.mxu0 %v5719
    %9497 = vmatpush.bf16.msra.mxu0 %v5691
    %9498 = vmatpush.bf16.msra.mxu0 %v5663
    %9499 = vmatmul.bf16.gmra.mxu0 %v156
    %v9500 = vpop.f32.mrf.mxu0
    %v9501 = vadd.f32 0.0, %v9500
    %v9502 = vpop.f32.mrf.mxu0
    %9503 = vdwg.mxu0
    %9504 = vmatpush.bf16.msra.mxu0 %v6083
    %9505 = vmatpush.bf16.msra.mxu0 %v6055
    %9506 = vmatpush.bf16.msra.mxu0 %v6027
    %9507 = vmatpush.bf16.msra.mxu0 %v5999
    %9508 = vmatpush.bf16.msra.mxu0 %v5971
    %9509 = vmatpush.bf16.msra.mxu0 %v5943
    %9510 = vmatpush.bf16.msra.mxu0 %v5915
    %9511 = vmatpush.bf16.msra.mxu0 %v5887
    %9512 = vmatmul.bf16.gmra.mxu0 %v157
    %v9513 = vpop.f32.mrf.mxu0
    %v9514 = vadd.f32 %v9501, %v9513
    %v9515 = vpop.f32.mrf.mxu0
    %9516 = vdwg.mxu0
    %9517 = vmatpush.bf16.msra.mxu0 %v6307
    %9518 = vmatpush.bf16.msra.mxu0 %v6279
    %9519 = vmatpush.bf16.msra.mxu0 %v6251
    %9520 = vmatpush.bf16.msra.mxu0 %v6223
    %9521 = vmatpush.bf16.msra.mxu0 %v6195
    %9522 = vmatpush.bf16.msra.mxu0 %v6167
    %9523 = vmatpush.bf16.msra.mxu0 %v6139
    %9524 = vmatpush.bf16.msra.mxu0 %v6111
    %9525 = vmatmul.bf16.gmra.mxu0 %v158
    %v9526 = vpop.f32.mrf.mxu0
    %v9527 = vadd.f32 %v9514, %v9526
    %v9528 = vpop.f32.mrf.mxu0
    %9529 = vdwg.mxu0
    %9530 = vmatpush.bf16.msra.mxu0 %v6531
    %9531 = vmatpush.bf16.msra.mxu0 %v6503
    %9532 = vmatpush.bf16.msra.mxu0 %v6475
    %9533 = vmatpush.bf16.msra.mxu0 %v6447
    %9534 = vmatpush.bf16.msra.mxu0 %v6419
    %9535 = vmatpush.bf16.msra.mxu0 %v6391
    %9536 = vmatpush.bf16.msra.mxu0 %v6363
    %9537 = vmatpush.bf16.msra.mxu0 %v6335
    %9538 = vmatmul.bf16.gmra.mxu0 %v159
    %v9539 = vpop.f32.mrf.mxu0
    %v9540 = vadd.f32 %v9527, %v9539
    %v9541 = vpop.f32.mrf.mxu0
    %9542 = vdwg.mxu0
    %9543 = vmatpush.bf16.msra.mxu0 %v6755
    %9544 = vmatpush.bf16.msra.mxu0 %v6727
    %9545 = vmatpush.bf16.msra.mxu0 %v6699
    %9546 = vmatpush.bf16.msra.mxu0 %v6671
    %9547 = vmatpush.bf16.msra.mxu0 %v6643
    %9548 = vmatpush.bf16.msra.mxu0 %v6615
    %9549 = vmatpush.bf16.msra.mxu0 %v6587
    %9550 = vmatpush.bf16.msra.mxu0 %v6559
    %9551 = vmatmul.bf16.gmra.mxu0 %v160
    %v9552 = vpop.f32.mrf.mxu0
    %v9553 = vadd.f32 %v9540, %v9552
    %v9554 = vpop.f32.mrf.mxu0
    %9555 = vdwg.mxu0
    %9556 = vmatpush.bf16.msra.mxu0 %v6979
    %9557 = vmatpush.bf16.msra.mxu0 %v6951
    %9558 = vmatpush.bf16.msra.mxu0 %v6923
    %9559 = vmatpush.bf16.msra.mxu0 %v6895
    %9560 = vmatpush.bf16.msra.mxu0 %v6867
    %9561 = vmatpush.bf16.msra.mxu0 %v6839
    %9562 = vmatpush.bf16.msra.mxu0 %v6811
    %9563 = vmatpush.bf16.msra.mxu0 %v6783
    %9564 = vmatmul.bf16.gmra.mxu0 %v161
    %v9565 = vpop.f32.mrf.mxu0
    %v9566 = vadd.f32 %v9553, %v9565
    %v9567 = vpop.f32.mrf.mxu0
    %9568 = vdwg.mxu0
    %9569 = vmatpush.bf16.msra.mxu0 0
    %9570 = vmatpush.bf16.msra.mxu0 0
    %9571 = vmatpush.bf16.msra.mxu0 0
    %9572 = vmatpush.bf16.msra.mxu0 0
    %9573 = vmatpush.bf16.msra.mxu0 0
    %9574 = vmatpush.bf16.msra.mxu0 0
    %9575 = vmatpush.bf16.msra.mxu0 0
    %9576 = vmatpush.bf16.msra.mxu0 %v7007
    %9577 = vmatmul.bf16.gmra.mxu0 %v8397
    %v9578 = vpop.f32.mrf.mxu0
    %v9579 = vadd.f32 %v9566, %v9578
    %v9580 = vpop.f32.mrf.mxu0
    %9581 = vdwg.mxu0
    %9582 = vmatpush.bf16.msra.mxu0 %v5860
    %9583 = vmatpush.bf16.msra.mxu0 %v5832
    %9584 = vmatpush.bf16.msra.mxu0 %v5804
    %9585 = vmatpush.bf16.msra.mxu0 %v5776
    %9586 = vmatpush.bf16.msra.mxu0 %v5748
    %9587 = vmatpush.bf16.msra.mxu0 %v5720
    %9588 = vmatpush.bf16.msra.mxu0 %v5692
    %9589 = vmatpush.bf16.msra.mxu0 %v5664
    %9590 = vmatmul.bf16.gmra.mxu0 %v156
    %v9591 = vpop.f32.mrf.mxu0
    %v9592 = vadd.f32 0.0, %v9591
    %v9593 = vpop.f32.mrf.mxu0
    %9594 = vdwg.mxu0
    %9595 = vmatpush.bf16.msra.mxu0 %v6084
    %9596 = vmatpush.bf16.msra.mxu0 %v6056
    %9597 = vmatpush.bf16.msra.mxu0 %v6028
    %9598 = vmatpush.bf16.msra.mxu0 %v6000
    %9599 = vmatpush.bf16.msra.mxu0 %v5972
    %9600 = vmatpush.bf16.msra.mxu0 %v5944
    %9601 = vmatpush.bf16.msra.mxu0 %v5916
    %9602 = vmatpush.bf16.msra.mxu0 %v5888
    %9603 = vmatmul.bf16.gmra.mxu0 %v157
    %v9604 = vpop.f32.mrf.mxu0
    %v9605 = vadd.f32 %v9592, %v9604
    %v9606 = vpop.f32.mrf.mxu0
    %9607 = vdwg.mxu0
    %9608 = vmatpush.bf16.msra.mxu0 %v6308
    %9609 = vmatpush.bf16.msra.mxu0 %v6280
    %9610 = vmatpush.bf16.msra.mxu0 %v6252
    %9611 = vmatpush.bf16.msra.mxu0 %v6224
    %9612 = vmatpush.bf16.msra.mxu0 %v6196
    %9613 = vmatpush.bf16.msra.mxu0 %v6168
    %9614 = vmatpush.bf16.msra.mxu0 %v6140
    %9615 = vmatpush.bf16.msra.mxu0 %v6112
    %9616 = vmatmul.bf16.gmra.mxu0 %v158
    %v9617 = vpop.f32.mrf.mxu0
    %v9618 = vadd.f32 %v9605, %v9617
    %v9619 = vpop.f32.mrf.mxu0
    %9620 = vdwg.mxu0
    %9621 = vmatpush.bf16.msra.mxu0 %v6532
    %9622 = vmatpush.bf16.msra.mxu0 %v6504
    %9623 = vmatpush.bf16.msra.mxu0 %v6476
    %9624 = vmatpush.bf16.msra.mxu0 %v6448
    %9625 = vmatpush.bf16.msra.mxu0 %v6420
    %9626 = vmatpush.bf16.msra.mxu0 %v6392
    %9627 = vmatpush.bf16.msra.mxu0 %v6364
    %9628 = vmatpush.bf16.msra.mxu0 %v6336
    %9629 = vmatmul.bf16.gmra.mxu0 %v159
    %v9630 = vpop.f32.mrf.mxu0
    %v9631 = vadd.f32 %v9618, %v9630
    %v9632 = vpop.f32.mrf.mxu0
    %9633 = vdwg.mxu0
    %9634 = vmatpush.bf16.msra.mxu0 %v6756
    %9635 = vmatpush.bf16.msra.mxu0 %v6728
    %9636 = vmatpush.bf16.msra.mxu0 %v6700
    %9637 = vmatpush.bf16.msra.mxu0 %v6672
    %9638 = vmatpush.bf16.msra.mxu0 %v6644
    %9639 = vmatpush.bf16.msra.mxu0 %v6616
    %9640 = vmatpush.bf16.msra.mxu0 %v6588
    %9641 = vmatpush.bf16.msra.mxu0 %v6560
    %9642 = vmatmul.bf16.gmra.mxu0 %v160
    %v9643 = vpop.f32.mrf.mxu0
    %v9644 = vadd.f32 %v9631, %v9643
    %v9645 = vpop.f32.mrf.mxu0
    %9646 = vdwg.mxu0
    %9647 = vmatpush.bf16.msra.mxu0 %v6980
    %9648 = vmatpush.bf16.msra.mxu0 %v6952
    %9649 = vmatpush.bf16.msra.mxu0 %v6924
    %9650 = vmatpush.bf16.msra.mxu0 %v6896
    %9651 = vmatpush.bf16.msra.mxu0 %v6868
    %9652 = vmatpush.bf16.msra.mxu0 %v6840
    %9653 = vmatpush.bf16.msra.mxu0 %v6812
    %9654 = vmatpush.bf16.msra.mxu0 %v6784
    %9655 = vmatmul.bf16.gmra.mxu0 %v161
    %v9656 = vpop.f32.mrf.mxu0
    %v9657 = vadd.f32 %v9644, %v9656
    %v9658 = vpop.f32.mrf.mxu0
    %9659 = vdwg.mxu0
    %9660 = vmatpush.bf16.msra.mxu0 0
    %9661 = vmatpush.bf16.msra.mxu0 0
    %9662 = vmatpush.bf16.msra.mxu0 0
    %9663 = vmatpush.bf16.msra.mxu0 0
    %9664 = vmatpush.bf16.msra.mxu0 0
    %9665 = vmatpush.bf16.msra.mxu0 0
    %9666 = vmatpush.bf16.msra.mxu0 0
    %9667 = vmatpush.bf16.msra.mxu0 %v7008
    %9668 = vmatmul.bf16.gmra.mxu0 %v8397
    %v9669 = vpop.f32.mrf.mxu0
    %v9670 = vadd.f32 %v9657, %v9669
    %v9671 = vpop.f32.mrf.mxu0
    %9672 = vdwg.mxu0
    %9673 = vmatpush.bf16.msra.mxu0 %v5861
    %9674 = vmatpush.bf16.msra.mxu0 %v5833
    %9675 = vmatpush.bf16.msra.mxu0 %v5805
    %9676 = vmatpush.bf16.msra.mxu0 %v5777
    %9677 = vmatpush.bf16.msra.mxu0 %v5749
    %9678 = vmatpush.bf16.msra.mxu0 %v5721
    %9679 = vmatpush.bf16.msra.mxu0 %v5693
    %9680 = vmatpush.bf16.msra.mxu0 %v5665
    %9681 = vmatmul.bf16.gmra.mxu0 %v156
    %v9682 = vpop.f32.mrf.mxu0
    %v9683 = vadd.f32 0.0, %v9682
    %v9684 = vpop.f32.mrf.mxu0
    %9685 = vdwg.mxu0
    %9686 = vmatpush.bf16.msra.mxu0 %v6085
    %9687 = vmatpush.bf16.msra.mxu0 %v6057
    %9688 = vmatpush.bf16.msra.mxu0 %v6029
    %9689 = vmatpush.bf16.msra.mxu0 %v6001
    %9690 = vmatpush.bf16.msra.mxu0 %v5973
    %9691 = vmatpush.bf16.msra.mxu0 %v5945
    %9692 = vmatpush.bf16.msra.mxu0 %v5917
    %9693 = vmatpush.bf16.msra.mxu0 %v5889
    %9694 = vmatmul.bf16.gmra.mxu0 %v157
    %v9695 = vpop.f32.mrf.mxu0
    %v9696 = vadd.f32 %v9683, %v9695
    %v9697 = vpop.f32.mrf.mxu0
    %9698 = vdwg.mxu0
    %9699 = vmatpush.bf16.msra.mxu0 %v6309
    %9700 = vmatpush.bf16.msra.mxu0 %v6281
    %9701 = vmatpush.bf16.msra.mxu0 %v6253
    %9702 = vmatpush.bf16.msra.mxu0 %v6225
    %9703 = vmatpush.bf16.msra.mxu0 %v6197
    %9704 = vmatpush.bf16.msra.mxu0 %v6169
    %9705 = vmatpush.bf16.msra.mxu0 %v6141
    %9706 = vmatpush.bf16.msra.mxu0 %v6113
    %9707 = vmatmul.bf16.gmra.mxu0 %v158
    %v9708 = vpop.f32.mrf.mxu0
    %v9709 = vadd.f32 %v9696, %v9708
    %v9710 = vpop.f32.mrf.mxu0
    %9711 = vdwg.mxu0
    %9712 = vmatpush.bf16.msra.mxu0 %v6533
    %9713 = vmatpush.bf16.msra.mxu0 %v6505
    %9714 = vmatpush.bf16.msra.mxu0 %v6477
    %9715 = vmatpush.bf16.msra.mxu0 %v6449
    %9716 = vmatpush.bf16.msra.mxu0 %v6421
    %9717 = vmatpush.bf16.msra.mxu0 %v6393
    %9718 = vmatpush.bf16.msra.mxu0 %v6365
    %9719 = vmatpush.bf16.msra.mxu0 %v6337
    %9720 = vmatmul.bf16.gmra.mxu0 %v159
    %v9721 = vpop.f32.mrf.mxu0
    %v9722 = vadd.f32 %v9709, %v9721
    %v9723 = vpop.f32.mrf.mxu0
    %9724 = vdwg.mxu0
    %9725 = vmatpush.bf16.msra.mxu0 %v6757
    %9726 = vmatpush.bf16.msra.mxu0 %v6729
    %9727 = vmatpush.bf16.msra.mxu0 %v6701
    %9728 = vmatpush.bf16.msra.mxu0 %v6673
    %9729 = vmatpush.bf16.msra.mxu0 %v6645
    %9730 = vmatpush.bf16.msra.mxu0 %v6617
    %9731 = vmatpush.bf16.msra.mxu0 %v6589
    %9732 = vmatpush.bf16.msra.mxu0 %v6561
    %9733 = vmatmul.bf16.gmra.mxu0 %v160
    %v9734 = vpop.f32.mrf.mxu0
    %v9735 = vadd.f32 %v9722, %v9734
    %v9736 = vpop.f32.mrf.mxu0
    %9737 = vdwg.mxu0
    %9738 = vmatpush.bf16.msra.mxu0 %v6981
    %9739 = vmatpush.bf16.msra.mxu0 %v6953
    %9740 = vmatpush.bf16.msra.mxu0 %v6925
    %9741 = vmatpush.bf16.msra.mxu0 %v6897
    %9742 = vmatpush.bf16.msra.mxu0 %v6869
    %9743 = vmatpush.bf16.msra.mxu0 %v6841
    %9744 = vmatpush.bf16.msra.mxu0 %v6813
    %9745 = vmatpush.bf16.msra.mxu0 %v6785
    %9746 = vmatmul.bf16.gmra.mxu0 %v161
    %v9747 = vpop.f32.mrf.mxu0
    %v9748 = vadd.f32 %v9735, %v9747
    %v9749 = vpop.f32.mrf.mxu0
    %9750 = vdwg.mxu0
    %9751 = vmatpush.bf16.msra.mxu0 0
    %9752 = vmatpush.bf16.msra.mxu0 0
    %9753 = vmatpush.bf16.msra.mxu0 0
    %9754 = vmatpush.bf16.msra.mxu0 0
    %9755 = vmatpush.bf16.msra.mxu0 0
    %9756 = vmatpush.bf16.msra.mxu0 0
    %9757 = vmatpush.bf16.msra.mxu0 0
    %9758 = vmatpush.bf16.msra.mxu0 %v7009
    %9759 = vmatmul.bf16.gmra.mxu0 %v8397
    %v9760 = vpop.f32.mrf.mxu0
    %v9761 = vadd.f32 %v9748, %v9760
    %v9762 = vpop.f32.mrf.mxu0
    %9763 = vdwg.mxu0
    %9764 = vmatpush.bf16.msra.mxu0 %v5862
    %9765 = vmatpush.bf16.msra.mxu0 %v5834
    %9766 = vmatpush.bf16.msra.mxu0 %v5806
    %9767 = vmatpush.bf16.msra.mxu0 %v5778
    %9768 = vmatpush.bf16.msra.mxu0 %v5750
    %9769 = vmatpush.bf16.msra.mxu0 %v5722
    %9770 = vmatpush.bf16.msra.mxu0 %v5694
    %9771 = vmatpush.bf16.msra.mxu0 %v5666
    %9772 = vmatmul.bf16.gmra.mxu0 %v156
    %v9773 = vpop.f32.mrf.mxu0
    %v9774 = vadd.f32 0.0, %v9773
    %v9775 = vpop.f32.mrf.mxu0
    %9776 = vdwg.mxu0
    %9777 = vmatpush.bf16.msra.mxu0 %v6086
    %9778 = vmatpush.bf16.msra.mxu0 %v6058
    %9779 = vmatpush.bf16.msra.mxu0 %v6030
    %9780 = vmatpush.bf16.msra.mxu0 %v6002
    %9781 = vmatpush.bf16.msra.mxu0 %v5974
    %9782 = vmatpush.bf16.msra.mxu0 %v5946
    %9783 = vmatpush.bf16.msra.mxu0 %v5918
    %9784 = vmatpush.bf16.msra.mxu0 %v5890
    %9785 = vmatmul.bf16.gmra.mxu0 %v157
    %v9786 = vpop.f32.mrf.mxu0
    %v9787 = vadd.f32 %v9774, %v9786
    %v9788 = vpop.f32.mrf.mxu0
    %9789 = vdwg.mxu0
    %9790 = vmatpush.bf16.msra.mxu0 %v6310
    %9791 = vmatpush.bf16.msra.mxu0 %v6282
    %9792 = vmatpush.bf16.msra.mxu0 %v6254
    %9793 = vmatpush.bf16.msra.mxu0 %v6226
    %9794 = vmatpush.bf16.msra.mxu0 %v6198
    %9795 = vmatpush.bf16.msra.mxu0 %v6170
    %9796 = vmatpush.bf16.msra.mxu0 %v6142
    %9797 = vmatpush.bf16.msra.mxu0 %v6114
    %9798 = vmatmul.bf16.gmra.mxu0 %v158
    %v9799 = vpop.f32.mrf.mxu0
    %v9800 = vadd.f32 %v9787, %v9799
    %v9801 = vpop.f32.mrf.mxu0
    %9802 = vdwg.mxu0
    %9803 = vmatpush.bf16.msra.mxu0 %v6534
    %9804 = vmatpush.bf16.msra.mxu0 %v6506
    %9805 = vmatpush.bf16.msra.mxu0 %v6478
    %9806 = vmatpush.bf16.msra.mxu0 %v6450
    %9807 = vmatpush.bf16.msra.mxu0 %v6422
    %9808 = vmatpush.bf16.msra.mxu0 %v6394
    %9809 = vmatpush.bf16.msra.mxu0 %v6366
    %9810 = vmatpush.bf16.msra.mxu0 %v6338
    %9811 = vmatmul.bf16.gmra.mxu0 %v159
    %v9812 = vpop.f32.mrf.mxu0
    %v9813 = vadd.f32 %v9800, %v9812
    %v9814 = vpop.f32.mrf.mxu0
    %9815 = vdwg.mxu0
    %9816 = vmatpush.bf16.msra.mxu0 %v6758
    %9817 = vmatpush.bf16.msra.mxu0 %v6730
    %9818 = vmatpush.bf16.msra.mxu0 %v6702
    %9819 = vmatpush.bf16.msra.mxu0 %v6674
    %9820 = vmatpush.bf16.msra.mxu0 %v6646
    %9821 = vmatpush.bf16.msra.mxu0 %v6618
    %9822 = vmatpush.bf16.msra.mxu0 %v6590
    %9823 = vmatpush.bf16.msra.mxu0 %v6562
    %9824 = vmatmul.bf16.gmra.mxu0 %v160
    %v9825 = vpop.f32.mrf.mxu0
    %v9826 = vadd.f32 %v9813, %v9825
    %v9827 = vpop.f32.mrf.mxu0
    %9828 = vdwg.mxu0
    %9829 = vmatpush.bf16.msra.mxu0 %v6982
    %9830 = vmatpush.bf16.msra.mxu0 %v6954
    %9831 = vmatpush.bf16.msra.mxu0 %v6926
    %9832 = vmatpush.bf16.msra.mxu0 %v6898
    %9833 = vmatpush.bf16.msra.mxu0 %v6870
    %9834 = vmatpush.bf16.msra.mxu0 %v6842
    %9835 = vmatpush.bf16.msra.mxu0 %v6814
    %9836 = vmatpush.bf16.msra.mxu0 %v6786
    %9837 = vmatmul.bf16.gmra.mxu0 %v161
    %v9838 = vpop.f32.mrf.mxu0
    %v9839 = vadd.f32 %v9826, %v9838
    %v9840 = vpop.f32.mrf.mxu0
    %9841 = vdwg.mxu0
    %9842 = vmatpush.bf16.msra.mxu0 0
    %9843 = vmatpush.bf16.msra.mxu0 0
    %9844 = vmatpush.bf16.msra.mxu0 0
    %9845 = vmatpush.bf16.msra.mxu0 0
    %9846 = vmatpush.bf16.msra.mxu0 0
    %9847 = vmatpush.bf16.msra.mxu0 0
    %9848 = vmatpush.bf16.msra.mxu0 0
    %9849 = vmatpush.bf16.msra.mxu0 %v7010
    %9850 = vmatmul.bf16.gmra.mxu0 %v8397
    %v9851 = vpop.f32.mrf.mxu0
    %v9852 = vadd.f32 %v9839, %v9851
    %v9853 = vpop.f32.mrf.mxu0
    %9854 = vdwg.mxu0
    %9855 = vmatpush.bf16.msra.mxu0 %v5863
    %9856 = vmatpush.bf16.msra.mxu0 %v5835
    %9857 = vmatpush.bf16.msra.mxu0 %v5807
    %9858 = vmatpush.bf16.msra.mxu0 %v5779
    %9859 = vmatpush.bf16.msra.mxu0 %v5751
    %9860 = vmatpush.bf16.msra.mxu0 %v5723
    %9861 = vmatpush.bf16.msra.mxu0 %v5695
    %9862 = vmatpush.bf16.msra.mxu0 %v5667
    %9863 = vmatmul.bf16.gmra.mxu0 %v156
    %v9864 = vpop.f32.mrf.mxu0
    %v9865 = vadd.f32 0.0, %v9864
    %v9866 = vpop.f32.mrf.mxu0
    %9867 = vdwg.mxu0
    %9868 = vmatpush.bf16.msra.mxu0 %v6087
    %9869 = vmatpush.bf16.msra.mxu0 %v6059
    %9870 = vmatpush.bf16.msra.mxu0 %v6031
    %9871 = vmatpush.bf16.msra.mxu0 %v6003
    %9872 = vmatpush.bf16.msra.mxu0 %v5975
    %9873 = vmatpush.bf16.msra.mxu0 %v5947
    %9874 = vmatpush.bf16.msra.mxu0 %v5919
    %9875 = vmatpush.bf16.msra.mxu0 %v5891
    %9876 = vmatmul.bf16.gmra.mxu0 %v157
    %v9877 = vpop.f32.mrf.mxu0
    %v9878 = vadd.f32 %v9865, %v9877
    %v9879 = vpop.f32.mrf.mxu0
    %9880 = vdwg.mxu0
    %9881 = vmatpush.bf16.msra.mxu0 %v6311
    %9882 = vmatpush.bf16.msra.mxu0 %v6283
    %9883 = vmatpush.bf16.msra.mxu0 %v6255
    %9884 = vmatpush.bf16.msra.mxu0 %v6227
    %9885 = vmatpush.bf16.msra.mxu0 %v6199
    %9886 = vmatpush.bf16.msra.mxu0 %v6171
    %9887 = vmatpush.bf16.msra.mxu0 %v6143
    %9888 = vmatpush.bf16.msra.mxu0 %v6115
    %9889 = vmatmul.bf16.gmra.mxu0 %v158
    %v9890 = vpop.f32.mrf.mxu0
    %v9891 = vadd.f32 %v9878, %v9890
    %v9892 = vpop.f32.mrf.mxu0
    %9893 = vdwg.mxu0
    %9894 = vmatpush.bf16.msra.mxu0 %v6535
    %9895 = vmatpush.bf16.msra.mxu0 %v6507
    %9896 = vmatpush.bf16.msra.mxu0 %v6479
    %9897 = vmatpush.bf16.msra.mxu0 %v6451
    %9898 = vmatpush.bf16.msra.mxu0 %v6423
    %9899 = vmatpush.bf16.msra.mxu0 %v6395
    %9900 = vmatpush.bf16.msra.mxu0 %v6367
    %9901 = vmatpush.bf16.msra.mxu0 %v6339
    %9902 = vmatmul.bf16.gmra.mxu0 %v159
    %v9903 = vpop.f32.mrf.mxu0
    %v9904 = vadd.f32 %v9891, %v9903
    %v9905 = vpop.f32.mrf.mxu0
    %9906 = vdwg.mxu0
    %9907 = vmatpush.bf16.msra.mxu0 %v6759
    %9908 = vmatpush.bf16.msra.mxu0 %v6731
    %9909 = vmatpush.bf16.msra.mxu0 %v6703
    %9910 = vmatpush.bf16.msra.mxu0 %v6675
    %9911 = vmatpush.bf16.msra.mxu0 %v6647
    %9912 = vmatpush.bf16.msra.mxu0 %v6619
    %9913 = vmatpush.bf16.msra.mxu0 %v6591
    %9914 = vmatpush.bf16.msra.mxu0 %v6563
    %9915 = vmatmul.bf16.gmra.mxu0 %v160
    %v9916 = vpop.f32.mrf.mxu0
    %v9917 = vadd.f32 %v9904, %v9916
    %v9918 = vpop.f32.mrf.mxu0
    %9919 = vdwg.mxu0
    %9920 = vmatpush.bf16.msra.mxu0 %v6983
    %9921 = vmatpush.bf16.msra.mxu0 %v6955
    %9922 = vmatpush.bf16.msra.mxu0 %v6927
    %9923 = vmatpush.bf16.msra.mxu0 %v6899
    %9924 = vmatpush.bf16.msra.mxu0 %v6871
    %9925 = vmatpush.bf16.msra.mxu0 %v6843
    %9926 = vmatpush.bf16.msra.mxu0 %v6815
    %9927 = vmatpush.bf16.msra.mxu0 %v6787
    %9928 = vmatmul.bf16.gmra.mxu0 %v161
    %v9929 = vpop.f32.mrf.mxu0
    %v9930 = vadd.f32 %v9917, %v9929
    %v9931 = vpop.f32.mrf.mxu0
    %9932 = vdwg.mxu0
    %9933 = vmatpush.bf16.msra.mxu0 0
    %9934 = vmatpush.bf16.msra.mxu0 0
    %9935 = vmatpush.bf16.msra.mxu0 0
    %9936 = vmatpush.bf16.msra.mxu0 0
    %9937 = vmatpush.bf16.msra.mxu0 0
    %9938 = vmatpush.bf16.msra.mxu0 0
    %9939 = vmatpush.bf16.msra.mxu0 0
    %9940 = vmatpush.bf16.msra.mxu0 %v7011
    %9941 = vmatmul.bf16.gmra.mxu0 %v8397
    %v9942 = vpop.f32.mrf.mxu0
    %v9943 = vadd.f32 %v9930, %v9942
    %v9944 = vpop.f32.mrf.mxu0
    %9945 = vdwg.mxu0
    %9946 = vmatpush.bf16.msra.mxu0 %v5864
    %9947 = vmatpush.bf16.msra.mxu0 %v5836
    %9948 = vmatpush.bf16.msra.mxu0 %v5808
    %9949 = vmatpush.bf16.msra.mxu0 %v5780
    %9950 = vmatpush.bf16.msra.mxu0 %v5752
    %9951 = vmatpush.bf16.msra.mxu0 %v5724
    %9952 = vmatpush.bf16.msra.mxu0 %v5696
    %9953 = vmatpush.bf16.msra.mxu0 %v5668
    %9954 = vmatmul.bf16.gmra.mxu0 %v156
    %v9955 = vpop.f32.mrf.mxu0
    %v9956 = vadd.f32 0.0, %v9955
    %v9957 = vpop.f32.mrf.mxu0
    %9958 = vdwg.mxu0
    %9959 = vmatpush.bf16.msra.mxu0 %v6088
    %9960 = vmatpush.bf16.msra.mxu0 %v6060
    %9961 = vmatpush.bf16.msra.mxu0 %v6032
    %9962 = vmatpush.bf16.msra.mxu0 %v6004
    %9963 = vmatpush.bf16.msra.mxu0 %v5976
    %9964 = vmatpush.bf16.msra.mxu0 %v5948
    %9965 = vmatpush.bf16.msra.mxu0 %v5920
    %9966 = vmatpush.bf16.msra.mxu0 %v5892
    %9967 = vmatmul.bf16.gmra.mxu0 %v157
    %v9968 = vpop.f32.mrf.mxu0
    %v9969 = vadd.f32 %v9956, %v9968
    %v9970 = vpop.f32.mrf.mxu0
    %9971 = vdwg.mxu0
    %9972 = vmatpush.bf16.msra.mxu0 %v6312
    %9973 = vmatpush.bf16.msra.mxu0 %v6284
    %9974 = vmatpush.bf16.msra.mxu0 %v6256
    %9975 = vmatpush.bf16.msra.mxu0 %v6228
    %9976 = vmatpush.bf16.msra.mxu0 %v6200
    %9977 = vmatpush.bf16.msra.mxu0 %v6172
    %9978 = vmatpush.bf16.msra.mxu0 %v6144
    %9979 = vmatpush.bf16.msra.mxu0 %v6116
    %9980 = vmatmul.bf16.gmra.mxu0 %v158
    %v9981 = vpop.f32.mrf.mxu0
    %v9982 = vadd.f32 %v9969, %v9981
    %v9983 = vpop.f32.mrf.mxu0
    %9984 = vdwg.mxu0
    %9985 = vmatpush.bf16.msra.mxu0 %v6536
    %9986 = vmatpush.bf16.msra.mxu0 %v6508
    %9987 = vmatpush.bf16.msra.mxu0 %v6480
    %9988 = vmatpush.bf16.msra.mxu0 %v6452
    %9989 = vmatpush.bf16.msra.mxu0 %v6424
    %9990 = vmatpush.bf16.msra.mxu0 %v6396
    %9991 = vmatpush.bf16.msra.mxu0 %v6368
    %9992 = vmatpush.bf16.msra.mxu0 %v6340
    %9993 = vmatmul.bf16.gmra.mxu0 %v159
    %v9994 = vpop.f32.mrf.mxu0
    %v9995 = vadd.f32 %v9982, %v9994
    %v9996 = vpop.f32.mrf.mxu0
    %9997 = vdwg.mxu0
    %9998 = vmatpush.bf16.msra.mxu0 %v6760
    %9999 = vmatpush.bf16.msra.mxu0 %v6732
    %10000 = vmatpush.bf16.msra.mxu0 %v6704
    %10001 = vmatpush.bf16.msra.mxu0 %v6676
    %10002 = vmatpush.bf16.msra.mxu0 %v6648
    %10003 = vmatpush.bf16.msra.mxu0 %v6620
    %10004 = vmatpush.bf16.msra.mxu0 %v6592
    %10005 = vmatpush.bf16.msra.mxu0 %v6564
    %10006 = vmatmul.bf16.gmra.mxu0 %v160
    %v10007 = vpop.f32.mrf.mxu0
    %v10008 = vadd.f32 %v9995, %v10007
    %v10009 = vpop.f32.mrf.mxu0
    %10010 = vdwg.mxu0
    %10011 = vmatpush.bf16.msra.mxu0 %v6984
    %10012 = vmatpush.bf16.msra.mxu0 %v6956
    %10013 = vmatpush.bf16.msra.mxu0 %v6928
    %10014 = vmatpush.bf16.msra.mxu0 %v6900
    %10015 = vmatpush.bf16.msra.mxu0 %v6872
    %10016 = vmatpush.bf16.msra.mxu0 %v6844
    %10017 = vmatpush.bf16.msra.mxu0 %v6816
    %10018 = vmatpush.bf16.msra.mxu0 %v6788
    %10019 = vmatmul.bf16.gmra.mxu0 %v161
    %v10020 = vpop.f32.mrf.mxu0
    %v10021 = vadd.f32 %v10008, %v10020
    %v10022 = vpop.f32.mrf.mxu0
    %10023 = vdwg.mxu0
    %10024 = vmatpush.bf16.msra.mxu0 0
    %10025 = vmatpush.bf16.msra.mxu0 0
    %10026 = vmatpush.bf16.msra.mxu0 0
    %10027 = vmatpush.bf16.msra.mxu0 0
    %10028 = vmatpush.bf16.msra.mxu0 0
    %10029 = vmatpush.bf16.msra.mxu0 0
    %10030 = vmatpush.bf16.msra.mxu0 0
    %10031 = vmatpush.bf16.msra.mxu0 %v7012
    %10032 = vmatmul.bf16.gmra.mxu0 %v8397
    %v10033 = vpop.f32.mrf.mxu0
    %v10034 = vadd.f32 %v10021, %v10033
    %v10035 = vpop.f32.mrf.mxu0
    %10036 = vdwg.mxu0
    %10037 = vmatpush.bf16.msra.mxu0 %v5865
    %10038 = vmatpush.bf16.msra.mxu0 %v5837
    %10039 = vmatpush.bf16.msra.mxu0 %v5809
    %10040 = vmatpush.bf16.msra.mxu0 %v5781
    %10041 = vmatpush.bf16.msra.mxu0 %v5753
    %10042 = vmatpush.bf16.msra.mxu0 %v5725
    %10043 = vmatpush.bf16.msra.mxu0 %v5697
    %10044 = vmatpush.bf16.msra.mxu0 %v5669
    %10045 = vmatmul.bf16.gmra.mxu0 %v156
    %v10046 = vpop.f32.mrf.mxu0
    %v10047 = vadd.f32 0.0, %v10046
    %v10048 = vpop.f32.mrf.mxu0
    %10049 = vdwg.mxu0
    %10050 = vmatpush.bf16.msra.mxu0 %v6089
    %10051 = vmatpush.bf16.msra.mxu0 %v6061
    %10052 = vmatpush.bf16.msra.mxu0 %v6033
    %10053 = vmatpush.bf16.msra.mxu0 %v6005
    %10054 = vmatpush.bf16.msra.mxu0 %v5977
    %10055 = vmatpush.bf16.msra.mxu0 %v5949
    %10056 = vmatpush.bf16.msra.mxu0 %v5921
    %10057 = vmatpush.bf16.msra.mxu0 %v5893
    %10058 = vmatmul.bf16.gmra.mxu0 %v157
    %v10059 = vpop.f32.mrf.mxu0
    %v10060 = vadd.f32 %v10047, %v10059
    %v10061 = vpop.f32.mrf.mxu0
    %10062 = vdwg.mxu0
    %10063 = vmatpush.bf16.msra.mxu0 %v6313
    %10064 = vmatpush.bf16.msra.mxu0 %v6285
    %10065 = vmatpush.bf16.msra.mxu0 %v6257
    %10066 = vmatpush.bf16.msra.mxu0 %v6229
    %10067 = vmatpush.bf16.msra.mxu0 %v6201
    %10068 = vmatpush.bf16.msra.mxu0 %v6173
    %10069 = vmatpush.bf16.msra.mxu0 %v6145
    %10070 = vmatpush.bf16.msra.mxu0 %v6117
    %10071 = vmatmul.bf16.gmra.mxu0 %v158
    %v10072 = vpop.f32.mrf.mxu0
    %v10073 = vadd.f32 %v10060, %v10072
    %v10074 = vpop.f32.mrf.mxu0
    %10075 = vdwg.mxu0
    %10076 = vmatpush.bf16.msra.mxu0 %v6537
    %10077 = vmatpush.bf16.msra.mxu0 %v6509
    %10078 = vmatpush.bf16.msra.mxu0 %v6481
    %10079 = vmatpush.bf16.msra.mxu0 %v6453
    %10080 = vmatpush.bf16.msra.mxu0 %v6425
    %10081 = vmatpush.bf16.msra.mxu0 %v6397
    %10082 = vmatpush.bf16.msra.mxu0 %v6369
    %10083 = vmatpush.bf16.msra.mxu0 %v6341
    %10084 = vmatmul.bf16.gmra.mxu0 %v159
    %v10085 = vpop.f32.mrf.mxu0
    %v10086 = vadd.f32 %v10073, %v10085
    %v10087 = vpop.f32.mrf.mxu0
    %10088 = vdwg.mxu0
    %10089 = vmatpush.bf16.msra.mxu0 %v6761
    %10090 = vmatpush.bf16.msra.mxu0 %v6733
    %10091 = vmatpush.bf16.msra.mxu0 %v6705
    %10092 = vmatpush.bf16.msra.mxu0 %v6677
    %10093 = vmatpush.bf16.msra.mxu0 %v6649
    %10094 = vmatpush.bf16.msra.mxu0 %v6621
    %10095 = vmatpush.bf16.msra.mxu0 %v6593
    %10096 = vmatpush.bf16.msra.mxu0 %v6565
    %10097 = vmatmul.bf16.gmra.mxu0 %v160
    %v10098 = vpop.f32.mrf.mxu0
    %v10099 = vadd.f32 %v10086, %v10098
    %v10100 = vpop.f32.mrf.mxu0
    %10101 = vdwg.mxu0
    %10102 = vmatpush.bf16.msra.mxu0 %v6985
    %10103 = vmatpush.bf16.msra.mxu0 %v6957
    %10104 = vmatpush.bf16.msra.mxu0 %v6929
    %10105 = vmatpush.bf16.msra.mxu0 %v6901
    %10106 = vmatpush.bf16.msra.mxu0 %v6873
    %10107 = vmatpush.bf16.msra.mxu0 %v6845
    %10108 = vmatpush.bf16.msra.mxu0 %v6817
    %10109 = vmatpush.bf16.msra.mxu0 %v6789
    %10110 = vmatmul.bf16.gmra.mxu0 %v161
    %v10111 = vpop.f32.mrf.mxu0
    %v10112 = vadd.f32 %v10099, %v10111
    %v10113 = vpop.f32.mrf.mxu0
    %10114 = vdwg.mxu0
    %10115 = vmatpush.bf16.msra.mxu0 0
    %10116 = vmatpush.bf16.msra.mxu0 0
    %10117 = vmatpush.bf16.msra.mxu0 0
    %10118 = vmatpush.bf16.msra.mxu0 0
    %10119 = vmatpush.bf16.msra.mxu0 0
    %10120 = vmatpush.bf16.msra.mxu0 0
    %10121 = vmatpush.bf16.msra.mxu0 0
    %10122 = vmatpush.bf16.msra.mxu0 %v7013
    %10123 = vmatmul.bf16.gmra.mxu0 %v8397
    %v10124 = vpop.f32.mrf.mxu0
    %v10125 = vadd.f32 %v10112, %v10124
    %v10126 = vpop.f32.mrf.mxu0
    %10127 = vdwg.mxu0
    %10128 = vmatpush.bf16.msra.mxu0 %v5866
    %10129 = vmatpush.bf16.msra.mxu0 %v5838
    %10130 = vmatpush.bf16.msra.mxu0 %v5810
    %10131 = vmatpush.bf16.msra.mxu0 %v5782
    %10132 = vmatpush.bf16.msra.mxu0 %v5754
    %10133 = vmatpush.bf16.msra.mxu0 %v5726
    %10134 = vmatpush.bf16.msra.mxu0 %v5698
    %10135 = vmatpush.bf16.msra.mxu0 %v5670
    %10136 = vmatmul.bf16.gmra.mxu0 %v156
    %v10137 = vpop.f32.mrf.mxu0
    %v10138 = vadd.f32 0.0, %v10137
    %v10139 = vpop.f32.mrf.mxu0
    %10140 = vdwg.mxu0
    %10141 = vmatpush.bf16.msra.mxu0 %v6090
    %10142 = vmatpush.bf16.msra.mxu0 %v6062
    %10143 = vmatpush.bf16.msra.mxu0 %v6034
    %10144 = vmatpush.bf16.msra.mxu0 %v6006
    %10145 = vmatpush.bf16.msra.mxu0 %v5978
    %10146 = vmatpush.bf16.msra.mxu0 %v5950
    %10147 = vmatpush.bf16.msra.mxu0 %v5922
    %10148 = vmatpush.bf16.msra.mxu0 %v5894
    %10149 = vmatmul.bf16.gmra.mxu0 %v157
    %v10150 = vpop.f32.mrf.mxu0
    %v10151 = vadd.f32 %v10138, %v10150
    %v10152 = vpop.f32.mrf.mxu0
    %10153 = vdwg.mxu0
    %10154 = vmatpush.bf16.msra.mxu0 %v6314
    %10155 = vmatpush.bf16.msra.mxu0 %v6286
    %10156 = vmatpush.bf16.msra.mxu0 %v6258
    %10157 = vmatpush.bf16.msra.mxu0 %v6230
    %10158 = vmatpush.bf16.msra.mxu0 %v6202
    %10159 = vmatpush.bf16.msra.mxu0 %v6174
    %10160 = vmatpush.bf16.msra.mxu0 %v6146
    %10161 = vmatpush.bf16.msra.mxu0 %v6118
    %10162 = vmatmul.bf16.gmra.mxu0 %v158
    %v10163 = vpop.f32.mrf.mxu0
    %v10164 = vadd.f32 %v10151, %v10163
    %v10165 = vpop.f32.mrf.mxu0
    %10166 = vdwg.mxu0
    %10167 = vmatpush.bf16.msra.mxu0 %v6538
    %10168 = vmatpush.bf16.msra.mxu0 %v6510
    %10169 = vmatpush.bf16.msra.mxu0 %v6482
    %10170 = vmatpush.bf16.msra.mxu0 %v6454
    %10171 = vmatpush.bf16.msra.mxu0 %v6426
    %10172 = vmatpush.bf16.msra.mxu0 %v6398
    %10173 = vmatpush.bf16.msra.mxu0 %v6370
    %10174 = vmatpush.bf16.msra.mxu0 %v6342
    %10175 = vmatmul.bf16.gmra.mxu0 %v159
    %v10176 = vpop.f32.mrf.mxu0
    %v10177 = vadd.f32 %v10164, %v10176
    %v10178 = vpop.f32.mrf.mxu0
    %10179 = vdwg.mxu0
    %10180 = vmatpush.bf16.msra.mxu0 %v6762
    %10181 = vmatpush.bf16.msra.mxu0 %v6734
    %10182 = vmatpush.bf16.msra.mxu0 %v6706
    %10183 = vmatpush.bf16.msra.mxu0 %v6678
    %10184 = vmatpush.bf16.msra.mxu0 %v6650
    %10185 = vmatpush.bf16.msra.mxu0 %v6622
    %10186 = vmatpush.bf16.msra.mxu0 %v6594
    %10187 = vmatpush.bf16.msra.mxu0 %v6566
    %10188 = vmatmul.bf16.gmra.mxu0 %v160
    %v10189 = vpop.f32.mrf.mxu0
    %v10190 = vadd.f32 %v10177, %v10189
    %v10191 = vpop.f32.mrf.mxu0
    %10192 = vdwg.mxu0
    %10193 = vmatpush.bf16.msra.mxu0 %v6986
    %10194 = vmatpush.bf16.msra.mxu0 %v6958
    %10195 = vmatpush.bf16.msra.mxu0 %v6930
    %10196 = vmatpush.bf16.msra.mxu0 %v6902
    %10197 = vmatpush.bf16.msra.mxu0 %v6874
    %10198 = vmatpush.bf16.msra.mxu0 %v6846
    %10199 = vmatpush.bf16.msra.mxu0 %v6818
    %10200 = vmatpush.bf16.msra.mxu0 %v6790
    %10201 = vmatmul.bf16.gmra.mxu0 %v161
    %v10202 = vpop.f32.mrf.mxu0
    %v10203 = vadd.f32 %v10190, %v10202
    %v10204 = vpop.f32.mrf.mxu0
    %10205 = vdwg.mxu0
    %10206 = vmatpush.bf16.msra.mxu0 0
    %10207 = vmatpush.bf16.msra.mxu0 0
    %10208 = vmatpush.bf16.msra.mxu0 0
    %10209 = vmatpush.bf16.msra.mxu0 0
    %10210 = vmatpush.bf16.msra.mxu0 0
    %10211 = vmatpush.bf16.msra.mxu0 0
    %10212 = vmatpush.bf16.msra.mxu0 0
    %10213 = vmatpush.bf16.msra.mxu0 %v7014
    %10214 = vmatmul.bf16.gmra.mxu0 %v8397
    %v10215 = vpop.f32.mrf.mxu0
    %v10216 = vadd.f32 %v10203, %v10215
    %v10217 = vpop.f32.mrf.mxu0
    %10218 = vdwg.mxu0
    %10219 = vmatpush.bf16.msra.mxu0 %v5867
    %10220 = vmatpush.bf16.msra.mxu0 %v5839
    %10221 = vmatpush.bf16.msra.mxu0 %v5811
    %10222 = vmatpush.bf16.msra.mxu0 %v5783
    %10223 = vmatpush.bf16.msra.mxu0 %v5755
    %10224 = vmatpush.bf16.msra.mxu0 %v5727
    %10225 = vmatpush.bf16.msra.mxu0 %v5699
    %10226 = vmatpush.bf16.msra.mxu0 %v5671
    %10227 = vmatmul.bf16.gmra.mxu0 %v156
    %v10228 = vpop.f32.mrf.mxu0
    %v10229 = vadd.f32 0.0, %v10228
    %v10230 = vpop.f32.mrf.mxu0
    %10231 = vdwg.mxu0
    %10232 = vmatpush.bf16.msra.mxu0 %v6091
    %10233 = vmatpush.bf16.msra.mxu0 %v6063
    %10234 = vmatpush.bf16.msra.mxu0 %v6035
    %10235 = vmatpush.bf16.msra.mxu0 %v6007
    %10236 = vmatpush.bf16.msra.mxu0 %v5979
    %10237 = vmatpush.bf16.msra.mxu0 %v5951
    %10238 = vmatpush.bf16.msra.mxu0 %v5923
    %10239 = vmatpush.bf16.msra.mxu0 %v5895
    %10240 = vmatmul.bf16.gmra.mxu0 %v157
    %v10241 = vpop.f32.mrf.mxu0
    %v10242 = vadd.f32 %v10229, %v10241
    %v10243 = vpop.f32.mrf.mxu0
    %10244 = vdwg.mxu0
    %10245 = vmatpush.bf16.msra.mxu0 %v6315
    %10246 = vmatpush.bf16.msra.mxu0 %v6287
    %10247 = vmatpush.bf16.msra.mxu0 %v6259
    %10248 = vmatpush.bf16.msra.mxu0 %v6231
    %10249 = vmatpush.bf16.msra.mxu0 %v6203
    %10250 = vmatpush.bf16.msra.mxu0 %v6175
    %10251 = vmatpush.bf16.msra.mxu0 %v6147
    %10252 = vmatpush.bf16.msra.mxu0 %v6119
    %10253 = vmatmul.bf16.gmra.mxu0 %v158
    %v10254 = vpop.f32.mrf.mxu0
    %v10255 = vadd.f32 %v10242, %v10254
    %v10256 = vpop.f32.mrf.mxu0
    %10257 = vdwg.mxu0
    %10258 = vmatpush.bf16.msra.mxu0 %v6539
    %10259 = vmatpush.bf16.msra.mxu0 %v6511
    %10260 = vmatpush.bf16.msra.mxu0 %v6483
    %10261 = vmatpush.bf16.msra.mxu0 %v6455
    %10262 = vmatpush.bf16.msra.mxu0 %v6427
    %10263 = vmatpush.bf16.msra.mxu0 %v6399
    %10264 = vmatpush.bf16.msra.mxu0 %v6371
    %10265 = vmatpush.bf16.msra.mxu0 %v6343
    %10266 = vmatmul.bf16.gmra.mxu0 %v159
    %v10267 = vpop.f32.mrf.mxu0
    %v10268 = vadd.f32 %v10255, %v10267
    %v10269 = vpop.f32.mrf.mxu0
    %10270 = vdwg.mxu0
    %10271 = vmatpush.bf16.msra.mxu0 %v6763
    %10272 = vmatpush.bf16.msra.mxu0 %v6735
    %10273 = vmatpush.bf16.msra.mxu0 %v6707
    %10274 = vmatpush.bf16.msra.mxu0 %v6679
    %10275 = vmatpush.bf16.msra.mxu0 %v6651
    %10276 = vmatpush.bf16.msra.mxu0 %v6623
    %10277 = vmatpush.bf16.msra.mxu0 %v6595
    %10278 = vmatpush.bf16.msra.mxu0 %v6567
    %10279 = vmatmul.bf16.gmra.mxu0 %v160
    %v10280 = vpop.f32.mrf.mxu0
    %v10281 = vadd.f32 %v10268, %v10280
    %v10282 = vpop.f32.mrf.mxu0
    %10283 = vdwg.mxu0
    %10284 = vmatpush.bf16.msra.mxu0 %v6987
    %10285 = vmatpush.bf16.msra.mxu0 %v6959
    %10286 = vmatpush.bf16.msra.mxu0 %v6931
    %10287 = vmatpush.bf16.msra.mxu0 %v6903
    %10288 = vmatpush.bf16.msra.mxu0 %v6875
    %10289 = vmatpush.bf16.msra.mxu0 %v6847
    %10290 = vmatpush.bf16.msra.mxu0 %v6819
    %10291 = vmatpush.bf16.msra.mxu0 %v6791
    %10292 = vmatmul.bf16.gmra.mxu0 %v161
    %v10293 = vpop.f32.mrf.mxu0
    %v10294 = vadd.f32 %v10281, %v10293
    %v10295 = vpop.f32.mrf.mxu0
    %10296 = vdwg.mxu0
    %10297 = vmatpush.bf16.msra.mxu0 0
    %10298 = vmatpush.bf16.msra.mxu0 0
    %10299 = vmatpush.bf16.msra.mxu0 0
    %10300 = vmatpush.bf16.msra.mxu0 0
    %10301 = vmatpush.bf16.msra.mxu0 0
    %10302 = vmatpush.bf16.msra.mxu0 0
    %10303 = vmatpush.bf16.msra.mxu0 0
    %10304 = vmatpush.bf16.msra.mxu0 %v7015
    %10305 = vmatmul.bf16.gmra.mxu0 %v8397
    %v10306 = vpop.f32.mrf.mxu0
    %v10307 = vadd.f32 %v10294, %v10306
    %v10308 = vpop.f32.mrf.mxu0
    %10309 = vdwg.mxu0
    %10310 = vmatpush.bf16.msra.mxu0 %v5868
    %10311 = vmatpush.bf16.msra.mxu0 %v5840
    %10312 = vmatpush.bf16.msra.mxu0 %v5812
    %10313 = vmatpush.bf16.msra.mxu0 %v5784
    %10314 = vmatpush.bf16.msra.mxu0 %v5756
    %10315 = vmatpush.bf16.msra.mxu0 %v5728
    %10316 = vmatpush.bf16.msra.mxu0 %v5700
    %10317 = vmatpush.bf16.msra.mxu0 %v5672
    %10318 = vmatmul.bf16.gmra.mxu0 %v156
    %v10319 = vpop.f32.mrf.mxu0
    %v10320 = vadd.f32 0.0, %v10319
    %v10321 = vpop.f32.mrf.mxu0
    %10322 = vdwg.mxu0
    %10323 = vmatpush.bf16.msra.mxu0 %v6092
    %10324 = vmatpush.bf16.msra.mxu0 %v6064
    %10325 = vmatpush.bf16.msra.mxu0 %v6036
    %10326 = vmatpush.bf16.msra.mxu0 %v6008
    %10327 = vmatpush.bf16.msra.mxu0 %v5980
    %10328 = vmatpush.bf16.msra.mxu0 %v5952
    %10329 = vmatpush.bf16.msra.mxu0 %v5924
    %10330 = vmatpush.bf16.msra.mxu0 %v5896
    %10331 = vmatmul.bf16.gmra.mxu0 %v157
    %v10332 = vpop.f32.mrf.mxu0
    %v10333 = vadd.f32 %v10320, %v10332
    %v10334 = vpop.f32.mrf.mxu0
    %10335 = vdwg.mxu0
    %10336 = vmatpush.bf16.msra.mxu0 %v6316
    %10337 = vmatpush.bf16.msra.mxu0 %v6288
    %10338 = vmatpush.bf16.msra.mxu0 %v6260
    %10339 = vmatpush.bf16.msra.mxu0 %v6232
    %10340 = vmatpush.bf16.msra.mxu0 %v6204
    %10341 = vmatpush.bf16.msra.mxu0 %v6176
    %10342 = vmatpush.bf16.msra.mxu0 %v6148
    %10343 = vmatpush.bf16.msra.mxu0 %v6120
    %10344 = vmatmul.bf16.gmra.mxu0 %v158
    %v10345 = vpop.f32.mrf.mxu0
    %v10346 = vadd.f32 %v10333, %v10345
    %v10347 = vpop.f32.mrf.mxu0
    %10348 = vdwg.mxu0
    %10349 = vmatpush.bf16.msra.mxu0 %v6540
    %10350 = vmatpush.bf16.msra.mxu0 %v6512
    %10351 = vmatpush.bf16.msra.mxu0 %v6484
    %10352 = vmatpush.bf16.msra.mxu0 %v6456
    %10353 = vmatpush.bf16.msra.mxu0 %v6428
    %10354 = vmatpush.bf16.msra.mxu0 %v6400
    %10355 = vmatpush.bf16.msra.mxu0 %v6372
    %10356 = vmatpush.bf16.msra.mxu0 %v6344
    %10357 = vmatmul.bf16.gmra.mxu0 %v159
    %v10358 = vpop.f32.mrf.mxu0
    %v10359 = vadd.f32 %v10346, %v10358
    %v10360 = vpop.f32.mrf.mxu0
    %10361 = vdwg.mxu0
    %10362 = vmatpush.bf16.msra.mxu0 %v6764
    %10363 = vmatpush.bf16.msra.mxu0 %v6736
    %10364 = vmatpush.bf16.msra.mxu0 %v6708
    %10365 = vmatpush.bf16.msra.mxu0 %v6680
    %10366 = vmatpush.bf16.msra.mxu0 %v6652
    %10367 = vmatpush.bf16.msra.mxu0 %v6624
    %10368 = vmatpush.bf16.msra.mxu0 %v6596
    %10369 = vmatpush.bf16.msra.mxu0 %v6568
    %10370 = vmatmul.bf16.gmra.mxu0 %v160
    %v10371 = vpop.f32.mrf.mxu0
    %v10372 = vadd.f32 %v10359, %v10371
    %v10373 = vpop.f32.mrf.mxu0
    %10374 = vdwg.mxu0
    %10375 = vmatpush.bf16.msra.mxu0 %v6988
    %10376 = vmatpush.bf16.msra.mxu0 %v6960
    %10377 = vmatpush.bf16.msra.mxu0 %v6932
    %10378 = vmatpush.bf16.msra.mxu0 %v6904
    %10379 = vmatpush.bf16.msra.mxu0 %v6876
    %10380 = vmatpush.bf16.msra.mxu0 %v6848
    %10381 = vmatpush.bf16.msra.mxu0 %v6820
    %10382 = vmatpush.bf16.msra.mxu0 %v6792
    %10383 = vmatmul.bf16.gmra.mxu0 %v161
    %v10384 = vpop.f32.mrf.mxu0
    %v10385 = vadd.f32 %v10372, %v10384
    %v10386 = vpop.f32.mrf.mxu0
    %10387 = vdwg.mxu0
    %10388 = vmatpush.bf16.msra.mxu0 0
    %10389 = vmatpush.bf16.msra.mxu0 0
    %10390 = vmatpush.bf16.msra.mxu0 0
    %10391 = vmatpush.bf16.msra.mxu0 0
    %10392 = vmatpush.bf16.msra.mxu0 0
    %10393 = vmatpush.bf16.msra.mxu0 0
    %10394 = vmatpush.bf16.msra.mxu0 0
    %10395 = vmatpush.bf16.msra.mxu0 %v7016
    %10396 = vmatmul.bf16.gmra.mxu0 %v8397
    %v10397 = vpop.f32.mrf.mxu0
    %v10398 = vadd.f32 %v10385, %v10397
    %v10399 = vpop.f32.mrf.mxu0
    %10400 = vdwg.mxu0
    %10401 = vmatpush.bf16.msra.mxu0 %v5869
    %10402 = vmatpush.bf16.msra.mxu0 %v5841
    %10403 = vmatpush.bf16.msra.mxu0 %v5813
    %10404 = vmatpush.bf16.msra.mxu0 %v5785
    %10405 = vmatpush.bf16.msra.mxu0 %v5757
    %10406 = vmatpush.bf16.msra.mxu0 %v5729
    %10407 = vmatpush.bf16.msra.mxu0 %v5701
    %10408 = vmatpush.bf16.msra.mxu0 %v5673
    %10409 = vmatmul.bf16.gmra.mxu0 %v156
    %v10410 = vpop.f32.mrf.mxu0
    %v10411 = vadd.f32 0.0, %v10410
    %v10412 = vpop.f32.mrf.mxu0
    %10413 = vdwg.mxu0
    %10414 = vmatpush.bf16.msra.mxu0 %v6093
    %10415 = vmatpush.bf16.msra.mxu0 %v6065
    %10416 = vmatpush.bf16.msra.mxu0 %v6037
    %10417 = vmatpush.bf16.msra.mxu0 %v6009
    %10418 = vmatpush.bf16.msra.mxu0 %v5981
    %10419 = vmatpush.bf16.msra.mxu0 %v5953
    %10420 = vmatpush.bf16.msra.mxu0 %v5925
    %10421 = vmatpush.bf16.msra.mxu0 %v5897
    %10422 = vmatmul.bf16.gmra.mxu0 %v157
    %v10423 = vpop.f32.mrf.mxu0
    %v10424 = vadd.f32 %v10411, %v10423
    %v10425 = vpop.f32.mrf.mxu0
    %10426 = vdwg.mxu0
    %10427 = vmatpush.bf16.msra.mxu0 %v6317
    %10428 = vmatpush.bf16.msra.mxu0 %v6289
    %10429 = vmatpush.bf16.msra.mxu0 %v6261
    %10430 = vmatpush.bf16.msra.mxu0 %v6233
    %10431 = vmatpush.bf16.msra.mxu0 %v6205
    %10432 = vmatpush.bf16.msra.mxu0 %v6177
    %10433 = vmatpush.bf16.msra.mxu0 %v6149
    %10434 = vmatpush.bf16.msra.mxu0 %v6121
    %10435 = vmatmul.bf16.gmra.mxu0 %v158
    %v10436 = vpop.f32.mrf.mxu0
    %v10437 = vadd.f32 %v10424, %v10436
    %v10438 = vpop.f32.mrf.mxu0
    %10439 = vdwg.mxu0
    %10440 = vmatpush.bf16.msra.mxu0 %v6541
    %10441 = vmatpush.bf16.msra.mxu0 %v6513
    %10442 = vmatpush.bf16.msra.mxu0 %v6485
    %10443 = vmatpush.bf16.msra.mxu0 %v6457
    %10444 = vmatpush.bf16.msra.mxu0 %v6429
    %10445 = vmatpush.bf16.msra.mxu0 %v6401
    %10446 = vmatpush.bf16.msra.mxu0 %v6373
    %10447 = vmatpush.bf16.msra.mxu0 %v6345
    %10448 = vmatmul.bf16.gmra.mxu0 %v159
    %v10449 = vpop.f32.mrf.mxu0
    %v10450 = vadd.f32 %v10437, %v10449
    %v10451 = vpop.f32.mrf.mxu0
    %10452 = vdwg.mxu0
    %10453 = vmatpush.bf16.msra.mxu0 %v6765
    %10454 = vmatpush.bf16.msra.mxu0 %v6737
    %10455 = vmatpush.bf16.msra.mxu0 %v6709
    %10456 = vmatpush.bf16.msra.mxu0 %v6681
    %10457 = vmatpush.bf16.msra.mxu0 %v6653
    %10458 = vmatpush.bf16.msra.mxu0 %v6625
    %10459 = vmatpush.bf16.msra.mxu0 %v6597
    %10460 = vmatpush.bf16.msra.mxu0 %v6569
    %10461 = vmatmul.bf16.gmra.mxu0 %v160
    %v10462 = vpop.f32.mrf.mxu0
    %v10463 = vadd.f32 %v10450, %v10462
    %v10464 = vpop.f32.mrf.mxu0
    %10465 = vdwg.mxu0
    %10466 = vmatpush.bf16.msra.mxu0 %v6989
    %10467 = vmatpush.bf16.msra.mxu0 %v6961
    %10468 = vmatpush.bf16.msra.mxu0 %v6933
    %10469 = vmatpush.bf16.msra.mxu0 %v6905
    %10470 = vmatpush.bf16.msra.mxu0 %v6877
    %10471 = vmatpush.bf16.msra.mxu0 %v6849
    %10472 = vmatpush.bf16.msra.mxu0 %v6821
    %10473 = vmatpush.bf16.msra.mxu0 %v6793
    %10474 = vmatmul.bf16.gmra.mxu0 %v161
    %v10475 = vpop.f32.mrf.mxu0
    %v10476 = vadd.f32 %v10463, %v10475
    %v10477 = vpop.f32.mrf.mxu0
    %10478 = vdwg.mxu0
    %10479 = vmatpush.bf16.msra.mxu0 0
    %10480 = vmatpush.bf16.msra.mxu0 0
    %10481 = vmatpush.bf16.msra.mxu0 0
    %10482 = vmatpush.bf16.msra.mxu0 0
    %10483 = vmatpush.bf16.msra.mxu0 0
    %10484 = vmatpush.bf16.msra.mxu0 0
    %10485 = vmatpush.bf16.msra.mxu0 0
    %10486 = vmatpush.bf16.msra.mxu0 %v7017
    %10487 = vmatmul.bf16.gmra.mxu0 %v8397
    %v10488 = vpop.f32.mrf.mxu0
    %v10489 = vadd.f32 %v10476, %v10488
    %v10490 = vpop.f32.mrf.mxu0
    %10491 = vdwg.mxu0
    %10492 = vmatpush.bf16.msra.mxu0 %v5870
    %10493 = vmatpush.bf16.msra.mxu0 %v5842
    %10494 = vmatpush.bf16.msra.mxu0 %v5814
    %10495 = vmatpush.bf16.msra.mxu0 %v5786
    %10496 = vmatpush.bf16.msra.mxu0 %v5758
    %10497 = vmatpush.bf16.msra.mxu0 %v5730
    %10498 = vmatpush.bf16.msra.mxu0 %v5702
    %10499 = vmatpush.bf16.msra.mxu0 %v5674
    %10500 = vmatmul.bf16.gmra.mxu0 %v156
    %v10501 = vpop.f32.mrf.mxu0
    %v10502 = vadd.f32 0.0, %v10501
    %v10503 = vpop.f32.mrf.mxu0
    %10504 = vdwg.mxu0
    %10505 = vmatpush.bf16.msra.mxu0 %v6094
    %10506 = vmatpush.bf16.msra.mxu0 %v6066
    %10507 = vmatpush.bf16.msra.mxu0 %v6038
    %10508 = vmatpush.bf16.msra.mxu0 %v6010
    %10509 = vmatpush.bf16.msra.mxu0 %v5982
    %10510 = vmatpush.bf16.msra.mxu0 %v5954
    %10511 = vmatpush.bf16.msra.mxu0 %v5926
    %10512 = vmatpush.bf16.msra.mxu0 %v5898
    %10513 = vmatmul.bf16.gmra.mxu0 %v157
    %v10514 = vpop.f32.mrf.mxu0
    %v10515 = vadd.f32 %v10502, %v10514
    %v10516 = vpop.f32.mrf.mxu0
    %10517 = vdwg.mxu0
    %10518 = vmatpush.bf16.msra.mxu0 %v6318
    %10519 = vmatpush.bf16.msra.mxu0 %v6290
    %10520 = vmatpush.bf16.msra.mxu0 %v6262
    %10521 = vmatpush.bf16.msra.mxu0 %v6234
    %10522 = vmatpush.bf16.msra.mxu0 %v6206
    %10523 = vmatpush.bf16.msra.mxu0 %v6178
    %10524 = vmatpush.bf16.msra.mxu0 %v6150
    %10525 = vmatpush.bf16.msra.mxu0 %v6122
    %10526 = vmatmul.bf16.gmra.mxu0 %v158
    %v10527 = vpop.f32.mrf.mxu0
    %v10528 = vadd.f32 %v10515, %v10527
    %v10529 = vpop.f32.mrf.mxu0
    %10530 = vdwg.mxu0
    %10531 = vmatpush.bf16.msra.mxu0 %v6542
    %10532 = vmatpush.bf16.msra.mxu0 %v6514
    %10533 = vmatpush.bf16.msra.mxu0 %v6486
    %10534 = vmatpush.bf16.msra.mxu0 %v6458
    %10535 = vmatpush.bf16.msra.mxu0 %v6430
    %10536 = vmatpush.bf16.msra.mxu0 %v6402
    %10537 = vmatpush.bf16.msra.mxu0 %v6374
    %10538 = vmatpush.bf16.msra.mxu0 %v6346
    %10539 = vmatmul.bf16.gmra.mxu0 %v159
    %v10540 = vpop.f32.mrf.mxu0
    %v10541 = vadd.f32 %v10528, %v10540
    %v10542 = vpop.f32.mrf.mxu0
    %10543 = vdwg.mxu0
    %10544 = vmatpush.bf16.msra.mxu0 %v6766
    %10545 = vmatpush.bf16.msra.mxu0 %v6738
    %10546 = vmatpush.bf16.msra.mxu0 %v6710
    %10547 = vmatpush.bf16.msra.mxu0 %v6682
    %10548 = vmatpush.bf16.msra.mxu0 %v6654
    %10549 = vmatpush.bf16.msra.mxu0 %v6626
    %10550 = vmatpush.bf16.msra.mxu0 %v6598
    %10551 = vmatpush.bf16.msra.mxu0 %v6570
    %10552 = vmatmul.bf16.gmra.mxu0 %v160
    %v10553 = vpop.f32.mrf.mxu0
    %v10554 = vadd.f32 %v10541, %v10553
    %v10555 = vpop.f32.mrf.mxu0
    %10556 = vdwg.mxu0
    %10557 = vmatpush.bf16.msra.mxu0 %v6990
    %10558 = vmatpush.bf16.msra.mxu0 %v6962
    %10559 = vmatpush.bf16.msra.mxu0 %v6934
    %10560 = vmatpush.bf16.msra.mxu0 %v6906
    %10561 = vmatpush.bf16.msra.mxu0 %v6878
    %10562 = vmatpush.bf16.msra.mxu0 %v6850
    %10563 = vmatpush.bf16.msra.mxu0 %v6822
    %10564 = vmatpush.bf16.msra.mxu0 %v6794
    %10565 = vmatmul.bf16.gmra.mxu0 %v161
    %v10566 = vpop.f32.mrf.mxu0
    %v10567 = vadd.f32 %v10554, %v10566
    %v10568 = vpop.f32.mrf.mxu0
    %10569 = vdwg.mxu0
    %10570 = vmatpush.bf16.msra.mxu0 0
    %10571 = vmatpush.bf16.msra.mxu0 0
    %10572 = vmatpush.bf16.msra.mxu0 0
    %10573 = vmatpush.bf16.msra.mxu0 0
    %10574 = vmatpush.bf16.msra.mxu0 0
    %10575 = vmatpush.bf16.msra.mxu0 0
    %10576 = vmatpush.bf16.msra.mxu0 0
    %10577 = vmatpush.bf16.msra.mxu0 %v7018
    %10578 = vmatmul.bf16.gmra.mxu0 %v8397
    %v10579 = vpop.f32.mrf.mxu0
    %v10580 = vadd.f32 %v10567, %v10579
    %v10581 = vpop.f32.mrf.mxu0
    %10582 = vdwg.mxu0
    %10583 = vmatpush.bf16.msra.mxu0 %v5871
    %10584 = vmatpush.bf16.msra.mxu0 %v5843
    %10585 = vmatpush.bf16.msra.mxu0 %v5815
    %10586 = vmatpush.bf16.msra.mxu0 %v5787
    %10587 = vmatpush.bf16.msra.mxu0 %v5759
    %10588 = vmatpush.bf16.msra.mxu0 %v5731
    %10589 = vmatpush.bf16.msra.mxu0 %v5703
    %10590 = vmatpush.bf16.msra.mxu0 %v5675
    %10591 = vmatmul.bf16.gmra.mxu0 %v156
    %v10592 = vpop.f32.mrf.mxu0
    %v10593 = vadd.f32 0.0, %v10592
    %v10594 = vpop.f32.mrf.mxu0
    %10595 = vdwg.mxu0
    %10596 = vmatpush.bf16.msra.mxu0 %v6095
    %10597 = vmatpush.bf16.msra.mxu0 %v6067
    %10598 = vmatpush.bf16.msra.mxu0 %v6039
    %10599 = vmatpush.bf16.msra.mxu0 %v6011
    %10600 = vmatpush.bf16.msra.mxu0 %v5983
    %10601 = vmatpush.bf16.msra.mxu0 %v5955
    %10602 = vmatpush.bf16.msra.mxu0 %v5927
    %10603 = vmatpush.bf16.msra.mxu0 %v5899
    %10604 = vmatmul.bf16.gmra.mxu0 %v157
    %v10605 = vpop.f32.mrf.mxu0
    %v10606 = vadd.f32 %v10593, %v10605
    %v10607 = vpop.f32.mrf.mxu0
    %10608 = vdwg.mxu0
    %10609 = vmatpush.bf16.msra.mxu0 %v6319
    %10610 = vmatpush.bf16.msra.mxu0 %v6291
    %10611 = vmatpush.bf16.msra.mxu0 %v6263
    %10612 = vmatpush.bf16.msra.mxu0 %v6235
    %10613 = vmatpush.bf16.msra.mxu0 %v6207
    %10614 = vmatpush.bf16.msra.mxu0 %v6179
    %10615 = vmatpush.bf16.msra.mxu0 %v6151
    %10616 = vmatpush.bf16.msra.mxu0 %v6123
    %10617 = vmatmul.bf16.gmra.mxu0 %v158
    %v10618 = vpop.f32.mrf.mxu0
    %v10619 = vadd.f32 %v10606, %v10618
    %v10620 = vpop.f32.mrf.mxu0
    %10621 = vdwg.mxu0
    %10622 = vmatpush.bf16.msra.mxu0 %v6543
    %10623 = vmatpush.bf16.msra.mxu0 %v6515
    %10624 = vmatpush.bf16.msra.mxu0 %v6487
    %10625 = vmatpush.bf16.msra.mxu0 %v6459
    %10626 = vmatpush.bf16.msra.mxu0 %v6431
    %10627 = vmatpush.bf16.msra.mxu0 %v6403
    %10628 = vmatpush.bf16.msra.mxu0 %v6375
    %10629 = vmatpush.bf16.msra.mxu0 %v6347
    %10630 = vmatmul.bf16.gmra.mxu0 %v159
    %v10631 = vpop.f32.mrf.mxu0
    %v10632 = vadd.f32 %v10619, %v10631
    %v10633 = vpop.f32.mrf.mxu0
    %10634 = vdwg.mxu0
    %10635 = vmatpush.bf16.msra.mxu0 %v6767
    %10636 = vmatpush.bf16.msra.mxu0 %v6739
    %10637 = vmatpush.bf16.msra.mxu0 %v6711
    %10638 = vmatpush.bf16.msra.mxu0 %v6683
    %10639 = vmatpush.bf16.msra.mxu0 %v6655
    %10640 = vmatpush.bf16.msra.mxu0 %v6627
    %10641 = vmatpush.bf16.msra.mxu0 %v6599
    %10642 = vmatpush.bf16.msra.mxu0 %v6571
    %10643 = vmatmul.bf16.gmra.mxu0 %v160
    %v10644 = vpop.f32.mrf.mxu0
    %v10645 = vadd.f32 %v10632, %v10644
    %v10646 = vpop.f32.mrf.mxu0
    %10647 = vdwg.mxu0
    %10648 = vmatpush.bf16.msra.mxu0 %v6991
    %10649 = vmatpush.bf16.msra.mxu0 %v6963
    %10650 = vmatpush.bf16.msra.mxu0 %v6935
    %10651 = vmatpush.bf16.msra.mxu0 %v6907
    %10652 = vmatpush.bf16.msra.mxu0 %v6879
    %10653 = vmatpush.bf16.msra.mxu0 %v6851
    %10654 = vmatpush.bf16.msra.mxu0 %v6823
    %10655 = vmatpush.bf16.msra.mxu0 %v6795
    %10656 = vmatmul.bf16.gmra.mxu0 %v161
    %v10657 = vpop.f32.mrf.mxu0
    %v10658 = vadd.f32 %v10645, %v10657
    %v10659 = vpop.f32.mrf.mxu0
    %10660 = vdwg.mxu0
    %10661 = vmatpush.bf16.msra.mxu0 0
    %10662 = vmatpush.bf16.msra.mxu0 0
    %10663 = vmatpush.bf16.msra.mxu0 0
    %10664 = vmatpush.bf16.msra.mxu0 0
    %10665 = vmatpush.bf16.msra.mxu0 0
    %10666 = vmatpush.bf16.msra.mxu0 0
    %10667 = vmatpush.bf16.msra.mxu0 0
    %10668 = vmatpush.bf16.msra.mxu0 %v7019
    %10669 = vmatmul.bf16.gmra.mxu0 %v8397
    %v10670 = vpop.f32.mrf.mxu0
    %v10671 = vadd.f32 %v10658, %v10670
    %v10672 = vpop.f32.mrf.mxu0
    %10673 = vdwg.mxu0
    %10674 = vmatpush.bf16.msra.mxu0 %v5872
    %10675 = vmatpush.bf16.msra.mxu0 %v5844
    %10676 = vmatpush.bf16.msra.mxu0 %v5816
    %10677 = vmatpush.bf16.msra.mxu0 %v5788
    %10678 = vmatpush.bf16.msra.mxu0 %v5760
    %10679 = vmatpush.bf16.msra.mxu0 %v5732
    %10680 = vmatpush.bf16.msra.mxu0 %v5704
    %10681 = vmatpush.bf16.msra.mxu0 %v5676
    %10682 = vmatmul.bf16.gmra.mxu0 %v156
    %v10683 = vpop.f32.mrf.mxu0
    %v10684 = vadd.f32 0.0, %v10683
    %v10685 = vpop.f32.mrf.mxu0
    %10686 = vdwg.mxu0
    %10687 = vmatpush.bf16.msra.mxu0 %v6096
    %10688 = vmatpush.bf16.msra.mxu0 %v6068
    %10689 = vmatpush.bf16.msra.mxu0 %v6040
    %10690 = vmatpush.bf16.msra.mxu0 %v6012
    %10691 = vmatpush.bf16.msra.mxu0 %v5984
    %10692 = vmatpush.bf16.msra.mxu0 %v5956
    %10693 = vmatpush.bf16.msra.mxu0 %v5928
    %10694 = vmatpush.bf16.msra.mxu0 %v5900
    %10695 = vmatmul.bf16.gmra.mxu0 %v157
    %v10696 = vpop.f32.mrf.mxu0
    %v10697 = vadd.f32 %v10684, %v10696
    %v10698 = vpop.f32.mrf.mxu0
    %10699 = vdwg.mxu0
    %10700 = vmatpush.bf16.msra.mxu0 %v6320
    %10701 = vmatpush.bf16.msra.mxu0 %v6292
    %10702 = vmatpush.bf16.msra.mxu0 %v6264
    %10703 = vmatpush.bf16.msra.mxu0 %v6236
    %10704 = vmatpush.bf16.msra.mxu0 %v6208
    %10705 = vmatpush.bf16.msra.mxu0 %v6180
    %10706 = vmatpush.bf16.msra.mxu0 %v6152
    %10707 = vmatpush.bf16.msra.mxu0 %v6124
    %10708 = vmatmul.bf16.gmra.mxu0 %v158
    %v10709 = vpop.f32.mrf.mxu0
    %v10710 = vadd.f32 %v10697, %v10709
    %v10711 = vpop.f32.mrf.mxu0
    %10712 = vdwg.mxu0
    %10713 = vmatpush.bf16.msra.mxu0 %v6544
    %10714 = vmatpush.bf16.msra.mxu0 %v6516
    %10715 = vmatpush.bf16.msra.mxu0 %v6488
    %10716 = vmatpush.bf16.msra.mxu0 %v6460
    %10717 = vmatpush.bf16.msra.mxu0 %v6432
    %10718 = vmatpush.bf16.msra.mxu0 %v6404
    %10719 = vmatpush.bf16.msra.mxu0 %v6376
    %10720 = vmatpush.bf16.msra.mxu0 %v6348
    %10721 = vmatmul.bf16.gmra.mxu0 %v159
    %v10722 = vpop.f32.mrf.mxu0
    %v10723 = vadd.f32 %v10710, %v10722
    %v10724 = vpop.f32.mrf.mxu0
    %10725 = vdwg.mxu0
    %10726 = vmatpush.bf16.msra.mxu0 %v6768
    %10727 = vmatpush.bf16.msra.mxu0 %v6740
    %10728 = vmatpush.bf16.msra.mxu0 %v6712
    %10729 = vmatpush.bf16.msra.mxu0 %v6684
    %10730 = vmatpush.bf16.msra.mxu0 %v6656
    %10731 = vmatpush.bf16.msra.mxu0 %v6628
    %10732 = vmatpush.bf16.msra.mxu0 %v6600
    %10733 = vmatpush.bf16.msra.mxu0 %v6572
    %10734 = vmatmul.bf16.gmra.mxu0 %v160
    %v10735 = vpop.f32.mrf.mxu0
    %v10736 = vadd.f32 %v10723, %v10735
    %v10737 = vpop.f32.mrf.mxu0
    %10738 = vdwg.mxu0
    %10739 = vmatpush.bf16.msra.mxu0 %v6992
    %10740 = vmatpush.bf16.msra.mxu0 %v6964
    %10741 = vmatpush.bf16.msra.mxu0 %v6936
    %10742 = vmatpush.bf16.msra.mxu0 %v6908
    %10743 = vmatpush.bf16.msra.mxu0 %v6880
    %10744 = vmatpush.bf16.msra.mxu0 %v6852
    %10745 = vmatpush.bf16.msra.mxu0 %v6824
    %10746 = vmatpush.bf16.msra.mxu0 %v6796
    %10747 = vmatmul.bf16.gmra.mxu0 %v161
    %v10748 = vpop.f32.mrf.mxu0
    %v10749 = vadd.f32 %v10736, %v10748
    %v10750 = vpop.f32.mrf.mxu0
    %10751 = vdwg.mxu0
    %10752 = vmatpush.bf16.msra.mxu0 0
    %10753 = vmatpush.bf16.msra.mxu0 0
    %10754 = vmatpush.bf16.msra.mxu0 0
    %10755 = vmatpush.bf16.msra.mxu0 0
    %10756 = vmatpush.bf16.msra.mxu0 0
    %10757 = vmatpush.bf16.msra.mxu0 0
    %10758 = vmatpush.bf16.msra.mxu0 0
    %10759 = vmatpush.bf16.msra.mxu0 %v7020
    %10760 = vmatmul.bf16.gmra.mxu0 %v8397
    %v10761 = vpop.f32.mrf.mxu0
    %v10762 = vadd.f32 %v10749, %v10761
    %v10763 = vpop.f32.mrf.mxu0
    %10764 = vdwg.mxu0
    %10765 = vmatpush.bf16.msra.mxu0 %v5873
    %10766 = vmatpush.bf16.msra.mxu0 %v5845
    %10767 = vmatpush.bf16.msra.mxu0 %v5817
    %10768 = vmatpush.bf16.msra.mxu0 %v5789
    %10769 = vmatpush.bf16.msra.mxu0 %v5761
    %10770 = vmatpush.bf16.msra.mxu0 %v5733
    %10771 = vmatpush.bf16.msra.mxu0 %v5705
    %10772 = vmatpush.bf16.msra.mxu0 %v5677
    %10773 = vmatmul.bf16.gmra.mxu0 %v156
    %v10774 = vpop.f32.mrf.mxu0
    %v10775 = vadd.f32 0.0, %v10774
    %v10776 = vpop.f32.mrf.mxu0
    %10777 = vdwg.mxu0
    %10778 = vmatpush.bf16.msra.mxu0 %v6097
    %10779 = vmatpush.bf16.msra.mxu0 %v6069
    %10780 = vmatpush.bf16.msra.mxu0 %v6041
    %10781 = vmatpush.bf16.msra.mxu0 %v6013
    %10782 = vmatpush.bf16.msra.mxu0 %v5985
    %10783 = vmatpush.bf16.msra.mxu0 %v5957
    %10784 = vmatpush.bf16.msra.mxu0 %v5929
    %10785 = vmatpush.bf16.msra.mxu0 %v5901
    %10786 = vmatmul.bf16.gmra.mxu0 %v157
    %v10787 = vpop.f32.mrf.mxu0
    %v10788 = vadd.f32 %v10775, %v10787
    %v10789 = vpop.f32.mrf.mxu0
    %10790 = vdwg.mxu0
    %10791 = vmatpush.bf16.msra.mxu0 %v6321
    %10792 = vmatpush.bf16.msra.mxu0 %v6293
    %10793 = vmatpush.bf16.msra.mxu0 %v6265
    %10794 = vmatpush.bf16.msra.mxu0 %v6237
    %10795 = vmatpush.bf16.msra.mxu0 %v6209
    %10796 = vmatpush.bf16.msra.mxu0 %v6181
    %10797 = vmatpush.bf16.msra.mxu0 %v6153
    %10798 = vmatpush.bf16.msra.mxu0 %v6125
    %10799 = vmatmul.bf16.gmra.mxu0 %v158
    %v10800 = vpop.f32.mrf.mxu0
    %v10801 = vadd.f32 %v10788, %v10800
    %v10802 = vpop.f32.mrf.mxu0
    %10803 = vdwg.mxu0
    %10804 = vmatpush.bf16.msra.mxu0 %v6545
    %10805 = vmatpush.bf16.msra.mxu0 %v6517
    %10806 = vmatpush.bf16.msra.mxu0 %v6489
    %10807 = vmatpush.bf16.msra.mxu0 %v6461
    %10808 = vmatpush.bf16.msra.mxu0 %v6433
    %10809 = vmatpush.bf16.msra.mxu0 %v6405
    %10810 = vmatpush.bf16.msra.mxu0 %v6377
    %10811 = vmatpush.bf16.msra.mxu0 %v6349
    %10812 = vmatmul.bf16.gmra.mxu0 %v159
    %v10813 = vpop.f32.mrf.mxu0
    %v10814 = vadd.f32 %v10801, %v10813
    %v10815 = vpop.f32.mrf.mxu0
    %10816 = vdwg.mxu0
    %10817 = vmatpush.bf16.msra.mxu0 %v6769
    %10818 = vmatpush.bf16.msra.mxu0 %v6741
    %10819 = vmatpush.bf16.msra.mxu0 %v6713
    %10820 = vmatpush.bf16.msra.mxu0 %v6685
    %10821 = vmatpush.bf16.msra.mxu0 %v6657
    %10822 = vmatpush.bf16.msra.mxu0 %v6629
    %10823 = vmatpush.bf16.msra.mxu0 %v6601
    %10824 = vmatpush.bf16.msra.mxu0 %v6573
    %10825 = vmatmul.bf16.gmra.mxu0 %v160
    %v10826 = vpop.f32.mrf.mxu0
    %v10827 = vadd.f32 %v10814, %v10826
    %v10828 = vpop.f32.mrf.mxu0
    %10829 = vdwg.mxu0
    %10830 = vmatpush.bf16.msra.mxu0 %v6993
    %10831 = vmatpush.bf16.msra.mxu0 %v6965
    %10832 = vmatpush.bf16.msra.mxu0 %v6937
    %10833 = vmatpush.bf16.msra.mxu0 %v6909
    %10834 = vmatpush.bf16.msra.mxu0 %v6881
    %10835 = vmatpush.bf16.msra.mxu0 %v6853
    %10836 = vmatpush.bf16.msra.mxu0 %v6825
    %10837 = vmatpush.bf16.msra.mxu0 %v6797
    %10838 = vmatmul.bf16.gmra.mxu0 %v161
    %v10839 = vpop.f32.mrf.mxu0
    %v10840 = vadd.f32 %v10827, %v10839
    %v10841 = vpop.f32.mrf.mxu0
    %10842 = vdwg.mxu0
    %10843 = vmatpush.bf16.msra.mxu0 0
    %10844 = vmatpush.bf16.msra.mxu0 0
    %10845 = vmatpush.bf16.msra.mxu0 0
    %10846 = vmatpush.bf16.msra.mxu0 0
    %10847 = vmatpush.bf16.msra.mxu0 0
    %10848 = vmatpush.bf16.msra.mxu0 0
    %10849 = vmatpush.bf16.msra.mxu0 0
    %10850 = vmatpush.bf16.msra.mxu0 %v7021
    %10851 = vmatmul.bf16.gmra.mxu0 %v8397
    %v10852 = vpop.f32.mrf.mxu0
    %v10853 = vadd.f32 %v10840, %v10852
    %v10854 = vpop.f32.mrf.mxu0
    %10855 = vdwg.mxu0
    %10856 = vmatpush.bf16.msra.mxu0 %v5874
    %10857 = vmatpush.bf16.msra.mxu0 %v5846
    %10858 = vmatpush.bf16.msra.mxu0 %v5818
    %10859 = vmatpush.bf16.msra.mxu0 %v5790
    %10860 = vmatpush.bf16.msra.mxu0 %v5762
    %10861 = vmatpush.bf16.msra.mxu0 %v5734
    %10862 = vmatpush.bf16.msra.mxu0 %v5706
    %10863 = vmatpush.bf16.msra.mxu0 %v5678
    %10864 = vmatmul.bf16.gmra.mxu0 %v156
    %v10865 = vpop.f32.mrf.mxu0
    %v10866 = vadd.f32 0.0, %v10865
    %v10867 = vpop.f32.mrf.mxu0
    %10868 = vdwg.mxu0
    %10869 = vmatpush.bf16.msra.mxu0 %v6098
    %10870 = vmatpush.bf16.msra.mxu0 %v6070
    %10871 = vmatpush.bf16.msra.mxu0 %v6042
    %10872 = vmatpush.bf16.msra.mxu0 %v6014
    %10873 = vmatpush.bf16.msra.mxu0 %v5986
    %10874 = vmatpush.bf16.msra.mxu0 %v5958
    %10875 = vmatpush.bf16.msra.mxu0 %v5930
    %10876 = vmatpush.bf16.msra.mxu0 %v5902
    %10877 = vmatmul.bf16.gmra.mxu0 %v157
    %v10878 = vpop.f32.mrf.mxu0
    %v10879 = vadd.f32 %v10866, %v10878
    %v10880 = vpop.f32.mrf.mxu0
    %10881 = vdwg.mxu0
    %10882 = vmatpush.bf16.msra.mxu0 %v6322
    %10883 = vmatpush.bf16.msra.mxu0 %v6294
    %10884 = vmatpush.bf16.msra.mxu0 %v6266
    %10885 = vmatpush.bf16.msra.mxu0 %v6238
    %10886 = vmatpush.bf16.msra.mxu0 %v6210
    %10887 = vmatpush.bf16.msra.mxu0 %v6182
    %10888 = vmatpush.bf16.msra.mxu0 %v6154
    %10889 = vmatpush.bf16.msra.mxu0 %v6126
    %10890 = vmatmul.bf16.gmra.mxu0 %v158
    %v10891 = vpop.f32.mrf.mxu0
    %v10892 = vadd.f32 %v10879, %v10891
    %v10893 = vpop.f32.mrf.mxu0
    %10894 = vdwg.mxu0
    %10895 = vmatpush.bf16.msra.mxu0 %v6546
    %10896 = vmatpush.bf16.msra.mxu0 %v6518
    %10897 = vmatpush.bf16.msra.mxu0 %v6490
    %10898 = vmatpush.bf16.msra.mxu0 %v6462
    %10899 = vmatpush.bf16.msra.mxu0 %v6434
    %10900 = vmatpush.bf16.msra.mxu0 %v6406
    %10901 = vmatpush.bf16.msra.mxu0 %v6378
    %10902 = vmatpush.bf16.msra.mxu0 %v6350
    %10903 = vmatmul.bf16.gmra.mxu0 %v159
    %v10904 = vpop.f32.mrf.mxu0
    %v10905 = vadd.f32 %v10892, %v10904
    %v10906 = vpop.f32.mrf.mxu0
    %10907 = vdwg.mxu0
    %10908 = vmatpush.bf16.msra.mxu0 %v6770
    %10909 = vmatpush.bf16.msra.mxu0 %v6742
    %10910 = vmatpush.bf16.msra.mxu0 %v6714
    %10911 = vmatpush.bf16.msra.mxu0 %v6686
    %10912 = vmatpush.bf16.msra.mxu0 %v6658
    %10913 = vmatpush.bf16.msra.mxu0 %v6630
    %10914 = vmatpush.bf16.msra.mxu0 %v6602
    %10915 = vmatpush.bf16.msra.mxu0 %v6574
    %10916 = vmatmul.bf16.gmra.mxu0 %v160
    %v10917 = vpop.f32.mrf.mxu0
    %v10918 = vadd.f32 %v10905, %v10917
    %v10919 = vpop.f32.mrf.mxu0
    %10920 = vdwg.mxu0
    %10921 = vmatpush.bf16.msra.mxu0 %v6994
    %10922 = vmatpush.bf16.msra.mxu0 %v6966
    %10923 = vmatpush.bf16.msra.mxu0 %v6938
    %10924 = vmatpush.bf16.msra.mxu0 %v6910
    %10925 = vmatpush.bf16.msra.mxu0 %v6882
    %10926 = vmatpush.bf16.msra.mxu0 %v6854
    %10927 = vmatpush.bf16.msra.mxu0 %v6826
    %10928 = vmatpush.bf16.msra.mxu0 %v6798
    %10929 = vmatmul.bf16.gmra.mxu0 %v161
    %v10930 = vpop.f32.mrf.mxu0
    %v10931 = vadd.f32 %v10918, %v10930
    %v10932 = vpop.f32.mrf.mxu0
    %10933 = vdwg.mxu0
    %10934 = vmatpush.bf16.msra.mxu0 0
    %10935 = vmatpush.bf16.msra.mxu0 0
    %10936 = vmatpush.bf16.msra.mxu0 0
    %10937 = vmatpush.bf16.msra.mxu0 0
    %10938 = vmatpush.bf16.msra.mxu0 0
    %10939 = vmatpush.bf16.msra.mxu0 0
    %10940 = vmatpush.bf16.msra.mxu0 0
    %10941 = vmatpush.bf16.msra.mxu0 %v7022
    %10942 = vmatmul.bf16.gmra.mxu0 %v8397
    %v10943 = vpop.f32.mrf.mxu0
    %v10944 = vadd.f32 %v10931, %v10943
    %v10945 = vpop.f32.mrf.mxu0
    %10946 = vdwg.mxu0
    %v10947 = vmax.f32 %v8487, %v9124
    %v10948 = vmax.f32 %v8578, %v9215
    %v10949 = vmax.f32 %v8669, %v9306
    %v10950 = vmax.f32 %v8760, %v9397
    %v10951 = vmax.f32 %v8851, %v9488
    %v10952 = vmax.f32 %v8942, %v9579
    %v10953 = vmax.f32 %v9033, %v9670
    %v10954 = vmax.f32 %v9761, %v10398
    %v10955 = vmax.f32 %v9852, %v10489
    %v10956 = vmax.f32 %v9943, %v10580
    %v10957 = vmax.f32 %v10034, %v10671
    %v10958 = vmax.f32 %v10125, %v10762
    %v10959 = vmax.f32 %v10216, %v10853
    %v10960 = vmax.f32 %v10307, %v10944
    %v10961 = vmax.f32 %v10947, %v10954
    %v10962 = vmax.f32 %v10948, %v10955
    %v10963 = vmax.f32 %v10949, %v10956
    %v10964 = vmax.f32 %v10950, %v10957
    %v10965 = vmax.f32 %v10951, %v10958
    %v10966 = vmax.f32 %v10952, %v10959
    %v10967 = vmax.f32 %v10953, %v10960
    %v10968 = vld [vmem:[#allocation5] sm:$0xff]
    %v10970 = vperm.slane %v10968, 0
    %v10971 = vperm.slane %v10968, 1
    %v10972 = vperm.slane %v10968, 2
    %v10973 = vperm.slane %v10968, 3
    %v10974 = vperm.slane %v10968, 4
    %v10975 = vperm.slane %v10968, 5
    %v10976 = vperm.slane %v10968, 6
    %v10984 = vadd.f32 %v10961, %v10970
    %v10985 = vadd.f32 %v10962, %v10971
    %v10986 = vadd.f32 %v10963, %v10972
    %v10987 = vadd.f32 %v10964, %v10973
    %v10988 = vadd.f32 %v10965, %v10974
    %v10989 = vadd.f32 %v10966, %v10975
    %v10990 = vadd.f32 %v10967, %v10976
    %v10991 = vmax.f32 %v10984, 0.0
    %v10992 = vmax.f32 %v10985, 0.0
    %v10993 = vmax.f32 %v10986, 0.0
    %v10994 = vmax.f32 %v10987, 0.0
    %v10995 = vmax.f32 %v10988, 0.0
    %v10996 = vmax.f32 %v10989, 0.0
    %v10997 = vmax.f32 %v10990, 0.0
    %v10998 = vpack.c.bf16 %v10991, %v10991
    %v10999 = vpack.c.bf16 %v10992, %v10992
    %v11000 = vpack.c.bf16 %v10993, %v10993
    %v11001 = vpack.c.bf16 %v10994, %v10994
    %v11002 = vpack.c.bf16 %v10995, %v10995
    %v11003 = vpack.c.bf16 %v10996, %v10996
    %v11004 = vpack.c.bf16 %v10997, %v10997
    %v11005 = vld [vmem:[#allocation7] sm:$0xff]
    %v11006 = vld [vmem:[#allocation7 + $0x8] sm:$0xff]
    %v11007 = vld [vmem:[#allocation7 + $0x10] sm:$0xff]
    %v11008 = vld [vmem:[#allocation7 + $0x18] sm:$0xff]
    %v11009 = vld [vmem:[#allocation7 + $0x20] sm:$0xff]
    %v11010 = vld [vmem:[#allocation7 + $0x28] sm:$0xff]
    %v11011 = vld [vmem:[#allocation7 + $0x30] sm:$0xff]
    %v11012 = vld [vmem:[#allocation7 + $0x38] sm:$0xff]
    %v11013 = vld [vmem:[#allocation7 + $0x40] sm:$0xff]
    %v11014 = vld [vmem:[#allocation7 + $0x48] sm:$0xff]
    %v11015 = vld [vmem:[#allocation7 + $0x50] sm:$0xff]
    %v11016 = vld [vmem:[#allocation7 + $0x58] sm:$0xff]
    %v11017 = vld [vmem:[#allocation7 + $0x60] sm:$0xff]
    %v11018 = vld [vmem:[#allocation7 + $0x68] sm:$0xff]
    %v11019 = vld [vmem:[#allocation7 + $0x70] sm:$0xff]
    %v11020 = vld [vmem:[#allocation7 + $0x78] sm:$0xff]
    %v11021 = vld [vmem:[#allocation7 + $0x80] sm:$0xff]
    %v11022 = vld [vmem:[#allocation7 + $0x88] sm:$0xff]
    %v11023 = vld [vmem:[#allocation7 + $0x90] sm:$0xff]
    %v11024 = vld [vmem:[#allocation7 + $0x98] sm:$0xff]
    %v11025 = vld [vmem:[#allocation7 + $0xa0] sm:$0xff]
    %v11026 = vld [vmem:[#allocation7 + $0xa8] sm:$0xff]
    %v11027 = vld [vmem:[#allocation7 + $0xb0] sm:$0xff]
    %v11028 = vld [vmem:[#allocation7 + $0xb8] sm:$0xff]
    %v11029 = vld [vmem:[#allocation7 + $0xc0] sm:$0xff]
    %v11030 = vld [vmem:[#allocation7 + $0xc8] sm:$0xff]
    %v11031 = vld [vmem:[#allocation7 + $0xd0] sm:$0xff]
    %v11032 = vld [vmem:[#allocation7 + $0xd8] sm:$0xff]
    %v11033 = vld [vmem:[#allocation7 + $0xe0] sm:$0xff]
    %v11034 = vld [vmem:[#allocation7 + $0xe8] sm:$0xff]
    %v11035 = vld [vmem:[#allocation7 + $0xf0] sm:$0xff]
    %v11036 = vld [vmem:[#allocation7 + $0xf8] sm:$0xff]
    %v11037 = vld [vmem:[#allocation7 + $0x100] sm:$0xff]
    %v11038 = vld [vmem:[#allocation7 + $0x108] sm:$0xff]
    %v11039 = vld [vmem:[#allocation7 + $0x110] sm:$0xff]
    %v11040 = vld [vmem:[#allocation7 + $0x118] sm:$0xff]
    %v11041 = vld [vmem:[#allocation7 + $0x120] sm:$0xff]
    %v11042 = vld [vmem:[#allocation7 + $0x128] sm:$0xff]
    %v11043 = vld [vmem:[#allocation7 + $0x130] sm:$0xff]
    %v11044 = vld [vmem:[#allocation7 + $0x138] sm:$0xff]
    %v11045 = vld [vmem:[#allocation7 + $0x140] sm:$0xff]
    %v11046 = vld [vmem:[#allocation7 + $0x148] sm:$0xff]
    %v11047 = vld [vmem:[#allocation7 + $0x150] sm:$0xff]
    %v11048 = vld [vmem:[#allocation7 + $0x158] sm:$0xff]
    %v11049 = vld [vmem:[#allocation7 + $0x160] sm:$0xff]
    %v11050 = vld [vmem:[#allocation7 + $0x168] sm:$0xff]
    %v11051 = vld [vmem:[#allocation7 + $0x170] sm:$0xff]
    %v11052 = vld [vmem:[#allocation7 + $0x178] sm:$0xff]
    %v11053 = vld [vmem:[#allocation7 + $0x180] sm:$0xff]
    %v11054 = vld [vmem:[#allocation7 + $0x188] sm:$0xff]
    %v11055 = vld [vmem:[#allocation7 + $0x190] sm:$0xff]
    %v11056 = vld [vmem:[#allocation7 + $0x198] sm:$0xff]
    %v11057 = vld [vmem:[#allocation7 + $0x1a0] sm:$0xff]
    %v11058 = vld [vmem:[#allocation7 + $0x1a8] sm:$0xff]
    %v11059 = vld [vmem:[#allocation7 + $0x1b0] sm:$0xff]
    %v11060 = vld [vmem:[#allocation7 + $0x1b8] sm:$0xff]
    %v11061 = vld [vmem:[#allocation7 + $0x1c0] sm:$0xff]
    %v11062 = vld [vmem:[#allocation7 + $0x1c8] sm:$0xff]
    %v11063 = vld [vmem:[#allocation7 + $0x1d0] sm:$0xff]
    %v11064 = vld [vmem:[#allocation7 + $0x1d8] sm:$0xff]
    %v11065 = vld [vmem:[#allocation7 + $0x1e0] sm:$0xff]
    %v11066 = vld [vmem:[#allocation7 + $0x1e8] sm:$0xff]
    %v11067 = vld [vmem:[#allocation7 + $0x1f0] sm:$0xff]
    %v11068 = vld [vmem:[#allocation7 + $0x1f8] sm:$0xff]
    %v11069 = vld [vmem:[#allocation7 + $0x200] sm:$0xff]
    %v11070 = vld [vmem:[#allocation7 + $0x208] sm:$0xff]
    %v11071 = vld [vmem:[#allocation7 + $0x210] sm:$0xff]
    %v11072 = vld [vmem:[#allocation7 + $0x218] sm:$0xff]
    %v11073 = vld [vmem:[#allocation7 + $0x220] sm:$0xff]
    %v11074 = vld [vmem:[#allocation7 + $0x228] sm:$0xff]
    %v11075 = vld [vmem:[#allocation7 + $0x230] sm:$0xff]
    %v11076 = vld [vmem:[#allocation7 + $0x238] sm:$0xff]
    %v11077 = vld [vmem:[#allocation7 + $0x240] sm:$0xff]
    %v11078 = vld [vmem:[#allocation7 + $0x248] sm:$0xff]
    %v11079 = vld [vmem:[#allocation7 + $0x250] sm:$0xff]
    %v11080 = vld [vmem:[#allocation7 + $0x258] sm:$0xff]
    %v11081 = vld [vmem:[#allocation7 + $0x260] sm:$0xff]
    %v11082 = vld [vmem:[#allocation7 + $0x268] sm:$0xff]
    %v11083 = vld [vmem:[#allocation7 + $0x270] sm:$0xff]
    %v11084 = vld [vmem:[#allocation7 + $0x278] sm:$0xff]
    %v11085 = vld [vmem:[#allocation7 + $0x280] sm:$0xff]
    %v11086 = vld [vmem:[#allocation7 + $0x288] sm:$0xff]
    %v11087 = vld [vmem:[#allocation7 + $0x290] sm:$0xff]
    %v11088 = vld [vmem:[#allocation7 + $0x298] sm:$0xff]
    %v11089 = vld [vmem:[#allocation7 + $0x2a0] sm:$0xff]
    %v11090 = vld [vmem:[#allocation7 + $0x2a8] sm:$0xff]
    %v11091 = vld [vmem:[#allocation7 + $0x2b0] sm:$0xff]
    %v11092 = vld [vmem:[#allocation7 + $0x2b8] sm:$0xff]
    %v11093 = vld [vmem:[#allocation7 + $0x2c0] sm:$0xff]
    %v11094 = vld [vmem:[#allocation7 + $0x2c8] sm:$0xff]
    %v11095 = vld [vmem:[#allocation7 + $0x2d0] sm:$0xff]
    %v11096 = vld [vmem:[#allocation7 + $0x2d8] sm:$0xff]
    %v11097 = vld [vmem:[#allocation7 + $0x2e0] sm:$0xff]
    %v11098 = vld [vmem:[#allocation7 + $0x2e8] sm:$0xff]
    %v11099 = vld [vmem:[#allocation7 + $0x2f0] sm:$0xff]
    %v11100 = vld [vmem:[#allocation7 + $0x2f8] sm:$0xff]
    %v11101 = vld [vmem:[#allocation7 + $0x300] sm:$0xff]
    %v11102 = vld [vmem:[#allocation7 + $0x308] sm:$0xff]
    %v11103 = vld [vmem:[#allocation7 + $0x310] sm:$0xff]
    %v11104 = vld [vmem:[#allocation7 + $0x318] sm:$0xff]
    %v11105 = vld [vmem:[#allocation7 + $0x320] sm:$0xff]
    %v11106 = vld [vmem:[#allocation7 + $0x328] sm:$0xff]
    %v11107 = vld [vmem:[#allocation7 + $0x330] sm:$0xff]
    %v11108 = vld [vmem:[#allocation7 + $0x338] sm:$0xff]
    %v11109 = vld [vmem:[#allocation7 + $0x340] sm:$0xff]
    %v11110 = vld [vmem:[#allocation7 + $0x348] sm:$0xff]
    %v11111 = vld [vmem:[#allocation7 + $0x350] sm:$0xff]
    %v11112 = vld [vmem:[#allocation7 + $0x358] sm:$0xff]
    %v11113 = vld [vmem:[#allocation7 + $0x360] sm:$0xff]
    %v11114 = vld [vmem:[#allocation7 + $0x368] sm:$0xff]
    %v11115 = vld [vmem:[#allocation7 + $0x370] sm:$0xff]
    %v11116 = vld [vmem:[#allocation7 + $0x378] sm:$0xff]
    %v11117 = vld [vmem:[#allocation7 + $0x380] sm:$0xff]
    %v11118 = vld [vmem:[#allocation7 + $0x388] sm:$0xff]
    %v11119 = vld [vmem:[#allocation7 + $0x390] sm:$0xff]
    %v11120 = vld [vmem:[#allocation7 + $0x398] sm:$0xff]
    %v11121 = vld [vmem:[#allocation7 + $0x3a0] sm:$0xff]
    %v11122 = vld [vmem:[#allocation7 + $0x3a8] sm:$0xff]
    %v11123 = vld [vmem:[#allocation7 + $0x3b0] sm:$0xff]
    %v11124 = vld [vmem:[#allocation7 + $0x3b8] sm:$0xff]
    %v11125 = vld [vmem:[#allocation7 + $0x3c0] sm:$0xff]
    %v11126 = vld [vmem:[#allocation7 + $0x3c8] sm:$0xff]
    %v11127 = vld [vmem:[#allocation7 + $0x3d0] sm:$0xff]
    %v11128 = vld [vmem:[#allocation7 + $0x3d8] sm:$0xff]
    %v11129 = vld [vmem:[#allocation7 + $0x3e0] sm:$0xff]
    %v11130 = vld [vmem:[#allocation7 + $0x3e8] sm:$0xff]
    %v11131 = vld [vmem:[#allocation7 + $0x3f0] sm:$0xff]
    %v11132 = vld [vmem:[#allocation7 + $0x3f8] sm:$0xff]
    %v11133 = vld [vmem:[#allocation7 + $0x400] sm:$0xff]
    %v11134 = vld [vmem:[#allocation7 + $0x408] sm:$0xff]
    %v11135 = vld [vmem:[#allocation7 + $0x410] sm:$0xff]
    %v11136 = vld [vmem:[#allocation7 + $0x418] sm:$0xff]
    %v11137 = vld [vmem:[#allocation7 + $0x420] sm:$0xff]
    %v11138 = vld [vmem:[#allocation7 + $0x428] sm:$0xff]
    %v11139 = vld [vmem:[#allocation7 + $0x430] sm:$0xff]
    %v11140 = vld [vmem:[#allocation7 + $0x438] sm:$0xff]
    %v11141 = vld [vmem:[#allocation7 + $0x440] sm:$0xff]
    %v11142 = vld [vmem:[#allocation7 + $0x448] sm:$0xff]
    %v11143 = vld [vmem:[#allocation7 + $0x450] sm:$0xff]
    %v11144 = vld [vmem:[#allocation7 + $0x458] sm:$0xff]
    %v11145 = vld [vmem:[#allocation7 + $0x460] sm:$0xff]
    %v11146 = vld [vmem:[#allocation7 + $0x468] sm:$0xff]
    %v11147 = vld [vmem:[#allocation7 + $0x470] sm:$0xff]
    %v11148 = vld [vmem:[#allocation7 + $0x478] sm:$0xff]
    %v11149 = vld [vmem:[#allocation7 + $0x480] sm:$0xff]
    %v11150 = vld [vmem:[#allocation7 + $0x488] sm:$0xff]
    %v11151 = vld [vmem:[#allocation7 + $0x490] sm:$0xff]
    %v11152 = vld [vmem:[#allocation7 + $0x498] sm:$0xff]
    %v11153 = vld [vmem:[#allocation7 + $0x4a0] sm:$0xff]
    %v11154 = vld [vmem:[#allocation7 + $0x4a8] sm:$0xff]
    %v11155 = vld [vmem:[#allocation7 + $0x4b0] sm:$0xff]
    %v11156 = vld [vmem:[#allocation7 + $0x4b8] sm:$0xff]
    %v11157 = vld [vmem:[#allocation7 + $0x4c0] sm:$0xff]
    %v11158 = vld [vmem:[#allocation7 + $0x4c8] sm:$0xff]
    %v11159 = vld [vmem:[#allocation7 + $0x4d0] sm:$0xff]
    %v11160 = vld [vmem:[#allocation7 + $0x4d8] sm:$0xff]
    %v11161 = vld [vmem:[#allocation7 + $0x4e0] sm:$0xff]
    %v11162 = vld [vmem:[#allocation7 + $0x4e8] sm:$0xff]
    %v11163 = vld [vmem:[#allocation7 + $0x4f0] sm:$0xff]
    %v11164 = vld [vmem:[#allocation7 + $0x4f8] sm:$0xff]
    %v11165 = vld [vmem:[#allocation7 + $0x500] sm:$0xff]
    %v11166 = vld [vmem:[#allocation7 + $0x508] sm:$0xff]
    %v11167 = vld [vmem:[#allocation7 + $0x510] sm:$0xff]
    %v11168 = vld [vmem:[#allocation7 + $0x518] sm:$0xff]
    %v11169 = vld [vmem:[#allocation7 + $0x520] sm:$0xff]
    %v11170 = vld [vmem:[#allocation7 + $0x528] sm:$0xff]
    %v11171 = vld [vmem:[#allocation7 + $0x530] sm:$0xff]
    %v11172 = vld [vmem:[#allocation7 + $0x538] sm:$0xff]
    %v11173 = vld [vmem:[#allocation7 + $0x540] sm:$0xff]
    %v11174 = vld [vmem:[#allocation7 + $0x548] sm:$0xff]
    %v11175 = vld [vmem:[#allocation7 + $0x550] sm:$0xff]
    %v11176 = vld [vmem:[#allocation7 + $0x558] sm:$0xff]
    %v11177 = vld [vmem:[#allocation7 + $0x560] sm:$0xff]
    %v11178 = vld [vmem:[#allocation7 + $0x568] sm:$0xff]
    %v11179 = vld [vmem:[#allocation7 + $0x570] sm:$0xff]
    %v11180 = vld [vmem:[#allocation7 + $0x578] sm:$0xff]
    %v11181 = vld [vmem:[#allocation7 + $0x580] sm:$0xff]
    %v11182 = vld [vmem:[#allocation7 + $0x588] sm:$0xff]
    %v11183 = vld [vmem:[#allocation7 + $0x590] sm:$0xff]
    %v11184 = vld [vmem:[#allocation7 + $0x598] sm:$0xff]
    %v11185 = vld [vmem:[#allocation7 + $0x5a0] sm:$0xff]
    %v11186 = vld [vmem:[#allocation7 + $0x5a8] sm:$0xff]
    %v11187 = vld [vmem:[#allocation7 + $0x5b0] sm:$0xff]
    %v11188 = vld [vmem:[#allocation7 + $0x5b8] sm:$0xff]
    %v11189 = vld [vmem:[#allocation7 + $0x5c0] sm:$0xff]
    %v11190 = vld [vmem:[#allocation7 + $0x5c8] sm:$0xff]
    %v11191 = vld [vmem:[#allocation7 + $0x5d0] sm:$0xff]
    %v11192 = vld [vmem:[#allocation7 + $0x5d8] sm:$0xff]
    %v11193 = vld [vmem:[#allocation7 + $0x5e0] sm:$0xff]
    %v11194 = vld [vmem:[#allocation7 + $0x5e8] sm:$0xff]
    %v11195 = vld [vmem:[#allocation7 + $0x5f0] sm:$0xff]
    %v11196 = vld [vmem:[#allocation7 + $0x5f8] sm:$0xff]
    %v11197 = vld [vmem:[#allocation7 + $0x600] sm:$0xff]
    %v11198 = vld [vmem:[#allocation7 + $0x608] sm:$0xff]
    %v11199 = vld [vmem:[#allocation7 + $0x610] sm:$0xff]
    %v11200 = vld [vmem:[#allocation7 + $0x618] sm:$0xff]
    %v11201 = vld [vmem:[#allocation7 + $0x620] sm:$0xff]
    %v11202 = vld [vmem:[#allocation7 + $0x628] sm:$0xff]
    %v11203 = vld [vmem:[#allocation7 + $0x630] sm:$0xff]
    %v11204 = vld [vmem:[#allocation7 + $0x638] sm:$0xff]
    %v11205 = vld [vmem:[#allocation7 + $0x640] sm:$0xff]
    %v11206 = vld [vmem:[#allocation7 + $0x648] sm:$0xff]
    %v11207 = vld [vmem:[#allocation7 + $0x650] sm:$0xff]
    %v11208 = vld [vmem:[#allocation7 + $0x658] sm:$0xff]
    %v11209 = vld [vmem:[#allocation7 + $0x660] sm:$0xff]
    %v11210 = vld [vmem:[#allocation7 + $0x668] sm:$0xff]
    %v11211 = vld [vmem:[#allocation7 + $0x670] sm:$0xff]
    %v11212 = vld [vmem:[#allocation7 + $0x678] sm:$0xff]
    %v11213 = vld [vmem:[#allocation7 + $0x680] sm:$0xff]
    %v11214 = vld [vmem:[#allocation7 + $0x688] sm:$0xff]
    %v11215 = vld [vmem:[#allocation7 + $0x690] sm:$0xff]
    %v11216 = vld [vmem:[#allocation7 + $0x698] sm:$0xff]
    %v11217 = vld [vmem:[#allocation7 + $0x6a0] sm:$0xff]
    %v11218 = vld [vmem:[#allocation7 + $0x6a8] sm:$0xff]
    %v11219 = vld [vmem:[#allocation7 + $0x6b0] sm:$0xff]
    %v11220 = vld [vmem:[#allocation7 + $0x6b8] sm:$0xff]
    %v11221 = vld [vmem:[#allocation7 + $0x6c0] sm:$0xff]
    %v11222 = vld [vmem:[#allocation7 + $0x6c8] sm:$0xff]
    %v11223 = vld [vmem:[#allocation7 + $0x6d0] sm:$0xff]
    %v11224 = vld [vmem:[#allocation7 + $0x6d8] sm:$0xff]
    %v11225 = vld [vmem:[#allocation7 + $0x6e0] sm:$0xff]
    %v11226 = vld [vmem:[#allocation7 + $0x6e8] sm:$0xff]
    %v11227 = vld [vmem:[#allocation7 + $0x6f0] sm:$0xff]
    %v11228 = vld [vmem:[#allocation7 + $0x6f8] sm:$0xff]
    %v11229 = vld [vmem:[#allocation7 + $0x700] sm:$0xff]
    %v11230 = vld [vmem:[#allocation7 + $0x708] sm:$0xff]
    %v11231 = vld [vmem:[#allocation7 + $0x710] sm:$0xff]
    %v11232 = vld [vmem:[#allocation7 + $0x718] sm:$0xff]
    %v11233 = vld [vmem:[#allocation7 + $0x720] sm:$0xff]
    %v11234 = vld [vmem:[#allocation7 + $0x728] sm:$0xff]
    %v11235 = vld [vmem:[#allocation7 + $0x730] sm:$0xff]
    %v11236 = vld [vmem:[#allocation7 + $0x738] sm:$0xff]
    %v11237 = vld [vmem:[#allocation7 + $0x740] sm:$0xff]
    %v11238 = vld [vmem:[#allocation7 + $0x748] sm:$0xff]
    %v11239 = vld [vmem:[#allocation7 + $0x750] sm:$0xff]
    %v11240 = vld [vmem:[#allocation7 + $0x758] sm:$0xff]
    %v11241 = vld [vmem:[#allocation7 + $0x760] sm:$0xff]
    %v11242 = vld [vmem:[#allocation7 + $0x768] sm:$0xff]
    %v11243 = vld [vmem:[#allocation7 + $0x770] sm:$0xff]
    %v11244 = vld [vmem:[#allocation7 + $0x778] sm:$0xff]
    %v11245 = vld [vmem:[#allocation7 + $0x780] sm:$0xff]
    %v11246 = vld [vmem:[#allocation7 + $0x788] sm:$0xff]
    %v11247 = vld [vmem:[#allocation7 + $0x790] sm:$0xff]
    %v11248 = vld [vmem:[#allocation7 + $0x798] sm:$0xff]
    %v11249 = vld [vmem:[#allocation7 + $0x7a0] sm:$0xff]
    %v11250 = vld [vmem:[#allocation7 + $0x7a8] sm:$0xff]
    %v11251 = vld [vmem:[#allocation7 + $0x7b0] sm:$0xff]
    %v11252 = vld [vmem:[#allocation7 + $0x7b8] sm:$0xff]
    %v11253 = vld [vmem:[#allocation7 + $0x7c0] sm:$0xff]
    %v11254 = vld [vmem:[#allocation7 + $0x7c8] sm:$0xff]
    %v11255 = vld [vmem:[#allocation7 + $0x7d0] sm:$0xff]
    %v11256 = vld [vmem:[#allocation7 + $0x7d8] sm:$0xff]
    %v11257 = vld [vmem:[#allocation7 + $0x7e0] sm:$0xff]
    %v11258 = vld [vmem:[#allocation7 + $0x7e8] sm:$0xff]
    %v11259 = vld [vmem:[#allocation7 + $0x7f0] sm:$0xff]
    %v11260 = vld [vmem:[#allocation7 + $0x7f8] sm:$0xff]
    %v11261 = vld [vmem:[#allocation7 + $0x800] sm:$0xff]
    %v11262 = vld [vmem:[#allocation7 + $0x808] sm:$0xff]
    %v11263 = vld [vmem:[#allocation7 + $0x810] sm:$0xff]
    %v11264 = vld [vmem:[#allocation7 + $0x818] sm:$0xff]
    %v11265 = vld [vmem:[#allocation7 + $0x820] sm:$0xff]
    %v11266 = vld [vmem:[#allocation7 + $0x828] sm:$0xff]
    %v11267 = vld [vmem:[#allocation7 + $0x830] sm:$0xff]
    %v11268 = vld [vmem:[#allocation7 + $0x838] sm:$0xff]
    %v11269 = vld [vmem:[#allocation7 + $0x840] sm:$0xff]
    %v11270 = vld [vmem:[#allocation7 + $0x848] sm:$0xff]
    %v11271 = vld [vmem:[#allocation7 + $0x850] sm:$0xff]
    %v11272 = vld [vmem:[#allocation7 + $0x858] sm:$0xff]
    %v11273 = vld [vmem:[#allocation7 + $0x860] sm:$0xff]
    %v11274 = vld [vmem:[#allocation7 + $0x868] sm:$0xff]
    %v11275 = vld [vmem:[#allocation7 + $0x870] sm:$0xff]
    %v11276 = vld [vmem:[#allocation7 + $0x878] sm:$0xff]
    %v11277 = vld [vmem:[#allocation7 + $0x880] sm:$0xff]
    %v11278 = vld [vmem:[#allocation7 + $0x888] sm:$0xff]
    %v11279 = vld [vmem:[#allocation7 + $0x890] sm:$0xff]
    %v11280 = vld [vmem:[#allocation7 + $0x898] sm:$0xff]
    %v11281 = vld [vmem:[#allocation7 + $0x8a0] sm:$0xff]
    %v11282 = vld [vmem:[#allocation7 + $0x8a8] sm:$0xff]
    %v11283 = vld [vmem:[#allocation7 + $0x8b0] sm:$0xff]
    %v11284 = vld [vmem:[#allocation7 + $0x8b8] sm:$0xff]
    %v11285 = vld [vmem:[#allocation7 + $0x8c0] sm:$0xff]
    %v11286 = vld [vmem:[#allocation7 + $0x8c8] sm:$0xff]
    %v11287 = vld [vmem:[#allocation7 + $0x8d0] sm:$0xff]
    %v11288 = vld [vmem:[#allocation7 + $0x8d8] sm:$0xff]
    %v11289 = vld [vmem:[#allocation7 + $0x8e0] sm:$0xff]
    %v11290 = vld [vmem:[#allocation7 + $0x8e8] sm:$0xff]
    %v11291 = vld [vmem:[#allocation7 + $0x8f0] sm:$0xff]
    %v11292 = vld [vmem:[#allocation7 + $0x8f8] sm:$0xff]
    %v11293 = vld [vmem:[#allocation7 + $0x900] sm:$0xff]
    %v11294 = vld [vmem:[#allocation7 + $0x908] sm:$0xff]
    %v11295 = vld [vmem:[#allocation7 + $0x910] sm:$0xff]
    %v11296 = vld [vmem:[#allocation7 + $0x918] sm:$0xff]
    %v11297 = vld [vmem:[#allocation7 + $0x920] sm:$0xff]
    %v11298 = vld [vmem:[#allocation7 + $0x928] sm:$0xff]
    %v11299 = vld [vmem:[#allocation7 + $0x930] sm:$0xff]
    %v11300 = vld [vmem:[#allocation7 + $0x938] sm:$0xff]
    %v11301 = vld [vmem:[#allocation7 + $0x940] sm:$0xff]
    %v11302 = vld [vmem:[#allocation7 + $0x948] sm:$0xff]
    %v11303 = vld [vmem:[#allocation7 + $0x950] sm:$0xff]
    %v11304 = vld [vmem:[#allocation7 + $0x958] sm:$0xff]
    %v11305 = vld [vmem:[#allocation7 + $0x960] sm:$0xff]
    %v11306 = vld [vmem:[#allocation7 + $0x968] sm:$0xff]
    %v11307 = vld [vmem:[#allocation7 + $0x970] sm:$0xff]
    %v11308 = vld [vmem:[#allocation7 + $0x978] sm:$0xff]
    %v11309 = vld [vmem:[#allocation7 + $0x980] sm:$0xff]
    %v11310 = vld [vmem:[#allocation7 + $0x988] sm:$0xff]
    %v11311 = vld [vmem:[#allocation7 + $0x990] sm:$0xff]
    %v11312 = vld [vmem:[#allocation7 + $0x998] sm:$0xff]
    %v11313 = vld [vmem:[#allocation7 + $0x9a0] sm:$0xff]
    %v11314 = vld [vmem:[#allocation7 + $0x9a8] sm:$0xff]
    %v11315 = vld [vmem:[#allocation7 + $0x9b0] sm:$0xff]
    %v11316 = vld [vmem:[#allocation7 + $0x9b8] sm:$0xff]
    %v11317 = vld [vmem:[#allocation7 + $0x9c0] sm:$0xff]
    %v11318 = vld [vmem:[#allocation7 + $0x9c8] sm:$0xff]
    %v11319 = vld [vmem:[#allocation7 + $0x9d0] sm:$0xff]
    %v11320 = vld [vmem:[#allocation7 + $0x9d8] sm:$0xff]
    %v11321 = vld [vmem:[#allocation7 + $0x9e0] sm:$0xff]
    %v11322 = vld [vmem:[#allocation7 + $0x9e8] sm:$0xff]
    %v11323 = vld [vmem:[#allocation7 + $0x9f0] sm:$0xff]
    %v11324 = vld [vmem:[#allocation7 + $0x9f8] sm:$0xff]
    %v11325 = vld [vmem:[#allocation7 + $0xa00] sm:$0xff]
    %v11326 = vld [vmem:[#allocation7 + $0xa08] sm:$0xff]
    %v11327 = vld [vmem:[#allocation7 + $0xa10] sm:$0xff]
    %v11328 = vld [vmem:[#allocation7 + $0xa18] sm:$0xff]
    %v11329 = vld [vmem:[#allocation7 + $0xa20] sm:$0xff]
    %v11330 = vld [vmem:[#allocation7 + $0xa28] sm:$0xff]
    %v11331 = vld [vmem:[#allocation7 + $0xa30] sm:$0xff]
    %v11332 = vld [vmem:[#allocation7 + $0xa38] sm:$0xff]
    %v11333 = vld [vmem:[#allocation7 + $0xa40] sm:$0xff]
    %v11334 = vld [vmem:[#allocation7 + $0xa48] sm:$0xff]
    %v11335 = vld [vmem:[#allocation7 + $0xa50] sm:$0xff]
    %v11336 = vld [vmem:[#allocation7 + $0xa58] sm:$0xff]
    %v11337 = vld [vmem:[#allocation7 + $0xa60] sm:$0xff]
    %v11338 = vld [vmem:[#allocation7 + $0xa68] sm:$0xff]
    %v11339 = vld [vmem:[#allocation7 + $0xa70] sm:$0xff]
    %v11340 = vld [vmem:[#allocation7 + $0xa78] sm:$0xff]
    %v11341 = vld [vmem:[#allocation7 + $0xa80] sm:$0xff]
    %v11342 = vld [vmem:[#allocation7 + $0xa88] sm:$0xff]
    %v11343 = vld [vmem:[#allocation7 + $0xa90] sm:$0xff]
    %v11344 = vld [vmem:[#allocation7 + $0xa98] sm:$0xff]
    %v11345 = vld [vmem:[#allocation7 + $0xaa0] sm:$0xff]
    %v11346 = vld [vmem:[#allocation7 + $0xaa8] sm:$0xff]
    %v11347 = vld [vmem:[#allocation7 + $0xab0] sm:$0xff]
    %v11348 = vld [vmem:[#allocation7 + $0xab8] sm:$0xff]
    %v11349 = vld [vmem:[#allocation7 + $0xac0] sm:$0xff]
    %v11350 = vld [vmem:[#allocation7 + $0xac8] sm:$0xff]
    %v11351 = vld [vmem:[#allocation7 + $0xad0] sm:$0xff]
    %v11352 = vld [vmem:[#allocation7 + $0xad8] sm:$0xff]
    %v11353 = vld [vmem:[#allocation7 + $0xae0] sm:$0xff]
    %v11354 = vld [vmem:[#allocation7 + $0xae8] sm:$0xff]
    %v11355 = vld [vmem:[#allocation7 + $0xaf0] sm:$0xff]
    %v11356 = vld [vmem:[#allocation7 + $0xaf8] sm:$0xff]
    %v11357 = vld [vmem:[#allocation7 + $0xb00] sm:$0xff]
    %v11358 = vld [vmem:[#allocation7 + $0xb08] sm:$0xff]
    %v11359 = vld [vmem:[#allocation7 + $0xb10] sm:$0xff]
    %v11360 = vld [vmem:[#allocation7 + $0xb18] sm:$0xff]
    %v11361 = vld [vmem:[#allocation7 + $0xb20] sm:$0xff]
    %v11362 = vld [vmem:[#allocation7 + $0xb28] sm:$0xff]
    %v11363 = vld [vmem:[#allocation7 + $0xb30] sm:$0xff]
    %v11364 = vld [vmem:[#allocation7 + $0xb38] sm:$0xff]
    %v11365 = vld [vmem:[#allocation7 + $0xb40] sm:$0xff]
    %v11366 = vld [vmem:[#allocation7 + $0xb48] sm:$0xff]
    %v11367 = vld [vmem:[#allocation7 + $0xb50] sm:$0xff]
    %v11368 = vld [vmem:[#allocation7 + $0xb58] sm:$0xff]
    %v11369 = vld [vmem:[#allocation7 + $0xb60] sm:$0xff]
    %v11370 = vld [vmem:[#allocation7 + $0xb68] sm:$0xff]
    %v11371 = vld [vmem:[#allocation7 + $0xb70] sm:$0xff]
    %v11372 = vld [vmem:[#allocation7 + $0xb78] sm:$0xff]
    %v11373 = vld [vmem:[#allocation7 + $0xb80] sm:$0xff]
    %v11374 = vld [vmem:[#allocation7 + $0xb88] sm:$0xff]
    %v11375 = vld [vmem:[#allocation7 + $0xb90] sm:$0xff]
    %v11376 = vld [vmem:[#allocation7 + $0xb98] sm:$0xff]
    %v11377 = vld [vmem:[#allocation7 + $0xba0] sm:$0xff]
    %v11378 = vld [vmem:[#allocation7 + $0xba8] sm:$0xff]
    %v11379 = vld [vmem:[#allocation7 + $0xbb0] sm:$0xff]
    %v11380 = vld [vmem:[#allocation7 + $0xbb8] sm:$0xff]
    %v11381 = vld [vmem:[#allocation7 + $0xbc0] sm:$0xff]
    %v11382 = vld [vmem:[#allocation7 + $0xbc8] sm:$0xff]
    %v11383 = vld [vmem:[#allocation7 + $0xbd0] sm:$0xff]
    %v11384 = vld [vmem:[#allocation7 + $0xbd8] sm:$0xff]
    %v11385 = vld [vmem:[#allocation7 + $0xbe0] sm:$0xff]
    %v11386 = vld [vmem:[#allocation7 + $0xbe8] sm:$0xff]
    %v11387 = vld [vmem:[#allocation7 + $0xbf0] sm:$0xff]
    %v11388 = vld [vmem:[#allocation7 + $0xbf8] sm:$0xff]
    %v11389 = vld [vmem:[#allocation7 + $0xc00] sm:$0xff]
    %v11390 = vld [vmem:[#allocation7 + $0xc08] sm:$0xff]
    %v11391 = vld [vmem:[#allocation7 + $0xc10] sm:$0xff]
    %v11392 = vld [vmem:[#allocation7 + $0xc18] sm:$0xff]
    %v11393 = vld [vmem:[#allocation7 + $0xc20] sm:$0xff]
    %v11394 = vld [vmem:[#allocation7 + $0xc28] sm:$0xff]
    %v11395 = vld [vmem:[#allocation7 + $0xc30] sm:$0xff]
    %v11396 = vld [vmem:[#allocation7 + $0xc38] sm:$0xff]
    %v11397 = vld [vmem:[#allocation7 + $0xc40] sm:$0xff]
    %v11398 = vld [vmem:[#allocation7 + $0xc48] sm:$0xff]
    %v11399 = vld [vmem:[#allocation7 + $0xc50] sm:$0xff]
    %v11400 = vld [vmem:[#allocation7 + $0xc58] sm:$0xff]
    %v11401 = vld [vmem:[#allocation7 + $0xc60] sm:$0xff]
    %v11402 = vld [vmem:[#allocation7 + $0xc68] sm:$0xff]
    %v11403 = vld [vmem:[#allocation7 + $0xc70] sm:$0xff]
    %v11404 = vld [vmem:[#allocation7 + $0xc78] sm:$0xff]
    %v11405 = vld [vmem:[#allocation7 + $0xc80] sm:$0xff]
    %v11406 = vld [vmem:[#allocation7 + $0xc88] sm:$0xff]
    %v11407 = vld [vmem:[#allocation7 + $0xc90] sm:$0xff]
    %v11408 = vld [vmem:[#allocation7 + $0xc98] sm:$0xff]
    %v11409 = vld [vmem:[#allocation7 + $0xca0] sm:$0xff]
    %v11410 = vld [vmem:[#allocation7 + $0xca8] sm:$0xff]
    %v11411 = vld [vmem:[#allocation7 + $0xcb0] sm:$0xff]
    %v11412 = vld [vmem:[#allocation7 + $0xcb8] sm:$0xff]
    %v11413 = vld [vmem:[#allocation7 + $0xcc0] sm:$0xff]
    %v11414 = vld [vmem:[#allocation7 + $0xcc8] sm:$0xff]
    %v11415 = vld [vmem:[#allocation7 + $0xcd0] sm:$0xff]
    %v11416 = vld [vmem:[#allocation7 + $0xcd8] sm:$0xff]
    %v11417 = vld [vmem:[#allocation7 + $0xce0] sm:$0xff]
    %v11418 = vld [vmem:[#allocation7 + $0xce8] sm:$0xff]
    %v11419 = vld [vmem:[#allocation7 + $0xcf0] sm:$0xff]
    %v11420 = vld [vmem:[#allocation7 + $0xcf8] sm:$0xff]
    %v11421 = vld [vmem:[#allocation7 + $0xd00] sm:$0xff]
    %v11422 = vld [vmem:[#allocation7 + $0xd08] sm:$0xff]
    %v11423 = vld [vmem:[#allocation7 + $0xd10] sm:$0xff]
    %v11424 = vld [vmem:[#allocation7 + $0xd18] sm:$0xff]
    %v11425 = vld [vmem:[#allocation7 + $0xd20] sm:$0xff]
    %v11426 = vld [vmem:[#allocation7 + $0xd28] sm:$0xff]
    %v11427 = vld [vmem:[#allocation7 + $0xd30] sm:$0xff]
    %v11428 = vld [vmem:[#allocation7 + $0xd38] sm:$0xff]
    %v11429 = vld [vmem:[#allocation7 + $0xd40] sm:$0xff]
    %v11430 = vld [vmem:[#allocation7 + $0xd48] sm:$0xff]
    %v11431 = vld [vmem:[#allocation7 + $0xd50] sm:$0xff]
    %v11432 = vld [vmem:[#allocation7 + $0xd58] sm:$0xff]
    %v11433 = vld [vmem:[#allocation7 + $0xd60] sm:$0xff]
    %v11434 = vld [vmem:[#allocation7 + $0xd68] sm:$0xff]
    %v11435 = vld [vmem:[#allocation7 + $0xd70] sm:$0xff]
    %v11436 = vld [vmem:[#allocation7 + $0xd78] sm:$0xff]
    %v11437 = vld [vmem:[#allocation7 + $0xd80] sm:$0xff]
    %v11438 = vld [vmem:[#allocation7 + $0xd88] sm:$0xff]
    %v11439 = vld [vmem:[#allocation7 + $0xd90] sm:$0xff]
    %v11440 = vld [vmem:[#allocation7 + $0xd98] sm:$0xff]
    %v11441 = vld [vmem:[#allocation7 + $0xda0] sm:$0xff]
    %v11442 = vld [vmem:[#allocation7 + $0xda8] sm:$0xff]
    %v11443 = vld [vmem:[#allocation7 + $0xdb0] sm:$0xff]
    %v11444 = vld [vmem:[#allocation7 + $0xdb8] sm:$0xff]
    %v11445 = vld [vmem:[#allocation7 + $0xdc0] sm:$0xff]
    %v11446 = vld [vmem:[#allocation7 + $0xdc8] sm:$0xff]
    %v11447 = vld [vmem:[#allocation7 + $0xdd0] sm:$0xff]
    %v11448 = vld [vmem:[#allocation7 + $0xdd8] sm:$0xff]
    %v11449 = vld [vmem:[#allocation7 + $0xde0] sm:$0xff]
    %v11450 = vld [vmem:[#allocation7 + $0xde8] sm:$0xff]
    %v11451 = vld [vmem:[#allocation7 + $0xdf0] sm:$0xff]
    %v11452 = vld [vmem:[#allocation7 + $0xdf8] sm:$0xff]
    %v11901 = vunpack.c.l.b16 %v11005
    %v11902 = vunpack.c.h.b16 %v11005
    %v11903 = vunpack.c.l.b16 %v11006
    %v11904 = vunpack.c.h.b16 %v11006
    %v11905 = vunpack.c.l.b16 %v11007
    %v11906 = vunpack.c.h.b16 %v11007
    %v11907 = vunpack.c.l.b16 %v11008
    %v11908 = vunpack.c.h.b16 %v11008
    %v11909 = vunpack.c.l.b16 %v11009
    %v11910 = vunpack.c.h.b16 %v11009
    %v11911 = vunpack.c.l.b16 %v11010
    %v11912 = vunpack.c.h.b16 %v11010
    %v11913 = vunpack.c.l.b16 %v11011
    %v11914 = vunpack.c.h.b16 %v11011
    %v11915 = vunpack.c.l.b16 %v11012
    %v11916 = vunpack.c.h.b16 %v11012
    %v11917 = vunpack.c.l.b16 %v11013
    %v11918 = vunpack.c.h.b16 %v11013
    %v11919 = vunpack.c.l.b16 %v11014
    %v11920 = vunpack.c.h.b16 %v11014
    %v11921 = vunpack.c.l.b16 %v11015
    %v11922 = vunpack.c.h.b16 %v11015
    %v11923 = vunpack.c.l.b16 %v11016
    %v11924 = vunpack.c.h.b16 %v11016
    %v11925 = vunpack.c.l.b16 %v11017
    %v11926 = vunpack.c.h.b16 %v11017
    %v11927 = vunpack.c.l.b16 %v11018
    %v11928 = vunpack.c.h.b16 %v11018
    %v11929 = vunpack.c.l.b16 %v11019
    %v11930 = vunpack.c.h.b16 %v11019
    %v11931 = vunpack.c.l.b16 %v11020
    %v11932 = vunpack.c.h.b16 %v11020
    %v11933 = vunpack.c.l.b16 %v11021
    %v11934 = vunpack.c.h.b16 %v11021
    %v11935 = vunpack.c.l.b16 %v11022
    %v11936 = vunpack.c.h.b16 %v11022
    %v11937 = vunpack.c.l.b16 %v11023
    %v11938 = vunpack.c.h.b16 %v11023
    %v11939 = vunpack.c.l.b16 %v11024
    %v11940 = vunpack.c.h.b16 %v11024
    %v11941 = vunpack.c.l.b16 %v11025
    %v11942 = vunpack.c.h.b16 %v11025
    %v11943 = vunpack.c.l.b16 %v11026
    %v11944 = vunpack.c.h.b16 %v11026
    %v11945 = vunpack.c.l.b16 %v11027
    %v11946 = vunpack.c.h.b16 %v11027
    %v11947 = vunpack.c.l.b16 %v11028
    %v11948 = vunpack.c.h.b16 %v11028
    %v11949 = vunpack.c.l.b16 %v11029
    %v11950 = vunpack.c.h.b16 %v11029
    %v11951 = vunpack.c.l.b16 %v11030
    %v11952 = vunpack.c.h.b16 %v11030
    %v11953 = vunpack.c.l.b16 %v11031
    %v11954 = vunpack.c.h.b16 %v11031
    %v11955 = vunpack.c.l.b16 %v11032
    %v11956 = vunpack.c.h.b16 %v11032
    %v11957 = vunpack.c.l.b16 %v11033
    %v11958 = vunpack.c.h.b16 %v11033
    %v11959 = vunpack.c.l.b16 %v11034
    %v11960 = vunpack.c.h.b16 %v11034
    %v11961 = vunpack.c.l.b16 %v11035
    %v11962 = vunpack.c.h.b16 %v11035
    %v11963 = vunpack.c.l.b16 %v11036
    %v11964 = vunpack.c.h.b16 %v11036
    %v11965 = vunpack.c.l.b16 %v11037
    %v11966 = vunpack.c.h.b16 %v11037
    %v11967 = vunpack.c.l.b16 %v11038
    %v11968 = vunpack.c.h.b16 %v11038
    %v11969 = vunpack.c.l.b16 %v11039
    %v11970 = vunpack.c.h.b16 %v11039
    %v11971 = vunpack.c.l.b16 %v11040
    %v11972 = vunpack.c.h.b16 %v11040
    %v11973 = vunpack.c.l.b16 %v11041
    %v11974 = vunpack.c.h.b16 %v11041
    %v11975 = vunpack.c.l.b16 %v11042
    %v11976 = vunpack.c.h.b16 %v11042
    %v11977 = vunpack.c.l.b16 %v11043
    %v11978 = vunpack.c.h.b16 %v11043
    %v11979 = vunpack.c.l.b16 %v11044
    %v11980 = vunpack.c.h.b16 %v11044
    %v11981 = vunpack.c.l.b16 %v11045
    %v11982 = vunpack.c.h.b16 %v11045
    %v11983 = vunpack.c.l.b16 %v11046
    %v11984 = vunpack.c.h.b16 %v11046
    %v11985 = vunpack.c.l.b16 %v11047
    %v11986 = vunpack.c.h.b16 %v11047
    %v11987 = vunpack.c.l.b16 %v11048
    %v11988 = vunpack.c.h.b16 %v11048
    %v11989 = vunpack.c.l.b16 %v11049
    %v11990 = vunpack.c.h.b16 %v11049
    %v11991 = vunpack.c.l.b16 %v11050
    %v11992 = vunpack.c.h.b16 %v11050
    %v11993 = vunpack.c.l.b16 %v11051
    %v11994 = vunpack.c.h.b16 %v11051
    %v11995 = vunpack.c.l.b16 %v11052
    %v11996 = vunpack.c.h.b16 %v11052
    %v11997 = vunpack.c.l.b16 %v11053
    %v11998 = vunpack.c.h.b16 %v11053
    %v11999 = vunpack.c.l.b16 %v11054
    %v12000 = vunpack.c.h.b16 %v11054
    %v12001 = vunpack.c.l.b16 %v11055
    %v12002 = vunpack.c.h.b16 %v11055
    %v12003 = vunpack.c.l.b16 %v11056
    %v12004 = vunpack.c.h.b16 %v11056
    %v12005 = vunpack.c.l.b16 %v11057
    %v12006 = vunpack.c.h.b16 %v11057
    %v12007 = vunpack.c.l.b16 %v11058
    %v12008 = vunpack.c.h.b16 %v11058
    %v12009 = vunpack.c.l.b16 %v11059
    %v12010 = vunpack.c.h.b16 %v11059
    %v12011 = vunpack.c.l.b16 %v11060
    %v12012 = vunpack.c.h.b16 %v11060
    %v12013 = vunpack.c.l.b16 %v11061
    %v12014 = vunpack.c.h.b16 %v11061
    %v12015 = vunpack.c.l.b16 %v11062
    %v12016 = vunpack.c.h.b16 %v11062
    %v12017 = vunpack.c.l.b16 %v11063
    %v12018 = vunpack.c.h.b16 %v11063
    %v12019 = vunpack.c.l.b16 %v11064
    %v12020 = vunpack.c.h.b16 %v11064
    %v12021 = vunpack.c.l.b16 %v11065
    %v12022 = vunpack.c.h.b16 %v11065
    %v12023 = vunpack.c.l.b16 %v11066
    %v12024 = vunpack.c.h.b16 %v11066
    %v12025 = vunpack.c.l.b16 %v11067
    %v12026 = vunpack.c.h.b16 %v11067
    %v12027 = vunpack.c.l.b16 %v11068
    %v12028 = vunpack.c.h.b16 %v11068
    %v12029 = vunpack.c.l.b16 %v11069
    %v12030 = vunpack.c.h.b16 %v11069
    %v12031 = vunpack.c.l.b16 %v11070
    %v12032 = vunpack.c.h.b16 %v11070
    %v12033 = vunpack.c.l.b16 %v11071
    %v12034 = vunpack.c.h.b16 %v11071
    %v12035 = vunpack.c.l.b16 %v11072
    %v12036 = vunpack.c.h.b16 %v11072
    %v12037 = vunpack.c.l.b16 %v11073
    %v12038 = vunpack.c.h.b16 %v11073
    %v12039 = vunpack.c.l.b16 %v11074
    %v12040 = vunpack.c.h.b16 %v11074
    %v12041 = vunpack.c.l.b16 %v11075
    %v12042 = vunpack.c.h.b16 %v11075
    %v12043 = vunpack.c.l.b16 %v11076
    %v12044 = vunpack.c.h.b16 %v11076
    %v12045 = vunpack.c.l.b16 %v11077
    %v12046 = vunpack.c.h.b16 %v11077
    %v12047 = vunpack.c.l.b16 %v11078
    %v12048 = vunpack.c.h.b16 %v11078
    %v12049 = vunpack.c.l.b16 %v11079
    %v12050 = vunpack.c.h.b16 %v11079
    %v12051 = vunpack.c.l.b16 %v11080
    %v12052 = vunpack.c.h.b16 %v11080
    %v12053 = vunpack.c.l.b16 %v11081
    %v12054 = vunpack.c.h.b16 %v11081
    %v12055 = vunpack.c.l.b16 %v11082
    %v12056 = vunpack.c.h.b16 %v11082
    %v12057 = vunpack.c.l.b16 %v11083
    %v12058 = vunpack.c.h.b16 %v11083
    %v12059 = vunpack.c.l.b16 %v11084
    %v12060 = vunpack.c.h.b16 %v11084
    %v12061 = vunpack.c.l.b16 %v11085
    %v12062 = vunpack.c.h.b16 %v11085
    %v12063 = vunpack.c.l.b16 %v11086
    %v12064 = vunpack.c.h.b16 %v11086
    %v12065 = vunpack.c.l.b16 %v11087
    %v12066 = vunpack.c.h.b16 %v11087
    %v12067 = vunpack.c.l.b16 %v11088
    %v12068 = vunpack.c.h.b16 %v11088
    %v12069 = vunpack.c.l.b16 %v11089
    %v12070 = vunpack.c.h.b16 %v11089
    %v12071 = vunpack.c.l.b16 %v11090
    %v12072 = vunpack.c.h.b16 %v11090
    %v12073 = vunpack.c.l.b16 %v11091
    %v12074 = vunpack.c.h.b16 %v11091
    %v12075 = vunpack.c.l.b16 %v11092
    %v12076 = vunpack.c.h.b16 %v11092
    %v12077 = vunpack.c.l.b16 %v11093
    %v12078 = vunpack.c.h.b16 %v11093
    %v12079 = vunpack.c.l.b16 %v11094
    %v12080 = vunpack.c.h.b16 %v11094
    %v12081 = vunpack.c.l.b16 %v11095
    %v12082 = vunpack.c.h.b16 %v11095
    %v12083 = vunpack.c.l.b16 %v11096
    %v12084 = vunpack.c.h.b16 %v11096
    %v12085 = vunpack.c.l.b16 %v11097
    %v12086 = vunpack.c.h.b16 %v11097
    %v12087 = vunpack.c.l.b16 %v11098
    %v12088 = vunpack.c.h.b16 %v11098
    %v12089 = vunpack.c.l.b16 %v11099
    %v12090 = vunpack.c.h.b16 %v11099
    %v12091 = vunpack.c.l.b16 %v11100
    %v12092 = vunpack.c.h.b16 %v11100
    %v12093 = vunpack.c.l.b16 %v11101
    %v12094 = vunpack.c.h.b16 %v11101
    %v12095 = vunpack.c.l.b16 %v11102
    %v12096 = vunpack.c.h.b16 %v11102
    %v12097 = vunpack.c.l.b16 %v11103
    %v12098 = vunpack.c.h.b16 %v11103
    %v12099 = vunpack.c.l.b16 %v11104
    %v12100 = vunpack.c.h.b16 %v11104
    %v12101 = vunpack.c.l.b16 %v11105
    %v12102 = vunpack.c.h.b16 %v11105
    %v12103 = vunpack.c.l.b16 %v11106
    %v12104 = vunpack.c.h.b16 %v11106
    %v12105 = vunpack.c.l.b16 %v11107
    %v12106 = vunpack.c.h.b16 %v11107
    %v12107 = vunpack.c.l.b16 %v11108
    %v12108 = vunpack.c.h.b16 %v11108
    %v12109 = vunpack.c.l.b16 %v11109
    %v12110 = vunpack.c.h.b16 %v11109
    %v12111 = vunpack.c.l.b16 %v11110
    %v12112 = vunpack.c.h.b16 %v11110
    %v12113 = vunpack.c.l.b16 %v11111
    %v12114 = vunpack.c.h.b16 %v11111
    %v12115 = vunpack.c.l.b16 %v11112
    %v12116 = vunpack.c.h.b16 %v11112
    %v12117 = vunpack.c.l.b16 %v11113
    %v12118 = vunpack.c.h.b16 %v11113
    %v12119 = vunpack.c.l.b16 %v11114
    %v12120 = vunpack.c.h.b16 %v11114
    %v12121 = vunpack.c.l.b16 %v11115
    %v12122 = vunpack.c.h.b16 %v11115
    %v12123 = vunpack.c.l.b16 %v11116
    %v12124 = vunpack.c.h.b16 %v11116
    %v12125 = vunpack.c.l.b16 %v11117
    %v12126 = vunpack.c.h.b16 %v11117
    %v12127 = vunpack.c.l.b16 %v11118
    %v12128 = vunpack.c.h.b16 %v11118
    %v12129 = vunpack.c.l.b16 %v11119
    %v12130 = vunpack.c.h.b16 %v11119
    %v12131 = vunpack.c.l.b16 %v11120
    %v12132 = vunpack.c.h.b16 %v11120
    %v12133 = vunpack.c.l.b16 %v11121
    %v12134 = vunpack.c.h.b16 %v11121
    %v12135 = vunpack.c.l.b16 %v11122
    %v12136 = vunpack.c.h.b16 %v11122
    %v12137 = vunpack.c.l.b16 %v11123
    %v12138 = vunpack.c.h.b16 %v11123
    %v12139 = vunpack.c.l.b16 %v11124
    %v12140 = vunpack.c.h.b16 %v11124
    %v12141 = vunpack.c.l.b16 %v11125
    %v12142 = vunpack.c.h.b16 %v11125
    %v12143 = vunpack.c.l.b16 %v11126
    %v12144 = vunpack.c.h.b16 %v11126
    %v12145 = vunpack.c.l.b16 %v11127
    %v12146 = vunpack.c.h.b16 %v11127
    %v12147 = vunpack.c.l.b16 %v11128
    %v12148 = vunpack.c.h.b16 %v11128
    %v12149 = vunpack.c.l.b16 %v11129
    %v12150 = vunpack.c.h.b16 %v11129
    %v12151 = vunpack.c.l.b16 %v11130
    %v12152 = vunpack.c.h.b16 %v11130
    %v12153 = vunpack.c.l.b16 %v11131
    %v12154 = vunpack.c.h.b16 %v11131
    %v12155 = vunpack.c.l.b16 %v11132
    %v12156 = vunpack.c.h.b16 %v11132
    %v12157 = vunpack.c.l.b16 %v11133
    %v12158 = vunpack.c.h.b16 %v11133
    %v12159 = vunpack.c.l.b16 %v11134
    %v12160 = vunpack.c.h.b16 %v11134
    %v12161 = vunpack.c.l.b16 %v11135
    %v12162 = vunpack.c.h.b16 %v11135
    %v12163 = vunpack.c.l.b16 %v11136
    %v12164 = vunpack.c.h.b16 %v11136
    %v12165 = vunpack.c.l.b16 %v11137
    %v12166 = vunpack.c.h.b16 %v11137
    %v12167 = vunpack.c.l.b16 %v11138
    %v12168 = vunpack.c.h.b16 %v11138
    %v12169 = vunpack.c.l.b16 %v11139
    %v12170 = vunpack.c.h.b16 %v11139
    %v12171 = vunpack.c.l.b16 %v11140
    %v12172 = vunpack.c.h.b16 %v11140
    %v12173 = vunpack.c.l.b16 %v11141
    %v12174 = vunpack.c.h.b16 %v11141
    %v12175 = vunpack.c.l.b16 %v11142
    %v12176 = vunpack.c.h.b16 %v11142
    %v12177 = vunpack.c.l.b16 %v11143
    %v12178 = vunpack.c.h.b16 %v11143
    %v12179 = vunpack.c.l.b16 %v11144
    %v12180 = vunpack.c.h.b16 %v11144
    %v12181 = vunpack.c.l.b16 %v11145
    %v12182 = vunpack.c.h.b16 %v11145
    %v12183 = vunpack.c.l.b16 %v11146
    %v12184 = vunpack.c.h.b16 %v11146
    %v12185 = vunpack.c.l.b16 %v11147
    %v12186 = vunpack.c.h.b16 %v11147
    %v12187 = vunpack.c.l.b16 %v11148
    %v12188 = vunpack.c.h.b16 %v11148
    %v12189 = vunpack.c.l.b16 %v11149
    %v12190 = vunpack.c.h.b16 %v11149
    %v12191 = vunpack.c.l.b16 %v11150
    %v12192 = vunpack.c.h.b16 %v11150
    %v12193 = vunpack.c.l.b16 %v11151
    %v12194 = vunpack.c.h.b16 %v11151
    %v12195 = vunpack.c.l.b16 %v11152
    %v12196 = vunpack.c.h.b16 %v11152
    %v12197 = vunpack.c.l.b16 %v11153
    %v12198 = vunpack.c.h.b16 %v11153
    %v12199 = vunpack.c.l.b16 %v11154
    %v12200 = vunpack.c.h.b16 %v11154
    %v12201 = vunpack.c.l.b16 %v11155
    %v12202 = vunpack.c.h.b16 %v11155
    %v12203 = vunpack.c.l.b16 %v11156
    %v12204 = vunpack.c.h.b16 %v11156
    %v12205 = vunpack.c.l.b16 %v11157
    %v12206 = vunpack.c.h.b16 %v11157
    %v12207 = vunpack.c.l.b16 %v11158
    %v12208 = vunpack.c.h.b16 %v11158
    %v12209 = vunpack.c.l.b16 %v11159
    %v12210 = vunpack.c.h.b16 %v11159
    %v12211 = vunpack.c.l.b16 %v11160
    %v12212 = vunpack.c.h.b16 %v11160
    %v12213 = vunpack.c.l.b16 %v11161
    %v12214 = vunpack.c.h.b16 %v11161
    %v12215 = vunpack.c.l.b16 %v11162
    %v12216 = vunpack.c.h.b16 %v11162
    %v12217 = vunpack.c.l.b16 %v11163
    %v12218 = vunpack.c.h.b16 %v11163
    %v12219 = vunpack.c.l.b16 %v11164
    %v12220 = vunpack.c.h.b16 %v11164
    %v12221 = vunpack.c.l.b16 %v11165
    %v12222 = vunpack.c.h.b16 %v11165
    %v12223 = vunpack.c.l.b16 %v11166
    %v12224 = vunpack.c.h.b16 %v11166
    %v12225 = vunpack.c.l.b16 %v11167
    %v12226 = vunpack.c.h.b16 %v11167
    %v12227 = vunpack.c.l.b16 %v11168
    %v12228 = vunpack.c.h.b16 %v11168
    %v12229 = vunpack.c.l.b16 %v11169
    %v12230 = vunpack.c.h.b16 %v11169
    %v12231 = vunpack.c.l.b16 %v11170
    %v12232 = vunpack.c.h.b16 %v11170
    %v12233 = vunpack.c.l.b16 %v11171
    %v12234 = vunpack.c.h.b16 %v11171
    %v12235 = vunpack.c.l.b16 %v11172
    %v12236 = vunpack.c.h.b16 %v11172
    %v12237 = vunpack.c.l.b16 %v11173
    %v12238 = vunpack.c.h.b16 %v11173
    %v12239 = vunpack.c.l.b16 %v11174
    %v12240 = vunpack.c.h.b16 %v11174
    %v12241 = vunpack.c.l.b16 %v11175
    %v12242 = vunpack.c.h.b16 %v11175
    %v12243 = vunpack.c.l.b16 %v11176
    %v12244 = vunpack.c.h.b16 %v11176
    %v12245 = vunpack.c.l.b16 %v11177
    %v12246 = vunpack.c.h.b16 %v11177
    %v12247 = vunpack.c.l.b16 %v11178
    %v12248 = vunpack.c.h.b16 %v11178
    %v12249 = vunpack.c.l.b16 %v11179
    %v12250 = vunpack.c.h.b16 %v11179
    %v12251 = vunpack.c.l.b16 %v11180
    %v12252 = vunpack.c.h.b16 %v11180
    %v12253 = vunpack.c.l.b16 %v11181
    %v12254 = vunpack.c.h.b16 %v11181
    %v12255 = vunpack.c.l.b16 %v11182
    %v12256 = vunpack.c.h.b16 %v11182
    %v12257 = vunpack.c.l.b16 %v11183
    %v12258 = vunpack.c.h.b16 %v11183
    %v12259 = vunpack.c.l.b16 %v11184
    %v12260 = vunpack.c.h.b16 %v11184
    %v12261 = vunpack.c.l.b16 %v11185
    %v12262 = vunpack.c.h.b16 %v11185
    %v12263 = vunpack.c.l.b16 %v11186
    %v12264 = vunpack.c.h.b16 %v11186
    %v12265 = vunpack.c.l.b16 %v11187
    %v12266 = vunpack.c.h.b16 %v11187
    %v12267 = vunpack.c.l.b16 %v11188
    %v12268 = vunpack.c.h.b16 %v11188
    %v12269 = vunpack.c.l.b16 %v11189
    %v12270 = vunpack.c.h.b16 %v11189
    %v12271 = vunpack.c.l.b16 %v11190
    %v12272 = vunpack.c.h.b16 %v11190
    %v12273 = vunpack.c.l.b16 %v11191
    %v12274 = vunpack.c.h.b16 %v11191
    %v12275 = vunpack.c.l.b16 %v11192
    %v12276 = vunpack.c.h.b16 %v11192
    %v12277 = vunpack.c.l.b16 %v11193
    %v12278 = vunpack.c.h.b16 %v11193
    %v12279 = vunpack.c.l.b16 %v11194
    %v12280 = vunpack.c.h.b16 %v11194
    %v12281 = vunpack.c.l.b16 %v11195
    %v12282 = vunpack.c.h.b16 %v11195
    %v12283 = vunpack.c.l.b16 %v11196
    %v12284 = vunpack.c.h.b16 %v11196
    %v12285 = vunpack.c.l.b16 %v11197
    %v12286 = vunpack.c.h.b16 %v11197
    %v12287 = vunpack.c.l.b16 %v11198
    %v12288 = vunpack.c.h.b16 %v11198
    %v12289 = vunpack.c.l.b16 %v11199
    %v12290 = vunpack.c.h.b16 %v11199
    %v12291 = vunpack.c.l.b16 %v11200
    %v12292 = vunpack.c.h.b16 %v11200
    %v12293 = vunpack.c.l.b16 %v11201
    %v12294 = vunpack.c.h.b16 %v11201
    %v12295 = vunpack.c.l.b16 %v11202
    %v12296 = vunpack.c.h.b16 %v11202
    %v12297 = vunpack.c.l.b16 %v11203
    %v12298 = vunpack.c.h.b16 %v11203
    %v12299 = vunpack.c.l.b16 %v11204
    %v12300 = vunpack.c.h.b16 %v11204
    %v12301 = vunpack.c.l.b16 %v11205
    %v12302 = vunpack.c.h.b16 %v11205
    %v12303 = vunpack.c.l.b16 %v11206
    %v12304 = vunpack.c.h.b16 %v11206
    %v12305 = vunpack.c.l.b16 %v11207
    %v12306 = vunpack.c.h.b16 %v11207
    %v12307 = vunpack.c.l.b16 %v11208
    %v12308 = vunpack.c.h.b16 %v11208
    %v12309 = vunpack.c.l.b16 %v11209
    %v12310 = vunpack.c.h.b16 %v11209
    %v12311 = vunpack.c.l.b16 %v11210
    %v12312 = vunpack.c.h.b16 %v11210
    %v12313 = vunpack.c.l.b16 %v11211
    %v12314 = vunpack.c.h.b16 %v11211
    %v12315 = vunpack.c.l.b16 %v11212
    %v12316 = vunpack.c.h.b16 %v11212
    %v12317 = vunpack.c.l.b16 %v11213
    %v12318 = vunpack.c.h.b16 %v11213
    %v12319 = vunpack.c.l.b16 %v11214
    %v12320 = vunpack.c.h.b16 %v11214
    %v12321 = vunpack.c.l.b16 %v11215
    %v12322 = vunpack.c.h.b16 %v11215
    %v12323 = vunpack.c.l.b16 %v11216
    %v12324 = vunpack.c.h.b16 %v11216
    %v12325 = vunpack.c.l.b16 %v11217
    %v12326 = vunpack.c.h.b16 %v11217
    %v12327 = vunpack.c.l.b16 %v11218
    %v12328 = vunpack.c.h.b16 %v11218
    %v12329 = vunpack.c.l.b16 %v11219
    %v12330 = vunpack.c.h.b16 %v11219
    %v12331 = vunpack.c.l.b16 %v11220
    %v12332 = vunpack.c.h.b16 %v11220
    %v12333 = vunpack.c.l.b16 %v11221
    %v12334 = vunpack.c.h.b16 %v11221
    %v12335 = vunpack.c.l.b16 %v11222
    %v12336 = vunpack.c.h.b16 %v11222
    %v12337 = vunpack.c.l.b16 %v11223
    %v12338 = vunpack.c.h.b16 %v11223
    %v12339 = vunpack.c.l.b16 %v11224
    %v12340 = vunpack.c.h.b16 %v11224
    %v12341 = vunpack.c.l.b16 %v11225
    %v12342 = vunpack.c.h.b16 %v11225
    %v12343 = vunpack.c.l.b16 %v11226
    %v12344 = vunpack.c.h.b16 %v11226
    %v12345 = vunpack.c.l.b16 %v11227
    %v12346 = vunpack.c.h.b16 %v11227
    %v12347 = vunpack.c.l.b16 %v11228
    %v12348 = vunpack.c.h.b16 %v11228
    %v12349 = vunpack.c.l.b16 %v11229
    %v12350 = vunpack.c.h.b16 %v11229
    %v12351 = vunpack.c.l.b16 %v11230
    %v12352 = vunpack.c.h.b16 %v11230
    %v12353 = vunpack.c.l.b16 %v11231
    %v12354 = vunpack.c.h.b16 %v11231
    %v12355 = vunpack.c.l.b16 %v11232
    %v12356 = vunpack.c.h.b16 %v11232
    %v12357 = vunpack.c.l.b16 %v11233
    %v12358 = vunpack.c.h.b16 %v11233
    %v12359 = vunpack.c.l.b16 %v11234
    %v12360 = vunpack.c.h.b16 %v11234
    %v12361 = vunpack.c.l.b16 %v11235
    %v12362 = vunpack.c.h.b16 %v11235
    %v12363 = vunpack.c.l.b16 %v11236
    %v12364 = vunpack.c.h.b16 %v11236
    %v12365 = vunpack.c.l.b16 %v11237
    %v12366 = vunpack.c.h.b16 %v11237
    %v12367 = vunpack.c.l.b16 %v11238
    %v12368 = vunpack.c.h.b16 %v11238
    %v12369 = vunpack.c.l.b16 %v11239
    %v12370 = vunpack.c.h.b16 %v11239
    %v12371 = vunpack.c.l.b16 %v11240
    %v12372 = vunpack.c.h.b16 %v11240
    %v12373 = vunpack.c.l.b16 %v11241
    %v12374 = vunpack.c.h.b16 %v11241
    %v12375 = vunpack.c.l.b16 %v11242
    %v12376 = vunpack.c.h.b16 %v11242
    %v12377 = vunpack.c.l.b16 %v11243
    %v12378 = vunpack.c.h.b16 %v11243
    %v12379 = vunpack.c.l.b16 %v11244
    %v12380 = vunpack.c.h.b16 %v11244
    %v12381 = vunpack.c.l.b16 %v11245
    %v12382 = vunpack.c.h.b16 %v11245
    %v12383 = vunpack.c.l.b16 %v11246
    %v12384 = vunpack.c.h.b16 %v11246
    %v12385 = vunpack.c.l.b16 %v11247
    %v12386 = vunpack.c.h.b16 %v11247
    %v12387 = vunpack.c.l.b16 %v11248
    %v12388 = vunpack.c.h.b16 %v11248
    %v12389 = vunpack.c.l.b16 %v11249
    %v12390 = vunpack.c.h.b16 %v11249
    %v12391 = vunpack.c.l.b16 %v11250
    %v12392 = vunpack.c.h.b16 %v11250
    %v12393 = vunpack.c.l.b16 %v11251
    %v12394 = vunpack.c.h.b16 %v11251
    %v12395 = vunpack.c.l.b16 %v11252
    %v12396 = vunpack.c.h.b16 %v11252
    %v12397 = vunpack.c.l.b16 %v11253
    %v12398 = vunpack.c.h.b16 %v11253
    %v12399 = vunpack.c.l.b16 %v11254
    %v12400 = vunpack.c.h.b16 %v11254
    %v12401 = vunpack.c.l.b16 %v11255
    %v12402 = vunpack.c.h.b16 %v11255
    %v12403 = vunpack.c.l.b16 %v11256
    %v12404 = vunpack.c.h.b16 %v11256
    %v12405 = vunpack.c.l.b16 %v11257
    %v12406 = vunpack.c.h.b16 %v11257
    %v12407 = vunpack.c.l.b16 %v11258
    %v12408 = vunpack.c.h.b16 %v11258
    %v12409 = vunpack.c.l.b16 %v11259
    %v12410 = vunpack.c.h.b16 %v11259
    %v12411 = vunpack.c.l.b16 %v11260
    %v12412 = vunpack.c.h.b16 %v11260
    %v12413 = vunpack.c.l.b16 %v11261
    %v12414 = vunpack.c.h.b16 %v11261
    %v12415 = vunpack.c.l.b16 %v11262
    %v12416 = vunpack.c.h.b16 %v11262
    %v12417 = vunpack.c.l.b16 %v11263
    %v12418 = vunpack.c.h.b16 %v11263
    %v12419 = vunpack.c.l.b16 %v11264
    %v12420 = vunpack.c.h.b16 %v11264
    %v12421 = vunpack.c.l.b16 %v11265
    %v12422 = vunpack.c.h.b16 %v11265
    %v12423 = vunpack.c.l.b16 %v11266
    %v12424 = vunpack.c.h.b16 %v11266
    %v12425 = vunpack.c.l.b16 %v11267
    %v12426 = vunpack.c.h.b16 %v11267
    %v12427 = vunpack.c.l.b16 %v11268
    %v12428 = vunpack.c.h.b16 %v11268
    %v12429 = vunpack.c.l.b16 %v11269
    %v12430 = vunpack.c.h.b16 %v11269
    %v12431 = vunpack.c.l.b16 %v11270
    %v12432 = vunpack.c.h.b16 %v11270
    %v12433 = vunpack.c.l.b16 %v11271
    %v12434 = vunpack.c.h.b16 %v11271
    %v12435 = vunpack.c.l.b16 %v11272
    %v12436 = vunpack.c.h.b16 %v11272
    %v12437 = vunpack.c.l.b16 %v11273
    %v12438 = vunpack.c.h.b16 %v11273
    %v12439 = vunpack.c.l.b16 %v11274
    %v12440 = vunpack.c.h.b16 %v11274
    %v12441 = vunpack.c.l.b16 %v11275
    %v12442 = vunpack.c.h.b16 %v11275
    %v12443 = vunpack.c.l.b16 %v11276
    %v12444 = vunpack.c.h.b16 %v11276
    %v12445 = vunpack.c.l.b16 %v11277
    %v12446 = vunpack.c.h.b16 %v11277
    %v12447 = vunpack.c.l.b16 %v11278
    %v12448 = vunpack.c.h.b16 %v11278
    %v12449 = vunpack.c.l.b16 %v11279
    %v12450 = vunpack.c.h.b16 %v11279
    %v12451 = vunpack.c.l.b16 %v11280
    %v12452 = vunpack.c.h.b16 %v11280
    %v12453 = vunpack.c.l.b16 %v11281
    %v12454 = vunpack.c.h.b16 %v11281
    %v12455 = vunpack.c.l.b16 %v11282
    %v12456 = vunpack.c.h.b16 %v11282
    %v12457 = vunpack.c.l.b16 %v11283
    %v12458 = vunpack.c.h.b16 %v11283
    %v12459 = vunpack.c.l.b16 %v11284
    %v12460 = vunpack.c.h.b16 %v11284
    %v12461 = vunpack.c.l.b16 %v11285
    %v12462 = vunpack.c.h.b16 %v11285
    %v12463 = vunpack.c.l.b16 %v11286
    %v12464 = vunpack.c.h.b16 %v11286
    %v12465 = vunpack.c.l.b16 %v11287
    %v12466 = vunpack.c.h.b16 %v11287
    %v12467 = vunpack.c.l.b16 %v11288
    %v12468 = vunpack.c.h.b16 %v11288
    %v12469 = vunpack.c.l.b16 %v11289
    %v12470 = vunpack.c.h.b16 %v11289
    %v12471 = vunpack.c.l.b16 %v11290
    %v12472 = vunpack.c.h.b16 %v11290
    %v12473 = vunpack.c.l.b16 %v11291
    %v12474 = vunpack.c.h.b16 %v11291
    %v12475 = vunpack.c.l.b16 %v11292
    %v12476 = vunpack.c.h.b16 %v11292
    %v12477 = vunpack.c.l.b16 %v11293
    %v12478 = vunpack.c.h.b16 %v11293
    %v12479 = vunpack.c.l.b16 %v11294
    %v12480 = vunpack.c.h.b16 %v11294
    %v12481 = vunpack.c.l.b16 %v11295
    %v12482 = vunpack.c.h.b16 %v11295
    %v12483 = vunpack.c.l.b16 %v11296
    %v12484 = vunpack.c.h.b16 %v11296
    %v12485 = vunpack.c.l.b16 %v11297
    %v12486 = vunpack.c.h.b16 %v11297
    %v12487 = vunpack.c.l.b16 %v11298
    %v12488 = vunpack.c.h.b16 %v11298
    %v12489 = vunpack.c.l.b16 %v11299
    %v12490 = vunpack.c.h.b16 %v11299
    %v12491 = vunpack.c.l.b16 %v11300
    %v12492 = vunpack.c.h.b16 %v11300
    %v12493 = vunpack.c.l.b16 %v11301
    %v12494 = vunpack.c.h.b16 %v11301
    %v12495 = vunpack.c.l.b16 %v11302
    %v12496 = vunpack.c.h.b16 %v11302
    %v12497 = vunpack.c.l.b16 %v11303
    %v12498 = vunpack.c.h.b16 %v11303
    %v12499 = vunpack.c.l.b16 %v11304
    %v12500 = vunpack.c.h.b16 %v11304
    %v12501 = vunpack.c.l.b16 %v11305
    %v12502 = vunpack.c.h.b16 %v11305
    %v12503 = vunpack.c.l.b16 %v11306
    %v12504 = vunpack.c.h.b16 %v11306
    %v12505 = vunpack.c.l.b16 %v11307
    %v12506 = vunpack.c.h.b16 %v11307
    %v12507 = vunpack.c.l.b16 %v11308
    %v12508 = vunpack.c.h.b16 %v11308
    %v12509 = vunpack.c.l.b16 %v11309
    %v12510 = vunpack.c.h.b16 %v11309
    %v12511 = vunpack.c.l.b16 %v11310
    %v12512 = vunpack.c.h.b16 %v11310
    %v12513 = vunpack.c.l.b16 %v11311
    %v12514 = vunpack.c.h.b16 %v11311
    %v12515 = vunpack.c.l.b16 %v11312
    %v12516 = vunpack.c.h.b16 %v11312
    %v12517 = vunpack.c.l.b16 %v11313
    %v12518 = vunpack.c.h.b16 %v11313
    %v12519 = vunpack.c.l.b16 %v11314
    %v12520 = vunpack.c.h.b16 %v11314
    %v12521 = vunpack.c.l.b16 %v11315
    %v12522 = vunpack.c.h.b16 %v11315
    %v12523 = vunpack.c.l.b16 %v11316
    %v12524 = vunpack.c.h.b16 %v11316
    %v12525 = vunpack.c.l.b16 %v11317
    %v12526 = vunpack.c.h.b16 %v11317
    %v12527 = vunpack.c.l.b16 %v11318
    %v12528 = vunpack.c.h.b16 %v11318
    %v12529 = vunpack.c.l.b16 %v11319
    %v12530 = vunpack.c.h.b16 %v11319
    %v12531 = vunpack.c.l.b16 %v11320
    %v12532 = vunpack.c.h.b16 %v11320
    %v12533 = vunpack.c.l.b16 %v11321
    %v12534 = vunpack.c.h.b16 %v11321
    %v12535 = vunpack.c.l.b16 %v11322
    %v12536 = vunpack.c.h.b16 %v11322
    %v12537 = vunpack.c.l.b16 %v11323
    %v12538 = vunpack.c.h.b16 %v11323
    %v12539 = vunpack.c.l.b16 %v11324
    %v12540 = vunpack.c.h.b16 %v11324
    %v12541 = vunpack.c.l.b16 %v11325
    %v12542 = vunpack.c.h.b16 %v11325
    %v12543 = vunpack.c.l.b16 %v11326
    %v12544 = vunpack.c.h.b16 %v11326
    %v12545 = vunpack.c.l.b16 %v11327
    %v12546 = vunpack.c.h.b16 %v11327
    %v12547 = vunpack.c.l.b16 %v11328
    %v12548 = vunpack.c.h.b16 %v11328
    %v12549 = vunpack.c.l.b16 %v11329
    %v12550 = vunpack.c.h.b16 %v11329
    %v12551 = vunpack.c.l.b16 %v11330
    %v12552 = vunpack.c.h.b16 %v11330
    %v12553 = vunpack.c.l.b16 %v11331
    %v12554 = vunpack.c.h.b16 %v11331
    %v12555 = vunpack.c.l.b16 %v11332
    %v12556 = vunpack.c.h.b16 %v11332
    %v12557 = vunpack.c.l.b16 %v11333
    %v12558 = vunpack.c.h.b16 %v11333
    %v12559 = vunpack.c.l.b16 %v11334
    %v12560 = vunpack.c.h.b16 %v11334
    %v12561 = vunpack.c.l.b16 %v11335
    %v12562 = vunpack.c.h.b16 %v11335
    %v12563 = vunpack.c.l.b16 %v11336
    %v12564 = vunpack.c.h.b16 %v11336
    %v12565 = vunpack.c.l.b16 %v11337
    %v12566 = vunpack.c.h.b16 %v11337
    %v12567 = vunpack.c.l.b16 %v11338
    %v12568 = vunpack.c.h.b16 %v11338
    %v12569 = vunpack.c.l.b16 %v11339
    %v12570 = vunpack.c.h.b16 %v11339
    %v12571 = vunpack.c.l.b16 %v11340
    %v12572 = vunpack.c.h.b16 %v11340
    %v12573 = vunpack.c.l.b16 %v11341
    %v12574 = vunpack.c.h.b16 %v11341
    %v12575 = vunpack.c.l.b16 %v11342
    %v12576 = vunpack.c.h.b16 %v11342
    %v12577 = vunpack.c.l.b16 %v11343
    %v12578 = vunpack.c.h.b16 %v11343
    %v12579 = vunpack.c.l.b16 %v11344
    %v12580 = vunpack.c.h.b16 %v11344
    %v12581 = vunpack.c.l.b16 %v11345
    %v12582 = vunpack.c.h.b16 %v11345
    %v12583 = vunpack.c.l.b16 %v11346
    %v12584 = vunpack.c.h.b16 %v11346
    %v12585 = vunpack.c.l.b16 %v11347
    %v12586 = vunpack.c.h.b16 %v11347
    %v12587 = vunpack.c.l.b16 %v11348
    %v12588 = vunpack.c.h.b16 %v11348
    %v12589 = vunpack.c.l.b16 %v11349
    %v12590 = vunpack.c.h.b16 %v11349
    %v12591 = vunpack.c.l.b16 %v11350
    %v12592 = vunpack.c.h.b16 %v11350
    %v12593 = vunpack.c.l.b16 %v11351
    %v12594 = vunpack.c.h.b16 %v11351
    %v12595 = vunpack.c.l.b16 %v11352
    %v12596 = vunpack.c.h.b16 %v11352
    %v12597 = vunpack.c.l.b16 %v11353
    %v12598 = vunpack.c.h.b16 %v11353
    %v12599 = vunpack.c.l.b16 %v11354
    %v12600 = vunpack.c.h.b16 %v11354
    %v12601 = vunpack.c.l.b16 %v11355
    %v12602 = vunpack.c.h.b16 %v11355
    %v12603 = vunpack.c.l.b16 %v11356
    %v12604 = vunpack.c.h.b16 %v11356
    %v12605 = vunpack.c.l.b16 %v11357
    %v12606 = vunpack.c.h.b16 %v11357
    %v12607 = vunpack.c.l.b16 %v11358
    %v12608 = vunpack.c.h.b16 %v11358
    %v12609 = vunpack.c.l.b16 %v11359
    %v12610 = vunpack.c.h.b16 %v11359
    %v12611 = vunpack.c.l.b16 %v11360
    %v12612 = vunpack.c.h.b16 %v11360
    %v12613 = vunpack.c.l.b16 %v11361
    %v12614 = vunpack.c.h.b16 %v11361
    %v12615 = vunpack.c.l.b16 %v11362
    %v12616 = vunpack.c.h.b16 %v11362
    %v12617 = vunpack.c.l.b16 %v11363
    %v12618 = vunpack.c.h.b16 %v11363
    %v12619 = vunpack.c.l.b16 %v11364
    %v12620 = vunpack.c.h.b16 %v11364
    %v12621 = vunpack.c.l.b16 %v11365
    %v12622 = vunpack.c.h.b16 %v11365
    %v12623 = vunpack.c.l.b16 %v11366
    %v12624 = vunpack.c.h.b16 %v11366
    %v12625 = vunpack.c.l.b16 %v11367
    %v12626 = vunpack.c.h.b16 %v11367
    %v12627 = vunpack.c.l.b16 %v11368
    %v12628 = vunpack.c.h.b16 %v11368
    %v12629 = vunpack.c.l.b16 %v11369
    %v12630 = vunpack.c.h.b16 %v11369
    %v12631 = vunpack.c.l.b16 %v11370
    %v12632 = vunpack.c.h.b16 %v11370
    %v12633 = vunpack.c.l.b16 %v11371
    %v12634 = vunpack.c.h.b16 %v11371
    %v12635 = vunpack.c.l.b16 %v11372
    %v12636 = vunpack.c.h.b16 %v11372
    %v12637 = vunpack.c.l.b16 %v11373
    %v12638 = vunpack.c.h.b16 %v11373
    %v12639 = vunpack.c.l.b16 %v11374
    %v12640 = vunpack.c.h.b16 %v11374
    %v12641 = vunpack.c.l.b16 %v11375
    %v12642 = vunpack.c.h.b16 %v11375
    %v12643 = vunpack.c.l.b16 %v11376
    %v12644 = vunpack.c.h.b16 %v11376
    %v12645 = vunpack.c.l.b16 %v11377
    %v12646 = vunpack.c.h.b16 %v11377
    %v12647 = vunpack.c.l.b16 %v11378
    %v12648 = vunpack.c.h.b16 %v11378
    %v12649 = vunpack.c.l.b16 %v11379
    %v12650 = vunpack.c.h.b16 %v11379
    %v12651 = vunpack.c.l.b16 %v11380
    %v12652 = vunpack.c.h.b16 %v11380
    %v12653 = vunpack.c.l.b16 %v11381
    %v12654 = vunpack.c.h.b16 %v11381
    %v12655 = vunpack.c.l.b16 %v11382
    %v12656 = vunpack.c.h.b16 %v11382
    %v12657 = vunpack.c.l.b16 %v11383
    %v12658 = vunpack.c.h.b16 %v11383
    %v12659 = vunpack.c.l.b16 %v11384
    %v12660 = vunpack.c.h.b16 %v11384
    %v12661 = vunpack.c.l.b16 %v11385
    %v12662 = vunpack.c.h.b16 %v11385
    %v12663 = vunpack.c.l.b16 %v11386
    %v12664 = vunpack.c.h.b16 %v11386
    %v12665 = vunpack.c.l.b16 %v11387
    %v12666 = vunpack.c.h.b16 %v11387
    %v12667 = vunpack.c.l.b16 %v11388
    %v12668 = vunpack.c.h.b16 %v11388
    %v12669 = vunpack.c.l.b16 %v11389
    %v12670 = vunpack.c.h.b16 %v11389
    %v12671 = vunpack.c.l.b16 %v11390
    %v12672 = vunpack.c.h.b16 %v11390
    %v12673 = vunpack.c.l.b16 %v11391
    %v12674 = vunpack.c.h.b16 %v11391
    %v12675 = vunpack.c.l.b16 %v11392
    %v12676 = vunpack.c.h.b16 %v11392
    %v12677 = vunpack.c.l.b16 %v11393
    %v12678 = vunpack.c.h.b16 %v11393
    %v12679 = vunpack.c.l.b16 %v11394
    %v12680 = vunpack.c.h.b16 %v11394
    %v12681 = vunpack.c.l.b16 %v11395
    %v12682 = vunpack.c.h.b16 %v11395
    %v12683 = vunpack.c.l.b16 %v11396
    %v12684 = vunpack.c.h.b16 %v11396
    %v12685 = vunpack.c.l.b16 %v11397
    %v12686 = vunpack.c.h.b16 %v11397
    %v12687 = vunpack.c.l.b16 %v11398
    %v12688 = vunpack.c.h.b16 %v11398
    %v12689 = vunpack.c.l.b16 %v11399
    %v12690 = vunpack.c.h.b16 %v11399
    %v12691 = vunpack.c.l.b16 %v11400
    %v12692 = vunpack.c.h.b16 %v11400
    %v12693 = vunpack.c.l.b16 %v11401
    %v12694 = vunpack.c.h.b16 %v11401
    %v12695 = vunpack.c.l.b16 %v11402
    %v12696 = vunpack.c.h.b16 %v11402
    %v12697 = vunpack.c.l.b16 %v11403
    %v12698 = vunpack.c.h.b16 %v11403
    %v12699 = vunpack.c.l.b16 %v11404
    %v12700 = vunpack.c.h.b16 %v11404
    %v12701 = vunpack.c.l.b16 %v11405
    %v12702 = vunpack.c.h.b16 %v11405
    %v12703 = vunpack.c.l.b16 %v11406
    %v12704 = vunpack.c.h.b16 %v11406
    %v12705 = vunpack.c.l.b16 %v11407
    %v12706 = vunpack.c.h.b16 %v11407
    %v12707 = vunpack.c.l.b16 %v11408
    %v12708 = vunpack.c.h.b16 %v11408
    %v12709 = vunpack.c.l.b16 %v11409
    %v12710 = vunpack.c.h.b16 %v11409
    %v12711 = vunpack.c.l.b16 %v11410
    %v12712 = vunpack.c.h.b16 %v11410
    %v12713 = vunpack.c.l.b16 %v11411
    %v12714 = vunpack.c.h.b16 %v11411
    %v12715 = vunpack.c.l.b16 %v11412
    %v12716 = vunpack.c.h.b16 %v11412
    %v12717 = vunpack.c.l.b16 %v11413
    %v12718 = vunpack.c.h.b16 %v11413
    %v12719 = vunpack.c.l.b16 %v11414
    %v12720 = vunpack.c.h.b16 %v11414
    %v12721 = vunpack.c.l.b16 %v11415
    %v12722 = vunpack.c.h.b16 %v11415
    %v12723 = vunpack.c.l.b16 %v11416
    %v12724 = vunpack.c.h.b16 %v11416
    %v12725 = vunpack.c.l.b16 %v11417
    %v12726 = vunpack.c.h.b16 %v11417
    %v12727 = vunpack.c.l.b16 %v11418
    %v12728 = vunpack.c.h.b16 %v11418
    %v12729 = vunpack.c.l.b16 %v11419
    %v12730 = vunpack.c.h.b16 %v11419
    %v12731 = vunpack.c.l.b16 %v11420
    %v12732 = vunpack.c.h.b16 %v11420
    %v12733 = vunpack.c.l.b16 %v11421
    %v12734 = vunpack.c.h.b16 %v11421
    %v12735 = vunpack.c.l.b16 %v11422
    %v12736 = vunpack.c.h.b16 %v11422
    %v12737 = vunpack.c.l.b16 %v11423
    %v12738 = vunpack.c.h.b16 %v11423
    %v12739 = vunpack.c.l.b16 %v11424
    %v12740 = vunpack.c.h.b16 %v11424
    %v12741 = vunpack.c.l.b16 %v11425
    %v12742 = vunpack.c.h.b16 %v11425
    %v12743 = vunpack.c.l.b16 %v11426
    %v12744 = vunpack.c.h.b16 %v11426
    %v12745 = vunpack.c.l.b16 %v11427
    %v12746 = vunpack.c.h.b16 %v11427
    %v12747 = vunpack.c.l.b16 %v11428
    %v12748 = vunpack.c.h.b16 %v11428
    %v12749 = vunpack.c.l.b16 %v11429
    %v12750 = vunpack.c.h.b16 %v11429
    %v12751 = vunpack.c.l.b16 %v11430
    %v12752 = vunpack.c.h.b16 %v11430
    %v12753 = vunpack.c.l.b16 %v11431
    %v12754 = vunpack.c.h.b16 %v11431
    %v12755 = vunpack.c.l.b16 %v11432
    %v12756 = vunpack.c.h.b16 %v11432
    %v12757 = vunpack.c.l.b16 %v11433
    %v12758 = vunpack.c.h.b16 %v11433
    %v12759 = vunpack.c.l.b16 %v11434
    %v12760 = vunpack.c.h.b16 %v11434
    %v12761 = vunpack.c.l.b16 %v11435
    %v12762 = vunpack.c.h.b16 %v11435
    %v12763 = vunpack.c.l.b16 %v11436
    %v12764 = vunpack.c.h.b16 %v11436
    %v12765 = vunpack.c.l.b16 %v11437
    %v12766 = vunpack.c.h.b16 %v11437
    %v12767 = vunpack.c.l.b16 %v11438
    %v12768 = vunpack.c.h.b16 %v11438
    %v12769 = vunpack.c.l.b16 %v11439
    %v12770 = vunpack.c.h.b16 %v11439
    %v12771 = vunpack.c.l.b16 %v11440
    %v12772 = vunpack.c.h.b16 %v11440
    %v12773 = vunpack.c.l.b16 %v11441
    %v12774 = vunpack.c.h.b16 %v11441
    %v12775 = vunpack.c.l.b16 %v11442
    %v12776 = vunpack.c.h.b16 %v11442
    %v12777 = vunpack.c.l.b16 %v11443
    %v12778 = vunpack.c.h.b16 %v11443
    %v12779 = vunpack.c.l.b16 %v11444
    %v12780 = vunpack.c.h.b16 %v11444
    %v12781 = vunpack.c.l.b16 %v11445
    %v12782 = vunpack.c.h.b16 %v11445
    %v12783 = vunpack.c.l.b16 %v11446
    %v12784 = vunpack.c.h.b16 %v11446
    %v12785 = vunpack.c.l.b16 %v11447
    %v12786 = vunpack.c.h.b16 %v11447
    %v12787 = vunpack.c.l.b16 %v11448
    %v12788 = vunpack.c.h.b16 %v11448
    %v12789 = vunpack.c.l.b16 %v11449
    %v12790 = vunpack.c.h.b16 %v11449
    %v12791 = vunpack.c.l.b16 %v11450
    %v12792 = vunpack.c.h.b16 %v11450
    %v12793 = vunpack.c.l.b16 %v11451
    %v12794 = vunpack.c.h.b16 %v11451
    %v12795 = vunpack.c.l.b16 %v11452
    %v12796 = vunpack.c.h.b16 %v11452
    %v12797 = vpack.c.b16 %v11909, %v11901
    %v12798 = vpack.c.b16 %v11910, %v11902
    %v12799 = vpack.c.b16 %v11911, %v11903
    %v12800 = vpack.c.b16 %v11912, %v11904
    %v12801 = vpack.c.b16 %v11913, %v11905
    %v12802 = vpack.c.b16 %v11914, %v11906
    %v12803 = vpack.c.b16 %v11915, %v11907
    %v12804 = vpack.c.b16 %v11916, %v11908
    %v12805 = vpack.c.b16 %v11925, %v11917
    %v12806 = vpack.c.b16 %v11926, %v11918
    %v12807 = vpack.c.b16 %v11927, %v11919
    %v12808 = vpack.c.b16 %v11928, %v11920
    %v12809 = vpack.c.b16 %v11929, %v11921
    %v12810 = vpack.c.b16 %v11930, %v11922
    %v12811 = vpack.c.b16 %v11931, %v11923
    %v12812 = vpack.c.b16 %v11932, %v11924
    %v12813 = vpack.c.b16 %v11941, %v11933
    %v12814 = vpack.c.b16 %v11942, %v11934
    %v12815 = vpack.c.b16 %v11943, %v11935
    %v12816 = vpack.c.b16 %v11944, %v11936
    %v12817 = vpack.c.b16 %v11945, %v11937
    %v12818 = vpack.c.b16 %v11946, %v11938
    %v12819 = vpack.c.b16 %v11947, %v11939
    %v12820 = vpack.c.b16 %v11948, %v11940
    %v12821 = vpack.c.b16 %v11957, %v11949
    %v12822 = vpack.c.b16 %v11958, %v11950
    %v12823 = vpack.c.b16 %v11959, %v11951
    %v12824 = vpack.c.b16 %v11960, %v11952
    %v12825 = vpack.c.b16 %v11961, %v11953
    %v12826 = vpack.c.b16 %v11962, %v11954
    %v12827 = vpack.c.b16 %v11963, %v11955
    %v12828 = vpack.c.b16 %v11964, %v11956
    %v12829 = vpack.c.b16 %v11973, %v11965
    %v12830 = vpack.c.b16 %v11974, %v11966
    %v12831 = vpack.c.b16 %v11975, %v11967
    %v12832 = vpack.c.b16 %v11976, %v11968
    %v12833 = vpack.c.b16 %v11977, %v11969
    %v12834 = vpack.c.b16 %v11978, %v11970
    %v12835 = vpack.c.b16 %v11979, %v11971
    %v12836 = vpack.c.b16 %v11980, %v11972
    %v12837 = vpack.c.b16 %v11989, %v11981
    %v12838 = vpack.c.b16 %v11990, %v11982
    %v12839 = vpack.c.b16 %v11991, %v11983
    %v12840 = vpack.c.b16 %v11992, %v11984
    %v12841 = vpack.c.b16 %v11993, %v11985
    %v12842 = vpack.c.b16 %v11994, %v11986
    %v12843 = vpack.c.b16 %v11995, %v11987
    %v12844 = vpack.c.b16 %v11996, %v11988
    %v12845 = vpack.c.b16 %v12005, %v11997
    %v12846 = vpack.c.b16 %v12006, %v11998
    %v12847 = vpack.c.b16 %v12007, %v11999
    %v12848 = vpack.c.b16 %v12008, %v12000
    %v12849 = vpack.c.b16 %v12009, %v12001
    %v12850 = vpack.c.b16 %v12010, %v12002
    %v12851 = vpack.c.b16 %v12011, %v12003
    %v12852 = vpack.c.b16 %v12012, %v12004
    %v12853 = vpack.c.b16 %v12021, %v12013
    %v12854 = vpack.c.b16 %v12022, %v12014
    %v12855 = vpack.c.b16 %v12023, %v12015
    %v12856 = vpack.c.b16 %v12024, %v12016
    %v12857 = vpack.c.b16 %v12025, %v12017
    %v12858 = vpack.c.b16 %v12026, %v12018
    %v12859 = vpack.c.b16 %v12027, %v12019
    %v12860 = vpack.c.b16 %v12028, %v12020
    %v12861 = vpack.c.b16 %v12037, %v12029
    %v12862 = vpack.c.b16 %v12038, %v12030
    %v12863 = vpack.c.b16 %v12039, %v12031
    %v12864 = vpack.c.b16 %v12040, %v12032
    %v12865 = vpack.c.b16 %v12041, %v12033
    %v12866 = vpack.c.b16 %v12042, %v12034
    %v12867 = vpack.c.b16 %v12043, %v12035
    %v12868 = vpack.c.b16 %v12044, %v12036
    %v12869 = vpack.c.b16 %v12053, %v12045
    %v12870 = vpack.c.b16 %v12054, %v12046
    %v12871 = vpack.c.b16 %v12055, %v12047
    %v12872 = vpack.c.b16 %v12056, %v12048
    %v12873 = vpack.c.b16 %v12057, %v12049
    %v12874 = vpack.c.b16 %v12058, %v12050
    %v12875 = vpack.c.b16 %v12059, %v12051
    %v12876 = vpack.c.b16 %v12060, %v12052
    %v12877 = vpack.c.b16 %v12069, %v12061
    %v12878 = vpack.c.b16 %v12070, %v12062
    %v12879 = vpack.c.b16 %v12071, %v12063
    %v12880 = vpack.c.b16 %v12072, %v12064
    %v12881 = vpack.c.b16 %v12073, %v12065
    %v12882 = vpack.c.b16 %v12074, %v12066
    %v12883 = vpack.c.b16 %v12075, %v12067
    %v12884 = vpack.c.b16 %v12076, %v12068
    %v12885 = vpack.c.b16 %v12085, %v12077
    %v12886 = vpack.c.b16 %v12086, %v12078
    %v12887 = vpack.c.b16 %v12087, %v12079
    %v12888 = vpack.c.b16 %v12088, %v12080
    %v12889 = vpack.c.b16 %v12089, %v12081
    %v12890 = vpack.c.b16 %v12090, %v12082
    %v12891 = vpack.c.b16 %v12091, %v12083
    %v12892 = vpack.c.b16 %v12092, %v12084
    %v12893 = vpack.c.b16 %v12101, %v12093
    %v12894 = vpack.c.b16 %v12102, %v12094
    %v12895 = vpack.c.b16 %v12103, %v12095
    %v12896 = vpack.c.b16 %v12104, %v12096
    %v12897 = vpack.c.b16 %v12105, %v12097
    %v12898 = vpack.c.b16 %v12106, %v12098
    %v12899 = vpack.c.b16 %v12107, %v12099
    %v12900 = vpack.c.b16 %v12108, %v12100
    %v12901 = vpack.c.b16 %v12117, %v12109
    %v12902 = vpack.c.b16 %v12118, %v12110
    %v12903 = vpack.c.b16 %v12119, %v12111
    %v12904 = vpack.c.b16 %v12120, %v12112
    %v12905 = vpack.c.b16 %v12121, %v12113
    %v12906 = vpack.c.b16 %v12122, %v12114
    %v12907 = vpack.c.b16 %v12123, %v12115
    %v12908 = vpack.c.b16 %v12124, %v12116
    %v12909 = vpack.c.b16 %v12133, %v12125
    %v12910 = vpack.c.b16 %v12134, %v12126
    %v12911 = vpack.c.b16 %v12135, %v12127
    %v12912 = vpack.c.b16 %v12136, %v12128
    %v12913 = vpack.c.b16 %v12137, %v12129
    %v12914 = vpack.c.b16 %v12138, %v12130
    %v12915 = vpack.c.b16 %v12139, %v12131
    %v12916 = vpack.c.b16 %v12140, %v12132
    %v12917 = vpack.c.b16 %v12149, %v12141
    %v12918 = vpack.c.b16 %v12150, %v12142
    %v12919 = vpack.c.b16 %v12151, %v12143
    %v12920 = vpack.c.b16 %v12152, %v12144
    %v12921 = vpack.c.b16 %v12153, %v12145
    %v12922 = vpack.c.b16 %v12154, %v12146
    %v12923 = vpack.c.b16 %v12155, %v12147
    %v12924 = vpack.c.b16 %v12156, %v12148
    %v12925 = vpack.c.b16 %v12165, %v12157
    %v12926 = vpack.c.b16 %v12166, %v12158
    %v12927 = vpack.c.b16 %v12167, %v12159
    %v12928 = vpack.c.b16 %v12168, %v12160
    %v12929 = vpack.c.b16 %v12169, %v12161
    %v12930 = vpack.c.b16 %v12170, %v12162
    %v12931 = vpack.c.b16 %v12171, %v12163
    %v12932 = vpack.c.b16 %v12172, %v12164
    %v12933 = vpack.c.b16 %v12181, %v12173
    %v12934 = vpack.c.b16 %v12182, %v12174
    %v12935 = vpack.c.b16 %v12183, %v12175
    %v12936 = vpack.c.b16 %v12184, %v12176
    %v12937 = vpack.c.b16 %v12185, %v12177
    %v12938 = vpack.c.b16 %v12186, %v12178
    %v12939 = vpack.c.b16 %v12187, %v12179
    %v12940 = vpack.c.b16 %v12188, %v12180
    %v12941 = vpack.c.b16 %v12197, %v12189
    %v12942 = vpack.c.b16 %v12198, %v12190
    %v12943 = vpack.c.b16 %v12199, %v12191
    %v12944 = vpack.c.b16 %v12200, %v12192
    %v12945 = vpack.c.b16 %v12201, %v12193
    %v12946 = vpack.c.b16 %v12202, %v12194
    %v12947 = vpack.c.b16 %v12203, %v12195
    %v12948 = vpack.c.b16 %v12204, %v12196
    %v12949 = vpack.c.b16 %v12213, %v12205
    %v12950 = vpack.c.b16 %v12214, %v12206
    %v12951 = vpack.c.b16 %v12215, %v12207
    %v12952 = vpack.c.b16 %v12216, %v12208
    %v12953 = vpack.c.b16 %v12217, %v12209
    %v12954 = vpack.c.b16 %v12218, %v12210
    %v12955 = vpack.c.b16 %v12219, %v12211
    %v12956 = vpack.c.b16 %v12220, %v12212
    %v12957 = vpack.c.b16 %v12229, %v12221
    %v12958 = vpack.c.b16 %v12230, %v12222
    %v12959 = vpack.c.b16 %v12231, %v12223
    %v12960 = vpack.c.b16 %v12232, %v12224
    %v12961 = vpack.c.b16 %v12233, %v12225
    %v12962 = vpack.c.b16 %v12234, %v12226
    %v12963 = vpack.c.b16 %v12235, %v12227
    %v12964 = vpack.c.b16 %v12236, %v12228
    %v12965 = vpack.c.b16 %v12245, %v12237
    %v12966 = vpack.c.b16 %v12246, %v12238
    %v12967 = vpack.c.b16 %v12247, %v12239
    %v12968 = vpack.c.b16 %v12248, %v12240
    %v12969 = vpack.c.b16 %v12249, %v12241
    %v12970 = vpack.c.b16 %v12250, %v12242
    %v12971 = vpack.c.b16 %v12251, %v12243
    %v12972 = vpack.c.b16 %v12252, %v12244
    %v12973 = vpack.c.b16 %v12261, %v12253
    %v12974 = vpack.c.b16 %v12262, %v12254
    %v12975 = vpack.c.b16 %v12263, %v12255
    %v12976 = vpack.c.b16 %v12264, %v12256
    %v12977 = vpack.c.b16 %v12265, %v12257
    %v12978 = vpack.c.b16 %v12266, %v12258
    %v12979 = vpack.c.b16 %v12267, %v12259
    %v12980 = vpack.c.b16 %v12268, %v12260
    %v12981 = vpack.c.b16 %v12277, %v12269
    %v12982 = vpack.c.b16 %v12278, %v12270
    %v12983 = vpack.c.b16 %v12279, %v12271
    %v12984 = vpack.c.b16 %v12280, %v12272
    %v12985 = vpack.c.b16 %v12281, %v12273
    %v12986 = vpack.c.b16 %v12282, %v12274
    %v12987 = vpack.c.b16 %v12283, %v12275
    %v12988 = vpack.c.b16 %v12284, %v12276
    %v12989 = vpack.c.b16 %v12293, %v12285
    %v12990 = vpack.c.b16 %v12294, %v12286
    %v12991 = vpack.c.b16 %v12295, %v12287
    %v12992 = vpack.c.b16 %v12296, %v12288
    %v12993 = vpack.c.b16 %v12297, %v12289
    %v12994 = vpack.c.b16 %v12298, %v12290
    %v12995 = vpack.c.b16 %v12299, %v12291
    %v12996 = vpack.c.b16 %v12300, %v12292
    %v12997 = vpack.c.b16 %v12309, %v12301
    %v12998 = vpack.c.b16 %v12310, %v12302
    %v12999 = vpack.c.b16 %v12311, %v12303
    %v13000 = vpack.c.b16 %v12312, %v12304
    %v13001 = vpack.c.b16 %v12313, %v12305
    %v13002 = vpack.c.b16 %v12314, %v12306
    %v13003 = vpack.c.b16 %v12315, %v12307
    %v13004 = vpack.c.b16 %v12316, %v12308
    %v13005 = vpack.c.b16 %v12325, %v12317
    %v13006 = vpack.c.b16 %v12326, %v12318
    %v13007 = vpack.c.b16 %v12327, %v12319
    %v13008 = vpack.c.b16 %v12328, %v12320
    %v13009 = vpack.c.b16 %v12329, %v12321
    %v13010 = vpack.c.b16 %v12330, %v12322
    %v13011 = vpack.c.b16 %v12331, %v12323
    %v13012 = vpack.c.b16 %v12332, %v12324
    %v13013 = vpack.c.b16 %v12341, %v12333
    %v13014 = vpack.c.b16 %v12342, %v12334
    %v13015 = vpack.c.b16 %v12343, %v12335
    %v13016 = vpack.c.b16 %v12344, %v12336
    %v13017 = vpack.c.b16 %v12345, %v12337
    %v13018 = vpack.c.b16 %v12346, %v12338
    %v13019 = vpack.c.b16 %v12347, %v12339
    %v13020 = vpack.c.b16 %v12348, %v12340
    %v13021 = vpack.c.b16 %v12357, %v12349
    %v13022 = vpack.c.b16 %v12358, %v12350
    %v13023 = vpack.c.b16 %v12359, %v12351
    %v13024 = vpack.c.b16 %v12360, %v12352
    %v13025 = vpack.c.b16 %v12361, %v12353
    %v13026 = vpack.c.b16 %v12362, %v12354
    %v13027 = vpack.c.b16 %v12363, %v12355
    %v13028 = vpack.c.b16 %v12364, %v12356
    %v13029 = vpack.c.b16 %v12373, %v12365
    %v13030 = vpack.c.b16 %v12374, %v12366
    %v13031 = vpack.c.b16 %v12375, %v12367
    %v13032 = vpack.c.b16 %v12376, %v12368
    %v13033 = vpack.c.b16 %v12377, %v12369
    %v13034 = vpack.c.b16 %v12378, %v12370
    %v13035 = vpack.c.b16 %v12379, %v12371
    %v13036 = vpack.c.b16 %v12380, %v12372
    %v13037 = vpack.c.b16 %v12389, %v12381
    %v13038 = vpack.c.b16 %v12390, %v12382
    %v13039 = vpack.c.b16 %v12391, %v12383
    %v13040 = vpack.c.b16 %v12392, %v12384
    %v13041 = vpack.c.b16 %v12393, %v12385
    %v13042 = vpack.c.b16 %v12394, %v12386
    %v13043 = vpack.c.b16 %v12395, %v12387
    %v13044 = vpack.c.b16 %v12396, %v12388
    %v13045 = vpack.c.b16 %v12405, %v12397
    %v13046 = vpack.c.b16 %v12406, %v12398
    %v13047 = vpack.c.b16 %v12407, %v12399
    %v13048 = vpack.c.b16 %v12408, %v12400
    %v13049 = vpack.c.b16 %v12409, %v12401
    %v13050 = vpack.c.b16 %v12410, %v12402
    %v13051 = vpack.c.b16 %v12411, %v12403
    %v13052 = vpack.c.b16 %v12412, %v12404
    %v13053 = vpack.c.b16 %v12421, %v12413
    %v13054 = vpack.c.b16 %v12422, %v12414
    %v13055 = vpack.c.b16 %v12423, %v12415
    %v13056 = vpack.c.b16 %v12424, %v12416
    %v13057 = vpack.c.b16 %v12425, %v12417
    %v13058 = vpack.c.b16 %v12426, %v12418
    %v13059 = vpack.c.b16 %v12427, %v12419
    %v13060 = vpack.c.b16 %v12428, %v12420
    %v13061 = vpack.c.b16 %v12437, %v12429
    %v13062 = vpack.c.b16 %v12438, %v12430
    %v13063 = vpack.c.b16 %v12439, %v12431
    %v13064 = vpack.c.b16 %v12440, %v12432
    %v13065 = vpack.c.b16 %v12441, %v12433
    %v13066 = vpack.c.b16 %v12442, %v12434
    %v13067 = vpack.c.b16 %v12443, %v12435
    %v13068 = vpack.c.b16 %v12444, %v12436
    %v13069 = vpack.c.b16 %v12453, %v12445
    %v13070 = vpack.c.b16 %v12454, %v12446
    %v13071 = vpack.c.b16 %v12455, %v12447
    %v13072 = vpack.c.b16 %v12456, %v12448
    %v13073 = vpack.c.b16 %v12457, %v12449
    %v13074 = vpack.c.b16 %v12458, %v12450
    %v13075 = vpack.c.b16 %v12459, %v12451
    %v13076 = vpack.c.b16 %v12460, %v12452
    %v13077 = vpack.c.b16 %v12469, %v12461
    %v13078 = vpack.c.b16 %v12470, %v12462
    %v13079 = vpack.c.b16 %v12471, %v12463
    %v13080 = vpack.c.b16 %v12472, %v12464
    %v13081 = vpack.c.b16 %v12473, %v12465
    %v13082 = vpack.c.b16 %v12474, %v12466
    %v13083 = vpack.c.b16 %v12475, %v12467
    %v13084 = vpack.c.b16 %v12476, %v12468
    %v13085 = vpack.c.b16 %v12485, %v12477
    %v13086 = vpack.c.b16 %v12486, %v12478
    %v13087 = vpack.c.b16 %v12487, %v12479
    %v13088 = vpack.c.b16 %v12488, %v12480
    %v13089 = vpack.c.b16 %v12489, %v12481
    %v13090 = vpack.c.b16 %v12490, %v12482
    %v13091 = vpack.c.b16 %v12491, %v12483
    %v13092 = vpack.c.b16 %v12492, %v12484
    %v13093 = vpack.c.b16 %v12501, %v12493
    %v13094 = vpack.c.b16 %v12502, %v12494
    %v13095 = vpack.c.b16 %v12503, %v12495
    %v13096 = vpack.c.b16 %v12504, %v12496
    %v13097 = vpack.c.b16 %v12505, %v12497
    %v13098 = vpack.c.b16 %v12506, %v12498
    %v13099 = vpack.c.b16 %v12507, %v12499
    %v13100 = vpack.c.b16 %v12508, %v12500
    %v13101 = vpack.c.b16 %v12517, %v12509
    %v13102 = vpack.c.b16 %v12518, %v12510
    %v13103 = vpack.c.b16 %v12519, %v12511
    %v13104 = vpack.c.b16 %v12520, %v12512
    %v13105 = vpack.c.b16 %v12521, %v12513
    %v13106 = vpack.c.b16 %v12522, %v12514
    %v13107 = vpack.c.b16 %v12523, %v12515
    %v13108 = vpack.c.b16 %v12524, %v12516
    %v13109 = vpack.c.b16 %v12533, %v12525
    %v13110 = vpack.c.b16 %v12534, %v12526
    %v13111 = vpack.c.b16 %v12535, %v12527
    %v13112 = vpack.c.b16 %v12536, %v12528
    %v13113 = vpack.c.b16 %v12537, %v12529
    %v13114 = vpack.c.b16 %v12538, %v12530
    %v13115 = vpack.c.b16 %v12539, %v12531
    %v13116 = vpack.c.b16 %v12540, %v12532
    %v13117 = vpack.c.b16 %v12549, %v12541
    %v13118 = vpack.c.b16 %v12550, %v12542
    %v13119 = vpack.c.b16 %v12551, %v12543
    %v13120 = vpack.c.b16 %v12552, %v12544
    %v13121 = vpack.c.b16 %v12553, %v12545
    %v13122 = vpack.c.b16 %v12554, %v12546
    %v13123 = vpack.c.b16 %v12555, %v12547
    %v13124 = vpack.c.b16 %v12556, %v12548
    %v13125 = vpack.c.b16 %v12565, %v12557
    %v13126 = vpack.c.b16 %v12566, %v12558
    %v13127 = vpack.c.b16 %v12567, %v12559
    %v13128 = vpack.c.b16 %v12568, %v12560
    %v13129 = vpack.c.b16 %v12569, %v12561
    %v13130 = vpack.c.b16 %v12570, %v12562
    %v13131 = vpack.c.b16 %v12571, %v12563
    %v13132 = vpack.c.b16 %v12572, %v12564
    %v13133 = vpack.c.b16 %v12581, %v12573
    %v13134 = vpack.c.b16 %v12582, %v12574
    %v13135 = vpack.c.b16 %v12583, %v12575
    %v13136 = vpack.c.b16 %v12584, %v12576
    %v13137 = vpack.c.b16 %v12585, %v12577
    %v13138 = vpack.c.b16 %v12586, %v12578
    %v13139 = vpack.c.b16 %v12587, %v12579
    %v13140 = vpack.c.b16 %v12588, %v12580
    %v13141 = vpack.c.b16 %v12597, %v12589
    %v13142 = vpack.c.b16 %v12598, %v12590
    %v13143 = vpack.c.b16 %v12599, %v12591
    %v13144 = vpack.c.b16 %v12600, %v12592
    %v13145 = vpack.c.b16 %v12601, %v12593
    %v13146 = vpack.c.b16 %v12602, %v12594
    %v13147 = vpack.c.b16 %v12603, %v12595
    %v13148 = vpack.c.b16 %v12604, %v12596
    %v13149 = vpack.c.b16 %v12613, %v12605
    %v13150 = vpack.c.b16 %v12614, %v12606
    %v13151 = vpack.c.b16 %v12615, %v12607
    %v13152 = vpack.c.b16 %v12616, %v12608
    %v13153 = vpack.c.b16 %v12617, %v12609
    %v13154 = vpack.c.b16 %v12618, %v12610
    %v13155 = vpack.c.b16 %v12619, %v12611
    %v13156 = vpack.c.b16 %v12620, %v12612
    %v13157 = vpack.c.b16 %v12629, %v12621
    %v13158 = vpack.c.b16 %v12630, %v12622
    %v13159 = vpack.c.b16 %v12631, %v12623
    %v13160 = vpack.c.b16 %v12632, %v12624
    %v13161 = vpack.c.b16 %v12633, %v12625
    %v13162 = vpack.c.b16 %v12634, %v12626
    %v13163 = vpack.c.b16 %v12635, %v12627
    %v13164 = vpack.c.b16 %v12636, %v12628
    %v13165 = vpack.c.b16 %v12645, %v12637
    %v13166 = vpack.c.b16 %v12646, %v12638
    %v13167 = vpack.c.b16 %v12647, %v12639
    %v13168 = vpack.c.b16 %v12648, %v12640
    %v13169 = vpack.c.b16 %v12649, %v12641
    %v13170 = vpack.c.b16 %v12650, %v12642
    %v13171 = vpack.c.b16 %v12651, %v12643
    %v13172 = vpack.c.b16 %v12652, %v12644
    %v13173 = vpack.c.b16 %v12661, %v12653
    %v13174 = vpack.c.b16 %v12662, %v12654
    %v13175 = vpack.c.b16 %v12663, %v12655
    %v13176 = vpack.c.b16 %v12664, %v12656
    %v13177 = vpack.c.b16 %v12665, %v12657
    %v13178 = vpack.c.b16 %v12666, %v12658
    %v13179 = vpack.c.b16 %v12667, %v12659
    %v13180 = vpack.c.b16 %v12668, %v12660
    %v13181 = vpack.c.b16 %v12677, %v12669
    %v13182 = vpack.c.b16 %v12678, %v12670
    %v13183 = vpack.c.b16 %v12679, %v12671
    %v13184 = vpack.c.b16 %v12680, %v12672
    %v13185 = vpack.c.b16 %v12681, %v12673
    %v13186 = vpack.c.b16 %v12682, %v12674
    %v13187 = vpack.c.b16 %v12683, %v12675
    %v13188 = vpack.c.b16 %v12684, %v12676
    %v13189 = vpack.c.b16 %v12693, %v12685
    %v13190 = vpack.c.b16 %v12694, %v12686
    %v13191 = vpack.c.b16 %v12695, %v12687
    %v13192 = vpack.c.b16 %v12696, %v12688
    %v13193 = vpack.c.b16 %v12697, %v12689
    %v13194 = vpack.c.b16 %v12698, %v12690
    %v13195 = vpack.c.b16 %v12699, %v12691
    %v13196 = vpack.c.b16 %v12700, %v12692
    %v13197 = vpack.c.b16 %v12709, %v12701
    %v13198 = vpack.c.b16 %v12710, %v12702
    %v13199 = vpack.c.b16 %v12711, %v12703
    %v13200 = vpack.c.b16 %v12712, %v12704
    %v13201 = vpack.c.b16 %v12713, %v12705
    %v13202 = vpack.c.b16 %v12714, %v12706
    %v13203 = vpack.c.b16 %v12715, %v12707
    %v13204 = vpack.c.b16 %v12716, %v12708
    %v13205 = vpack.c.b16 %v12725, %v12717
    %v13206 = vpack.c.b16 %v12726, %v12718
    %v13207 = vpack.c.b16 %v12727, %v12719
    %v13208 = vpack.c.b16 %v12728, %v12720
    %v13209 = vpack.c.b16 %v12729, %v12721
    %v13210 = vpack.c.b16 %v12730, %v12722
    %v13211 = vpack.c.b16 %v12731, %v12723
    %v13212 = vpack.c.b16 %v12732, %v12724
    %v13213 = vpack.c.b16 %v12741, %v12733
    %v13214 = vpack.c.b16 %v12742, %v12734
    %v13215 = vpack.c.b16 %v12743, %v12735
    %v13216 = vpack.c.b16 %v12744, %v12736
    %v13217 = vpack.c.b16 %v12745, %v12737
    %v13218 = vpack.c.b16 %v12746, %v12738
    %v13219 = vpack.c.b16 %v12747, %v12739
    %v13220 = vpack.c.b16 %v12748, %v12740
    %v13221 = vpack.c.b16 %v12757, %v12749
    %v13222 = vpack.c.b16 %v12758, %v12750
    %v13223 = vpack.c.b16 %v12759, %v12751
    %v13224 = vpack.c.b16 %v12760, %v12752
    %v13225 = vpack.c.b16 %v12761, %v12753
    %v13226 = vpack.c.b16 %v12762, %v12754
    %v13227 = vpack.c.b16 %v12763, %v12755
    %v13228 = vpack.c.b16 %v12764, %v12756
    %v13229 = vpack.c.b16 %v12773, %v12765
    %v13230 = vpack.c.b16 %v12774, %v12766
    %v13231 = vpack.c.b16 %v12775, %v12767
    %v13232 = vpack.c.b16 %v12776, %v12768
    %v13233 = vpack.c.b16 %v12777, %v12769
    %v13234 = vpack.c.b16 %v12778, %v12770
    %v13235 = vpack.c.b16 %v12779, %v12771
    %v13236 = vpack.c.b16 %v12780, %v12772
    %v13237 = vpack.c.b16 %v12789, %v12781
    %v13238 = vpack.c.b16 %v12790, %v12782
    %v13239 = vpack.c.b16 %v12791, %v12783
    %v13240 = vpack.c.b16 %v12792, %v12784
    %v13241 = vpack.c.b16 %v12793, %v12785
    %v13242 = vpack.c.b16 %v12794, %v12786
    %v13243 = vpack.c.b16 %v12795, %v12787
    %v13244 = vpack.c.b16 %v12796, %v12788
    %13693 = vmatpush.bf16.msra.mxu0 %v12853
    %13694 = vmatpush.bf16.msra.mxu0 %v12845
    %13695 = vmatpush.bf16.msra.mxu0 %v12837
    %13696 = vmatpush.bf16.msra.mxu0 %v12829
    %13697 = vmatpush.bf16.msra.mxu0 %v12821
    %13698 = vmatpush.bf16.msra.mxu0 %v12813
    %13699 = vmatpush.bf16.msra.mxu0 %v12805
    %13700 = vmatpush.bf16.msra.mxu0 %v12797
    %13701 = vmatmul.bf16.gmra.mxu0 %v10998
    %v13702 = vpop.f32.mrf.mxu0
    %v13703 = vadd.f32 0.0, %v13702
    %v13704 = vpop.f32.mrf.mxu0
    %13705 = vdwg.mxu0
    %13706 = vmatpush.bf16.msra.mxu0 %v12917
    %13707 = vmatpush.bf16.msra.mxu0 %v12909
    %13708 = vmatpush.bf16.msra.mxu0 %v12901
    %13709 = vmatpush.bf16.msra.mxu0 %v12893
    %13710 = vmatpush.bf16.msra.mxu0 %v12885
    %13711 = vmatpush.bf16.msra.mxu0 %v12877
    %13712 = vmatpush.bf16.msra.mxu0 %v12869
    %13713 = vmatpush.bf16.msra.mxu0 %v12861
    %13714 = vmatmul.bf16.gmra.mxu0 %v10999
    %v13715 = vpop.f32.mrf.mxu0
    %v13716 = vadd.f32 %v13703, %v13715
    %v13717 = vpop.f32.mrf.mxu0
    %13718 = vdwg.mxu0
    %13719 = vmatpush.bf16.msra.mxu0 %v12981
    %13720 = vmatpush.bf16.msra.mxu0 %v12973
    %13721 = vmatpush.bf16.msra.mxu0 %v12965
    %13722 = vmatpush.bf16.msra.mxu0 %v12957
    %13723 = vmatpush.bf16.msra.mxu0 %v12949
    %13724 = vmatpush.bf16.msra.mxu0 %v12941
    %13725 = vmatpush.bf16.msra.mxu0 %v12933
    %13726 = vmatpush.bf16.msra.mxu0 %v12925
    %13727 = vmatmul.bf16.gmra.mxu0 %v11000
    %v13728 = vpop.f32.mrf.mxu0
    %v13729 = vadd.f32 %v13716, %v13728
    %v13730 = vpop.f32.mrf.mxu0
    %13731 = vdwg.mxu0
    %13732 = vmatpush.bf16.msra.mxu0 %v13045
    %13733 = vmatpush.bf16.msra.mxu0 %v13037
    %13734 = vmatpush.bf16.msra.mxu0 %v13029
    %13735 = vmatpush.bf16.msra.mxu0 %v13021
    %13736 = vmatpush.bf16.msra.mxu0 %v13013
    %13737 = vmatpush.bf16.msra.mxu0 %v13005
    %13738 = vmatpush.bf16.msra.mxu0 %v12997
    %13739 = vmatpush.bf16.msra.mxu0 %v12989
    %13740 = vmatmul.bf16.gmra.mxu0 %v11001
    %v13741 = vpop.f32.mrf.mxu0
    %v13742 = vadd.f32 %v13729, %v13741
    %v13743 = vpop.f32.mrf.mxu0
    %13744 = vdwg.mxu0
    %13745 = vmatpush.bf16.msra.mxu0 %v13109
    %13746 = vmatpush.bf16.msra.mxu0 %v13101
    %13747 = vmatpush.bf16.msra.mxu0 %v13093
    %13748 = vmatpush.bf16.msra.mxu0 %v13085
    %13749 = vmatpush.bf16.msra.mxu0 %v13077
    %13750 = vmatpush.bf16.msra.mxu0 %v13069
    %13751 = vmatpush.bf16.msra.mxu0 %v13061
    %13752 = vmatpush.bf16.msra.mxu0 %v13053
    %13753 = vmatmul.bf16.gmra.mxu0 %v11002
    %v13754 = vpop.f32.mrf.mxu0
    %v13755 = vadd.f32 %v13742, %v13754
    %v13756 = vpop.f32.mrf.mxu0
    %13757 = vdwg.mxu0
    %13758 = vmatpush.bf16.msra.mxu0 %v13173
    %13759 = vmatpush.bf16.msra.mxu0 %v13165
    %13760 = vmatpush.bf16.msra.mxu0 %v13157
    %13761 = vmatpush.bf16.msra.mxu0 %v13149
    %13762 = vmatpush.bf16.msra.mxu0 %v13141
    %13763 = vmatpush.bf16.msra.mxu0 %v13133
    %13764 = vmatpush.bf16.msra.mxu0 %v13125
    %13765 = vmatpush.bf16.msra.mxu0 %v13117
    %13766 = vmatmul.bf16.gmra.mxu0 %v11003
    %v13767 = vpop.f32.mrf.mxu0
    %v13768 = vadd.f32 %v13755, %v13767
    %v13769 = vpop.f32.mrf.mxu0
    %13770 = vdwg.mxu0
    %13771 = vmatpush.bf16.msra.mxu0 %v13237
    %13772 = vmatpush.bf16.msra.mxu0 %v13229
    %13773 = vmatpush.bf16.msra.mxu0 %v13221
    %13774 = vmatpush.bf16.msra.mxu0 %v13213
    %13775 = vmatpush.bf16.msra.mxu0 %v13205
    %13776 = vmatpush.bf16.msra.mxu0 %v13197
    %13777 = vmatpush.bf16.msra.mxu0 %v13189
    %13778 = vmatpush.bf16.msra.mxu0 %v13181
    %13779 = vmatmul.bf16.gmra.mxu0 %v11004
    %v13780 = vpop.f32.mrf.mxu0
    %v13781 = vadd.f32 %v13768, %v13780
    %v13782 = vpop.f32.mrf.mxu0
    %13783 = vdwg.mxu0
    %13784 = vmatpush.bf16.msra.mxu0 %v12854
    %13785 = vmatpush.bf16.msra.mxu0 %v12846
    %13786 = vmatpush.bf16.msra.mxu0 %v12838
    %13787 = vmatpush.bf16.msra.mxu0 %v12830
    %13788 = vmatpush.bf16.msra.mxu0 %v12822
    %13789 = vmatpush.bf16.msra.mxu0 %v12814
    %13790 = vmatpush.bf16.msra.mxu0 %v12806
    %13791 = vmatpush.bf16.msra.mxu0 %v12798
    %13792 = vmatmul.bf16.gmra.mxu0 %v10998
    %v13793 = vpop.f32.mrf.mxu0
    %v13794 = vadd.f32 0.0, %v13793
    %v13795 = vpop.f32.mrf.mxu0
    %13796 = vdwg.mxu0
    %13797 = vmatpush.bf16.msra.mxu0 %v12918
    %13798 = vmatpush.bf16.msra.mxu0 %v12910
    %13799 = vmatpush.bf16.msra.mxu0 %v12902
    %13800 = vmatpush.bf16.msra.mxu0 %v12894
    %13801 = vmatpush.bf16.msra.mxu0 %v12886
    %13802 = vmatpush.bf16.msra.mxu0 %v12878
    %13803 = vmatpush.bf16.msra.mxu0 %v12870
    %13804 = vmatpush.bf16.msra.mxu0 %v12862
    %13805 = vmatmul.bf16.gmra.mxu0 %v10999
    %v13806 = vpop.f32.mrf.mxu0
    %v13807 = vadd.f32 %v13794, %v13806
    %v13808 = vpop.f32.mrf.mxu0
    %13809 = vdwg.mxu0
    %13810 = vmatpush.bf16.msra.mxu0 %v12982
    %13811 = vmatpush.bf16.msra.mxu0 %v12974
    %13812 = vmatpush.bf16.msra.mxu0 %v12966
    %13813 = vmatpush.bf16.msra.mxu0 %v12958
    %13814 = vmatpush.bf16.msra.mxu0 %v12950
    %13815 = vmatpush.bf16.msra.mxu0 %v12942
    %13816 = vmatpush.bf16.msra.mxu0 %v12934
    %13817 = vmatpush.bf16.msra.mxu0 %v12926
    %13818 = vmatmul.bf16.gmra.mxu0 %v11000
    %v13819 = vpop.f32.mrf.mxu0
    %v13820 = vadd.f32 %v13807, %v13819
    %v13821 = vpop.f32.mrf.mxu0
    %13822 = vdwg.mxu0
    %13823 = vmatpush.bf16.msra.mxu0 %v13046
    %13824 = vmatpush.bf16.msra.mxu0 %v13038
    %13825 = vmatpush.bf16.msra.mxu0 %v13030
    %13826 = vmatpush.bf16.msra.mxu0 %v13022
    %13827 = vmatpush.bf16.msra.mxu0 %v13014
    %13828 = vmatpush.bf16.msra.mxu0 %v13006
    %13829 = vmatpush.bf16.msra.mxu0 %v12998
    %13830 = vmatpush.bf16.msra.mxu0 %v12990
    %13831 = vmatmul.bf16.gmra.mxu0 %v11001
    %v13832 = vpop.f32.mrf.mxu0
    %v13833 = vadd.f32 %v13820, %v13832
    %v13834 = vpop.f32.mrf.mxu0
    %13835 = vdwg.mxu0
    %13836 = vmatpush.bf16.msra.mxu0 %v13110
    %13837 = vmatpush.bf16.msra.mxu0 %v13102
    %13838 = vmatpush.bf16.msra.mxu0 %v13094
    %13839 = vmatpush.bf16.msra.mxu0 %v13086
    %13840 = vmatpush.bf16.msra.mxu0 %v13078
    %13841 = vmatpush.bf16.msra.mxu0 %v13070
    %13842 = vmatpush.bf16.msra.mxu0 %v13062
    %13843 = vmatpush.bf16.msra.mxu0 %v13054
    %13844 = vmatmul.bf16.gmra.mxu0 %v11002
    %v13845 = vpop.f32.mrf.mxu0
    %v13846 = vadd.f32 %v13833, %v13845
    %v13847 = vpop.f32.mrf.mxu0
    %13848 = vdwg.mxu0
    %13849 = vmatpush.bf16.msra.mxu0 %v13174
    %13850 = vmatpush.bf16.msra.mxu0 %v13166
    %13851 = vmatpush.bf16.msra.mxu0 %v13158
    %13852 = vmatpush.bf16.msra.mxu0 %v13150
    %13853 = vmatpush.bf16.msra.mxu0 %v13142
    %13854 = vmatpush.bf16.msra.mxu0 %v13134
    %13855 = vmatpush.bf16.msra.mxu0 %v13126
    %13856 = vmatpush.bf16.msra.mxu0 %v13118
    %13857 = vmatmul.bf16.gmra.mxu0 %v11003
    %v13858 = vpop.f32.mrf.mxu0
    %v13859 = vadd.f32 %v13846, %v13858
    %v13860 = vpop.f32.mrf.mxu0
    %13861 = vdwg.mxu0
    %13862 = vmatpush.bf16.msra.mxu0 %v13238
    %13863 = vmatpush.bf16.msra.mxu0 %v13230
    %13864 = vmatpush.bf16.msra.mxu0 %v13222
    %13865 = vmatpush.bf16.msra.mxu0 %v13214
    %13866 = vmatpush.bf16.msra.mxu0 %v13206
    %13867 = vmatpush.bf16.msra.mxu0 %v13198
    %13868 = vmatpush.bf16.msra.mxu0 %v13190
    %13869 = vmatpush.bf16.msra.mxu0 %v13182
    %13870 = vmatmul.bf16.gmra.mxu0 %v11004
    %v13871 = vpop.f32.mrf.mxu0
    %v13872 = vadd.f32 %v13859, %v13871
    %v13873 = vpop.f32.mrf.mxu0
    %13874 = vdwg.mxu0
    %13875 = vmatpush.bf16.msra.mxu0 %v12855
    %13876 = vmatpush.bf16.msra.mxu0 %v12847
    %13877 = vmatpush.bf16.msra.mxu0 %v12839
    %13878 = vmatpush.bf16.msra.mxu0 %v12831
    %13879 = vmatpush.bf16.msra.mxu0 %v12823
    %13880 = vmatpush.bf16.msra.mxu0 %v12815
    %13881 = vmatpush.bf16.msra.mxu0 %v12807
    %13882 = vmatpush.bf16.msra.mxu0 %v12799
    %13883 = vmatmul.bf16.gmra.mxu0 %v10998
    %v13884 = vpop.f32.mrf.mxu0
    %v13885 = vadd.f32 0.0, %v13884
    %v13886 = vpop.f32.mrf.mxu0
    %13887 = vdwg.mxu0
    %13888 = vmatpush.bf16.msra.mxu0 %v12919
    %13889 = vmatpush.bf16.msra.mxu0 %v12911
    %13890 = vmatpush.bf16.msra.mxu0 %v12903
    %13891 = vmatpush.bf16.msra.mxu0 %v12895
    %13892 = vmatpush.bf16.msra.mxu0 %v12887
    %13893 = vmatpush.bf16.msra.mxu0 %v12879
    %13894 = vmatpush.bf16.msra.mxu0 %v12871
    %13895 = vmatpush.bf16.msra.mxu0 %v12863
    %13896 = vmatmul.bf16.gmra.mxu0 %v10999
    %v13897 = vpop.f32.mrf.mxu0
    %v13898 = vadd.f32 %v13885, %v13897
    %v13899 = vpop.f32.mrf.mxu0
    %13900 = vdwg.mxu0
    %13901 = vmatpush.bf16.msra.mxu0 %v12983
    %13902 = vmatpush.bf16.msra.mxu0 %v12975
    %13903 = vmatpush.bf16.msra.mxu0 %v12967
    %13904 = vmatpush.bf16.msra.mxu0 %v12959
    %13905 = vmatpush.bf16.msra.mxu0 %v12951
    %13906 = vmatpush.bf16.msra.mxu0 %v12943
    %13907 = vmatpush.bf16.msra.mxu0 %v12935
    %13908 = vmatpush.bf16.msra.mxu0 %v12927
    %13909 = vmatmul.bf16.gmra.mxu0 %v11000
    %v13910 = vpop.f32.mrf.mxu0
    %v13911 = vadd.f32 %v13898, %v13910
    %v13912 = vpop.f32.mrf.mxu0
    %13913 = vdwg.mxu0
    %13914 = vmatpush.bf16.msra.mxu0 %v13047
    %13915 = vmatpush.bf16.msra.mxu0 %v13039
    %13916 = vmatpush.bf16.msra.mxu0 %v13031
    %13917 = vmatpush.bf16.msra.mxu0 %v13023
    %13918 = vmatpush.bf16.msra.mxu0 %v13015
    %13919 = vmatpush.bf16.msra.mxu0 %v13007
    %13920 = vmatpush.bf16.msra.mxu0 %v12999
    %13921 = vmatpush.bf16.msra.mxu0 %v12991
    %13922 = vmatmul.bf16.gmra.mxu0 %v11001
    %v13923 = vpop.f32.mrf.mxu0
    %v13924 = vadd.f32 %v13911, %v13923
    %v13925 = vpop.f32.mrf.mxu0
    %13926 = vdwg.mxu0
    %13927 = vmatpush.bf16.msra.mxu0 %v13111
    %13928 = vmatpush.bf16.msra.mxu0 %v13103
    %13929 = vmatpush.bf16.msra.mxu0 %v13095
    %13930 = vmatpush.bf16.msra.mxu0 %v13087
    %13931 = vmatpush.bf16.msra.mxu0 %v13079
    %13932 = vmatpush.bf16.msra.mxu0 %v13071
    %13933 = vmatpush.bf16.msra.mxu0 %v13063
    %13934 = vmatpush.bf16.msra.mxu0 %v13055
    %13935 = vmatmul.bf16.gmra.mxu0 %v11002
    %v13936 = vpop.f32.mrf.mxu0
    %v13937 = vadd.f32 %v13924, %v13936
    %v13938 = vpop.f32.mrf.mxu0
    %13939 = vdwg.mxu0
    %13940 = vmatpush.bf16.msra.mxu0 %v13175
    %13941 = vmatpush.bf16.msra.mxu0 %v13167
    %13942 = vmatpush.bf16.msra.mxu0 %v13159
    %13943 = vmatpush.bf16.msra.mxu0 %v13151
    %13944 = vmatpush.bf16.msra.mxu0 %v13143
    %13945 = vmatpush.bf16.msra.mxu0 %v13135
    %13946 = vmatpush.bf16.msra.mxu0 %v13127
    %13947 = vmatpush.bf16.msra.mxu0 %v13119
    %13948 = vmatmul.bf16.gmra.mxu0 %v11003
    %v13949 = vpop.f32.mrf.mxu0
    %v13950 = vadd.f32 %v13937, %v13949
    %v13951 = vpop.f32.mrf.mxu0
    %13952 = vdwg.mxu0
    %13953 = vmatpush.bf16.msra.mxu0 %v13239
    %13954 = vmatpush.bf16.msra.mxu0 %v13231
    %13955 = vmatpush.bf16.msra.mxu0 %v13223
    %13956 = vmatpush.bf16.msra.mxu0 %v13215
    %13957 = vmatpush.bf16.msra.mxu0 %v13207
    %13958 = vmatpush.bf16.msra.mxu0 %v13199
    %13959 = vmatpush.bf16.msra.mxu0 %v13191
    %13960 = vmatpush.bf16.msra.mxu0 %v13183
    %13961 = vmatmul.bf16.gmra.mxu0 %v11004
    %v13962 = vpop.f32.mrf.mxu0
    %v13963 = vadd.f32 %v13950, %v13962
    %v13964 = vpop.f32.mrf.mxu0
    %13965 = vdwg.mxu0
    %13966 = vmatpush.bf16.msra.mxu0 %v12856
    %13967 = vmatpush.bf16.msra.mxu0 %v12848
    %13968 = vmatpush.bf16.msra.mxu0 %v12840
    %13969 = vmatpush.bf16.msra.mxu0 %v12832
    %13970 = vmatpush.bf16.msra.mxu0 %v12824
    %13971 = vmatpush.bf16.msra.mxu0 %v12816
    %13972 = vmatpush.bf16.msra.mxu0 %v12808
    %13973 = vmatpush.bf16.msra.mxu0 %v12800
    %13974 = vmatmul.bf16.gmra.mxu0 %v10998
    %v13975 = vpop.f32.mrf.mxu0
    %v13976 = vadd.f32 0.0, %v13975
    %v13977 = vpop.f32.mrf.mxu0
    %13978 = vdwg.mxu0
    %13979 = vmatpush.bf16.msra.mxu0 %v12920
    %13980 = vmatpush.bf16.msra.mxu0 %v12912
    %13981 = vmatpush.bf16.msra.mxu0 %v12904
    %13982 = vmatpush.bf16.msra.mxu0 %v12896
    %13983 = vmatpush.bf16.msra.mxu0 %v12888
    %13984 = vmatpush.bf16.msra.mxu0 %v12880
    %13985 = vmatpush.bf16.msra.mxu0 %v12872
    %13986 = vmatpush.bf16.msra.mxu0 %v12864
    %13987 = vmatmul.bf16.gmra.mxu0 %v10999
    %v13988 = vpop.f32.mrf.mxu0
    %v13989 = vadd.f32 %v13976, %v13988
    %v13990 = vpop.f32.mrf.mxu0
    %13991 = vdwg.mxu0
    %13992 = vmatpush.bf16.msra.mxu0 %v12984
    %13993 = vmatpush.bf16.msra.mxu0 %v12976
    %13994 = vmatpush.bf16.msra.mxu0 %v12968
    %13995 = vmatpush.bf16.msra.mxu0 %v12960
    %13996 = vmatpush.bf16.msra.mxu0 %v12952
    %13997 = vmatpush.bf16.msra.mxu0 %v12944
    %13998 = vmatpush.bf16.msra.mxu0 %v12936
    %13999 = vmatpush.bf16.msra.mxu0 %v12928
    %14000 = vmatmul.bf16.gmra.mxu0 %v11000
    %v14001 = vpop.f32.mrf.mxu0
    %v14002 = vadd.f32 %v13989, %v14001
    %v14003 = vpop.f32.mrf.mxu0
    %14004 = vdwg.mxu0
    %14005 = vmatpush.bf16.msra.mxu0 %v13048
    %14006 = vmatpush.bf16.msra.mxu0 %v13040
    %14007 = vmatpush.bf16.msra.mxu0 %v13032
    %14008 = vmatpush.bf16.msra.mxu0 %v13024
    %14009 = vmatpush.bf16.msra.mxu0 %v13016
    %14010 = vmatpush.bf16.msra.mxu0 %v13008
    %14011 = vmatpush.bf16.msra.mxu0 %v13000
    %14012 = vmatpush.bf16.msra.mxu0 %v12992
    %14013 = vmatmul.bf16.gmra.mxu0 %v11001
    %v14014 = vpop.f32.mrf.mxu0
    %v14015 = vadd.f32 %v14002, %v14014
    %v14016 = vpop.f32.mrf.mxu0
    %14017 = vdwg.mxu0
    %14018 = vmatpush.bf16.msra.mxu0 %v13112
    %14019 = vmatpush.bf16.msra.mxu0 %v13104
    %14020 = vmatpush.bf16.msra.mxu0 %v13096
    %14021 = vmatpush.bf16.msra.mxu0 %v13088
    %14022 = vmatpush.bf16.msra.mxu0 %v13080
    %14023 = vmatpush.bf16.msra.mxu0 %v13072
    %14024 = vmatpush.bf16.msra.mxu0 %v13064
    %14025 = vmatpush.bf16.msra.mxu0 %v13056
    %14026 = vmatmul.bf16.gmra.mxu0 %v11002
    %v14027 = vpop.f32.mrf.mxu0
    %v14028 = vadd.f32 %v14015, %v14027
    %v14029 = vpop.f32.mrf.mxu0
    %14030 = vdwg.mxu0
    %14031 = vmatpush.bf16.msra.mxu0 %v13176
    %14032 = vmatpush.bf16.msra.mxu0 %v13168
    %14033 = vmatpush.bf16.msra.mxu0 %v13160
    %14034 = vmatpush.bf16.msra.mxu0 %v13152
    %14035 = vmatpush.bf16.msra.mxu0 %v13144
    %14036 = vmatpush.bf16.msra.mxu0 %v13136
    %14037 = vmatpush.bf16.msra.mxu0 %v13128
    %14038 = vmatpush.bf16.msra.mxu0 %v13120
    %14039 = vmatmul.bf16.gmra.mxu0 %v11003
    %v14040 = vpop.f32.mrf.mxu0
    %v14041 = vadd.f32 %v14028, %v14040
    %v14042 = vpop.f32.mrf.mxu0
    %14043 = vdwg.mxu0
    %14044 = vmatpush.bf16.msra.mxu0 %v13240
    %14045 = vmatpush.bf16.msra.mxu0 %v13232
    %14046 = vmatpush.bf16.msra.mxu0 %v13224
    %14047 = vmatpush.bf16.msra.mxu0 %v13216
    %14048 = vmatpush.bf16.msra.mxu0 %v13208
    %14049 = vmatpush.bf16.msra.mxu0 %v13200
    %14050 = vmatpush.bf16.msra.mxu0 %v13192
    %14051 = vmatpush.bf16.msra.mxu0 %v13184
    %14052 = vmatmul.bf16.gmra.mxu0 %v11004
    %v14053 = vpop.f32.mrf.mxu0
    %v14054 = vadd.f32 %v14041, %v14053
    %v14055 = vpop.f32.mrf.mxu0
    %14056 = vdwg.mxu0
    %14057 = vmatpush.bf16.msra.mxu0 %v12857
    %14058 = vmatpush.bf16.msra.mxu0 %v12849
    %14059 = vmatpush.bf16.msra.mxu0 %v12841
    %14060 = vmatpush.bf16.msra.mxu0 %v12833
    %14061 = vmatpush.bf16.msra.mxu0 %v12825
    %14062 = vmatpush.bf16.msra.mxu0 %v12817
    %14063 = vmatpush.bf16.msra.mxu0 %v12809
    %14064 = vmatpush.bf16.msra.mxu0 %v12801
    %14065 = vmatmul.bf16.gmra.mxu0 %v10998
    %v14066 = vpop.f32.mrf.mxu0
    %v14067 = vadd.f32 0.0, %v14066
    %v14068 = vpop.f32.mrf.mxu0
    %14069 = vdwg.mxu0
    %14070 = vmatpush.bf16.msra.mxu0 %v12921
    %14071 = vmatpush.bf16.msra.mxu0 %v12913
    %14072 = vmatpush.bf16.msra.mxu0 %v12905
    %14073 = vmatpush.bf16.msra.mxu0 %v12897
    %14074 = vmatpush.bf16.msra.mxu0 %v12889
    %14075 = vmatpush.bf16.msra.mxu0 %v12881
    %14076 = vmatpush.bf16.msra.mxu0 %v12873
    %14077 = vmatpush.bf16.msra.mxu0 %v12865
    %14078 = vmatmul.bf16.gmra.mxu0 %v10999
    %v14079 = vpop.f32.mrf.mxu0
    %v14080 = vadd.f32 %v14067, %v14079
    %v14081 = vpop.f32.mrf.mxu0
    %14082 = vdwg.mxu0
    %14083 = vmatpush.bf16.msra.mxu0 %v12985
    %14084 = vmatpush.bf16.msra.mxu0 %v12977
    %14085 = vmatpush.bf16.msra.mxu0 %v12969
    %14086 = vmatpush.bf16.msra.mxu0 %v12961
    %14087 = vmatpush.bf16.msra.mxu0 %v12953
    %14088 = vmatpush.bf16.msra.mxu0 %v12945
    %14089 = vmatpush.bf16.msra.mxu0 %v12937
    %14090 = vmatpush.bf16.msra.mxu0 %v12929
    %14091 = vmatmul.bf16.gmra.mxu0 %v11000
    %v14092 = vpop.f32.mrf.mxu0
    %v14093 = vadd.f32 %v14080, %v14092
    %v14094 = vpop.f32.mrf.mxu0
    %14095 = vdwg.mxu0
    %14096 = vmatpush.bf16.msra.mxu0 %v13049
    %14097 = vmatpush.bf16.msra.mxu0 %v13041
    %14098 = vmatpush.bf16.msra.mxu0 %v13033
    %14099 = vmatpush.bf16.msra.mxu0 %v13025
    %14100 = vmatpush.bf16.msra.mxu0 %v13017
    %14101 = vmatpush.bf16.msra.mxu0 %v13009
    %14102 = vmatpush.bf16.msra.mxu0 %v13001
    %14103 = vmatpush.bf16.msra.mxu0 %v12993
    %14104 = vmatmul.bf16.gmra.mxu0 %v11001
    %v14105 = vpop.f32.mrf.mxu0
    %v14106 = vadd.f32 %v14093, %v14105
    %v14107 = vpop.f32.mrf.mxu0
    %14108 = vdwg.mxu0
    %14109 = vmatpush.bf16.msra.mxu0 %v13113
    %14110 = vmatpush.bf16.msra.mxu0 %v13105
    %14111 = vmatpush.bf16.msra.mxu0 %v13097
    %14112 = vmatpush.bf16.msra.mxu0 %v13089
    %14113 = vmatpush.bf16.msra.mxu0 %v13081
    %14114 = vmatpush.bf16.msra.mxu0 %v13073
    %14115 = vmatpush.bf16.msra.mxu0 %v13065
    %14116 = vmatpush.bf16.msra.mxu0 %v13057
    %14117 = vmatmul.bf16.gmra.mxu0 %v11002
    %v14118 = vpop.f32.mrf.mxu0
    %v14119 = vadd.f32 %v14106, %v14118
    %v14120 = vpop.f32.mrf.mxu0
    %14121 = vdwg.mxu0
    %14122 = vmatpush.bf16.msra.mxu0 %v13177
    %14123 = vmatpush.bf16.msra.mxu0 %v13169
    %14124 = vmatpush.bf16.msra.mxu0 %v13161
    %14125 = vmatpush.bf16.msra.mxu0 %v13153
    %14126 = vmatpush.bf16.msra.mxu0 %v13145
    %14127 = vmatpush.bf16.msra.mxu0 %v13137
    %14128 = vmatpush.bf16.msra.mxu0 %v13129
    %14129 = vmatpush.bf16.msra.mxu0 %v13121
    %14130 = vmatmul.bf16.gmra.mxu0 %v11003
    %v14131 = vpop.f32.mrf.mxu0
    %v14132 = vadd.f32 %v14119, %v14131
    %v14133 = vpop.f32.mrf.mxu0
    %14134 = vdwg.mxu0
    %14135 = vmatpush.bf16.msra.mxu0 %v13241
    %14136 = vmatpush.bf16.msra.mxu0 %v13233
    %14137 = vmatpush.bf16.msra.mxu0 %v13225
    %14138 = vmatpush.bf16.msra.mxu0 %v13217
    %14139 = vmatpush.bf16.msra.mxu0 %v13209
    %14140 = vmatpush.bf16.msra.mxu0 %v13201
    %14141 = vmatpush.bf16.msra.mxu0 %v13193
    %14142 = vmatpush.bf16.msra.mxu0 %v13185
    %14143 = vmatmul.bf16.gmra.mxu0 %v11004
    %v14144 = vpop.f32.mrf.mxu0
    %v14145 = vadd.f32 %v14132, %v14144
    %v14146 = vpop.f32.mrf.mxu0
    %14147 = vdwg.mxu0
    %14148 = vmatpush.bf16.msra.mxu0 %v12858
    %14149 = vmatpush.bf16.msra.mxu0 %v12850
    %14150 = vmatpush.bf16.msra.mxu0 %v12842
    %14151 = vmatpush.bf16.msra.mxu0 %v12834
    %14152 = vmatpush.bf16.msra.mxu0 %v12826
    %14153 = vmatpush.bf16.msra.mxu0 %v12818
    %14154 = vmatpush.bf16.msra.mxu0 %v12810
    %14155 = vmatpush.bf16.msra.mxu0 %v12802
    %14156 = vmatmul.bf16.gmra.mxu0 %v10998
    %v14157 = vpop.f32.mrf.mxu0
    %v14158 = vadd.f32 0.0, %v14157
    %v14159 = vpop.f32.mrf.mxu0
    %14160 = vdwg.mxu0
    %14161 = vmatpush.bf16.msra.mxu0 %v12922
    %14162 = vmatpush.bf16.msra.mxu0 %v12914
    %14163 = vmatpush.bf16.msra.mxu0 %v12906
    %14164 = vmatpush.bf16.msra.mxu0 %v12898
    %14165 = vmatpush.bf16.msra.mxu0 %v12890
    %14166 = vmatpush.bf16.msra.mxu0 %v12882
    %14167 = vmatpush.bf16.msra.mxu0 %v12874
    %14168 = vmatpush.bf16.msra.mxu0 %v12866
    %14169 = vmatmul.bf16.gmra.mxu0 %v10999
    %v14170 = vpop.f32.mrf.mxu0
    %v14171 = vadd.f32 %v14158, %v14170
    %v14172 = vpop.f32.mrf.mxu0
    %14173 = vdwg.mxu0
    %14174 = vmatpush.bf16.msra.mxu0 %v12986
    %14175 = vmatpush.bf16.msra.mxu0 %v12978
    %14176 = vmatpush.bf16.msra.mxu0 %v12970
    %14177 = vmatpush.bf16.msra.mxu0 %v12962
    %14178 = vmatpush.bf16.msra.mxu0 %v12954
    %14179 = vmatpush.bf16.msra.mxu0 %v12946
    %14180 = vmatpush.bf16.msra.mxu0 %v12938
    %14181 = vmatpush.bf16.msra.mxu0 %v12930
    %14182 = vmatmul.bf16.gmra.mxu0 %v11000
    %v14183 = vpop.f32.mrf.mxu0
    %v14184 = vadd.f32 %v14171, %v14183
    %v14185 = vpop.f32.mrf.mxu0
    %14186 = vdwg.mxu0
    %14187 = vmatpush.bf16.msra.mxu0 %v13050
    %14188 = vmatpush.bf16.msra.mxu0 %v13042
    %14189 = vmatpush.bf16.msra.mxu0 %v13034
    %14190 = vmatpush.bf16.msra.mxu0 %v13026
    %14191 = vmatpush.bf16.msra.mxu0 %v13018
    %14192 = vmatpush.bf16.msra.mxu0 %v13010
    %14193 = vmatpush.bf16.msra.mxu0 %v13002
    %14194 = vmatpush.bf16.msra.mxu0 %v12994
    %14195 = vmatmul.bf16.gmra.mxu0 %v11001
    %v14196 = vpop.f32.mrf.mxu0
    %v14197 = vadd.f32 %v14184, %v14196
    %v14198 = vpop.f32.mrf.mxu0
    %14199 = vdwg.mxu0
    %14200 = vmatpush.bf16.msra.mxu0 %v13114
    %14201 = vmatpush.bf16.msra.mxu0 %v13106
    %14202 = vmatpush.bf16.msra.mxu0 %v13098
    %14203 = vmatpush.bf16.msra.mxu0 %v13090
    %14204 = vmatpush.bf16.msra.mxu0 %v13082
    %14205 = vmatpush.bf16.msra.mxu0 %v13074
    %14206 = vmatpush.bf16.msra.mxu0 %v13066
    %14207 = vmatpush.bf16.msra.mxu0 %v13058
    %14208 = vmatmul.bf16.gmra.mxu0 %v11002
    %v14209 = vpop.f32.mrf.mxu0
    %v14210 = vadd.f32 %v14197, %v14209
    %v14211 = vpop.f32.mrf.mxu0
    %14212 = vdwg.mxu0
    %14213 = vmatpush.bf16.msra.mxu0 %v13178
    %14214 = vmatpush.bf16.msra.mxu0 %v13170
    %14215 = vmatpush.bf16.msra.mxu0 %v13162
    %14216 = vmatpush.bf16.msra.mxu0 %v13154
    %14217 = vmatpush.bf16.msra.mxu0 %v13146
    %14218 = vmatpush.bf16.msra.mxu0 %v13138
    %14219 = vmatpush.bf16.msra.mxu0 %v13130
    %14220 = vmatpush.bf16.msra.mxu0 %v13122
    %14221 = vmatmul.bf16.gmra.mxu0 %v11003
    %v14222 = vpop.f32.mrf.mxu0
    %v14223 = vadd.f32 %v14210, %v14222
    %v14224 = vpop.f32.mrf.mxu0
    %14225 = vdwg.mxu0
    %14226 = vmatpush.bf16.msra.mxu0 %v13242
    %14227 = vmatpush.bf16.msra.mxu0 %v13234
    %14228 = vmatpush.bf16.msra.mxu0 %v13226
    %14229 = vmatpush.bf16.msra.mxu0 %v13218
    %14230 = vmatpush.bf16.msra.mxu0 %v13210
    %14231 = vmatpush.bf16.msra.mxu0 %v13202
    %14232 = vmatpush.bf16.msra.mxu0 %v13194
    %14233 = vmatpush.bf16.msra.mxu0 %v13186
    %14234 = vmatmul.bf16.gmra.mxu0 %v11004
    %v14235 = vpop.f32.mrf.mxu0
    %v14236 = vadd.f32 %v14223, %v14235
    %v14237 = vpop.f32.mrf.mxu0
    %14238 = vdwg.mxu0
    %14239 = vmatpush.bf16.msra.mxu0 %v12859
    %14240 = vmatpush.bf16.msra.mxu0 %v12851
    %14241 = vmatpush.bf16.msra.mxu0 %v12843
    %14242 = vmatpush.bf16.msra.mxu0 %v12835
    %14243 = vmatpush.bf16.msra.mxu0 %v12827
    %14244 = vmatpush.bf16.msra.mxu0 %v12819
    %14245 = vmatpush.bf16.msra.mxu0 %v12811
    %14246 = vmatpush.bf16.msra.mxu0 %v12803
    %14247 = vmatmul.bf16.gmra.mxu0 %v10998
    %v14248 = vpop.f32.mrf.mxu0
    %v14249 = vadd.f32 0.0, %v14248
    %v14250 = vpop.f32.mrf.mxu0
    %14251 = vdwg.mxu0
    %14252 = vmatpush.bf16.msra.mxu0 %v12923
    %14253 = vmatpush.bf16.msra.mxu0 %v12915
    %14254 = vmatpush.bf16.msra.mxu0 %v12907
    %14255 = vmatpush.bf16.msra.mxu0 %v12899
    %14256 = vmatpush.bf16.msra.mxu0 %v12891
    %14257 = vmatpush.bf16.msra.mxu0 %v12883
    %14258 = vmatpush.bf16.msra.mxu0 %v12875
    %14259 = vmatpush.bf16.msra.mxu0 %v12867
    %14260 = vmatmul.bf16.gmra.mxu0 %v10999
    %v14261 = vpop.f32.mrf.mxu0
    %v14262 = vadd.f32 %v14249, %v14261
    %v14263 = vpop.f32.mrf.mxu0
    %14264 = vdwg.mxu0
    %14265 = vmatpush.bf16.msra.mxu0 %v12987
    %14266 = vmatpush.bf16.msra.mxu0 %v12979
    %14267 = vmatpush.bf16.msra.mxu0 %v12971
    %14268 = vmatpush.bf16.msra.mxu0 %v12963
    %14269 = vmatpush.bf16.msra.mxu0 %v12955
    %14270 = vmatpush.bf16.msra.mxu0 %v12947
    %14271 = vmatpush.bf16.msra.mxu0 %v12939
    %14272 = vmatpush.bf16.msra.mxu0 %v12931
    %14273 = vmatmul.bf16.gmra.mxu0 %v11000
    %v14274 = vpop.f32.mrf.mxu0
    %v14275 = vadd.f32 %v14262, %v14274
    %v14276 = vpop.f32.mrf.mxu0
    %14277 = vdwg.mxu0
    %14278 = vmatpush.bf16.msra.mxu0 %v13051
    %14279 = vmatpush.bf16.msra.mxu0 %v13043
    %14280 = vmatpush.bf16.msra.mxu0 %v13035
    %14281 = vmatpush.bf16.msra.mxu0 %v13027
    %14282 = vmatpush.bf16.msra.mxu0 %v13019
    %14283 = vmatpush.bf16.msra.mxu0 %v13011
    %14284 = vmatpush.bf16.msra.mxu0 %v13003
    %14285 = vmatpush.bf16.msra.mxu0 %v12995
    %14286 = vmatmul.bf16.gmra.mxu0 %v11001
    %v14287 = vpop.f32.mrf.mxu0
    %v14288 = vadd.f32 %v14275, %v14287
    %v14289 = vpop.f32.mrf.mxu0
    %14290 = vdwg.mxu0
    %14291 = vmatpush.bf16.msra.mxu0 %v13115
    %14292 = vmatpush.bf16.msra.mxu0 %v13107
    %14293 = vmatpush.bf16.msra.mxu0 %v13099
    %14294 = vmatpush.bf16.msra.mxu0 %v13091
    %14295 = vmatpush.bf16.msra.mxu0 %v13083
    %14296 = vmatpush.bf16.msra.mxu0 %v13075
    %14297 = vmatpush.bf16.msra.mxu0 %v13067
    %14298 = vmatpush.bf16.msra.mxu0 %v13059
    %14299 = vmatmul.bf16.gmra.mxu0 %v11002
    %v14300 = vpop.f32.mrf.mxu0
    %v14301 = vadd.f32 %v14288, %v14300
    %v14302 = vpop.f32.mrf.mxu0
    %14303 = vdwg.mxu0
    %14304 = vmatpush.bf16.msra.mxu0 %v13179
    %14305 = vmatpush.bf16.msra.mxu0 %v13171
    %14306 = vmatpush.bf16.msra.mxu0 %v13163
    %14307 = vmatpush.bf16.msra.mxu0 %v13155
    %14308 = vmatpush.bf16.msra.mxu0 %v13147
    %14309 = vmatpush.bf16.msra.mxu0 %v13139
    %14310 = vmatpush.bf16.msra.mxu0 %v13131
    %14311 = vmatpush.bf16.msra.mxu0 %v13123
    %14312 = vmatmul.bf16.gmra.mxu0 %v11003
    %v14313 = vpop.f32.mrf.mxu0
    %v14314 = vadd.f32 %v14301, %v14313
    %v14315 = vpop.f32.mrf.mxu0
    %14316 = vdwg.mxu0
    %14317 = vmatpush.bf16.msra.mxu0 %v13243
    %14318 = vmatpush.bf16.msra.mxu0 %v13235
    %14319 = vmatpush.bf16.msra.mxu0 %v13227
    %14320 = vmatpush.bf16.msra.mxu0 %v13219
    %14321 = vmatpush.bf16.msra.mxu0 %v13211
    %14322 = vmatpush.bf16.msra.mxu0 %v13203
    %14323 = vmatpush.bf16.msra.mxu0 %v13195
    %14324 = vmatpush.bf16.msra.mxu0 %v13187
    %14325 = vmatmul.bf16.gmra.mxu0 %v11004
    %v14326 = vpop.f32.mrf.mxu0
    %v14327 = vadd.f32 %v14314, %v14326
    %v14328 = vpop.f32.mrf.mxu0
    %14329 = vdwg.mxu0
    %14330 = vmatpush.bf16.msra.mxu0 %v12860
    %14331 = vmatpush.bf16.msra.mxu0 %v12852
    %14332 = vmatpush.bf16.msra.mxu0 %v12844
    %14333 = vmatpush.bf16.msra.mxu0 %v12836
    %14334 = vmatpush.bf16.msra.mxu0 %v12828
    %14335 = vmatpush.bf16.msra.mxu0 %v12820
    %14336 = vmatpush.bf16.msra.mxu0 %v12812
    %14337 = vmatpush.bf16.msra.mxu0 %v12804
    %14338 = vmatmul.bf16.gmra.mxu0 %v10998
    %v14339 = vpop.f32.mrf.mxu0
    %v14340 = vadd.f32 0.0, %v14339
    %v14341 = vpop.f32.mrf.mxu0
    %14342 = vdwg.mxu0
    %14343 = vmatpush.bf16.msra.mxu0 %v12924
    %14344 = vmatpush.bf16.msra.mxu0 %v12916
    %14345 = vmatpush.bf16.msra.mxu0 %v12908
    %14346 = vmatpush.bf16.msra.mxu0 %v12900
    %14347 = vmatpush.bf16.msra.mxu0 %v12892
    %14348 = vmatpush.bf16.msra.mxu0 %v12884
    %14349 = vmatpush.bf16.msra.mxu0 %v12876
    %14350 = vmatpush.bf16.msra.mxu0 %v12868
    %14351 = vmatmul.bf16.gmra.mxu0 %v10999
    %v14352 = vpop.f32.mrf.mxu0
    %v14353 = vadd.f32 %v14340, %v14352
    %v14354 = vpop.f32.mrf.mxu0
    %14355 = vdwg.mxu0
    %14356 = vmatpush.bf16.msra.mxu0 %v12988
    %14357 = vmatpush.bf16.msra.mxu0 %v12980
    %14358 = vmatpush.bf16.msra.mxu0 %v12972
    %14359 = vmatpush.bf16.msra.mxu0 %v12964
    %14360 = vmatpush.bf16.msra.mxu0 %v12956
    %14361 = vmatpush.bf16.msra.mxu0 %v12948
    %14362 = vmatpush.bf16.msra.mxu0 %v12940
    %14363 = vmatpush.bf16.msra.mxu0 %v12932
    %14364 = vmatmul.bf16.gmra.mxu0 %v11000
    %v14365 = vpop.f32.mrf.mxu0
    %v14366 = vadd.f32 %v14353, %v14365
    %v14367 = vpop.f32.mrf.mxu0
    %14368 = vdwg.mxu0
    %14369 = vmatpush.bf16.msra.mxu0 %v13052
    %14370 = vmatpush.bf16.msra.mxu0 %v13044
    %14371 = vmatpush.bf16.msra.mxu0 %v13036
    %14372 = vmatpush.bf16.msra.mxu0 %v13028
    %14373 = vmatpush.bf16.msra.mxu0 %v13020
    %14374 = vmatpush.bf16.msra.mxu0 %v13012
    %14375 = vmatpush.bf16.msra.mxu0 %v13004
    %14376 = vmatpush.bf16.msra.mxu0 %v12996
    %14377 = vmatmul.bf16.gmra.mxu0 %v11001
    %v14378 = vpop.f32.mrf.mxu0
    %v14379 = vadd.f32 %v14366, %v14378
    %v14380 = vpop.f32.mrf.mxu0
    %14381 = vdwg.mxu0
    %14382 = vmatpush.bf16.msra.mxu0 %v13116
    %14383 = vmatpush.bf16.msra.mxu0 %v13108
    %14384 = vmatpush.bf16.msra.mxu0 %v13100
    %14385 = vmatpush.bf16.msra.mxu0 %v13092
    %14386 = vmatpush.bf16.msra.mxu0 %v13084
    %14387 = vmatpush.bf16.msra.mxu0 %v13076
    %14388 = vmatpush.bf16.msra.mxu0 %v13068
    %14389 = vmatpush.bf16.msra.mxu0 %v13060
    %14390 = vmatmul.bf16.gmra.mxu0 %v11002
    %v14391 = vpop.f32.mrf.mxu0
    %v14392 = vadd.f32 %v14379, %v14391
    %v14393 = vpop.f32.mrf.mxu0
    %14394 = vdwg.mxu0
    %14395 = vmatpush.bf16.msra.mxu0 %v13180
    %14396 = vmatpush.bf16.msra.mxu0 %v13172
    %14397 = vmatpush.bf16.msra.mxu0 %v13164
    %14398 = vmatpush.bf16.msra.mxu0 %v13156
    %14399 = vmatpush.bf16.msra.mxu0 %v13148
    %14400 = vmatpush.bf16.msra.mxu0 %v13140
    %14401 = vmatpush.bf16.msra.mxu0 %v13132
    %14402 = vmatpush.bf16.msra.mxu0 %v13124
    %14403 = vmatmul.bf16.gmra.mxu0 %v11003
    %v14404 = vpop.f32.mrf.mxu0
    %v14405 = vadd.f32 %v14392, %v14404
    %v14406 = vpop.f32.mrf.mxu0
    %14407 = vdwg.mxu0
    %14408 = vmatpush.bf16.msra.mxu0 %v13244
    %14409 = vmatpush.bf16.msra.mxu0 %v13236
    %14410 = vmatpush.bf16.msra.mxu0 %v13228
    %14411 = vmatpush.bf16.msra.mxu0 %v13220
    %14412 = vmatpush.bf16.msra.mxu0 %v13212
    %14413 = vmatpush.bf16.msra.mxu0 %v13204
    %14414 = vmatpush.bf16.msra.mxu0 %v13196
    %14415 = vmatpush.bf16.msra.mxu0 %v13188
    %14416 = vmatmul.bf16.gmra.mxu0 %v11004
    %v14417 = vpop.f32.mrf.mxu0
    %v14418 = vadd.f32 %v14405, %v14417
    %v14419 = vpop.f32.mrf.mxu0
    %14420 = vdwg.mxu0
    %v14421 = vmax.f32 %v13781, %v13963
    %v14422 = vmax.f32 %v13872, %v14054
    %v14423 = vmax.f32 %v14145, %v14327
    %v14424 = vmax.f32 %v14236, %v14418
    %v14425 = vmax.f32 %v14421, %v14423
    %v14426 = vmax.f32 %v14422, %v14424
    %v14427 = vld [vmem:[#allocation8] sm:$0x3]
    %v14429 = vperm.slane %v14427, 0
    %v14430 = vperm.slane %v14427, 1
    %v14433 = vadd.f32 %v14425, %v14429
    %v14434 = vadd.f32 %v14426, %v14430
    %v14435 = vmax.f32 %v14433, 0.0
    %v14436 = vmax.f32 %v14434, 0.0
    %v14437 = vpack.c.bf16 %v14435, %v14435
    %v14438 = vpack.c.bf16 %v14436, %v14436
    %v14439 = vld [vmem:[%s5] sm:$0xf]
    %v14440 = vld [vmem:[%s5 + $0x4] sm:$0xf]
    %v14441 = vld [vmem:[%s5 + $0x8] sm:$0xf]
    %v14442 = vld [vmem:[%s5 + $0xc] sm:$0xf]
    %v14443 = vld [vmem:[%s5 + $0x10] sm:$0xf]
    %v14444 = vld [vmem:[%s5 + $0x14] sm:$0xf]
    %v14445 = vld [vmem:[%s5 + $0x18] sm:$0xf]
    %v14446 = vld [vmem:[%s5 + $0x1c] sm:$0xf]
    %v14447 = vld [vmem:[%s5 + $0x20] sm:$0xf]
    %v14448 = vld [vmem:[%s5 + $0x24] sm:$0xf]
    %v14449 = vld [vmem:[%s5 + $0x28] sm:$0xf]
    %v14450 = vld [vmem:[%s5 + $0x2c] sm:$0xf]
    %v14451 = vld [vmem:[%s5 + $0x30] sm:$0xf]
    %v14452 = vld [vmem:[%s5 + $0x34] sm:$0xf]
    %v14453 = vld [vmem:[%s5 + $0x38] sm:$0xf]
    %v14454 = vld [vmem:[%s5 + $0x3c] sm:$0xf]
    %v14455 = vld [vmem:[%s5 + $0x40] sm:$0xf]
    %v14456 = vld [vmem:[%s5 + $0x44] sm:$0xf]
    %v14457 = vld [vmem:[%s5 + $0x48] sm:$0xf]
    %v14458 = vld [vmem:[%s5 + $0x4c] sm:$0xf]
    %v14459 = vld [vmem:[%s5 + $0x50] sm:$0xf]
    %v14460 = vld [vmem:[%s5 + $0x54] sm:$0xf]
    %v14461 = vld [vmem:[%s5 + $0x58] sm:$0xf]
    %v14462 = vld [vmem:[%s5 + $0x5c] sm:$0xf]
    %v14463 = vld [vmem:[%s5 + $0x60] sm:$0xf]
    %v14464 = vld [vmem:[%s5 + $0x64] sm:$0xf]
    %v14465 = vld [vmem:[%s5 + $0x68] sm:$0xf]
    %v14466 = vld [vmem:[%s5 + $0x6c] sm:$0xf]
    %v14467 = vld [vmem:[%s5 + $0x70] sm:$0xf]
    %v14468 = vld [vmem:[%s5 + $0x74] sm:$0xf]
    %v14469 = vld [vmem:[%s5 + $0x78] sm:$0xf]
    %v14470 = vld [vmem:[%s5 + $0x7c] sm:$0xf]
    %v14471 = vld [vmem:[#allocation10] sm:$0x1]
    %v14473 = vperm.slane %v14471, 0
    %v14507 = vunpack.c.l.b16 %v14439
    %v14508 = vunpack.c.l.b16 %v14440
    %v14509 = vunpack.c.l.b16 %v14441
    %v14510 = vunpack.c.l.b16 %v14442
    %v14511 = vunpack.c.l.b16 %v14443
    %v14512 = vunpack.c.l.b16 %v14444
    %v14513 = vunpack.c.l.b16 %v14445
    %v14514 = vunpack.c.l.b16 %v14446
    %v14515 = vunpack.c.l.b16 %v14447
    %v14516 = vunpack.c.l.b16 %v14448
    %v14517 = vunpack.c.l.b16 %v14449
    %v14518 = vunpack.c.l.b16 %v14450
    %v14519 = vunpack.c.l.b16 %v14451
    %v14520 = vunpack.c.l.b16 %v14452
    %v14521 = vunpack.c.l.b16 %v14453
    %v14522 = vunpack.c.l.b16 %v14454
    %v14523 = vunpack.c.l.b16 %v14455
    %v14524 = vunpack.c.l.b16 %v14456
    %v14525 = vunpack.c.l.b16 %v14457
    %v14526 = vunpack.c.l.b16 %v14458
    %v14527 = vunpack.c.l.b16 %v14459
    %v14528 = vunpack.c.l.b16 %v14460
    %v14529 = vunpack.c.l.b16 %v14461
    %v14530 = vunpack.c.l.b16 %v14462
    %v14531 = vunpack.c.l.b16 %v14463
    %v14532 = vunpack.c.l.b16 %v14464
    %v14533 = vunpack.c.l.b16 %v14465
    %v14534 = vunpack.c.l.b16 %v14466
    %v14535 = vunpack.c.l.b16 %v14467
    %v14536 = vunpack.c.l.b16 %v14468
    %v14537 = vunpack.c.l.b16 %v14469
    %v14538 = vunpack.c.l.b16 %v14470
    %v14539 = vpack.c.b16 %v14508, %v14507
    %v14540 = vpack.c.b16 %v14510, %v14509
    %v14541 = vpack.c.b16 %v14512, %v14511
    %v14542 = vpack.c.b16 %v14514, %v14513
    %v14543 = vpack.c.b16 %v14516, %v14515
    %v14544 = vpack.c.b16 %v14518, %v14517
    %v14545 = vpack.c.b16 %v14520, %v14519
    %v14546 = vpack.c.b16 %v14522, %v14521
    %v14547 = vpack.c.b16 %v14524, %v14523
    %v14548 = vpack.c.b16 %v14526, %v14525
    %v14549 = vpack.c.b16 %v14528, %v14527
    %v14550 = vpack.c.b16 %v14530, %v14529
    %v14551 = vpack.c.b16 %v14532, %v14531
    %v14552 = vpack.c.b16 %v14534, %v14533
    %v14553 = vpack.c.b16 %v14536, %v14535
    %v14554 = vpack.c.b16 %v14538, %v14537
    %14571 = vmatpush.bf16.msra.mxu0 %v14546
    %14572 = vmatpush.bf16.msra.mxu0 %v14545
    %14573 = vmatpush.bf16.msra.mxu0 %v14544
    %14574 = vmatpush.bf16.msra.mxu0 %v14543
    %14575 = vmatpush.bf16.msra.mxu0 %v14542
    %14576 = vmatpush.bf16.msra.mxu0 %v14541
    %14577 = vmatpush.bf16.msra.mxu0 %v14540
    %14578 = vmatpush.bf16.msra.mxu0 %v14539
    %14579 = vmatmul.bf16.gmra.mxu0 %v14437
    %v14580 = vpop.f32.mrf.mxu0
    %v14581 = vadd.f32 %v14473, %v14580
    %v14582 = vpop.f32.mrf.mxu0
    %14583 = vdwg.mxu0
    %14584 = vmatpush.bf16.msra.mxu0 %v14554
    %14585 = vmatpush.bf16.msra.mxu0 %v14553
    %14586 = vmatpush.bf16.msra.mxu0 %v14552
    %14587 = vmatpush.bf16.msra.mxu0 %v14551
    %14588 = vmatpush.bf16.msra.mxu0 %v14550
    %14589 = vmatpush.bf16.msra.mxu0 %v14549
    %14590 = vmatpush.bf16.msra.mxu0 %v14548
    %14591 = vmatpush.bf16.msra.mxu0 %v14547
    %14592 = vmatmul.bf16.gmra.mxu0 %v14438
    %v14593 = vpop.f32.mrf.mxu0
    %v14594 = vadd.f32 %v14581, %v14593
    %v14595 = vpop.f32.mrf.mxu0
    %14596 = vdwg.mxu0
    %v14597 = vmax.f32 %v14594, 0.0
    %v14598 = vpack.c.bf16 %v14597, %v14597
    %v14599 = vld [vmem:[#allocation11] sm:$0xf]
    %v14600 = vld [vmem:[#allocation11 + $0x4] sm:$0xf]
    %v14601 = vld [vmem:[#allocation11 + $0x8] sm:$0xf]
    %v14602 = vld [vmem:[#allocation11 + $0xc] sm:$0xf]
    %v14603 = vld [vmem:[#allocation13] sm:$0x1]
    %v14605 = vperm.slane %v14603, 0
    %v14611 = vunpack.c.l.b16 %v14599
    %v14612 = vunpack.c.l.b16 %v14600
    %v14613 = vunpack.c.l.b16 %v14601
    %v14614 = vunpack.c.l.b16 %v14602
    %v14615 = vpack.c.b16 %v14612, %v14611
    %v14616 = vpack.c.b16 %v14614, %v14613
    %vm14619 = vcmask 261120
    %v14621 = vsel %vm14619, %v14598, 0
    %14623 = vmatpush.bf16.msra.mxu0 0
    %14624 = vmatpush.bf16.msra.mxu0 0
    %14625 = vmatpush.bf16.msra.mxu0 0
    %14626 = vmatpush.bf16.msra.mxu0 0
    %14627 = vmatpush.bf16.msra.mxu0 0
    %14628 = vmatpush.bf16.msra.mxu0 0
    %14629 = vmatpush.bf16.msra.mxu0 %v14616
    %14630 = vmatpush.bf16.msra.mxu0 %v14615
    %14631 = vmatmul.bf16.gmra.mxu0 %v14621
    %v14632 = vpop.f32.mrf.mxu0
    %v14633 = vadd.f32 %v14605, %v14632
    %v14634 = vpop.f32.mrf.mxu0
    %14635 = vdwg.mxu0
    %v14636 = vmax.f32 %v14633, 0.0
    %14637 = vst [vmem:[#allocation14] sm:$0x3] %v14636
    // Predicated region
    $region66: #{forward.1} parent=1 // pred_check
      _
    $region67: #{forward.1} parent=1 // pred_check_branch
      %14639 = sbr.rel (0) target = $region69
    $region68: #{forward.1} parent=1 // pred_region
      %14641 = vsyncadd [#allocation4], 0
      %s14643 = sshll.u32 [#allocation14], 4
      %s14644 = int_to_ptr.vmem [resolvable:$true] %s14643
      %s14645 = sshll.u32 %s9, 4
      %s14646 = int_to_ptr.hbm [resolvable:$true] %s14645
      %14648 = dma.vmem_to_hbm [thread:$0]  %s14644, 32, %s14646, [#allocation4]
    $region69: #{forward.1} parent=1 // pred_fallthru
      _
    // Predicated region
    $region70: #{forward.1} parent=1 // pred_check
      _
    $region71: #{forward.1} parent=1 // pred_check_branch
      %14650 = sbr.rel (0) target = $region73
    $region72: #{forward.1} parent=1 // pred_region
      %14652 = dma.done [#allocation4], 32
    $region73: #{forward.1} parent=1 // pred_fallthru
      _
    %14653 = vsyncpa [#allocation3], 1
    %14654 = vsyncpa [#allocation6], 1
    %14655 = vsyncpa [#allocation9], 1
    %14656 = vsyncpa [#allocation12], 1
    %14657 = vsyncpa [#allocation4], 1

</llo_original>
